<compile_context>
chip_gen: v5e
topology: v5e:2x2
jax: 0.10.0
libtpu: 0.0.40
codegen_flags: <defaults>
</compile_context>

<pallas_src>
import functools
import math

import jax
import jax.numpy as jnp
from jax.experimental import pallas as pl
from jax.experimental.pallas import tpu as pltpu

HIDDEN = 400        # hard-coded in the PyTorch module
HIDDEN_PAD = 512    # 400 padded to a multiple of 128 lanes (zero padding)
LATENT_PAD = 128    # latent (30) padded to one full lane group


def _round_up(x, a):
    return ((x + a - 1) // a) * a


def _choose_batch_tile(B, *, max_tile=512):
    """Pick (TB, n_blocks) for the batch grid axis.

    Perf-review driven:
      * n_blocks >= 2 whenever B >= 16 so the "parallel" axis feeds both v7x
        TensorCores (harmless on single-TC v5e/v6e),
      * TB is sublane-aligned (8); promoted to a 128/256 MXU-row multiple only
        when that adds < ~8% dead (padded) batch rows,
      * total padding TB*n_blocks - B (pure wasted vmatmul issue) is minimized.
    """
    if B < 16:
        return B, 1                       # single tile == full array extent
    n_blocks = max(2, pl.cdiv(B, max_tile))
    tb_raw = pl.cdiv(B, n_blocks)
    tb = _round_up(tb_raw, 8)
    budget = _round_up(int(B * 1.08) + 8, 8)
    for align in (256, 128):
        cand = _round_up(tb_raw, align)
        if cand * n_blocks <= budget:
            tb = cand
            break
    return tb, pl.cdiv(B, tb)


def _vmem_limit_bytes():
    """~75% of physical VMEM: ~48 MiB on v7x (64 MiB), 96 MiB on v5e/v6e (128 MiB)."""
    try:
        info = pltpu.get_tpu_info()
        cap = int(getattr(info, "vmem_capacity_bytes", 64 << 20))
    except Exception:
        cap = 64 << 20                    # conservative (v7x-sized) fallback
    return min((cap * 3) // 4, 100 << 20)


def _vae_kernel(x_ref, eps_ref,
                w1_ref, b1_ref, w2_ref, b2_ref, wh_ref, bh_ref,
                wd1_ref, bd1_ref, wd2_ref, bd2_ref, wd3_ref, bd3_ref,
                recon_ref, mean_ref, logvar_ref, z_ref, *, lp):
    f32, bf16 = jnp.float32, jnp.bfloat16

    def lin(a_bf16, w_ref, b_ref):
        # bf16 MXU matmul with f32 accumulation, f32 bias add.
        return jnp.dot(a_bf16, w_ref[...], preferred_element_type=f32) + b_ref[...]

    def relu_bf16(a):
        # ReLU + immediate bf16 downcast so spilled (TB, 512) intermediates are 2B/elem.
        return jnp.maximum(a, 0.0).astype(bf16)

    # ---- encoder: Linear -> ReLU -> Linear -> ReLU --------------------------
    h = relu_bf16(lin(x_ref[...], w1_ref, b1_ref))
    h = relu_bf16(lin(h, w2_ref, b2_ref))

    # ---- fused latent heads: one (512 -> 2*128) matmul, lane-aligned slices -
    heads = lin(h, wh_ref, bh_ref)
    mean = heads[:, :lp]
    logvar = heads[:, lp:]

    # ---- reparameterize: z = mean + eps * exp(0.5 * logvar) -----------------
    # (padded lanes: mean == logvar == eps == 0  ->  z == 0; sliced in wrapper)
    z = mean + eps_ref[...] * jnp.exp(0.5 * logvar)

    # ---- decoder: Linear -> ReLU -> Linear -> ReLU -> Linear -> Sigmoid -----
    d = relu_bf16(lin(z.astype(bf16), wd1_ref, bd1_ref))
    d = relu_bf16(lin(d, wd2_ref, bd2_ref))
    logits = lin(d, wd3_ref, bd3_ref)

    # sigmoid via EUP exp + EUP approximate reciprocal (free slot under MXU).
    # recon stored as bf16: halves HBM writeback (kernel is HBM-bound on v6e).
    recon_ref[...] = pl.reciprocal(1.0 + jnp.exp(-logits), approx=True).astype(bf16)
    mean_ref[...] = mean
    logvar_ref[...] = logvar
    z_ref[...] = z


def init_params(key, image_w, image_h, latent_size):
    """PyTorch-style Linear init U(-1/sqrt(fan_in), 1/sqrt(fan_in)).

    Weights are stored as (in_features, out_features) so the kernel does x @ W.
    """
    D = 3 * image_w * image_h
    layer_dims = {
        "1": (D, HIDDEN), "2": (HIDDEN, HIDDEN),
        "m": (HIDDEN, latent_size), "s": (HIDDEN, latent_size),
        "d1": (latent_size, HIDDEN), "d2": (HIDDEN, HIDDEN), "d3": (HIDDEN, D),
    }
    params = {}
    keys = jax.random.split(key, 2 * len(layer_dims))
    for i, (name, (fan_in, fan_out)) in enumerate(layer_dims.items()):
        bound = 1.0 / math.sqrt(fan_in)
        params[f"w{name}"] = jax.random.uniform(
            keys[2 * i], (fan_in, fan_out), jnp.float32, -bound, bound)
        params[f"b{name}"] = jax.random.uniform(
            keys[2 * i + 1], (1, fan_out), jnp.float32, -bound, bound)
    return params


def pack_params(params):
    """Zero-pad to MXU/vreg-friendly shapes, fuse mean|logvar heads, bf16 weights."""
    bf16 = jnp.bfloat16
    D = params["w1"].shape[0]
    DP = _round_up(D, 128)                 # lane-dense recon store for any image size
    HP, LP = HIDDEN_PAD, LATENT_PAD

    def padw(w, rows, cols):
        return jnp.pad(w, ((0, rows - w.shape[0]), (0, cols - w.shape[1])))

    def padb(b, cols):
        return jnp.pad(b, ((0, 0), (0, cols - b.shape[1])))

    # fused latent heads: [wm | ws], each column-group padded to LP lanes.
    wh = jnp.concatenate([padw(params["wm"], HIDDEN, LP),
                          padw(params["ws"], HIDDEN, LP)], axis=1)
    bh = jnp.concatenate([padb(params["bm"], LP), padb(params["bs"], LP)], axis=1)

    return {
        "w1": padw(params["w1"], DP, HP).astype(bf16),   "b1": padb(params["b1"], HP),
        "w2": padw(params["w2"], HP, HP).astype(bf16),   "b2": padb(params["b2"], HP),
        "wh": padw(wh, HP, 2 * LP).astype(bf16),         "bh": bh,
        "wd1": padw(params["wd1"], LP, HP).astype(bf16), "bd1": padb(params["bd1"], HP),
        "wd2": padw(params["wd2"], HP, HP).astype(bf16), "bd2": padb(params["bd2"], HP),
        "wd3": padw(params["wd3"], HP, DP).astype(bf16), "bd3": padb(params["bd3"], DP),
    }


def deep_vae_forward(x_nchw, eps, packed, latent_size, *, max_batch_tile=512):
    """Runs the DeepVAE forward pass. Returns (recon[bf16], mean, logvar, z).

    Contract: `eps` must be the (B, latent_size) standard-normal noise; it is
    zero-padded to LATENT_PAD lanes here so padded latent lanes stay zero.
    """
    B = x_nchw.shape[0]
    D = x_nchw.shape[1] * x_nchw.shape[2] * x_nchw.shape[3]
    DP = packed["w1"].shape[0]
    LP = LATENT_PAD
    HP = HIDDEN_PAD

    # flatten exactly like torch .view(-1, 3*W*H); stream activations as bf16.
    x_flat = x_nchw.reshape(B, D).astype(jnp.bfloat16)
    if DP != D:
        x_flat = jnp.pad(x_flat, ((0, 0), (0, DP - D)))
    eps_p = jnp.pad(eps.astype(jnp.float32), ((0, 0), (0, LP - eps.shape[1])))

    TB, n_blocks = _choose_batch_tile(B, max_tile=max_batch_tile)
    B_pad = TB * n_blocks
    if B_pad != B:
        x_flat = jnp.pad(x_flat, ((0, B_pad - B), (0, 0)))
        eps_p = jnp.pad(eps_p, ((0, B_pad - B), (0, 0)))

    w_order = ("w1", "b1", "w2", "b2", "wh", "bh",
               "wd1", "bd1", "wd2", "bd2", "wd3", "bd3")
    weights = tuple(packed[k] for k in w_order)

    # Advisory cost estimate on the *padded* problem actually executed.
    flops = 2 * B_pad * (DP * HP + HP * HP + HP * (2 * LP)
                         + LP * HP + HP * HP + HP * DP)
    transcendentals = B_pad * (2 * DP + LP)      # exp+recip per recon, exp per latent
    bytes_accessed = (int(x_flat.size) * 2 + int(eps_p.size) * 4
                      + sum(int(a.size) * a.dtype.itemsize for a in weights)
                      + B_pad * DP * 2           # recon writeback (bf16)
                      + 3 * B_pad * LP * 4)      # mean / logvar / z

    def run(weight_buffers):
        batch_spec = lambda cols: pl.BlockSpec((TB, cols), lambda i: (i, 0))
        if weight_buffers is None:
            resident = lambda a: pl.BlockSpec(a.shape, lambda i: (0, 0))
        else:
            # constant index_map => fetched once; single buffer halves VMEM use.
            resident = lambda a: pl.BlockSpec(a.shape, lambda i: (0, 0),
                                              pipeline_mode=pl.Buffered(weight_buffers))
        in_specs = [batch_spec(DP), batch_spec(LP)] + [resident(w) for w in weights]
        out_specs = (batch_spec(DP), batch_spec(LP), batch_spec(LP), batch_spec(LP))
        out_shape = (
            jax.ShapeDtypeStruct((B_pad, DP), jnp.bfloat16),   # recon (bf16 writeback)
            jax.ShapeDtypeStruct((B_pad, LP), jnp.float32),    # mean   (lane-padded)
            jax.ShapeDtypeStruct((B_pad, LP), jnp.float32),    # logvar (lane-padded)
            jax.ShapeDtypeStruct((B_pad, LP), jnp.float32),    # z      (lane-padded)
        )
        return pl.pallas_call(
            functools.partial(_vae_kernel, lp=LP),
            grid=(n_blocks,),
            in_specs=in_specs,
            out_specs=out_specs,
            out_shape=out_shape,
            compiler_params=pltpu.CompilerParams(
                dimension_semantics=("parallel",),        # split batch tiles over TCs
                vmem_limit_bytes=_vmem_limit_bytes(),     # per-generation VMEM budget
            ),
            cost_estimate=pl.CostEstimate(flops=flops,
                                          transcendentals=transcendentals,
                                          bytes_accessed=bytes_accessed),
        )(x_flat, eps_p, *weights)

    try:
        recon, mean_p, logvar_p, z_p = run(1)             # single-buffered weights
    except Exception:
        # Fallback for jax versions that reject pl.Buffered(1) on the implicit
        # pipeline; only costs the extra (double) weight buffers in VMEM.
        recon, mean_p, logvar_p, z_p = run(None)

    return (recon[:B, :D],
            mean_p[:B, :latent_size],
            logvar_p[:B, :latent_size],
            z_p[:B, :latent_size])


def reference_forward(x_nchw, eps, params):
    """Pure-JAX reference mirroring the kernel's bf16-weight / f32-accum math."""
    bf16, f32 = jnp.bfloat16, jnp.float32
    B = x_nchw.shape[0]

    def lin(a, w, b):
        return jnp.dot(a.astype(bf16), w.astype(bf16),
                       preferred_element_type=f32) + b

    x = x_nchw.reshape(B, -1)
    h = jnp.maximum(lin(x, params["w1"], params["b1"]), 0.0)
    h = jnp.maximum(lin(h, params["w2"], params["b2"]), 0.0)
    mean = lin(h, params["wm"], params["bm"])
    logvar = lin(h, params["ws"], params["bs"])
    z = mean + eps * jnp.exp(0.5 * logvar)
    d = jnp.maximum(lin(z, params["wd1"], params["bd1"]), 0.0)
    d = jnp.maximum(lin(d, params["wd2"], params["bd2"]), 0.0)
    recon = jax.nn.sigmoid(lin(d, params["wd3"], params["bd3"]))
    return recon, mean, logvar, z


if __name__ == "__main__":
    # Small shapes consistent with the module's forward: batch=2, 3x16x16 image,
    # latent_size=30 (module default), hidden=400 (hard-coded in the module).
    IMAGE_W, IMAGE_H, LATENT, BATCH = 16, 16, 30, 2

    key = jax.random.PRNGKey(0)
    k_params, k_x, k_eps = jax.random.split(key, 3)

    params = init_params(k_params, IMAGE_W, IMAGE_H, LATENT)
    packed = pack_params(params)
    x = jax.random.uniform(k_x, (BATCH, 3, IMAGE_H, IMAGE_W), jnp.float32)
    # torch.randn_like(std) equivalent: pre-sampled gaussian noise, passed in.
    eps = jax.random.normal(k_eps, (BATCH, LATENT), jnp.float32)

    recon, mean, logvar, z = deep_vae_forward(x, eps, packed, LATENT)
    jax.block_until_ready((recon, mean, logvar, z))

    # Verify against the pure-JAX reference (bf16 weights + bf16 recon writeback
    # => loosened tolerance).
    r_ref, m_ref, lv_ref, z_ref = reference_forward(x, eps, params)
    assert recon.shape == (BATCH, 3 * IMAGE_W * IMAGE_H)
    assert recon.dtype == jnp.bfloat16
    assert mean.shape == (BATCH, LATENT) and z.shape == (BATCH, LATENT)
    assert jnp.allclose(recon.astype(jnp.float32), r_ref, atol=2e-2, rtol=2e-2)
    assert jnp.allclose(mean, m_ref, atol=2e-2, rtol=2e-2)
    assert jnp.allclose(logvar, lv_ref, atol=2e-2, rtol=2e-2)
    assert jnp.allclose(z, z_ref, atol=2e-2, rtol=2e-2)

    print("KERNEL_OK")
</pallas_src>

<mosaic_0001>
module attributes {stable_mosaic.version = 11 : i64} {
  func.func @_vae_kernel(%arg0: i32, %arg1: memref<2x768xbf16, #tpu.memory_space<vmem>>, %arg2: memref<2x128xf32, #tpu.memory_space<vmem>>, %arg3: memref<768x512xbf16, #tpu.memory_space<vmem>>, %arg4: memref<1x512xf32, #tpu.memory_space<vmem>>, %arg5: memref<512x512xbf16, #tpu.memory_space<vmem>>, %arg6: memref<1x512xf32, #tpu.memory_space<vmem>>, %arg7: memref<512x256xbf16, #tpu.memory_space<vmem>>, %arg8: memref<1x256xf32, #tpu.memory_space<vmem>>, %arg9: memref<128x512xbf16, #tpu.memory_space<vmem>>, %arg10: memref<1x512xf32, #tpu.memory_space<vmem>>, %arg11: memref<512x512xbf16, #tpu.memory_space<vmem>>, %arg12: memref<1x512xf32, #tpu.memory_space<vmem>>, %arg13: memref<512x768xbf16, #tpu.memory_space<vmem>>, %arg14: memref<1x768xf32, #tpu.memory_space<vmem>>, %arg15: memref<2x768xbf16, #tpu.memory_space<vmem>>, %arg16: memref<2x128xf32, #tpu.memory_space<vmem>>, %arg17: memref<2x128xf32, #tpu.memory_space<vmem>>, %arg18: memref<2x128xf32, #tpu.memory_space<vmem>>) attributes {dimension_semantics = [#tpu.dimension_semantics<parallel>], iteration_bounds = array<i64: 1>, scalar_prefetch = 0 : i64, scratch_operands = 0 : i64, tpu.core_type = #tpu.core_type<tc>, window_params = [{transform_indices = @transform_0, window_bounds = array<i64: 2, 768>}, {transform_indices = @transform_1, window_bounds = array<i64: 2, 128>}, {pipeline_mode = #tpu.pipeline_mode<synchronous>, transform_indices = @transform_2, window_bounds = array<i64: 768, 512>}, {pipeline_mode = #tpu.pipeline_mode<synchronous>, transform_indices = @transform_3, window_bounds = array<i64: 1, 512>}, {pipeline_mode = #tpu.pipeline_mode<synchronous>, transform_indices = @transform_4, window_bounds = array<i64: 512, 512>}, {pipeline_mode = #tpu.pipeline_mode<synchronous>, transform_indices = @transform_5, window_bounds = array<i64: 1, 512>}, {pipeline_mode = #tpu.pipeline_mode<synchronous>, transform_indices = @transform_6, window_bounds = array<i64: 512, 256>}, {pipeline_mode = #tpu.pipeline_mode<synchronous>, transform_indices = @transform_7, window_bounds = array<i64: 1, 256>}, {pipeline_mode = #tpu.pipeline_mode<synchronous>, transform_indices = @transform_8, window_bounds = array<i64: 128, 512>}, {pipeline_mode = #tpu.pipeline_mode<synchronous>, transform_indices = @transform_9, window_bounds = array<i64: 1, 512>}, {pipeline_mode = #tpu.pipeline_mode<synchronous>, transform_indices = @transform_10, window_bounds = array<i64: 512, 512>}, {pipeline_mode = #tpu.pipeline_mode<synchronous>, transform_indices = @transform_11, window_bounds = array<i64: 1, 512>}, {pipeline_mode = #tpu.pipeline_mode<synchronous>, transform_indices = @transform_12, window_bounds = array<i64: 512, 768>}, {pipeline_mode = #tpu.pipeline_mode<synchronous>, transform_indices = @transform_13, window_bounds = array<i64: 1, 768>}, {transform_indices = @transform_14, window_bounds = array<i64: 2, 768>}, {transform_indices = @transform_15, window_bounds = array<i64: 2, 128>}, {transform_indices = @transform_16, window_bounds = array<i64: 2, 128>}, {transform_indices = @transform_17, window_bounds = array<i64: 2, 128>}]} {
    %c0 = arith.constant 0 : index
    %c0_0 = arith.constant 0 : index
    %0 = vector.load %arg1[%c0, %c0_0] : memref<2x768xbf16, #tpu.memory_space<vmem>>, vector<2x768xbf16>
    %c0_1 = arith.constant 0 : index
    %c0_2 = arith.constant 0 : index
    %1 = vector.load %arg3[%c0_1, %c0_2] : memref<768x512xbf16, #tpu.memory_space<vmem>>, vector<768x512xbf16>
    %cst = arith.constant dense<0.000000e+00> : vector<2x512xf32>
    %2 = tpu.matmul %0, %1, %cst {dimension_numbers = #tpu.dot_dimension_numbers<[1], [0], [0], [1], [0, 0, 1, 1], [], []>} : vector<2x768xbf16>, vector<768x512xbf16>, vector<2x512xf32> -> vector<2x512xf32>
    %c0_3 = arith.constant 0 : index
    %c0_4 = arith.constant 0 : index
    %3 = vector.load %arg4[%c0_3, %c0_4] : memref<1x512xf32, #tpu.memory_space<vmem>>, vector<1x512xf32>
    %4 = vector.broadcast %3 : vector<1x512xf32> to vector<2x512xf32>
    %5 = arith.addf %2, %4 : vector<2x512xf32>
    %cst_5 = arith.constant 0.000000e+00 : f32
    %6 = vector.broadcast %cst_5 : f32 to vector<2x512xf32>
    %7 = arith.maximumf %5, %6 : vector<2x512xf32>
    %8 = arith.truncf %7 : vector<2x512xf32> to vector<2x512xbf16>
    %c0_6 = arith.constant 0 : index
    %c0_7 = arith.constant 0 : index
    %9 = vector.load %arg5[%c0_6, %c0_7] : memref<512x512xbf16, #tpu.memory_space<vmem>>, vector<512x512xbf16>
    %cst_8 = arith.constant dense<0.000000e+00> : vector<2x512xf32>
    %10 = tpu.matmul %8, %9, %cst_8 {dimension_numbers = #tpu.dot_dimension_numbers<[1], [0], [0], [1], [0, 0, 1, 1], [], []>} : vector<2x512xbf16>, vector<512x512xbf16>, vector<2x512xf32> -> vector<2x512xf32>
    %c0_9 = arith.constant 0 : index
    %c0_10 = arith.constant 0 : index
    %11 = vector.load %arg6[%c0_9, %c0_10] : memref<1x512xf32, #tpu.memory_space<vmem>>, vector<1x512xf32>
    %12 = vector.broadcast %11 : vector<1x512xf32> to vector<2x512xf32>
    %13 = arith.addf %10, %12 : vector<2x512xf32>
    %cst_11 = arith.constant 0.000000e+00 : f32
    %14 = vector.broadcast %cst_11 : f32 to vector<2x512xf32>
    %15 = arith.maximumf %13, %14 : vector<2x512xf32>
    %16 = arith.truncf %15 : vector<2x512xf32> to vector<2x512xbf16>
    %c0_12 = arith.constant 0 : index
    %c0_13 = arith.constant 0 : index
    %17 = vector.load %arg7[%c0_12, %c0_13] : memref<512x256xbf16, #tpu.memory_space<vmem>>, vector<512x256xbf16>
    %cst_14 = arith.constant dense<0.000000e+00> : vector<2x256xf32>
    %18 = tpu.matmul %16, %17, %cst_14 {dimension_numbers = #tpu.dot_dimension_numbers<[1], [0], [0], [1], [0, 0, 1, 1], [], []>} : vector<2x512xbf16>, vector<512x256xbf16>, vector<2x256xf32> -> vector<2x256xf32>
    %c0_15 = arith.constant 0 : index
    %c0_16 = arith.constant 0 : index
    %19 = vector.load %arg8[%c0_15, %c0_16] : memref<1x256xf32, #tpu.memory_space<vmem>>, vector<1x256xf32>
    %20 = vector.broadcast %19 : vector<1x256xf32> to vector<2x256xf32>
    %21 = arith.addf %18, %20 : vector<2x256xf32>
    %22 = vector.extract_strided_slice %21 {offsets = [0, 0], sizes = [2, 128], strides = [1, 1]} : vector<2x256xf32> to vector<2x128xf32>
    %23 = vector.extract_strided_slice %21 {offsets = [0, 128], sizes = [2, 128], strides = [1, 1]} : vector<2x256xf32> to vector<2x128xf32>
    %c0_17 = arith.constant 0 : index
    %c0_18 = arith.constant 0 : index
    %24 = vector.load %arg2[%c0_17, %c0_18] : memref<2x128xf32, #tpu.memory_space<vmem>>, vector<2x128xf32>
    %cst_19 = arith.constant 5.000000e-01 : f32
    %25 = vector.broadcast %cst_19 : f32 to vector<2x128xf32>
    %26 = arith.mulf %25, %23 : vector<2x128xf32>
    %27 = math.exp %26 : vector<2x128xf32>
    %28 = arith.mulf %24, %27 : vector<2x128xf32>
    %29 = arith.addf %22, %28 : vector<2x128xf32>
    %30 = arith.truncf %29 : vector<2x128xf32> to vector<2x128xbf16>
    %c0_20 = arith.constant 0 : index
    %c0_21 = arith.constant 0 : index
    %31 = vector.load %arg9[%c0_20, %c0_21] : memref<128x512xbf16, #tpu.memory_space<vmem>>, vector<128x512xbf16>
    %cst_22 = arith.constant dense<0.000000e+00> : vector<2x512xf32>
    %32 = tpu.matmul %30, %31, %cst_22 {dimension_numbers = #tpu.dot_dimension_numbers<[1], [0], [0], [1], [0, 0, 1, 1], [], []>} : vector<2x128xbf16>, vector<128x512xbf16>, vector<2x512xf32> -> vector<2x512xf32>
    %c0_23 = arith.constant 0 : index
    %c0_24 = arith.constant 0 : index
    %33 = vector.load %arg10[%c0_23, %c0_24] : memref<1x512xf32, #tpu.memory_space<vmem>>, vector<1x512xf32>
    %34 = vector.broadcast %33 : vector<1x512xf32> to vector<2x512xf32>
    %35 = arith.addf %32, %34 : vector<2x512xf32>
    %cst_25 = arith.constant 0.000000e+00 : f32
    %36 = vector.broadcast %cst_25 : f32 to vector<2x512xf32>
    %37 = arith.maximumf %35, %36 : vector<2x512xf32>
    %38 = arith.truncf %37 : vector<2x512xf32> to vector<2x512xbf16>
    %c0_26 = arith.constant 0 : index
    %c0_27 = arith.constant 0 : index
    %39 = vector.load %arg11[%c0_26, %c0_27] : memref<512x512xbf16, #tpu.memory_space<vmem>>, vector<512x512xbf16>
    %cst_28 = arith.constant dense<0.000000e+00> : vector<2x512xf32>
    %40 = tpu.matmul %38, %39, %cst_28 {dimension_numbers = #tpu.dot_dimension_numbers<[1], [0], [0], [1], [0, 0, 1, 1], [], []>} : vector<2x512xbf16>, vector<512x512xbf16>, vector<2x512xf32> -> vector<2x512xf32>
    %c0_29 = arith.constant 0 : index
    %c0_30 = arith.constant 0 : index
    %41 = vector.load %arg12[%c0_29, %c0_30] : memref<1x512xf32, #tpu.memory_space<vmem>>, vector<1x512xf32>
    %42 = vector.broadcast %41 : vector<1x512xf32> to vector<2x512xf32>
    %43 = arith.addf %40, %42 : vector<2x512xf32>
    %cst_31 = arith.constant 0.000000e+00 : f32
    %44 = vector.broadcast %cst_31 : f32 to vector<2x512xf32>
    %45 = arith.maximumf %43, %44 : vector<2x512xf32>
    %46 = arith.truncf %45 : vector<2x512xf32> to vector<2x512xbf16>
    %c0_32 = arith.constant 0 : index
    %c0_33 = arith.constant 0 : index
    %47 = vector.load %arg13[%c0_32, %c0_33] : memref<512x768xbf16, #tpu.memory_space<vmem>>, vector<512x768xbf16>
    %cst_34 = arith.constant dense<0.000000e+00> : vector<2x768xf32>
    %48 = tpu.matmul %46, %47, %cst_34 {dimension_numbers = #tpu.dot_dimension_numbers<[1], [0], [0], [1], [0, 0, 1, 1], [], []>} : vector<2x512xbf16>, vector<512x768xbf16>, vector<2x768xf32> -> vector<2x768xf32>
    %c0_35 = arith.constant 0 : index
    %c0_36 = arith.constant 0 : index
    %49 = vector.load %arg14[%c0_35, %c0_36] : memref<1x768xf32, #tpu.memory_space<vmem>>, vector<1x768xf32>
    %50 = vector.broadcast %49 : vector<1x768xf32> to vector<2x768xf32>
    %51 = arith.addf %48, %50 : vector<2x768xf32>
    %cst_37 = arith.constant 0.000000e+00 : f32
    %52 = vector.broadcast %cst_37 : f32 to vector<2x768xf32>
    %53 = arith.subf %52, %51 : vector<2x768xf32>
    %54 = math.exp %53 : vector<2x768xf32>
    %cst_38 = arith.constant 1.000000e+00 : f32
    %55 = vector.broadcast %cst_38 : f32 to vector<2x768xf32>
    %56 = arith.addf %55, %54 : vector<2x768xf32>
    %57 = tpu.reciprocal %56 {approx = true} : vector<2x768xf32> -> vector<2x768xf32>
    %58 = arith.truncf %57 : vector<2x768xf32> to vector<2x768xbf16>
    %c0_39 = arith.constant 0 : index
    %c0_40 = arith.constant 0 : index
    %59 = vector.load %arg15[%c0_39, %c0_40] : memref<2x768xbf16, #tpu.memory_space<vmem>>, vector<2x768xbf16>
    tpu.vector_store %arg15[%c0_39, %c0_40], %58 {strides = array<i32>} : memref<2x768xbf16, #tpu.memory_space<vmem>>, vector<2x768xbf16>,
    %c0_41 = arith.constant 0 : index
    %c0_42 = arith.constant 0 : index
    %60 = vector.load %arg16[%c0_41, %c0_42] : memref<2x128xf32, #tpu.memory_space<vmem>>, vector<2x128xf32>
    tpu.vector_store %arg16[%c0_41, %c0_42], %22 {strides = array<i32>} : memref<2x128xf32, #tpu.memory_space<vmem>>, vector<2x128xf32>,
    %c0_43 = arith.constant 0 : index
    %c0_44 = arith.constant 0 : index
    %61 = vector.load %arg17[%c0_43, %c0_44] : memref<2x128xf32, #tpu.memory_space<vmem>>, vector<2x128xf32>
    tpu.vector_store %arg17[%c0_43, %c0_44], %23 {strides = array<i32>} : memref<2x128xf32, #tpu.memory_space<vmem>>, vector<2x128xf32>,
    %c0_45 = arith.constant 0 : index
    %c0_46 = arith.constant 0 : index
    %62 = vector.load %arg18[%c0_45, %c0_46] : memref<2x128xf32, #tpu.memory_space<vmem>>, vector<2x128xf32>
    tpu.vector_store %arg18[%c0_45, %c0_46], %29 {strides = array<i32>} : memref<2x128xf32, #tpu.memory_space<vmem>>, vector<2x128xf32>,
    return
  }
  func.func @transform_0(%arg0: i32) -> (i32, i32) {
    %c0_i32 = arith.constant 0 : i32
    %c0_i32_0 = arith.constant 0 : i32
    return %arg0, %c0_i32 : i32, i32
  }
  func.func @transform_1(%arg0: i32) -> (i32, i32) {
    %c0_i32 = arith.constant 0 : i32
    %c0_i32_0 = arith.constant 0 : i32
    return %arg0, %c0_i32 : i32, i32
  }
  func.func @transform_2(%arg0: i32) -> (i32, i32) {
    %c0_i32 = arith.constant 0 : i32
    %c0_i32_0 = arith.constant 0 : i32
    %c0_i32_1 = arith.constant 0 : i32
    return %c0_i32, %c0_i32_0 : i32, i32
  }
  func.func @transform_3(%arg0: i32) -> (i32, i32) {
    %c0_i32 = arith.constant 0 : i32
    %c0_i32_0 = arith.constant 0 : i32
    %c0_i32_1 = arith.constant 0 : i32
    return %c0_i32, %c0_i32_0 : i32, i32
  }
  func.func @transform_4(%arg0: i32) -> (i32, i32) {
    %c0_i32 = arith.constant 0 : i32
    %c0_i32_0 = arith.constant 0 : i32
    %c0_i32_1 = arith.constant 0 : i32
    return %c0_i32, %c0_i32_0 : i32, i32
  }
  func.func @transform_5(%arg0: i32) -> (i32, i32) {
    %c0_i32 = arith.constant 0 : i32
    %c0_i32_0 = arith.constant 0 : i32
    %c0_i32_1 = arith.constant 0 : i32
    return %c0_i32, %c0_i32_0 : i32, i32
  }
  func.func @transform_6(%arg0: i32) -> (i32, i32) {
    %c0_i32 = arith.constant 0 : i32
    %c0_i32_0 = arith.constant 0 : i32
    %c0_i32_1 = arith.constant 0 : i32
    return %c0_i32, %c0_i32_0 : i32, i32
  }
  func.func @transform_7(%arg0: i32) -> (i32, i32) {
    %c0_i32 = arith.constant 0 : i32
    %c0_i32_0 = arith.constant 0 : i32
    %c0_i32_1 = arith.constant 0 : i32
    return %c0_i32, %c0_i32_0 : i32, i32
  }
  func.func @transform_8(%arg0: i32) -> (i32, i32) {
    %c0_i32 = arith.constant 0 : i32
    %c0_i32_0 = arith.constant 0 : i32
    %c0_i32_1 = arith.constant 0 : i32
    return %c0_i32, %c0_i32_0 : i32, i32
  }
  func.func @transform_9(%arg0: i32) -> (i32, i32) {
    %c0_i32 = arith.constant 0 : i32
    %c0_i32_0 = arith.constant 0 : i32
    %c0_i32_1 = arith.constant 0 : i32
    return %c0_i32, %c0_i32_0 : i32, i32
  }
  func.func @transform_10(%arg0: i32) -> (i32, i32) {
    %c0_i32 = arith.constant 0 : i32
    %c0_i32_0 = arith.constant 0 : i32
    %c0_i32_1 = arith.constant 0 : i32
    return %c0_i32, %c0_i32_0 : i32, i32
  }
  func.func @transform_11(%arg0: i32) -> (i32, i32) {
    %c0_i32 = arith.constant 0 : i32
    %c0_i32_0 = arith.constant 0 : i32
    %c0_i32_1 = arith.constant 0 : i32
    return %c0_i32, %c0_i32_0 : i32, i32
  }
  func.func @transform_12(%arg0: i32) -> (i32, i32) {
    %c0_i32 = arith.constant 0 : i32
    %c0_i32_0 = arith.constant 0 : i32
    %c0_i32_1 = arith.constant 0 : i32
    return %c0_i32, %c0_i32_0 : i32, i32
  }
  func.func @transform_13(%arg0: i32) -> (i32, i32) {
    %c0_i32 = arith.constant 0 : i32
    %c0_i32_0 = arith.constant 0 : i32
    %c0_i32_1 = arith.constant 0 : i32
    return %c0_i32, %c0_i32_0 : i32, i32
  }
  func.func @transform_14(%arg0: i32) -> (i32, i32) {
    %c0_i32 = arith.constant 0 : i32
    %c0_i32_0 = arith.constant 0 : i32
    return %arg0, %c0_i32 : i32, i32
  }
  func.func @transform_15(%arg0: i32) -> (i32, i32) {
    %c0_i32 = arith.constant 0 : i32
    %c0_i32_0 = arith.constant 0 : i32
    return %arg0, %c0_i32 : i32, i32
  }
  func.func @transform_16(%arg0: i32) -> (i32, i32) {
    %c0_i32 = arith.constant 0 : i32
    %c0_i32_0 = arith.constant 0 : i32
    return %arg0, %c0_i32 : i32, i32
  }
  func.func @transform_17(%arg0: i32) -> (i32, i32) {
    %c0_i32 = arith.constant 0 : i32
    %c0_i32_0 = arith.constant 0 : i32
    return %arg0, %c0_i32 : i32, i32
  }
}

module attributes {stable_mosaic.version = 11 : i64} {
  func.func @_vae_kernel(%arg0: i32, %arg1: memref<2x768xbf16, #tpu.memory_space<vmem>>, %arg2: memref<2x128xf32, #tpu.memory_space<vmem>>, %arg3: memref<768x512xbf16, #tpu.memory_space<vmem>>, %arg4: memref<1x512xf32, #tpu.memory_space<vmem>>, %arg5: memref<512x512xbf16, #tpu.memory_space<vmem>>, %arg6: memref<1x512xf32, #tpu.memory_space<vmem>>, %arg7: memref<512x256xbf16, #tpu.memory_space<vmem>>, %arg8: memref<1x256xf32, #tpu.memory_space<vmem>>, %arg9: memref<128x512xbf16, #tpu.memory_space<vmem>>, %arg10: memref<1x512xf32, #tpu.memory_space<vmem>>, %arg11: memref<512x512xbf16, #tpu.memory_space<vmem>>, %arg12: memref<1x512xf32, #tpu.memory_space<vmem>>, %arg13: memref<512x768xbf16, #tpu.memory_space<vmem>>, %arg14: memref<1x768xf32, #tpu.memory_space<vmem>>, %arg15: memref<2x768xbf16, #tpu.memory_space<vmem>>, %arg16: memref<2x128xf32, #tpu.memory_space<vmem>>, %arg17: memref<2x128xf32, #tpu.memory_space<vmem>>, %arg18: memref<2x128xf32, #tpu.memory_space<vmem>>) attributes {dimension_semantics = [#tpu.dimension_semantics<parallel>], iteration_bounds = array<i64: 1>, scalar_prefetch = 0 : i64, scratch_operands = 0 : i64, tpu.core_type = #tpu.core_type<tc>, window_params = [{transform_indices = @transform_0, window_bounds = array<i64: 2, 768>}, {transform_indices = @transform_1, window_bounds = array<i64: 2, 128>}, {pipeline_mode = #tpu.pipeline_mode<synchronous>, transform_indices = @transform_2, window_bounds = array<i64: 768, 512>}, {pipeline_mode = #tpu.pipeline_mode<synchronous>, transform_indices = @transform_3, window_bounds = array<i64: 1, 512>}, {pipeline_mode = #tpu.pipeline_mode<synchronous>, transform_indices = @transform_4, window_bounds = array<i64: 512, 512>}, {pipeline_mode = #tpu.pipeline_mode<synchronous>, transform_indices = @transform_5, window_bounds = array<i64: 1, 512>}, {pipeline_mode = #tpu.pipeline_mode<synchronous>, transform_indices = @transform_6, window_bounds = array<i64: 512, 256>}, {pipeline_mode = #tpu.pipeline_mode<synchronous>, transform_indices = @transform_7, window_bounds = array<i64: 1, 256>}, {pipeline_mode = #tpu.pipeline_mode<synchronous>, transform_indices = @transform_8, window_bounds = array<i64: 128, 512>}, {pipeline_mode = #tpu.pipeline_mode<synchronous>, transform_indices = @transform_9, window_bounds = array<i64: 1, 512>}, {pipeline_mode = #tpu.pipeline_mode<synchronous>, transform_indices = @transform_10, window_bounds = array<i64: 512, 512>}, {pipeline_mode = #tpu.pipeline_mode<synchronous>, transform_indices = @transform_11, window_bounds = array<i64: 1, 512>}, {pipeline_mode = #tpu.pipeline_mode<synchronous>, transform_indices = @transform_12, window_bounds = array<i64: 512, 768>}, {pipeline_mode = #tpu.pipeline_mode<synchronous>, transform_indices = @transform_13, window_bounds = array<i64: 1, 768>}, {transform_indices = @transform_14, window_bounds = array<i64: 2, 768>}, {transform_indices = @transform_15, window_bounds = array<i64: 2, 128>}, {transform_indices = @transform_16, window_bounds = array<i64: 2, 128>}, {transform_indices = @transform_17, window_bounds = array<i64: 2, 128>}]} {
    %c0 = arith.constant 0 : index
    %c0_0 = arith.constant 0 : index
    %0 = vector.load %arg1[%c0, %c0_0] : memref<2x768xbf16, #tpu.memory_space<vmem>>, vector<2x768xbf16>
    %c0_1 = arith.constant 0 : index
    %c0_2 = arith.constant 0 : index
    %1 = vector.load %arg3[%c0_1, %c0_2] : memref<768x512xbf16, #tpu.memory_space<vmem>>, vector<768x512xbf16>
    %cst = arith.constant dense<0.000000e+00> : vector<2x512xf32>
    %2 = tpu.matmul %0, %1, %cst {dimension_numbers = #tpu.dot_dimension_numbers<[1], [0], [0], [1], [0, 0, 1, 1], [], []>} : vector<2x768xbf16>, vector<768x512xbf16>, vector<2x512xf32> -> vector<2x512xf32>
    %c0_3 = arith.constant 0 : index
    %c0_4 = arith.constant 0 : index
    %3 = vector.load %arg4[%c0_3, %c0_4] : memref<1x512xf32, #tpu.memory_space<vmem>>, vector<1x512xf32>
    %4 = vector.broadcast %3 : vector<1x512xf32> to vector<2x512xf32>
    %5 = arith.addf %2, %4 : vector<2x512xf32>
    %cst_5 = arith.constant 0.000000e+00 : f32
    %6 = vector.broadcast %cst_5 : f32 to vector<2x512xf32>
    %7 = arith.maximumf %5, %6 : vector<2x512xf32>
    %8 = arith.truncf %7 : vector<2x512xf32> to vector<2x512xbf16>
    %c0_6 = arith.constant 0 : index
    %c0_7 = arith.constant 0 : index
    %9 = vector.load %arg5[%c0_6, %c0_7] : memref<512x512xbf16, #tpu.memory_space<vmem>>, vector<512x512xbf16>
    %cst_8 = arith.constant dense<0.000000e+00> : vector<2x512xf32>
    %10 = tpu.matmul %8, %9, %cst_8 {dimension_numbers = #tpu.dot_dimension_numbers<[1], [0], [0], [1], [0, 0, 1, 1], [], []>} : vector<2x512xbf16>, vector<512x512xbf16>, vector<2x512xf32> -> vector<2x512xf32>
    %c0_9 = arith.constant 0 : index
    %c0_10 = arith.constant 0 : index
    %11 = vector.load %arg6[%c0_9, %c0_10] : memref<1x512xf32, #tpu.memory_space<vmem>>, vector<1x512xf32>
    %12 = vector.broadcast %11 : vector<1x512xf32> to vector<2x512xf32>
    %13 = arith.addf %10, %12 : vector<2x512xf32>
    %cst_11 = arith.constant 0.000000e+00 : f32
    %14 = vector.broadcast %cst_11 : f32 to vector<2x512xf32>
    %15 = arith.maximumf %13, %14 : vector<2x512xf32>
    %16 = arith.truncf %15 : vector<2x512xf32> to vector<2x512xbf16>
    %c0_12 = arith.constant 0 : index
    %c0_13 = arith.constant 0 : index
    %17 = vector.load %arg7[%c0_12, %c0_13] : memref<512x256xbf16, #tpu.memory_space<vmem>>, vector<512x256xbf16>
    %cst_14 = arith.constant dense<0.000000e+00> : vector<2x256xf32>
    %18 = tpu.matmul %16, %17, %cst_14 {dimension_numbers = #tpu.dot_dimension_numbers<[1], [0], [0], [1], [0, 0, 1, 1], [], []>} : vector<2x512xbf16>, vector<512x256xbf16>, vector<2x256xf32> -> vector<2x256xf32>
    %c0_15 = arith.constant 0 : index
    %c0_16 = arith.constant 0 : index
    %19 = vector.load %arg8[%c0_15, %c0_16] : memref<1x256xf32, #tpu.memory_space<vmem>>, vector<1x256xf32>
    %20 = vector.broadcast %19 : vector<1x256xf32> to vector<2x256xf32>
    %21 = arith.addf %18, %20 : vector<2x256xf32>
    %22 = vector.extract_strided_slice %21 {offsets = [0, 0], sizes = [2, 128], strides = [1, 1]} : vector<2x256xf32> to vector<2x128xf32>
    %23 = vector.extract_strided_slice %21 {offsets = [0, 128], sizes = [2, 128], strides = [1, 1]} : vector<2x256xf32> to vector<2x128xf32>
    %c0_17 = arith.constant 0 : index
    %c0_18 = arith.constant 0 : index
    %24 = vector.load %arg2[%c0_17, %c0_18] : memref<2x128xf32, #tpu.memory_space<vmem>>, vector<2x128xf32>
    %cst_19 = arith.constant 5.000000e-01 : f32
    %25 = vector.broadcast %cst_19 : f32 to vector<2x128xf32>
    %26 = arith.mulf %25, %23 : vector<2x128xf32>
    %27 = math.exp %26 : vector<2x128xf32>
    %28 = arith.mulf %24, %27 : vector<2x128xf32>
    %29 = arith.addf %22, %28 : vector<2x128xf32>
    %30 = arith.truncf %29 : vector<2x128xf32> to vector<2x128xbf16>
    %c0_20 = arith.constant 0 : index
    %c0_21 = arith.constant 0 : index
    %31 = vector.load %arg9[%c0_20, %c0_21] : memref<128x512xbf16, #tpu.memory_space<vmem>>, vector<128x512xbf16>
    %cst_22 = arith.constant dense<0.000000e+00> : vector<2x512xf32>
    %32 = tpu.matmul %30, %31, %cst_22 {dimension_numbers = #tpu.dot_dimension_numbers<[1], [0], [0], [1], [0, 0, 1, 1], [], []>} : vector<2x128xbf16>, vector<128x512xbf16>, vector<2x512xf32> -> vector<2x512xf32>
    %c0_23 = arith.constant 0 : index
    %c0_24 = arith.constant 0 : index
    %33 = vector.load %arg10[%c0_23, %c0_24] : memref<1x512xf32, #tpu.memory_space<vmem>>, vector<1x512xf32>
    %34 = vector.broadcast %33 : vector<1x512xf32> to vector<2x512xf32>
    %35 = arith.addf %32, %34 : vector<2x512xf32>
    %cst_25 = arith.constant 0.000000e+00 : f32
    %36 = vector.broadcast %cst_25 : f32 to vector<2x512xf32>
    %37 = arith.maximumf %35, %36 : vector<2x512xf32>
    %38 = arith.truncf %37 : vector<2x512xf32> to vector<2x512xbf16>
    %c0_26 = arith.constant 0 : index
    %c0_27 = arith.constant 0 : index
    %39 = vector.load %arg11[%c0_26, %c0_27] : memref<512x512xbf16, #tpu.memory_space<vmem>>, vector<512x512xbf16>
    %cst_28 = arith.constant dense<0.000000e+00> : vector<2x512xf32>
    %40 = tpu.matmul %38, %39, %cst_28 {dimension_numbers = #tpu.dot_dimension_numbers<[1], [0], [0], [1], [0, 0, 1, 1], [], []>} : vector<2x512xbf16>, vector<512x512xbf16>, vector<2x512xf32> -> vector<2x512xf32>
    %c0_29 = arith.constant 0 : index
    %c0_30 = arith.constant 0 : index
    %41 = vector.load %arg12[%c0_29, %c0_30] : memref<1x512xf32, #tpu.memory_space<vmem>>, vector<1x512xf32>
    %42 = vector.broadcast %41 : vector<1x512xf32> to vector<2x512xf32>
    %43 = arith.addf %40, %42 : vector<2x512xf32>
    %cst_31 = arith.constant 0.000000e+00 : f32
    %44 = vector.broadcast %cst_31 : f32 to vector<2x512xf32>
    %45 = arith.maximumf %43, %44 : vector<2x512xf32>
    %46 = arith.truncf %45 : vector<2x512xf32> to vector<2x512xbf16>
    %c0_32 = arith.constant 0 : index
    %c0_33 = arith.constant 0 : index
    %47 = vector.load %arg13[%c0_32, %c0_33] : memref<512x768xbf16, #tpu.memory_space<vmem>>, vector<512x768xbf16>
    %cst_34 = arith.constant dense<0.000000e+00> : vector<2x768xf32>
    %48 = tpu.matmul %46, %47, %cst_34 {dimension_numbers = #tpu.dot_dimension_numbers<[1], [0], [0], [1], [0, 0, 1, 1], [], []>} : vector<2x512xbf16>, vector<512x768xbf16>, vector<2x768xf32> -> vector<2x768xf32>
    %c0_35 = arith.constant 0 : index
    %c0_36 = arith.constant 0 : index
    %49 = vector.load %arg14[%c0_35, %c0_36] : memref<1x768xf32, #tpu.memory_space<vmem>>, vector<1x768xf32>
    %50 = vector.broadcast %49 : vector<1x768xf32> to vector<2x768xf32>
    %51 = arith.addf %48, %50 : vector<2x768xf32>
    %cst_37 = arith.constant 0.000000e+00 : f32
    %52 = vector.broadcast %cst_37 : f32 to vector<2x768xf32>
    %53 = arith.subf %52, %51 : vector<2x768xf32>
    %54 = math.exp %53 : vector<2x768xf32>
    %cst_38 = arith.constant 1.000000e+00 : f32
    %55 = vector.broadcast %cst_38 : f32 to vector<2x768xf32>
    %56 = arith.addf %55, %54 : vector<2x768xf32>
    %57 = tpu.reciprocal %56 {approx = true} : vector<2x768xf32> -> vector<2x768xf32>
    %58 = arith.truncf %57 : vector<2x768xf32> to vector<2x768xbf16>
    %c0_39 = arith.constant 0 : index
    %c0_40 = arith.constant 0 : index
    %59 = vector.load %arg15[%c0_39, %c0_40] : memref<2x768xbf16, #tpu.memory_space<vmem>>, vector<2x768xbf16>
    tpu.vector_store %arg15[%c0_39, %c0_40], %58 {strides = array<i32>} : memref<2x768xbf16, #tpu.memory_space<vmem>>, vector<2x768xbf16>,
    %c0_41 = arith.constant 0 : index
    %c0_42 = arith.constant 0 : index
    %60 = vector.load %arg16[%c0_41, %c0_42] : memref<2x128xf32, #tpu.memory_space<vmem>>, vector<2x128xf32>
    tpu.vector_store %arg16[%c0_41, %c0_42], %22 {strides = array<i32>} : memref<2x128xf32, #tpu.memory_space<vmem>>, vector<2x128xf32>,
    %c0_43 = arith.constant 0 : index
    %c0_44 = arith.constant 0 : index
    %61 = vector.load %arg17[%c0_43, %c0_44] : memref<2x128xf32, #tpu.memory_space<vmem>>, vector<2x128xf32>
    tpu.vector_store %arg17[%c0_43, %c0_44], %23 {strides = array<i32>} : memref<2x128xf32, #tpu.memory_space<vmem>>, vector<2x128xf32>,
    %c0_45 = arith.constant 0 : index
    %c0_46 = arith.constant 0 : index
    %62 = vector.load %arg18[%c0_45, %c0_46] : memref<2x128xf32, #tpu.memory_space<vmem>>, vector<2x128xf32>
    tpu.vector_store %arg18[%c0_45, %c0_46], %29 {strides = array<i32>} : memref<2x128xf32, #tpu.memory_space<vmem>>, vector<2x128xf32>,
    return
  }
  func.func @transform_0(%arg0: i32) -> (i32, i32) {
    %c0_i32 = arith.constant 0 : i32
    %c0_i32_0 = arith.constant 0 : i32
    return %arg0, %c0_i32 : i32, i32
  }
  func.func @transform_1(%arg0: i32) -> (i32, i32) {
    %c0_i32 = arith.constant 0 : i32
    %c0_i32_0 = arith.constant 0 : i32
    return %arg0, %c0_i32 : i32, i32
  }
  func.func @transform_2(%arg0: i32) -> (i32, i32) {
    %c0_i32 = arith.constant 0 : i32
    %c0_i32_0 = arith.constant 0 : i32
    %c0_i32_1 = arith.constant 0 : i32
    return %c0_i32, %c0_i32_0 : i32, i32
  }
  func.func @transform_3(%arg0: i32) -> (i32, i32) {
    %c0_i32 = arith.constant 0 : i32
    %c0_i32_0 = arith.constant 0 : i32
    %c0_i32_1 = arith.constant 0 : i32
    return %c0_i32, %c0_i32_0 : i32, i32
  }
  func.func @transform_4(%arg0: i32) -> (i32, i32) {
    %c0_i32 = arith.constant 0 : i32
    %c0_i32_0 = arith.constant 0 : i32
    %c0_i32_1 = arith.constant 0 : i32
    return %c0_i32, %c0_i32_0 : i32, i32
  }
  func.func @transform_5(%arg0: i32) -> (i32, i32) {
    %c0_i32 = arith.constant 0 : i32
    %c0_i32_0 = arith.constant 0 : i32
    %c0_i32_1 = arith.constant 0 : i32
    return %c0_i32, %c0_i32_0 : i32, i32
  }
  func.func @transform_6(%arg0: i32) -> (i32, i32) {
    %c0_i32 = arith.constant 0 : i32
    %c0_i32_0 = arith.constant 0 : i32
    %c0_i32_1 = arith.constant 0 : i32
    return %c0_i32, %c0_i32_0 : i32, i32
  }
  func.func @transform_7(%arg0: i32) -> (i32, i32) {
    %c0_i32 = arith.constant 0 : i32
    %c0_i32_0 = arith.constant 0 : i32
    %c0_i32_1 = arith.constant 0 : i32
    return %c0_i32, %c0_i32_0 : i32, i32
  }
  func.func @transform_8(%arg0: i32) -> (i32, i32) {
    %c0_i32 = arith.constant 0 : i32
    %c0_i32_0 = arith.constant 0 : i32
    %c0_i32_1 = arith.constant 0 : i32
    return %c0_i32, %c0_i32_0 : i32, i32
  }
  func.func @transform_9(%arg0: i32) -> (i32, i32) {
    %c0_i32 = arith.constant 0 : i32
    %c0_i32_0 = arith.constant 0 : i32
    %c0_i32_1 = arith.constant 0 : i32
    return %c0_i32, %c0_i32_0 : i32, i32
  }
  func.func @transform_10(%arg0: i32) -> (i32, i32) {
    %c0_i32 = arith.constant 0 : i32
    %c0_i32_0 = arith.constant 0 : i32
    %c0_i32_1 = arith.constant 0 : i32
    return %c0_i32, %c0_i32_0 : i32, i32
  }
  func.func @transform_11(%arg0: i32) -> (i32, i32) {
    %c0_i32 = arith.constant 0 : i32
    %c0_i32_0 = arith.constant 0 : i32
    %c0_i32_1 = arith.constant 0 : i32
    return %c0_i32, %c0_i32_0 : i32, i32
  }
  func.func @transform_12(%arg0: i32) -> (i32, i32) {
    %c0_i32 = arith.constant 0 : i32
    %c0_i32_0 = arith.constant 0 : i32
    %c0_i32_1 = arith.constant 0 : i32
    return %c0_i32, %c0_i32_0 : i32, i32
  }
  func.func @transform_13(%arg0: i32) -> (i32, i32) {
    %c0_i32 = arith.constant 0 : i32
    %c0_i32_0 = arith.constant 0 : i32
    %c0_i32_1 = arith.constant 0 : i32
    return %c0_i32, %c0_i32_0 : i32, i32
  }
  func.func @transform_14(%arg0: i32) -> (i32, i32) {
    %c0_i32 = arith.constant 0 : i32
    %c0_i32_0 = arith.constant 0 : i32
    return %arg0, %c0_i32 : i32, i32
  }
  func.func @transform_15(%arg0: i32) -> (i32, i32) {
    %c0_i32 = arith.constant 0 : i32
    %c0_i32_0 = arith.constant 0 : i32
    return %arg0, %c0_i32 : i32, i32
  }
  func.func @transform_16(%arg0: i32) -> (i32, i32) {
    %c0_i32 = arith.constant 0 : i32
    %c0_i32_0 = arith.constant 0 : i32
    return %arg0, %c0_i32 : i32, i32
  }
  func.func @transform_17(%arg0: i32) -> (i32, i32) {
    %c0_i32 = arith.constant 0 : i32
    %c0_i32_0 = arith.constant 0 : i32
    return %arg0, %c0_i32 : i32, i32
  }
}

</mosaic_0001>

<llo_original>
// kernel: tpu_custom_call.1
$region0: #{tpu_custom_call.1}
  #allocation0 [shape = 'u32[]', space=smem, size = 0x4, offset = 0x4, fixed_abs, tag = 'smem constant byte address 0x4 - core index']
  #allocation1 [shape = 'u32[72,128]{1,0:T(1,128)}', space=vmem, size = 0x9000, scoped, tag = 'internal scratch']
  %s0 = inlined_call_operand.hbm [shape: bf16[2,768], index: 0, kind: input, shape index: {}]
  %s1 = inlined_call_operand.hbm [shape: f32[2,128], index: 1, kind: input, shape index: {}]
  %s2 = inlined_call_operand.hbm [shape: bf16[768,512], index: 2, kind: input, shape index: {}]
  %s3 = inlined_call_operand.hbm [shape: f32[1,512], index: 3, kind: input, shape index: {}]
  %s4 = inlined_call_operand.hbm [shape: bf16[512,512], index: 4, kind: input, shape index: {}]
  %s5 = inlined_call_operand.vmem [shape: f32[1,512], index: 5, kind: input, shape index: {}]
  %s6 = inlined_call_operand.hbm [shape: bf16[512,256], index: 6, kind: input, shape index: {}]
  %s7 = inlined_call_operand.hbm [shape: f32[1,256], index: 7, kind: input, shape index: {}]
  %s8 = inlined_call_operand.hbm [shape: bf16[128,512], index: 8, kind: input, shape index: {}]
  %s9 = inlined_call_operand.hbm [shape: f32[1,512], index: 9, kind: input, shape index: {}]
  %s10 = inlined_call_operand.hbm [shape: bf16[512,512], index: 10, kind: input, shape index: {}]
  %s11 = inlined_call_operand.hbm [shape: f32[1,512], index: 11, kind: input, shape index: {}]
  %s12 = inlined_call_operand.hbm [shape: bf16[512,768], index: 12, kind: input, shape index: {}]
  %s13 = inlined_call_operand.vmem [shape: f32[1,768], index: 13, kind: input, shape index: {}]
  %s14 = inlined_call_operand.hbm [shape: bf16[2,768], index: 14, kind: output, shape index: {0}]
  %s15 = inlined_call_operand.hbm [shape: f32[2,128], index: 15, kind: output, shape index: {1}]
  %s16 = inlined_call_operand.hbm [shape: f32[2,128], index: 16, kind: output, shape index: {2}]
  %s17 = inlined_call_operand.hbm [shape: f32[2,128], index: 17, kind: output, shape index: {3}]
  %18 = xla_tuple %s14, %s15, %s16, %s17
  %s19 = sld [smem:[#allocation0]]
  $region138: #{tpu_custom_call.1} parent=0
    _
  %s21 = ssub.s32 1, %s19
  %s22 = scalar_select 0, %s21, %s19
  $region1: #{tpu_custom_call.1} parent=0
    #allocation2 [shape = 'u8[3072]{0}', space=vmem, size = 0xc00, scoped, tag = 'input window, operand 0, single buffered']
    #allocation3 [shape = 's32[1]{0}', space=sflag, size = 0x4, scoped, tag = 'scoped memory for tpu_custom_call.1']
    #allocation4 [shape = 's32[1]{0}', space=sflag, size = 0x4, scoped, tag = 'scoped memory for tpu_custom_call.1']
    #allocation5 [shape = 'u8[1024]{0}', space=vmem, size = 0x400, scoped, tag = 'input window, operand 1, single buffered']
    #allocation6 [shape = 's32[1]{0}', space=sflag, size = 0x4, scoped, tag = 'scoped memory for tpu_custom_call.1']
    #allocation7 [shape = 'u8[786432]{0}', space=vmem, size = 0xc0000, scoped, tag = 'input window, operand 2, single buffered']
    #allocation8 [shape = 'u8[2048]{0}', space=vmem, size = 0x800, scoped, tag = 'input window, operand 3, single buffered']
    #allocation9 [shape = 's32[1]{0}', space=sflag, size = 0x4, scoped, tag = 'scoped memory for tpu_custom_call.1']
    #allocation10 [shape = 'u8[524288]{0}', space=vmem, size = 0x80000, scoped, tag = 'input window, operand 4, single buffered']
    #allocation11 [shape = 'u8[262144]{0}', space=vmem, size = 0x40000, scoped, tag = 'input window, operand 6, single buffered']
    #allocation12 [shape = 's32[1]{0}', space=sflag, size = 0x4, scoped, tag = 'scoped memory for tpu_custom_call.1']
    #allocation13 [shape = 'u8[1024]{0}', space=vmem, size = 0x400, scoped, tag = 'input window, operand 7, single buffered']
    #allocation14 [shape = 'u8[131072]{0}', space=vmem, size = 0x20000, scoped, tag = 'input window, operand 8, single buffered']
    #allocation15 [shape = 's32[1]{0}', space=sflag, size = 0x4, scoped, tag = 'scoped memory for tpu_custom_call.1']
    #allocation16 [shape = 'u8[2048]{0}', space=vmem, size = 0x800, scoped, tag = 'input window, operand 9, single buffered']
    #allocation17 [shape = 'u8[524288]{0}', space=vmem, size = 0x80000, scoped, tag = 'input window, operand 10, single buffered']
    #allocation18 [shape = 's32[1]{0}', space=sflag, size = 0x4, scoped, tag = 'scoped memory for tpu_custom_call.1']
    #allocation19 [shape = 'u8[2048]{0}', space=vmem, size = 0x800, scoped, tag = 'input window, operand 11, single buffered']
    #allocation20 [shape = 'u8[786432]{0}', space=vmem, size = 0xc0000, scoped, tag = 'input window, operand 12, single buffered']
    #allocation21 [shape = 's32[1]{0}', space=sflag, size = 0x4, scoped, tag = 'scoped memory for tpu_custom_call.1']
    #allocation22 [shape = 'u8[3072]{0}', space=vmem, size = 0xc00, scoped, tag = 'output window, operand 0, single buffered']
    #allocation23 [shape = 'u8[1024]{0}', space=vmem, size = 0x400, scoped, tag = 'output window, operand 1, single buffered']
    #allocation24 [shape = 's32[1]{0}', space=sflag, size = 0x4, scoped, tag = 'scoped memory for tpu_custom_call.1']
    #allocation25 [shape = 'u8[1024]{0}', space=vmem, size = 0x400, scoped, tag = 'output window, operand 2, single buffered']
    #allocation26 [shape = 'u8[1024]{0}', space=vmem, size = 0x400, scoped, tag = 'output window, operand 3, single buffered']
    #allocation27 [shape = 's32[1]{0}', space=sflag, size = 0x4, scoped, tag = 'scoped memory for tpu_custom_call.1']
    %23 = vsyncpa [#allocation3], 0
    %24 = vsyncpa [#allocation6], 0
    %25 = vsyncpa [#allocation9], 0
    %26 = vsyncpa [#allocation12], 0
    %27 = vsyncpa [#allocation15], 0
    %28 = vsyncpa [#allocation18], 0
    %29 = vsyncpa [#allocation21], 0
    %30 = vsyncpa [#allocation4], 0
    %31 = vsyncpa [#allocation24], 0
    %32 = vsyncpa [#allocation27], 0
    // Predicated region
    $region2: #{tpu_custom_call.1} parent=1 // pred_check
      _
    $region3: #{tpu_custom_call.1} parent=1 // pred_check_branch
      %34 = sbr.rel (0) target = $region5
    $region4: #{tpu_custom_call.1} parent=1 // pred_region
      %36 = vsyncadd [#allocation3], 0
      %s38 = sshll.u32 %s0, 4
      %s39 = int_to_ptr.hbm [resolvable:$true] %s38
      %s40 = sshll.u32 [#allocation2], 4
      %s41 = int_to_ptr.vmem [resolvable:$true] %s40
      %43 = dma.hbm_to_vmem [thread:$0]  %s39, 96, %s41, [#allocation3]
    $region5: #{tpu_custom_call.1} parent=1 // pred_fallthru
      _
    // Predicated region
    $region6: #{tpu_custom_call.1} parent=1 // pred_check
      _
    $region7: #{tpu_custom_call.1} parent=1 // pred_check_branch
      %45 = sbr.rel (0) target = $region9
    $region8: #{tpu_custom_call.1} parent=1 // pred_region
      %47 = vsyncadd [#allocation6], 0
      %s49 = sshll.u32 %s1, 4
      %s50 = int_to_ptr.hbm [resolvable:$true] %s49
      %s51 = sshll.u32 [#allocation5], 4
      %s52 = int_to_ptr.vmem [resolvable:$true] %s51
      %54 = dma.hbm_to_vmem [thread:$0]  %s50, 32, %s52, [#allocation6]
    $region9: #{tpu_custom_call.1} parent=1 // pred_fallthru
      _
    // Predicated region
    $region10: #{tpu_custom_call.1} parent=1 // pred_check
      _
    $region11: #{tpu_custom_call.1} parent=1 // pred_check_branch
      %56 = sbr.rel (0) target = $region13
    $region12: #{tpu_custom_call.1} parent=1 // pred_region
      %58 = vsyncadd [#allocation6], 0
      %s59 = sshll.u32 %s2, 4
      %s60 = int_to_ptr.hbm [resolvable:$true] %s59
      %s61 = sshll.u32 [#allocation7], 4
      %s62 = int_to_ptr.vmem [resolvable:$true] %s61
      %67 = dma.hbm_to_vmem [thread:$0]  %s60, 24576, %s62, [#allocation6], 256, 256, 16
    $region13: #{tpu_custom_call.1} parent=1 // pred_fallthru
      _
    // Predicated region
    $region14: #{tpu_custom_call.1} parent=1 // pred_check
      _
    $region15: #{tpu_custom_call.1} parent=1 // pred_check_branch
      %69 = sbr.rel (0) target = $region17
    $region16: #{tpu_custom_call.1} parent=1 // pred_region
      %71 = vsyncadd [#allocation9], 0
      %s73 = sshll.u32 %s3, 4
      %s74 = int_to_ptr.hbm [resolvable:$true] %s73
      %s75 = sshll.u32 [#allocation8], 4
      %s76 = int_to_ptr.vmem [resolvable:$true] %s75
      %78 = dma.hbm_to_vmem [thread:$0]  %s74, 64, %s76, [#allocation9]
    $region17: #{tpu_custom_call.1} parent=1 // pred_fallthru
      _
    // Predicated region
    $region18: #{tpu_custom_call.1} parent=1 // pred_check
      _
    $region19: #{tpu_custom_call.1} parent=1 // pred_check_branch
      %80 = sbr.rel (0) target = $region21
    $region20: #{tpu_custom_call.1} parent=1 // pred_region
      %82 = vsyncadd [#allocation9], 0
      %s83 = sshll.u32 %s4, 4
      %s84 = int_to_ptr.hbm [resolvable:$true] %s83
      %s85 = sshll.u32 [#allocation10], 4
      %s86 = int_to_ptr.vmem [resolvable:$true] %s85
      %91 = dma.hbm_to_vmem [thread:$0]  %s84, 16384, %s86, [#allocation9], 256, 256, 16
    $region21: #{tpu_custom_call.1} parent=1 // pred_fallthru
      _
    // Predicated region
    $region22: #{tpu_custom_call.1} parent=1 // pred_check
      _
    $region23: #{tpu_custom_call.1} parent=1 // pred_check_branch
      %93 = sbr.rel (0) target = $region25
    $region24: #{tpu_custom_call.1} parent=1 // pred_region
      _
    $region25: #{tpu_custom_call.1} parent=1 // pred_fallthru
      _
    // Predicated region
    $region26: #{tpu_custom_call.1} parent=1 // pred_check
      _
    $region27: #{tpu_custom_call.1} parent=1 // pred_check_branch
      %95 = sbr.rel (0) target = $region29
    $region28: #{tpu_custom_call.1} parent=1 // pred_region
      %97 = vsyncadd [#allocation12], 0
      %s98 = sshll.u32 %s6, 4
      %s99 = int_to_ptr.hbm [resolvable:$true] %s98
      %s100 = sshll.u32 [#allocation11], 4
      %s101 = int_to_ptr.vmem [resolvable:$true] %s100
      %106 = dma.hbm_to_vmem [thread:$0]  %s99, 8192, %s101, [#allocation12], 128, 128, 8
    $region29: #{tpu_custom_call.1} parent=1 // pred_fallthru
      _
    // Predicated region
    $region30: #{tpu_custom_call.1} parent=1 // pred_check
      _
    $region31: #{tpu_custom_call.1} parent=1 // pred_check_branch
      %108 = sbr.rel (0) target = $region33
    $region32: #{tpu_custom_call.1} parent=1 // pred_region
      %110 = vsyncadd [#allocation12], 0
      %s112 = sshll.u32 %s7, 4
      %s113 = int_to_ptr.hbm [resolvable:$true] %s112
      %s114 = sshll.u32 [#allocation13], 4
      %s115 = int_to_ptr.vmem [resolvable:$true] %s114
      %117 = dma.hbm_to_vmem [thread:$0]  %s113, 32, %s115, [#allocation12]
    $region33: #{tpu_custom_call.1} parent=1 // pred_fallthru
      _
    // Predicated region
    $region34: #{tpu_custom_call.1} parent=1 // pred_check
      _
    $region35: #{tpu_custom_call.1} parent=1 // pred_check_branch
      %119 = sbr.rel (0) target = $region37
    $region36: #{tpu_custom_call.1} parent=1 // pred_region
      %121 = vsyncadd [#allocation15], 0
      %s122 = sshll.u32 %s8, 4
      %s123 = int_to_ptr.hbm [resolvable:$true] %s122
      %s124 = sshll.u32 [#allocation14], 4
      %s125 = int_to_ptr.vmem [resolvable:$true] %s124
      %130 = dma.hbm_to_vmem [thread:$0]  %s123, 4096, %s125, [#allocation15], 256, 256, 16
    $region37: #{tpu_custom_call.1} parent=1 // pred_fallthru
      _
    // Predicated region
    $region38: #{tpu_custom_call.1} parent=1 // pred_check
      _
    $region39: #{tpu_custom_call.1} parent=1 // pred_check_branch
      %132 = sbr.rel (0) target = $region41
    $region40: #{tpu_custom_call.1} parent=1 // pred_region
      %134 = vsyncadd [#allocation15], 0
      %s136 = sshll.u32 %s9, 4
      %s137 = int_to_ptr.hbm [resolvable:$true] %s136
      %s138 = sshll.u32 [#allocation16], 4
      %s139 = int_to_ptr.vmem [resolvable:$true] %s138
      %141 = dma.hbm_to_vmem [thread:$0]  %s137, 64, %s139, [#allocation15]
    $region41: #{tpu_custom_call.1} parent=1 // pred_fallthru
      _
    // Predicated region
    $region42: #{tpu_custom_call.1} parent=1 // pred_check
      _
    $region43: #{tpu_custom_call.1} parent=1 // pred_check_branch
      %143 = sbr.rel (0) target = $region45
    $region44: #{tpu_custom_call.1} parent=1 // pred_region
      %145 = vsyncadd [#allocation18], 0
      %s146 = sshll.u32 %s10, 4
      %s147 = int_to_ptr.hbm [resolvable:$true] %s146
      %s148 = sshll.u32 [#allocation17], 4
      %s149 = int_to_ptr.vmem [resolvable:$true] %s148
      %154 = dma.hbm_to_vmem [thread:$0]  %s147, 16384, %s149, [#allocation18], 256, 256, 16
    $region45: #{tpu_custom_call.1} parent=1 // pred_fallthru
      _
    // Predicated region
    $region46: #{tpu_custom_call.1} parent=1 // pred_check
      _
    $region47: #{tpu_custom_call.1} parent=1 // pred_check_branch
      %156 = sbr.rel (0) target = $region49
    $region48: #{tpu_custom_call.1} parent=1 // pred_region
      %158 = vsyncadd [#allocation18], 0
      %s160 = sshll.u32 %s11, 4
      %s161 = int_to_ptr.hbm [resolvable:$true] %s160
      %s162 = sshll.u32 [#allocation19], 4
      %s163 = int_to_ptr.vmem [resolvable:$true] %s162
      %165 = dma.hbm_to_vmem [thread:$0]  %s161, 64, %s163, [#allocation18]
    $region49: #{tpu_custom_call.1} parent=1 // pred_fallthru
      _
    // Predicated region
    $region50: #{tpu_custom_call.1} parent=1 // pred_check
      _
    $region51: #{tpu_custom_call.1} parent=1 // pred_check_branch
      %167 = sbr.rel (0) target = $region53
    $region52: #{tpu_custom_call.1} parent=1 // pred_region
      %169 = vsyncadd [#allocation21], 0
      %s170 = sshll.u32 %s12, 4
      %s171 = int_to_ptr.hbm [resolvable:$true] %s170
      %s172 = sshll.u32 [#allocation20], 4
      %s173 = int_to_ptr.vmem [resolvable:$true] %s172
      %178 = dma.hbm_to_vmem [thread:$0]  %s171, 24576, %s173, [#allocation21], 384, 384, 24
    $region53: #{tpu_custom_call.1} parent=1 // pred_fallthru
      _
    // Predicated region
    $region54: #{tpu_custom_call.1} parent=1 // pred_check
      _
    $region55: #{tpu_custom_call.1} parent=1 // pred_check_branch
      %180 = sbr.rel (0) target = $region57
    $region56: #{tpu_custom_call.1} parent=1 // pred_region
      _
    $region57: #{tpu_custom_call.1} parent=1 // pred_fallthru
      _
    // Predicated region
    $region58: #{tpu_custom_call.1} parent=1 // pred_check
      _
    $region59: #{tpu_custom_call.1} parent=1 // pred_check_branch
      %182 = sbr.rel (0) target = $region61
    $region60: #{tpu_custom_call.1} parent=1 // pred_region
      %184 = dma.done [#allocation3], 96
    $region61: #{tpu_custom_call.1} parent=1 // pred_fallthru
      _
    // Predicated region
    $region62: #{tpu_custom_call.1} parent=1 // pred_check
      _
    $region63: #{tpu_custom_call.1} parent=1 // pred_check_branch
      %186 = sbr.rel (0) target = $region65
    $region64: #{tpu_custom_call.1} parent=1 // pred_region
      %188 = dma.done [#allocation6], 32
    $region65: #{tpu_custom_call.1} parent=1 // pred_fallthru
      _
    // Predicated region
    $region66: #{tpu_custom_call.1} parent=1 // pred_check
      _
    $region67: #{tpu_custom_call.1} parent=1 // pred_check_branch
      %190 = sbr.rel (0) target = $region69
    $region68: #{tpu_custom_call.1} parent=1 // pred_region
      %192 = dma.done [#allocation6], 24576
    $region69: #{tpu_custom_call.1} parent=1 // pred_fallthru
      _
    // Predicated region
    $region70: #{tpu_custom_call.1} parent=1 // pred_check
      _
    $region71: #{tpu_custom_call.1} parent=1 // pred_check_branch
      %194 = sbr.rel (0) target = $region73
    $region72: #{tpu_custom_call.1} parent=1 // pred_region
      %196 = dma.done [#allocation9], 64
    $region73: #{tpu_custom_call.1} parent=1 // pred_fallthru
      _
    // Predicated region
    $region74: #{tpu_custom_call.1} parent=1 // pred_check
      _
    $region75: #{tpu_custom_call.1} parent=1 // pred_check_branch
      %198 = sbr.rel (0) target = $region77
    $region76: #{tpu_custom_call.1} parent=1 // pred_region
      %200 = dma.done [#allocation9], 16384
    $region77: #{tpu_custom_call.1} parent=1 // pred_fallthru
      _
    // Predicated region
    $region78: #{tpu_custom_call.1} parent=1 // pred_check
      _
    $region79: #{tpu_custom_call.1} parent=1 // pred_check_branch
      %202 = sbr.rel (0) target = $region81
    $region80: #{tpu_custom_call.1} parent=1 // pred_region
      %204 = dma.done [#allocation12], 8192
    $region81: #{tpu_custom_call.1} parent=1 // pred_fallthru
      _
    // Predicated region
    $region82: #{tpu_custom_call.1} parent=1 // pred_check
      _
    $region83: #{tpu_custom_call.1} parent=1 // pred_check_branch
      %206 = sbr.rel (0) target = $region85
    $region84: #{tpu_custom_call.1} parent=1 // pred_region
      %208 = dma.done [#allocation12], 32
    $region85: #{tpu_custom_call.1} parent=1 // pred_fallthru
      _
    // Predicated region
    $region86: #{tpu_custom_call.1} parent=1 // pred_check
      _
    $region87: #{tpu_custom_call.1} parent=1 // pred_check_branch
      %210 = sbr.rel (0) target = $region89
    $region88: #{tpu_custom_call.1} parent=1 // pred_region
      %212 = dma.done [#allocation15], 4096
    $region89: #{tpu_custom_call.1} parent=1 // pred_fallthru
      _
    // Predicated region
    $region90: #{tpu_custom_call.1} parent=1 // pred_check
      _
    $region91: #{tpu_custom_call.1} parent=1 // pred_check_branch
      %214 = sbr.rel (0) target = $region93
    $region92: #{tpu_custom_call.1} parent=1 // pred_region
      %216 = dma.done [#allocation15], 64
    $region93: #{tpu_custom_call.1} parent=1 // pred_fallthru
      _
    // Predicated region
    $region94: #{tpu_custom_call.1} parent=1 // pred_check
      _
    $region95: #{tpu_custom_call.1} parent=1 // pred_check_branch
      %218 = sbr.rel (0) target = $region97
    $region96: #{tpu_custom_call.1} parent=1 // pred_region
      %220 = dma.done [#allocation18], 16384
    $region97: #{tpu_custom_call.1} parent=1 // pred_fallthru
      _
    // Predicated region
    $region98: #{tpu_custom_call.1} parent=1 // pred_check
      _
    $region99: #{tpu_custom_call.1} parent=1 // pred_check_branch
      %222 = sbr.rel (0) target = $region101
    $region100: #{tpu_custom_call.1} parent=1 // pred_region
      %224 = dma.done [#allocation18], 64
    $region101: #{tpu_custom_call.1} parent=1 // pred_fallthru
      _
    // Predicated region
    $region102: #{tpu_custom_call.1} parent=1 // pred_check
      _
    $region103: #{tpu_custom_call.1} parent=1 // pred_check_branch
      %226 = sbr.rel (0) target = $region105
    $region104: #{tpu_custom_call.1} parent=1 // pred_region
      %228 = dma.done [#allocation21], 24576
    $region105: #{tpu_custom_call.1} parent=1 // pred_fallthru
      _
    %v229 = vld [vmem:[#allocation2] sm:$0x3f]
    %v230 = vld [vmem:[#allocation7] sm:$0xff]
    %v231 = vld [vmem:[#allocation7 + $0x8] sm:$0xff]
    %v232 = vld [vmem:[#allocation7 + $0x10] sm:$0xff]
    %v233 = vld [vmem:[#allocation7 + $0x18] sm:$0xff]
    %v234 = vld [vmem:[#allocation7 + $0x20] sm:$0xff]
    %v235 = vld [vmem:[#allocation7 + $0x28] sm:$0xff]
    %v236 = vld [vmem:[#allocation7 + $0x30] sm:$0xff]
    %v237 = vld [vmem:[#allocation7 + $0x38] sm:$0xff]
    %v238 = vld [vmem:[#allocation7 + $0x40] sm:$0xff]
    %v239 = vld [vmem:[#allocation7 + $0x48] sm:$0xff]
    %v240 = vld [vmem:[#allocation7 + $0x50] sm:$0xff]
    %v241 = vld [vmem:[#allocation7 + $0x58] sm:$0xff]
    %v242 = vld [vmem:[#allocation7 + $0x60] sm:$0xff]
    %v243 = vld [vmem:[#allocation7 + $0x68] sm:$0xff]
    %v244 = vld [vmem:[#allocation7 + $0x70] sm:$0xff]
    %v245 = vld [vmem:[#allocation7 + $0x78] sm:$0xff]
    %v246 = vld [vmem:[#allocation7 + $0x80] sm:$0xff]
    %v247 = vld [vmem:[#allocation7 + $0x88] sm:$0xff]
    %v248 = vld [vmem:[#allocation7 + $0x90] sm:$0xff]
    %v249 = vld [vmem:[#allocation7 + $0x98] sm:$0xff]
    %v250 = vld [vmem:[#allocation7 + $0xa0] sm:$0xff]
    %v251 = vld [vmem:[#allocation7 + $0xa8] sm:$0xff]
    %v252 = vld [vmem:[#allocation7 + $0xb0] sm:$0xff]
    %v253 = vld [vmem:[#allocation7 + $0xb8] sm:$0xff]
    %v254 = vld [vmem:[#allocation7 + $0xc0] sm:$0xff]
    %v255 = vld [vmem:[#allocation7 + $0xc8] sm:$0xff]
    %v256 = vld [vmem:[#allocation7 + $0xd0] sm:$0xff]
    %v257 = vld [vmem:[#allocation7 + $0xd8] sm:$0xff]
    %v258 = vld [vmem:[#allocation7 + $0xe0] sm:$0xff]
    %v259 = vld [vmem:[#allocation7 + $0xe8] sm:$0xff]
    %v260 = vld [vmem:[#allocation7 + $0xf0] sm:$0xff]
    %v261 = vld [vmem:[#allocation7 + $0xf8] sm:$0xff]
    %v262 = vld [vmem:[#allocation7 + $0x100] sm:$0xff]
    %v263 = vld [vmem:[#allocation7 + $0x108] sm:$0xff]
    %v264 = vld [vmem:[#allocation7 + $0x110] sm:$0xff]
    %v265 = vld [vmem:[#allocation7 + $0x118] sm:$0xff]
    %v266 = vld [vmem:[#allocation7 + $0x120] sm:$0xff]
    %v267 = vld [vmem:[#allocation7 + $0x128] sm:$0xff]
    %v268 = vld [vmem:[#allocation7 + $0x130] sm:$0xff]
    %v269 = vld [vmem:[#allocation7 + $0x138] sm:$0xff]
    %v270 = vld [vmem:[#allocation7 + $0x140] sm:$0xff]
    %v271 = vld [vmem:[#allocation7 + $0x148] sm:$0xff]
    %v272 = vld [vmem:[#allocation7 + $0x150] sm:$0xff]
    %v273 = vld [vmem:[#allocation7 + $0x158] sm:$0xff]
    %v274 = vld [vmem:[#allocation7 + $0x160] sm:$0xff]
    %v275 = vld [vmem:[#allocation7 + $0x168] sm:$0xff]
    %v276 = vld [vmem:[#allocation7 + $0x170] sm:$0xff]
    %v277 = vld [vmem:[#allocation7 + $0x178] sm:$0xff]
    %v278 = vld [vmem:[#allocation7 + $0x180] sm:$0xff]
    %v279 = vld [vmem:[#allocation7 + $0x188] sm:$0xff]
    %v280 = vld [vmem:[#allocation7 + $0x190] sm:$0xff]
    %v281 = vld [vmem:[#allocation7 + $0x198] sm:$0xff]
    %v282 = vld [vmem:[#allocation7 + $0x1a0] sm:$0xff]
    %v283 = vld [vmem:[#allocation7 + $0x1a8] sm:$0xff]
    %v284 = vld [vmem:[#allocation7 + $0x1b0] sm:$0xff]
    %v285 = vld [vmem:[#allocation7 + $0x1b8] sm:$0xff]
    %v286 = vld [vmem:[#allocation7 + $0x1c0] sm:$0xff]
    %v287 = vld [vmem:[#allocation7 + $0x1c8] sm:$0xff]
    %v288 = vld [vmem:[#allocation7 + $0x1d0] sm:$0xff]
    %v289 = vld [vmem:[#allocation7 + $0x1d8] sm:$0xff]
    %v290 = vld [vmem:[#allocation7 + $0x1e0] sm:$0xff]
    %v291 = vld [vmem:[#allocation7 + $0x1e8] sm:$0xff]
    %v292 = vld [vmem:[#allocation7 + $0x1f0] sm:$0xff]
    %v293 = vld [vmem:[#allocation7 + $0x1f8] sm:$0xff]
    %v294 = vld [vmem:[#allocation7 + $0x200] sm:$0xff]
    %v295 = vld [vmem:[#allocation7 + $0x208] sm:$0xff]
    %v296 = vld [vmem:[#allocation7 + $0x210] sm:$0xff]
    %v297 = vld [vmem:[#allocation7 + $0x218] sm:$0xff]
    %v298 = vld [vmem:[#allocation7 + $0x220] sm:$0xff]
    %v299 = vld [vmem:[#allocation7 + $0x228] sm:$0xff]
    %v300 = vld [vmem:[#allocation7 + $0x230] sm:$0xff]
    %v301 = vld [vmem:[#allocation7 + $0x238] sm:$0xff]
    %v302 = vld [vmem:[#allocation7 + $0x240] sm:$0xff]
    %v303 = vld [vmem:[#allocation7 + $0x248] sm:$0xff]
    %v304 = vld [vmem:[#allocation7 + $0x250] sm:$0xff]
    %v305 = vld [vmem:[#allocation7 + $0x258] sm:$0xff]
    %v306 = vld [vmem:[#allocation7 + $0x260] sm:$0xff]
    %v307 = vld [vmem:[#allocation7 + $0x268] sm:$0xff]
    %v308 = vld [vmem:[#allocation7 + $0x270] sm:$0xff]
    %v309 = vld [vmem:[#allocation7 + $0x278] sm:$0xff]
    %v310 = vld [vmem:[#allocation7 + $0x280] sm:$0xff]
    %v311 = vld [vmem:[#allocation7 + $0x288] sm:$0xff]
    %v312 = vld [vmem:[#allocation7 + $0x290] sm:$0xff]
    %v313 = vld [vmem:[#allocation7 + $0x298] sm:$0xff]
    %v314 = vld [vmem:[#allocation7 + $0x2a0] sm:$0xff]
    %v315 = vld [vmem:[#allocation7 + $0x2a8] sm:$0xff]
    %v316 = vld [vmem:[#allocation7 + $0x2b0] sm:$0xff]
    %v317 = vld [vmem:[#allocation7 + $0x2b8] sm:$0xff]
    %v318 = vld [vmem:[#allocation7 + $0x2c0] sm:$0xff]
    %v319 = vld [vmem:[#allocation7 + $0x2c8] sm:$0xff]
    %v320 = vld [vmem:[#allocation7 + $0x2d0] sm:$0xff]
    %v321 = vld [vmem:[#allocation7 + $0x2d8] sm:$0xff]
    %v322 = vld [vmem:[#allocation7 + $0x2e0] sm:$0xff]
    %v323 = vld [vmem:[#allocation7 + $0x2e8] sm:$0xff]
    %v324 = vld [vmem:[#allocation7 + $0x2f0] sm:$0xff]
    %v325 = vld [vmem:[#allocation7 + $0x2f8] sm:$0xff]
    %v326 = vld [vmem:[#allocation7 + $0x300] sm:$0xff]
    %v327 = vld [vmem:[#allocation7 + $0x308] sm:$0xff]
    %v328 = vld [vmem:[#allocation7 + $0x310] sm:$0xff]
    %v329 = vld [vmem:[#allocation7 + $0x318] sm:$0xff]
    %v330 = vld [vmem:[#allocation7 + $0x320] sm:$0xff]
    %v331 = vld [vmem:[#allocation7 + $0x328] sm:$0xff]
    %v332 = vld [vmem:[#allocation7 + $0x330] sm:$0xff]
    %v333 = vld [vmem:[#allocation7 + $0x338] sm:$0xff]
    %v334 = vld [vmem:[#allocation7 + $0x340] sm:$0xff]
    %v335 = vld [vmem:[#allocation7 + $0x348] sm:$0xff]
    %v336 = vld [vmem:[#allocation7 + $0x350] sm:$0xff]
    %v337 = vld [vmem:[#allocation7 + $0x358] sm:$0xff]
    %v338 = vld [vmem:[#allocation7 + $0x360] sm:$0xff]
    %v339 = vld [vmem:[#allocation7 + $0x368] sm:$0xff]
    %v340 = vld [vmem:[#allocation7 + $0x370] sm:$0xff]
    %v341 = vld [vmem:[#allocation7 + $0x378] sm:$0xff]
    %v342 = vld [vmem:[#allocation7 + $0x380] sm:$0xff]
    %v343 = vld [vmem:[#allocation7 + $0x388] sm:$0xff]
    %v344 = vld [vmem:[#allocation7 + $0x390] sm:$0xff]
    %v345 = vld [vmem:[#allocation7 + $0x398] sm:$0xff]
    %v346 = vld [vmem:[#allocation7 + $0x3a0] sm:$0xff]
    %v347 = vld [vmem:[#allocation7 + $0x3a8] sm:$0xff]
    %v348 = vld [vmem:[#allocation7 + $0x3b0] sm:$0xff]
    %v349 = vld [vmem:[#allocation7 + $0x3b8] sm:$0xff]
    %v350 = vld [vmem:[#allocation7 + $0x3c0] sm:$0xff]
    %v351 = vld [vmem:[#allocation7 + $0x3c8] sm:$0xff]
    %v352 = vld [vmem:[#allocation7 + $0x3d0] sm:$0xff]
    %v353 = vld [vmem:[#allocation7 + $0x3d8] sm:$0xff]
    %v354 = vld [vmem:[#allocation7 + $0x3e0] sm:$0xff]
    %v355 = vld [vmem:[#allocation7 + $0x3e8] sm:$0xff]
    %v356 = vld [vmem:[#allocation7 + $0x3f0] sm:$0xff]
    %v357 = vld [vmem:[#allocation7 + $0x3f8] sm:$0xff]
    %v358 = vld [vmem:[#allocation7 + $0x400] sm:$0xff]
    %v359 = vld [vmem:[#allocation7 + $0x408] sm:$0xff]
    %v360 = vld [vmem:[#allocation7 + $0x410] sm:$0xff]
    %v361 = vld [vmem:[#allocation7 + $0x418] sm:$0xff]
    %v362 = vld [vmem:[#allocation7 + $0x420] sm:$0xff]
    %v363 = vld [vmem:[#allocation7 + $0x428] sm:$0xff]
    %v364 = vld [vmem:[#allocation7 + $0x430] sm:$0xff]
    %v365 = vld [vmem:[#allocation7 + $0x438] sm:$0xff]
    %v366 = vld [vmem:[#allocation7 + $0x440] sm:$0xff]
    %v367 = vld [vmem:[#allocation7 + $0x448] sm:$0xff]
    %v368 = vld [vmem:[#allocation7 + $0x450] sm:$0xff]
    %v369 = vld [vmem:[#allocation7 + $0x458] sm:$0xff]
    %v370 = vld [vmem:[#allocation7 + $0x460] sm:$0xff]
    %v371 = vld [vmem:[#allocation7 + $0x468] sm:$0xff]
    %v372 = vld [vmem:[#allocation7 + $0x470] sm:$0xff]
    %v373 = vld [vmem:[#allocation7 + $0x478] sm:$0xff]
    %v374 = vld [vmem:[#allocation7 + $0x480] sm:$0xff]
    %v375 = vld [vmem:[#allocation7 + $0x488] sm:$0xff]
    %v376 = vld [vmem:[#allocation7 + $0x490] sm:$0xff]
    %v377 = vld [vmem:[#allocation7 + $0x498] sm:$0xff]
    %v378 = vld [vmem:[#allocation7 + $0x4a0] sm:$0xff]
    %v379 = vld [vmem:[#allocation7 + $0x4a8] sm:$0xff]
    %v380 = vld [vmem:[#allocation7 + $0x4b0] sm:$0xff]
    %v381 = vld [vmem:[#allocation7 + $0x4b8] sm:$0xff]
    %v382 = vld [vmem:[#allocation7 + $0x4c0] sm:$0xff]
    %v383 = vld [vmem:[#allocation7 + $0x4c8] sm:$0xff]
    %v384 = vld [vmem:[#allocation7 + $0x4d0] sm:$0xff]
    %v385 = vld [vmem:[#allocation7 + $0x4d8] sm:$0xff]
    %v386 = vld [vmem:[#allocation7 + $0x4e0] sm:$0xff]
    %v387 = vld [vmem:[#allocation7 + $0x4e8] sm:$0xff]
    %v388 = vld [vmem:[#allocation7 + $0x4f0] sm:$0xff]
    %v389 = vld [vmem:[#allocation7 + $0x4f8] sm:$0xff]
    %v390 = vld [vmem:[#allocation7 + $0x500] sm:$0xff]
    %v391 = vld [vmem:[#allocation7 + $0x508] sm:$0xff]
    %v392 = vld [vmem:[#allocation7 + $0x510] sm:$0xff]
    %v393 = vld [vmem:[#allocation7 + $0x518] sm:$0xff]
    %v394 = vld [vmem:[#allocation7 + $0x520] sm:$0xff]
    %v395 = vld [vmem:[#allocation7 + $0x528] sm:$0xff]
    %v396 = vld [vmem:[#allocation7 + $0x530] sm:$0xff]
    %v397 = vld [vmem:[#allocation7 + $0x538] sm:$0xff]
    %v398 = vld [vmem:[#allocation7 + $0x540] sm:$0xff]
    %v399 = vld [vmem:[#allocation7 + $0x548] sm:$0xff]
    %v400 = vld [vmem:[#allocation7 + $0x550] sm:$0xff]
    %v401 = vld [vmem:[#allocation7 + $0x558] sm:$0xff]
    %v402 = vld [vmem:[#allocation7 + $0x560] sm:$0xff]
    %v403 = vld [vmem:[#allocation7 + $0x568] sm:$0xff]
    %v404 = vld [vmem:[#allocation7 + $0x570] sm:$0xff]
    %v405 = vld [vmem:[#allocation7 + $0x578] sm:$0xff]
    %v406 = vld [vmem:[#allocation7 + $0x580] sm:$0xff]
    %v407 = vld [vmem:[#allocation7 + $0x588] sm:$0xff]
    %v408 = vld [vmem:[#allocation7 + $0x590] sm:$0xff]
    %v409 = vld [vmem:[#allocation7 + $0x598] sm:$0xff]
    %v410 = vld [vmem:[#allocation7 + $0x5a0] sm:$0xff]
    %v411 = vld [vmem:[#allocation7 + $0x5a8] sm:$0xff]
    %v412 = vld [vmem:[#allocation7 + $0x5b0] sm:$0xff]
    %v413 = vld [vmem:[#allocation7 + $0x5b8] sm:$0xff]
    %v414 = vld [vmem:[#allocation7 + $0x5c0] sm:$0xff]
    %v415 = vld [vmem:[#allocation7 + $0x5c8] sm:$0xff]
    %v416 = vld [vmem:[#allocation7 + $0x5d0] sm:$0xff]
    %v417 = vld [vmem:[#allocation7 + $0x5d8] sm:$0xff]
    %v418 = vld [vmem:[#allocation7 + $0x5e0] sm:$0xff]
    %v419 = vld [vmem:[#allocation7 + $0x5e8] sm:$0xff]
    %v420 = vld [vmem:[#allocation7 + $0x5f0] sm:$0xff]
    %v421 = vld [vmem:[#allocation7 + $0x5f8] sm:$0xff]
    %v422 = vld [vmem:[#allocation8] sm:$0xf]
    %v424 = vperm.slane %v422, 0
    %v425 = vperm.slane %v422, 1
    %v426 = vperm.slane %v422, 2
    %v427 = vperm.slane %v422, 3
    %433 = vst [vmem:[#allocation1] ss:$9 sm:$0xff] %v229
    %v434 = vld [vmem:[#allocation1] sm:$0xff]
    %v435 = vld [vmem:[#allocation1 + $0x9] sm:$0xff]
    %v436 = vld [vmem:[#allocation1 + $0x12] sm:$0xff]
    %v437 = vld [vmem:[#allocation1 + $0x1b] sm:$0xff]
    %v438 = vld [vmem:[#allocation1 + $0x24] sm:$0xff]
    %v439 = vld [vmem:[#allocation1 + $0x2d] sm:$0xff]
    %v638 = vunpack.c.l.b16 %v230
    %v639 = vunpack.c.h.b16 %v230
    %v640 = vunpack.c.l.b16 %v231
    %v641 = vunpack.c.h.b16 %v231
    %v642 = vunpack.c.l.b16 %v232
    %v643 = vunpack.c.h.b16 %v232
    %v644 = vunpack.c.l.b16 %v233
    %v645 = vunpack.c.h.b16 %v233
    %v646 = vunpack.c.l.b16 %v234
    %v647 = vunpack.c.h.b16 %v234
    %v648 = vunpack.c.l.b16 %v235
    %v649 = vunpack.c.h.b16 %v235
    %v650 = vunpack.c.l.b16 %v236
    %v651 = vunpack.c.h.b16 %v236
    %v652 = vunpack.c.l.b16 %v237
    %v653 = vunpack.c.h.b16 %v237
    %v654 = vunpack.c.l.b16 %v238
    %v655 = vunpack.c.h.b16 %v238
    %v656 = vunpack.c.l.b16 %v239
    %v657 = vunpack.c.h.b16 %v239
    %v658 = vunpack.c.l.b16 %v240
    %v659 = vunpack.c.h.b16 %v240
    %v660 = vunpack.c.l.b16 %v241
    %v661 = vunpack.c.h.b16 %v241
    %v662 = vunpack.c.l.b16 %v242
    %v663 = vunpack.c.h.b16 %v242
    %v664 = vunpack.c.l.b16 %v243
    %v665 = vunpack.c.h.b16 %v243
    %v666 = vunpack.c.l.b16 %v244
    %v667 = vunpack.c.h.b16 %v244
    %v668 = vunpack.c.l.b16 %v245
    %v669 = vunpack.c.h.b16 %v245
    %v670 = vunpack.c.l.b16 %v246
    %v671 = vunpack.c.h.b16 %v246
    %v672 = vunpack.c.l.b16 %v247
    %v673 = vunpack.c.h.b16 %v247
    %v674 = vunpack.c.l.b16 %v248
    %v675 = vunpack.c.h.b16 %v248
    %v676 = vunpack.c.l.b16 %v249
    %v677 = vunpack.c.h.b16 %v249
    %v678 = vunpack.c.l.b16 %v250
    %v679 = vunpack.c.h.b16 %v250
    %v680 = vunpack.c.l.b16 %v251
    %v681 = vunpack.c.h.b16 %v251
    %v682 = vunpack.c.l.b16 %v252
    %v683 = vunpack.c.h.b16 %v252
    %v684 = vunpack.c.l.b16 %v253
    %v685 = vunpack.c.h.b16 %v253
    %v686 = vunpack.c.l.b16 %v254
    %v687 = vunpack.c.h.b16 %v254
    %v688 = vunpack.c.l.b16 %v255
    %v689 = vunpack.c.h.b16 %v255
    %v690 = vunpack.c.l.b16 %v256
    %v691 = vunpack.c.h.b16 %v256
    %v692 = vunpack.c.l.b16 %v257
    %v693 = vunpack.c.h.b16 %v257
    %v694 = vunpack.c.l.b16 %v258
    %v695 = vunpack.c.h.b16 %v258
    %v696 = vunpack.c.l.b16 %v259
    %v697 = vunpack.c.h.b16 %v259
    %v698 = vunpack.c.l.b16 %v260
    %v699 = vunpack.c.h.b16 %v260
    %v700 = vunpack.c.l.b16 %v261
    %v701 = vunpack.c.h.b16 %v261
    %v702 = vunpack.c.l.b16 %v262
    %v703 = vunpack.c.h.b16 %v262
    %v704 = vunpack.c.l.b16 %v263
    %v705 = vunpack.c.h.b16 %v263
    %v706 = vunpack.c.l.b16 %v264
    %v707 = vunpack.c.h.b16 %v264
    %v708 = vunpack.c.l.b16 %v265
    %v709 = vunpack.c.h.b16 %v265
    %v710 = vunpack.c.l.b16 %v266
    %v711 = vunpack.c.h.b16 %v266
    %v712 = vunpack.c.l.b16 %v267
    %v713 = vunpack.c.h.b16 %v267
    %v714 = vunpack.c.l.b16 %v268
    %v715 = vunpack.c.h.b16 %v268
    %v716 = vunpack.c.l.b16 %v269
    %v717 = vunpack.c.h.b16 %v269
    %v718 = vunpack.c.l.b16 %v270
    %v719 = vunpack.c.h.b16 %v270
    %v720 = vunpack.c.l.b16 %v271
    %v721 = vunpack.c.h.b16 %v271
    %v722 = vunpack.c.l.b16 %v272
    %v723 = vunpack.c.h.b16 %v272
    %v724 = vunpack.c.l.b16 %v273
    %v725 = vunpack.c.h.b16 %v273
    %v726 = vunpack.c.l.b16 %v274
    %v727 = vunpack.c.h.b16 %v274
    %v728 = vunpack.c.l.b16 %v275
    %v729 = vunpack.c.h.b16 %v275
    %v730 = vunpack.c.l.b16 %v276
    %v731 = vunpack.c.h.b16 %v276
    %v732 = vunpack.c.l.b16 %v277
    %v733 = vunpack.c.h.b16 %v277
    %v734 = vunpack.c.l.b16 %v278
    %v735 = vunpack.c.h.b16 %v278
    %v736 = vunpack.c.l.b16 %v279
    %v737 = vunpack.c.h.b16 %v279
    %v738 = vunpack.c.l.b16 %v280
    %v739 = vunpack.c.h.b16 %v280
    %v740 = vunpack.c.l.b16 %v281
    %v741 = vunpack.c.h.b16 %v281
    %v742 = vunpack.c.l.b16 %v282
    %v743 = vunpack.c.h.b16 %v282
    %v744 = vunpack.c.l.b16 %v283
    %v745 = vunpack.c.h.b16 %v283
    %v746 = vunpack.c.l.b16 %v284
    %v747 = vunpack.c.h.b16 %v284
    %v748 = vunpack.c.l.b16 %v285
    %v749 = vunpack.c.h.b16 %v285
    %v750 = vunpack.c.l.b16 %v286
    %v751 = vunpack.c.h.b16 %v286
    %v752 = vunpack.c.l.b16 %v287
    %v753 = vunpack.c.h.b16 %v287
    %v754 = vunpack.c.l.b16 %v288
    %v755 = vunpack.c.h.b16 %v288
    %v756 = vunpack.c.l.b16 %v289
    %v757 = vunpack.c.h.b16 %v289
    %v758 = vunpack.c.l.b16 %v290
    %v759 = vunpack.c.h.b16 %v290
    %v760 = vunpack.c.l.b16 %v291
    %v761 = vunpack.c.h.b16 %v291
    %v762 = vunpack.c.l.b16 %v292
    %v763 = vunpack.c.h.b16 %v292
    %v764 = vunpack.c.l.b16 %v293
    %v765 = vunpack.c.h.b16 %v293
    %v766 = vunpack.c.l.b16 %v294
    %v767 = vunpack.c.h.b16 %v294
    %v768 = vunpack.c.l.b16 %v295
    %v769 = vunpack.c.h.b16 %v295
    %v770 = vunpack.c.l.b16 %v296
    %v771 = vunpack.c.h.b16 %v296
    %v772 = vunpack.c.l.b16 %v297
    %v773 = vunpack.c.h.b16 %v297
    %v774 = vunpack.c.l.b16 %v298
    %v775 = vunpack.c.h.b16 %v298
    %v776 = vunpack.c.l.b16 %v299
    %v777 = vunpack.c.h.b16 %v299
    %v778 = vunpack.c.l.b16 %v300
    %v779 = vunpack.c.h.b16 %v300
    %v780 = vunpack.c.l.b16 %v301
    %v781 = vunpack.c.h.b16 %v301
    %v782 = vunpack.c.l.b16 %v302
    %v783 = vunpack.c.h.b16 %v302
    %v784 = vunpack.c.l.b16 %v303
    %v785 = vunpack.c.h.b16 %v303
    %v786 = vunpack.c.l.b16 %v304
    %v787 = vunpack.c.h.b16 %v304
    %v788 = vunpack.c.l.b16 %v305
    %v789 = vunpack.c.h.b16 %v305
    %v790 = vunpack.c.l.b16 %v306
    %v791 = vunpack.c.h.b16 %v306
    %v792 = vunpack.c.l.b16 %v307
    %v793 = vunpack.c.h.b16 %v307
    %v794 = vunpack.c.l.b16 %v308
    %v795 = vunpack.c.h.b16 %v308
    %v796 = vunpack.c.l.b16 %v309
    %v797 = vunpack.c.h.b16 %v309
    %v798 = vunpack.c.l.b16 %v310
    %v799 = vunpack.c.h.b16 %v310
    %v800 = vunpack.c.l.b16 %v311
    %v801 = vunpack.c.h.b16 %v311
    %v802 = vunpack.c.l.b16 %v312
    %v803 = vunpack.c.h.b16 %v312
    %v804 = vunpack.c.l.b16 %v313
    %v805 = vunpack.c.h.b16 %v313
    %v806 = vunpack.c.l.b16 %v314
    %v807 = vunpack.c.h.b16 %v314
    %v808 = vunpack.c.l.b16 %v315
    %v809 = vunpack.c.h.b16 %v315
    %v810 = vunpack.c.l.b16 %v316
    %v811 = vunpack.c.h.b16 %v316
    %v812 = vunpack.c.l.b16 %v317
    %v813 = vunpack.c.h.b16 %v317
    %v814 = vunpack.c.l.b16 %v318
    %v815 = vunpack.c.h.b16 %v318
    %v816 = vunpack.c.l.b16 %v319
    %v817 = vunpack.c.h.b16 %v319
    %v818 = vunpack.c.l.b16 %v320
    %v819 = vunpack.c.h.b16 %v320
    %v820 = vunpack.c.l.b16 %v321
    %v821 = vunpack.c.h.b16 %v321
    %v822 = vunpack.c.l.b16 %v322
    %v823 = vunpack.c.h.b16 %v322
    %v824 = vunpack.c.l.b16 %v323
    %v825 = vunpack.c.h.b16 %v323
    %v826 = vunpack.c.l.b16 %v324
    %v827 = vunpack.c.h.b16 %v324
    %v828 = vunpack.c.l.b16 %v325
    %v829 = vunpack.c.h.b16 %v325
    %v830 = vunpack.c.l.b16 %v326
    %v831 = vunpack.c.h.b16 %v326
    %v832 = vunpack.c.l.b16 %v327
    %v833 = vunpack.c.h.b16 %v327
    %v834 = vunpack.c.l.b16 %v328
    %v835 = vunpack.c.h.b16 %v328
    %v836 = vunpack.c.l.b16 %v329
    %v837 = vunpack.c.h.b16 %v329
    %v838 = vunpack.c.l.b16 %v330
    %v839 = vunpack.c.h.b16 %v330
    %v840 = vunpack.c.l.b16 %v331
    %v841 = vunpack.c.h.b16 %v331
    %v842 = vunpack.c.l.b16 %v332
    %v843 = vunpack.c.h.b16 %v332
    %v844 = vunpack.c.l.b16 %v333
    %v845 = vunpack.c.h.b16 %v333
    %v846 = vunpack.c.l.b16 %v334
    %v847 = vunpack.c.h.b16 %v334
    %v848 = vunpack.c.l.b16 %v335
    %v849 = vunpack.c.h.b16 %v335
    %v850 = vunpack.c.l.b16 %v336
    %v851 = vunpack.c.h.b16 %v336
    %v852 = vunpack.c.l.b16 %v337
    %v853 = vunpack.c.h.b16 %v337
    %v854 = vunpack.c.l.b16 %v338
    %v855 = vunpack.c.h.b16 %v338
    %v856 = vunpack.c.l.b16 %v339
    %v857 = vunpack.c.h.b16 %v339
    %v858 = vunpack.c.l.b16 %v340
    %v859 = vunpack.c.h.b16 %v340
    %v860 = vunpack.c.l.b16 %v341
    %v861 = vunpack.c.h.b16 %v341
    %v862 = vunpack.c.l.b16 %v342
    %v863 = vunpack.c.h.b16 %v342
    %v864 = vunpack.c.l.b16 %v343
    %v865 = vunpack.c.h.b16 %v343
    %v866 = vunpack.c.l.b16 %v344
    %v867 = vunpack.c.h.b16 %v344
    %v868 = vunpack.c.l.b16 %v345
    %v869 = vunpack.c.h.b16 %v345
    %v870 = vunpack.c.l.b16 %v346
    %v871 = vunpack.c.h.b16 %v346
    %v872 = vunpack.c.l.b16 %v347
    %v873 = vunpack.c.h.b16 %v347
    %v874 = vunpack.c.l.b16 %v348
    %v875 = vunpack.c.h.b16 %v348
    %v876 = vunpack.c.l.b16 %v349
    %v877 = vunpack.c.h.b16 %v349
    %v878 = vunpack.c.l.b16 %v350
    %v879 = vunpack.c.h.b16 %v350
    %v880 = vunpack.c.l.b16 %v351
    %v881 = vunpack.c.h.b16 %v351
    %v882 = vunpack.c.l.b16 %v352
    %v883 = vunpack.c.h.b16 %v352
    %v884 = vunpack.c.l.b16 %v353
    %v885 = vunpack.c.h.b16 %v353
    %v886 = vunpack.c.l.b16 %v354
    %v887 = vunpack.c.h.b16 %v354
    %v888 = vunpack.c.l.b16 %v355
    %v889 = vunpack.c.h.b16 %v355
    %v890 = vunpack.c.l.b16 %v356
    %v891 = vunpack.c.h.b16 %v356
    %v892 = vunpack.c.l.b16 %v357
    %v893 = vunpack.c.h.b16 %v357
    %v894 = vunpack.c.l.b16 %v358
    %v895 = vunpack.c.h.b16 %v358
    %v896 = vunpack.c.l.b16 %v359
    %v897 = vunpack.c.h.b16 %v359
    %v898 = vunpack.c.l.b16 %v360
    %v899 = vunpack.c.h.b16 %v360
    %v900 = vunpack.c.l.b16 %v361
    %v901 = vunpack.c.h.b16 %v361
    %v902 = vunpack.c.l.b16 %v362
    %v903 = vunpack.c.h.b16 %v362
    %v904 = vunpack.c.l.b16 %v363
    %v905 = vunpack.c.h.b16 %v363
    %v906 = vunpack.c.l.b16 %v364
    %v907 = vunpack.c.h.b16 %v364
    %v908 = vunpack.c.l.b16 %v365
    %v909 = vunpack.c.h.b16 %v365
    %v910 = vunpack.c.l.b16 %v366
    %v911 = vunpack.c.h.b16 %v366
    %v912 = vunpack.c.l.b16 %v367
    %v913 = vunpack.c.h.b16 %v367
    %v914 = vunpack.c.l.b16 %v368
    %v915 = vunpack.c.h.b16 %v368
    %v916 = vunpack.c.l.b16 %v369
    %v917 = vunpack.c.h.b16 %v369
    %v918 = vunpack.c.l.b16 %v370
    %v919 = vunpack.c.h.b16 %v370
    %v920 = vunpack.c.l.b16 %v371
    %v921 = vunpack.c.h.b16 %v371
    %v922 = vunpack.c.l.b16 %v372
    %v923 = vunpack.c.h.b16 %v372
    %v924 = vunpack.c.l.b16 %v373
    %v925 = vunpack.c.h.b16 %v373
    %v926 = vunpack.c.l.b16 %v374
    %v927 = vunpack.c.h.b16 %v374
    %v928 = vunpack.c.l.b16 %v375
    %v929 = vunpack.c.h.b16 %v375
    %v930 = vunpack.c.l.b16 %v376
    %v931 = vunpack.c.h.b16 %v376
    %v932 = vunpack.c.l.b16 %v377
    %v933 = vunpack.c.h.b16 %v377
    %v934 = vunpack.c.l.b16 %v378
    %v935 = vunpack.c.h.b16 %v378
    %v936 = vunpack.c.l.b16 %v379
    %v937 = vunpack.c.h.b16 %v379
    %v938 = vunpack.c.l.b16 %v380
    %v939 = vunpack.c.h.b16 %v380
    %v940 = vunpack.c.l.b16 %v381
    %v941 = vunpack.c.h.b16 %v381
    %v942 = vunpack.c.l.b16 %v382
    %v943 = vunpack.c.h.b16 %v382
    %v944 = vunpack.c.l.b16 %v383
    %v945 = vunpack.c.h.b16 %v383
    %v946 = vunpack.c.l.b16 %v384
    %v947 = vunpack.c.h.b16 %v384
    %v948 = vunpack.c.l.b16 %v385
    %v949 = vunpack.c.h.b16 %v385
    %v950 = vunpack.c.l.b16 %v386
    %v951 = vunpack.c.h.b16 %v386
    %v952 = vunpack.c.l.b16 %v387
    %v953 = vunpack.c.h.b16 %v387
    %v954 = vunpack.c.l.b16 %v388
    %v955 = vunpack.c.h.b16 %v388
    %v956 = vunpack.c.l.b16 %v389
    %v957 = vunpack.c.h.b16 %v389
    %v958 = vunpack.c.l.b16 %v390
    %v959 = vunpack.c.h.b16 %v390
    %v960 = vunpack.c.l.b16 %v391
    %v961 = vunpack.c.h.b16 %v391
    %v962 = vunpack.c.l.b16 %v392
    %v963 = vunpack.c.h.b16 %v392
    %v964 = vunpack.c.l.b16 %v393
    %v965 = vunpack.c.h.b16 %v393
    %v966 = vunpack.c.l.b16 %v394
    %v967 = vunpack.c.h.b16 %v394
    %v968 = vunpack.c.l.b16 %v395
    %v969 = vunpack.c.h.b16 %v395
    %v970 = vunpack.c.l.b16 %v396
    %v971 = vunpack.c.h.b16 %v396
    %v972 = vunpack.c.l.b16 %v397
    %v973 = vunpack.c.h.b16 %v397
    %v974 = vunpack.c.l.b16 %v398
    %v975 = vunpack.c.h.b16 %v398
    %v976 = vunpack.c.l.b16 %v399
    %v977 = vunpack.c.h.b16 %v399
    %v978 = vunpack.c.l.b16 %v400
    %v979 = vunpack.c.h.b16 %v400
    %v980 = vunpack.c.l.b16 %v401
    %v981 = vunpack.c.h.b16 %v401
    %v982 = vunpack.c.l.b16 %v402
    %v983 = vunpack.c.h.b16 %v402
    %v984 = vunpack.c.l.b16 %v403
    %v985 = vunpack.c.h.b16 %v403
    %v986 = vunpack.c.l.b16 %v404
    %v987 = vunpack.c.h.b16 %v404
    %v988 = vunpack.c.l.b16 %v405
    %v989 = vunpack.c.h.b16 %v405
    %v990 = vunpack.c.l.b16 %v406
    %v991 = vunpack.c.h.b16 %v406
    %v992 = vunpack.c.l.b16 %v407
    %v993 = vunpack.c.h.b16 %v407
    %v994 = vunpack.c.l.b16 %v408
    %v995 = vunpack.c.h.b16 %v408
    %v996 = vunpack.c.l.b16 %v409
    %v997 = vunpack.c.h.b16 %v409
    %v998 = vunpack.c.l.b16 %v410
    %v999 = vunpack.c.h.b16 %v410
    %v1000 = vunpack.c.l.b16 %v411
    %v1001 = vunpack.c.h.b16 %v411
    %v1002 = vunpack.c.l.b16 %v412
    %v1003 = vunpack.c.h.b16 %v412
    %v1004 = vunpack.c.l.b16 %v413
    %v1005 = vunpack.c.h.b16 %v413
    %v1006 = vunpack.c.l.b16 %v414
    %v1007 = vunpack.c.h.b16 %v414
    %v1008 = vunpack.c.l.b16 %v415
    %v1009 = vunpack.c.h.b16 %v415
    %v1010 = vunpack.c.l.b16 %v416
    %v1011 = vunpack.c.h.b16 %v416
    %v1012 = vunpack.c.l.b16 %v417
    %v1013 = vunpack.c.h.b16 %v417
    %v1014 = vunpack.c.l.b16 %v418
    %v1015 = vunpack.c.h.b16 %v418
    %v1016 = vunpack.c.l.b16 %v419
    %v1017 = vunpack.c.h.b16 %v419
    %v1018 = vunpack.c.l.b16 %v420
    %v1019 = vunpack.c.h.b16 %v420
    %v1020 = vunpack.c.l.b16 %v421
    %v1021 = vunpack.c.h.b16 %v421
    %v1022 = vpack.c.b16 %v642, %v638
    %v1023 = vpack.c.b16 %v643, %v639
    %v1024 = vpack.c.b16 %v644, %v640
    %v1025 = vpack.c.b16 %v645, %v641
    %v1026 = vpack.c.b16 %v650, %v646
    %v1027 = vpack.c.b16 %v651, %v647
    %v1028 = vpack.c.b16 %v652, %v648
    %v1029 = vpack.c.b16 %v653, %v649
    %v1030 = vpack.c.b16 %v658, %v654
    %v1031 = vpack.c.b16 %v659, %v655
    %v1032 = vpack.c.b16 %v660, %v656
    %v1033 = vpack.c.b16 %v661, %v657
    %v1034 = vpack.c.b16 %v666, %v662
    %v1035 = vpack.c.b16 %v667, %v663
    %v1036 = vpack.c.b16 %v668, %v664
    %v1037 = vpack.c.b16 %v669, %v665
    %v1038 = vpack.c.b16 %v674, %v670
    %v1039 = vpack.c.b16 %v675, %v671
    %v1040 = vpack.c.b16 %v676, %v672
    %v1041 = vpack.c.b16 %v677, %v673
    %v1042 = vpack.c.b16 %v682, %v678
    %v1043 = vpack.c.b16 %v683, %v679
    %v1044 = vpack.c.b16 %v684, %v680
    %v1045 = vpack.c.b16 %v685, %v681
    %v1046 = vpack.c.b16 %v690, %v686
    %v1047 = vpack.c.b16 %v691, %v687
    %v1048 = vpack.c.b16 %v692, %v688
    %v1049 = vpack.c.b16 %v693, %v689
    %v1050 = vpack.c.b16 %v698, %v694
    %v1051 = vpack.c.b16 %v699, %v695
    %v1052 = vpack.c.b16 %v700, %v696
    %v1053 = vpack.c.b16 %v701, %v697
    %v1054 = vpack.c.b16 %v706, %v702
    %v1055 = vpack.c.b16 %v707, %v703
    %v1056 = vpack.c.b16 %v708, %v704
    %v1057 = vpack.c.b16 %v709, %v705
    %v1058 = vpack.c.b16 %v714, %v710
    %v1059 = vpack.c.b16 %v715, %v711
    %v1060 = vpack.c.b16 %v716, %v712
    %v1061 = vpack.c.b16 %v717, %v713
    %v1062 = vpack.c.b16 %v722, %v718
    %v1063 = vpack.c.b16 %v723, %v719
    %v1064 = vpack.c.b16 %v724, %v720
    %v1065 = vpack.c.b16 %v725, %v721
    %v1066 = vpack.c.b16 %v730, %v726
    %v1067 = vpack.c.b16 %v731, %v727
    %v1068 = vpack.c.b16 %v732, %v728
    %v1069 = vpack.c.b16 %v733, %v729
    %v1070 = vpack.c.b16 %v738, %v734
    %v1071 = vpack.c.b16 %v739, %v735
    %v1072 = vpack.c.b16 %v740, %v736
    %v1073 = vpack.c.b16 %v741, %v737
    %v1074 = vpack.c.b16 %v746, %v742
    %v1075 = vpack.c.b16 %v747, %v743
    %v1076 = vpack.c.b16 %v748, %v744
    %v1077 = vpack.c.b16 %v749, %v745
    %v1078 = vpack.c.b16 %v754, %v750
    %v1079 = vpack.c.b16 %v755, %v751
    %v1080 = vpack.c.b16 %v756, %v752
    %v1081 = vpack.c.b16 %v757, %v753
    %v1082 = vpack.c.b16 %v762, %v758
    %v1083 = vpack.c.b16 %v763, %v759
    %v1084 = vpack.c.b16 %v764, %v760
    %v1085 = vpack.c.b16 %v765, %v761
    %v1086 = vpack.c.b16 %v770, %v766
    %v1087 = vpack.c.b16 %v771, %v767
    %v1088 = vpack.c.b16 %v772, %v768
    %v1089 = vpack.c.b16 %v773, %v769
    %v1090 = vpack.c.b16 %v778, %v774
    %v1091 = vpack.c.b16 %v779, %v775
    %v1092 = vpack.c.b16 %v780, %v776
    %v1093 = vpack.c.b16 %v781, %v777
    %v1094 = vpack.c.b16 %v786, %v782
    %v1095 = vpack.c.b16 %v787, %v783
    %v1096 = vpack.c.b16 %v788, %v784
    %v1097 = vpack.c.b16 %v789, %v785
    %v1098 = vpack.c.b16 %v794, %v790
    %v1099 = vpack.c.b16 %v795, %v791
    %v1100 = vpack.c.b16 %v796, %v792
    %v1101 = vpack.c.b16 %v797, %v793
    %v1102 = vpack.c.b16 %v802, %v798
    %v1103 = vpack.c.b16 %v803, %v799
    %v1104 = vpack.c.b16 %v804, %v800
    %v1105 = vpack.c.b16 %v805, %v801
    %v1106 = vpack.c.b16 %v810, %v806
    %v1107 = vpack.c.b16 %v811, %v807
    %v1108 = vpack.c.b16 %v812, %v808
    %v1109 = vpack.c.b16 %v813, %v809
    %v1110 = vpack.c.b16 %v818, %v814
    %v1111 = vpack.c.b16 %v819, %v815
    %v1112 = vpack.c.b16 %v820, %v816
    %v1113 = vpack.c.b16 %v821, %v817
    %v1114 = vpack.c.b16 %v826, %v822
    %v1115 = vpack.c.b16 %v827, %v823
    %v1116 = vpack.c.b16 %v828, %v824
    %v1117 = vpack.c.b16 %v829, %v825
    %v1118 = vpack.c.b16 %v834, %v830
    %v1119 = vpack.c.b16 %v835, %v831
    %v1120 = vpack.c.b16 %v836, %v832
    %v1121 = vpack.c.b16 %v837, %v833
    %v1122 = vpack.c.b16 %v842, %v838
    %v1123 = vpack.c.b16 %v843, %v839
    %v1124 = vpack.c.b16 %v844, %v840
    %v1125 = vpack.c.b16 %v845, %v841
    %v1126 = vpack.c.b16 %v850, %v846
    %v1127 = vpack.c.b16 %v851, %v847
    %v1128 = vpack.c.b16 %v852, %v848
    %v1129 = vpack.c.b16 %v853, %v849
    %v1130 = vpack.c.b16 %v858, %v854
    %v1131 = vpack.c.b16 %v859, %v855
    %v1132 = vpack.c.b16 %v860, %v856
    %v1133 = vpack.c.b16 %v861, %v857
    %v1134 = vpack.c.b16 %v866, %v862
    %v1135 = vpack.c.b16 %v867, %v863
    %v1136 = vpack.c.b16 %v868, %v864
    %v1137 = vpack.c.b16 %v869, %v865
    %v1138 = vpack.c.b16 %v874, %v870
    %v1139 = vpack.c.b16 %v875, %v871
    %v1140 = vpack.c.b16 %v876, %v872
    %v1141 = vpack.c.b16 %v877, %v873
    %v1142 = vpack.c.b16 %v882, %v878
    %v1143 = vpack.c.b16 %v883, %v879
    %v1144 = vpack.c.b16 %v884, %v880
    %v1145 = vpack.c.b16 %v885, %v881
    %v1146 = vpack.c.b16 %v890, %v886
    %v1147 = vpack.c.b16 %v891, %v887
    %v1148 = vpack.c.b16 %v892, %v888
    %v1149 = vpack.c.b16 %v893, %v889
    %v1150 = vpack.c.b16 %v898, %v894
    %v1151 = vpack.c.b16 %v899, %v895
    %v1152 = vpack.c.b16 %v900, %v896
    %v1153 = vpack.c.b16 %v901, %v897
    %v1154 = vpack.c.b16 %v906, %v902
    %v1155 = vpack.c.b16 %v907, %v903
    %v1156 = vpack.c.b16 %v908, %v904
    %v1157 = vpack.c.b16 %v909, %v905
    %v1158 = vpack.c.b16 %v914, %v910
    %v1159 = vpack.c.b16 %v915, %v911
    %v1160 = vpack.c.b16 %v916, %v912
    %v1161 = vpack.c.b16 %v917, %v913
    %v1162 = vpack.c.b16 %v922, %v918
    %v1163 = vpack.c.b16 %v923, %v919
    %v1164 = vpack.c.b16 %v924, %v920
    %v1165 = vpack.c.b16 %v925, %v921
    %v1166 = vpack.c.b16 %v930, %v926
    %v1167 = vpack.c.b16 %v931, %v927
    %v1168 = vpack.c.b16 %v932, %v928
    %v1169 = vpack.c.b16 %v933, %v929
    %v1170 = vpack.c.b16 %v938, %v934
    %v1171 = vpack.c.b16 %v939, %v935
    %v1172 = vpack.c.b16 %v940, %v936
    %v1173 = vpack.c.b16 %v941, %v937
    %v1174 = vpack.c.b16 %v946, %v942
    %v1175 = vpack.c.b16 %v947, %v943
    %v1176 = vpack.c.b16 %v948, %v944
    %v1177 = vpack.c.b16 %v949, %v945
    %v1178 = vpack.c.b16 %v954, %v950
    %v1179 = vpack.c.b16 %v955, %v951
    %v1180 = vpack.c.b16 %v956, %v952
    %v1181 = vpack.c.b16 %v957, %v953
    %v1182 = vpack.c.b16 %v962, %v958
    %v1183 = vpack.c.b16 %v963, %v959
    %v1184 = vpack.c.b16 %v964, %v960
    %v1185 = vpack.c.b16 %v965, %v961
    %v1186 = vpack.c.b16 %v970, %v966
    %v1187 = vpack.c.b16 %v971, %v967
    %v1188 = vpack.c.b16 %v972, %v968
    %v1189 = vpack.c.b16 %v973, %v969
    %v1190 = vpack.c.b16 %v978, %v974
    %v1191 = vpack.c.b16 %v979, %v975
    %v1192 = vpack.c.b16 %v980, %v976
    %v1193 = vpack.c.b16 %v981, %v977
    %v1194 = vpack.c.b16 %v986, %v982
    %v1195 = vpack.c.b16 %v987, %v983
    %v1196 = vpack.c.b16 %v988, %v984
    %v1197 = vpack.c.b16 %v989, %v985
    %v1198 = vpack.c.b16 %v994, %v990
    %v1199 = vpack.c.b16 %v995, %v991
    %v1200 = vpack.c.b16 %v996, %v992
    %v1201 = vpack.c.b16 %v997, %v993
    %v1202 = vpack.c.b16 %v1002, %v998
    %v1203 = vpack.c.b16 %v1003, %v999
    %v1204 = vpack.c.b16 %v1004, %v1000
    %v1205 = vpack.c.b16 %v1005, %v1001
    %v1206 = vpack.c.b16 %v1010, %v1006
    %v1207 = vpack.c.b16 %v1011, %v1007
    %v1208 = vpack.c.b16 %v1012, %v1008
    %v1209 = vpack.c.b16 %v1013, %v1009
    %v1210 = vpack.c.b16 %v1018, %v1014
    %v1211 = vpack.c.b16 %v1019, %v1015
    %v1212 = vpack.c.b16 %v1020, %v1016
    %v1213 = vpack.c.b16 %v1021, %v1017
    %1406 = vmatpush.bf16.msra.mxu0 %v1050
    %1407 = vmatpush.bf16.msra.mxu0 %v1046
    %1408 = vmatpush.bf16.msra.mxu0 %v1042
    %1409 = vmatpush.bf16.msra.mxu0 %v1038
    %1410 = vmatpush.bf16.msra.mxu0 %v1034
    %1411 = vmatpush.bf16.msra.mxu0 %v1030
    %1412 = vmatpush.bf16.msra.mxu0 %v1026
    %1413 = vmatpush.bf16.msra.mxu0 %v1022
    %1414 = vmatmul.bf16.gmra.mxu0 %v434
    %v1415 = vpop.f32.mrf.mxu0
    %v1416 = vadd.f32 %v424, %v1415
    %v1417 = vpop.f32.mrf.mxu0
    %1418 = vdwg.mxu0
    %1419 = vmatpush.bf16.msra.mxu0 %v1082
    %1420 = vmatpush.bf16.msra.mxu0 %v1078
    %1421 = vmatpush.bf16.msra.mxu0 %v1074
    %1422 = vmatpush.bf16.msra.mxu0 %v1070
    %1423 = vmatpush.bf16.msra.mxu0 %v1066
    %1424 = vmatpush.bf16.msra.mxu0 %v1062
    %1425 = vmatpush.bf16.msra.mxu0 %v1058
    %1426 = vmatpush.bf16.msra.mxu0 %v1054
    %1427 = vmatmul.bf16.gmra.mxu0 %v435
    %v1428 = vpop.f32.mrf.mxu0
    %v1429 = vadd.f32 %v1416, %v1428
    %v1430 = vpop.f32.mrf.mxu0
    %1431 = vdwg.mxu0
    %1432 = vmatpush.bf16.msra.mxu0 %v1114
    %1433 = vmatpush.bf16.msra.mxu0 %v1110
    %1434 = vmatpush.bf16.msra.mxu0 %v1106
    %1435 = vmatpush.bf16.msra.mxu0 %v1102
    %1436 = vmatpush.bf16.msra.mxu0 %v1098
    %1437 = vmatpush.bf16.msra.mxu0 %v1094
    %1438 = vmatpush.bf16.msra.mxu0 %v1090
    %1439 = vmatpush.bf16.msra.mxu0 %v1086
    %1440 = vmatmul.bf16.gmra.mxu0 %v436
    %v1441 = vpop.f32.mrf.mxu0
    %v1442 = vadd.f32 %v1429, %v1441
    %v1443 = vpop.f32.mrf.mxu0
    %1444 = vdwg.mxu0
    %1445 = vmatpush.bf16.msra.mxu0 %v1146
    %1446 = vmatpush.bf16.msra.mxu0 %v1142
    %1447 = vmatpush.bf16.msra.mxu0 %v1138
    %1448 = vmatpush.bf16.msra.mxu0 %v1134
    %1449 = vmatpush.bf16.msra.mxu0 %v1130
    %1450 = vmatpush.bf16.msra.mxu0 %v1126
    %1451 = vmatpush.bf16.msra.mxu0 %v1122
    %1452 = vmatpush.bf16.msra.mxu0 %v1118
    %1453 = vmatmul.bf16.gmra.mxu0 %v437
    %v1454 = vpop.f32.mrf.mxu0
    %v1455 = vadd.f32 %v1442, %v1454
    %v1456 = vpop.f32.mrf.mxu0
    %1457 = vdwg.mxu0
    %1458 = vmatpush.bf16.msra.mxu0 %v1178
    %1459 = vmatpush.bf16.msra.mxu0 %v1174
    %1460 = vmatpush.bf16.msra.mxu0 %v1170
    %1461 = vmatpush.bf16.msra.mxu0 %v1166
    %1462 = vmatpush.bf16.msra.mxu0 %v1162
    %1463 = vmatpush.bf16.msra.mxu0 %v1158
    %1464 = vmatpush.bf16.msra.mxu0 %v1154
    %1465 = vmatpush.bf16.msra.mxu0 %v1150
    %1466 = vmatmul.bf16.gmra.mxu0 %v438
    %v1467 = vpop.f32.mrf.mxu0
    %v1468 = vadd.f32 %v1455, %v1467
    %v1469 = vpop.f32.mrf.mxu0
    %1470 = vdwg.mxu0
    %1471 = vmatpush.bf16.msra.mxu0 %v1210
    %1472 = vmatpush.bf16.msra.mxu0 %v1206
    %1473 = vmatpush.bf16.msra.mxu0 %v1202
    %1474 = vmatpush.bf16.msra.mxu0 %v1198
    %1475 = vmatpush.bf16.msra.mxu0 %v1194
    %1476 = vmatpush.bf16.msra.mxu0 %v1190
    %1477 = vmatpush.bf16.msra.mxu0 %v1186
    %1478 = vmatpush.bf16.msra.mxu0 %v1182
    %1479 = vmatmul.bf16.gmra.mxu0 %v439
    %v1480 = vpop.f32.mrf.mxu0
    %v1481 = vadd.f32 %v1468, %v1480
    %v1482 = vpop.f32.mrf.mxu0
    %1483 = vdwg.mxu0
    %1484 = vmatpush.bf16.msra.mxu0 %v1051
    %1485 = vmatpush.bf16.msra.mxu0 %v1047
    %1486 = vmatpush.bf16.msra.mxu0 %v1043
    %1487 = vmatpush.bf16.msra.mxu0 %v1039
    %1488 = vmatpush.bf16.msra.mxu0 %v1035
    %1489 = vmatpush.bf16.msra.mxu0 %v1031
    %1490 = vmatpush.bf16.msra.mxu0 %v1027
    %1491 = vmatpush.bf16.msra.mxu0 %v1023
    %1492 = vmatmul.bf16.gmra.mxu0 %v434
    %v1493 = vpop.f32.mrf.mxu0
    %v1494 = vadd.f32 %v425, %v1493
    %v1495 = vpop.f32.mrf.mxu0
    %1496 = vdwg.mxu0
    %1497 = vmatpush.bf16.msra.mxu0 %v1083
    %1498 = vmatpush.bf16.msra.mxu0 %v1079
    %1499 = vmatpush.bf16.msra.mxu0 %v1075
    %1500 = vmatpush.bf16.msra.mxu0 %v1071
    %1501 = vmatpush.bf16.msra.mxu0 %v1067
    %1502 = vmatpush.bf16.msra.mxu0 %v1063
    %1503 = vmatpush.bf16.msra.mxu0 %v1059
    %1504 = vmatpush.bf16.msra.mxu0 %v1055
    %1505 = vmatmul.bf16.gmra.mxu0 %v435
    %v1506 = vpop.f32.mrf.mxu0
    %v1507 = vadd.f32 %v1494, %v1506
    %v1508 = vpop.f32.mrf.mxu0
    %1509 = vdwg.mxu0
    %1510 = vmatpush.bf16.msra.mxu0 %v1115
    %1511 = vmatpush.bf16.msra.mxu0 %v1111
    %1512 = vmatpush.bf16.msra.mxu0 %v1107
    %1513 = vmatpush.bf16.msra.mxu0 %v1103
    %1514 = vmatpush.bf16.msra.mxu0 %v1099
    %1515 = vmatpush.bf16.msra.mxu0 %v1095
    %1516 = vmatpush.bf16.msra.mxu0 %v1091
    %1517 = vmatpush.bf16.msra.mxu0 %v1087
    %1518 = vmatmul.bf16.gmra.mxu0 %v436
    %v1519 = vpop.f32.mrf.mxu0
    %v1520 = vadd.f32 %v1507, %v1519
    %v1521 = vpop.f32.mrf.mxu0
    %1522 = vdwg.mxu0
    %1523 = vmatpush.bf16.msra.mxu0 %v1147
    %1524 = vmatpush.bf16.msra.mxu0 %v1143
    %1525 = vmatpush.bf16.msra.mxu0 %v1139
    %1526 = vmatpush.bf16.msra.mxu0 %v1135
    %1527 = vmatpush.bf16.msra.mxu0 %v1131
    %1528 = vmatpush.bf16.msra.mxu0 %v1127
    %1529 = vmatpush.bf16.msra.mxu0 %v1123
    %1530 = vmatpush.bf16.msra.mxu0 %v1119
    %1531 = vmatmul.bf16.gmra.mxu0 %v437
    %v1532 = vpop.f32.mrf.mxu0
    %v1533 = vadd.f32 %v1520, %v1532
    %v1534 = vpop.f32.mrf.mxu0
    %1535 = vdwg.mxu0
    %1536 = vmatpush.bf16.msra.mxu0 %v1179
    %1537 = vmatpush.bf16.msra.mxu0 %v1175
    %1538 = vmatpush.bf16.msra.mxu0 %v1171
    %1539 = vmatpush.bf16.msra.mxu0 %v1167
    %1540 = vmatpush.bf16.msra.mxu0 %v1163
    %1541 = vmatpush.bf16.msra.mxu0 %v1159
    %1542 = vmatpush.bf16.msra.mxu0 %v1155
    %1543 = vmatpush.bf16.msra.mxu0 %v1151
    %1544 = vmatmul.bf16.gmra.mxu0 %v438
    %v1545 = vpop.f32.mrf.mxu0
    %v1546 = vadd.f32 %v1533, %v1545
    %v1547 = vpop.f32.mrf.mxu0
    %1548 = vdwg.mxu0
    %1549 = vmatpush.bf16.msra.mxu0 %v1211
    %1550 = vmatpush.bf16.msra.mxu0 %v1207
    %1551 = vmatpush.bf16.msra.mxu0 %v1203
    %1552 = vmatpush.bf16.msra.mxu0 %v1199
    %1553 = vmatpush.bf16.msra.mxu0 %v1195
    %1554 = vmatpush.bf16.msra.mxu0 %v1191
    %1555 = vmatpush.bf16.msra.mxu0 %v1187
    %1556 = vmatpush.bf16.msra.mxu0 %v1183
    %1557 = vmatmul.bf16.gmra.mxu0 %v439
    %v1558 = vpop.f32.mrf.mxu0
    %v1559 = vadd.f32 %v1546, %v1558
    %v1560 = vpop.f32.mrf.mxu0
    %1561 = vdwg.mxu0
    %1562 = vmatpush.bf16.msra.mxu0 %v1052
    %1563 = vmatpush.bf16.msra.mxu0 %v1048
    %1564 = vmatpush.bf16.msra.mxu0 %v1044
    %1565 = vmatpush.bf16.msra.mxu0 %v1040
    %1566 = vmatpush.bf16.msra.mxu0 %v1036
    %1567 = vmatpush.bf16.msra.mxu0 %v1032
    %1568 = vmatpush.bf16.msra.mxu0 %v1028
    %1569 = vmatpush.bf16.msra.mxu0 %v1024
    %1570 = vmatmul.bf16.gmra.mxu0 %v434
    %v1571 = vpop.f32.mrf.mxu0
    %v1572 = vadd.f32 %v426, %v1571
    %v1573 = vpop.f32.mrf.mxu0
    %1574 = vdwg.mxu0
    %1575 = vmatpush.bf16.msra.mxu0 %v1084
    %1576 = vmatpush.bf16.msra.mxu0 %v1080
    %1577 = vmatpush.bf16.msra.mxu0 %v1076
    %1578 = vmatpush.bf16.msra.mxu0 %v1072
    %1579 = vmatpush.bf16.msra.mxu0 %v1068
    %1580 = vmatpush.bf16.msra.mxu0 %v1064
    %1581 = vmatpush.bf16.msra.mxu0 %v1060
    %1582 = vmatpush.bf16.msra.mxu0 %v1056
    %1583 = vmatmul.bf16.gmra.mxu0 %v435
    %v1584 = vpop.f32.mrf.mxu0
    %v1585 = vadd.f32 %v1572, %v1584
    %v1586 = vpop.f32.mrf.mxu0
    %1587 = vdwg.mxu0
    %1588 = vmatpush.bf16.msra.mxu0 %v1116
    %1589 = vmatpush.bf16.msra.mxu0 %v1112
    %1590 = vmatpush.bf16.msra.mxu0 %v1108
    %1591 = vmatpush.bf16.msra.mxu0 %v1104
    %1592 = vmatpush.bf16.msra.mxu0 %v1100
    %1593 = vmatpush.bf16.msra.mxu0 %v1096
    %1594 = vmatpush.bf16.msra.mxu0 %v1092
    %1595 = vmatpush.bf16.msra.mxu0 %v1088
    %1596 = vmatmul.bf16.gmra.mxu0 %v436
    %v1597 = vpop.f32.mrf.mxu0
    %v1598 = vadd.f32 %v1585, %v1597
    %v1599 = vpop.f32.mrf.mxu0
    %1600 = vdwg.mxu0
    %1601 = vmatpush.bf16.msra.mxu0 %v1148
    %1602 = vmatpush.bf16.msra.mxu0 %v1144
    %1603 = vmatpush.bf16.msra.mxu0 %v1140
    %1604 = vmatpush.bf16.msra.mxu0 %v1136
    %1605 = vmatpush.bf16.msra.mxu0 %v1132
    %1606 = vmatpush.bf16.msra.mxu0 %v1128
    %1607 = vmatpush.bf16.msra.mxu0 %v1124
    %1608 = vmatpush.bf16.msra.mxu0 %v1120
    %1609 = vmatmul.bf16.gmra.mxu0 %v437
    %v1610 = vpop.f32.mrf.mxu0
    %v1611 = vadd.f32 %v1598, %v1610
    %v1612 = vpop.f32.mrf.mxu0
    %1613 = vdwg.mxu0
    %1614 = vmatpush.bf16.msra.mxu0 %v1180
    %1615 = vmatpush.bf16.msra.mxu0 %v1176
    %1616 = vmatpush.bf16.msra.mxu0 %v1172
    %1617 = vmatpush.bf16.msra.mxu0 %v1168
    %1618 = vmatpush.bf16.msra.mxu0 %v1164
    %1619 = vmatpush.bf16.msra.mxu0 %v1160
    %1620 = vmatpush.bf16.msra.mxu0 %v1156
    %1621 = vmatpush.bf16.msra.mxu0 %v1152
    %1622 = vmatmul.bf16.gmra.mxu0 %v438
    %v1623 = vpop.f32.mrf.mxu0
    %v1624 = vadd.f32 %v1611, %v1623
    %v1625 = vpop.f32.mrf.mxu0
    %1626 = vdwg.mxu0
    %1627 = vmatpush.bf16.msra.mxu0 %v1212
    %1628 = vmatpush.bf16.msra.mxu0 %v1208
    %1629 = vmatpush.bf16.msra.mxu0 %v1204
    %1630 = vmatpush.bf16.msra.mxu0 %v1200
    %1631 = vmatpush.bf16.msra.mxu0 %v1196
    %1632 = vmatpush.bf16.msra.mxu0 %v1192
    %1633 = vmatpush.bf16.msra.mxu0 %v1188
    %1634 = vmatpush.bf16.msra.mxu0 %v1184
    %1635 = vmatmul.bf16.gmra.mxu0 %v439
    %v1636 = vpop.f32.mrf.mxu0
    %v1637 = vadd.f32 %v1624, %v1636
    %v1638 = vpop.f32.mrf.mxu0
    %1639 = vdwg.mxu0
    %1640 = vmatpush.bf16.msra.mxu0 %v1053
    %1641 = vmatpush.bf16.msra.mxu0 %v1049
    %1642 = vmatpush.bf16.msra.mxu0 %v1045
    %1643 = vmatpush.bf16.msra.mxu0 %v1041
    %1644 = vmatpush.bf16.msra.mxu0 %v1037
    %1645 = vmatpush.bf16.msra.mxu0 %v1033
    %1646 = vmatpush.bf16.msra.mxu0 %v1029
    %1647 = vmatpush.bf16.msra.mxu0 %v1025
    %1648 = vmatmul.bf16.gmra.mxu0 %v434
    %v1649 = vpop.f32.mrf.mxu0
    %v1650 = vadd.f32 %v427, %v1649
    %v1651 = vpop.f32.mrf.mxu0
    %1652 = vdwg.mxu0
    %1653 = vmatpush.bf16.msra.mxu0 %v1085
    %1654 = vmatpush.bf16.msra.mxu0 %v1081
    %1655 = vmatpush.bf16.msra.mxu0 %v1077
    %1656 = vmatpush.bf16.msra.mxu0 %v1073
    %1657 = vmatpush.bf16.msra.mxu0 %v1069
    %1658 = vmatpush.bf16.msra.mxu0 %v1065
    %1659 = vmatpush.bf16.msra.mxu0 %v1061
    %1660 = vmatpush.bf16.msra.mxu0 %v1057
    %1661 = vmatmul.bf16.gmra.mxu0 %v435
    %v1662 = vpop.f32.mrf.mxu0
    %v1663 = vadd.f32 %v1650, %v1662
    %v1664 = vpop.f32.mrf.mxu0
    %1665 = vdwg.mxu0
    %1666 = vmatpush.bf16.msra.mxu0 %v1117
    %1667 = vmatpush.bf16.msra.mxu0 %v1113
    %1668 = vmatpush.bf16.msra.mxu0 %v1109
    %1669 = vmatpush.bf16.msra.mxu0 %v1105
    %1670 = vmatpush.bf16.msra.mxu0 %v1101
    %1671 = vmatpush.bf16.msra.mxu0 %v1097
    %1672 = vmatpush.bf16.msra.mxu0 %v1093
    %1673 = vmatpush.bf16.msra.mxu0 %v1089
    %1674 = vmatmul.bf16.gmra.mxu0 %v436
    %v1675 = vpop.f32.mrf.mxu0
    %v1676 = vadd.f32 %v1663, %v1675
    %v1677 = vpop.f32.mrf.mxu0
    %1678 = vdwg.mxu0
    %1679 = vmatpush.bf16.msra.mxu0 %v1149
    %1680 = vmatpush.bf16.msra.mxu0 %v1145
    %1681 = vmatpush.bf16.msra.mxu0 %v1141
    %1682 = vmatpush.bf16.msra.mxu0 %v1137
    %1683 = vmatpush.bf16.msra.mxu0 %v1133
    %1684 = vmatpush.bf16.msra.mxu0 %v1129
    %1685 = vmatpush.bf16.msra.mxu0 %v1125
    %1686 = vmatpush.bf16.msra.mxu0 %v1121
    %1687 = vmatmul.bf16.gmra.mxu0 %v437
    %v1688 = vpop.f32.mrf.mxu0
    %v1689 = vadd.f32 %v1676, %v1688
    %v1690 = vpop.f32.mrf.mxu0
    %1691 = vdwg.mxu0
    %1692 = vmatpush.bf16.msra.mxu0 %v1181
    %1693 = vmatpush.bf16.msra.mxu0 %v1177
    %1694 = vmatpush.bf16.msra.mxu0 %v1173
    %1695 = vmatpush.bf16.msra.mxu0 %v1169
    %1696 = vmatpush.bf16.msra.mxu0 %v1165
    %1697 = vmatpush.bf16.msra.mxu0 %v1161
    %1698 = vmatpush.bf16.msra.mxu0 %v1157
    %1699 = vmatpush.bf16.msra.mxu0 %v1153
    %1700 = vmatmul.bf16.gmra.mxu0 %v438
    %v1701 = vpop.f32.mrf.mxu0
    %v1702 = vadd.f32 %v1689, %v1701
    %v1703 = vpop.f32.mrf.mxu0
    %1704 = vdwg.mxu0
    %1705 = vmatpush.bf16.msra.mxu0 %v1213
    %1706 = vmatpush.bf16.msra.mxu0 %v1209
    %1707 = vmatpush.bf16.msra.mxu0 %v1205
    %1708 = vmatpush.bf16.msra.mxu0 %v1201
    %1709 = vmatpush.bf16.msra.mxu0 %v1197
    %1710 = vmatpush.bf16.msra.mxu0 %v1193
    %1711 = vmatpush.bf16.msra.mxu0 %v1189
    %1712 = vmatpush.bf16.msra.mxu0 %v1185
    %1713 = vmatmul.bf16.gmra.mxu0 %v439
    %v1714 = vpop.f32.mrf.mxu0
    %v1715 = vadd.f32 %v1702, %v1714
    %v1716 = vpop.f32.mrf.mxu0
    %1717 = vdwg.mxu0
    %v1718 = vmax.f32 %v1481, 0.0
    %v1719 = vmax.f32 %v1559, 0.0
    %v1720 = vmax.f32 %v1637, 0.0
    %v1721 = vmax.f32 %v1715, 0.0
    %v1722 = vpack.c.bf16 %v1718, %v1718
    %v1723 = vpack.c.bf16 %v1719, %v1719
    %v1724 = vpack.c.bf16 %v1720, %v1720
    %v1725 = vpack.c.bf16 %v1721, %v1721
    %v1726 = vld [vmem:[#allocation10] sm:$0xff]
    %v1727 = vld [vmem:[#allocation10 + $0x8] sm:$0xff]
    %v1728 = vld [vmem:[#allocation10 + $0x10] sm:$0xff]
    %v1729 = vld [vmem:[#allocation10 + $0x18] sm:$0xff]
    %v1730 = vld [vmem:[#allocation10 + $0x20] sm:$0xff]
    %v1731 = vld [vmem:[#allocation10 + $0x28] sm:$0xff]
    %v1732 = vld [vmem:[#allocation10 + $0x30] sm:$0xff]
    %v1733 = vld [vmem:[#allocation10 + $0x38] sm:$0xff]
    %v1734 = vld [vmem:[#allocation10 + $0x40] sm:$0xff]
    %v1735 = vld [vmem:[#allocation10 + $0x48] sm:$0xff]
    %v1736 = vld [vmem:[#allocation10 + $0x50] sm:$0xff]
    %v1737 = vld [vmem:[#allocation10 + $0x58] sm:$0xff]
    %v1738 = vld [vmem:[#allocation10 + $0x60] sm:$0xff]
    %v1739 = vld [vmem:[#allocation10 + $0x68] sm:$0xff]
    %v1740 = vld [vmem:[#allocation10 + $0x70] sm:$0xff]
    %v1741 = vld [vmem:[#allocation10 + $0x78] sm:$0xff]
    %v1742 = vld [vmem:[#allocation10 + $0x80] sm:$0xff]
    %v1743 = vld [vmem:[#allocation10 + $0x88] sm:$0xff]
    %v1744 = vld [vmem:[#allocation10 + $0x90] sm:$0xff]
    %v1745 = vld [vmem:[#allocation10 + $0x98] sm:$0xff]
    %v1746 = vld [vmem:[#allocation10 + $0xa0] sm:$0xff]
    %v1747 = vld [vmem:[#allocation10 + $0xa8] sm:$0xff]
    %v1748 = vld [vmem:[#allocation10 + $0xb0] sm:$0xff]
    %v1749 = vld [vmem:[#allocation10 + $0xb8] sm:$0xff]
    %v1750 = vld [vmem:[#allocation10 + $0xc0] sm:$0xff]
    %v1751 = vld [vmem:[#allocation10 + $0xc8] sm:$0xff]
    %v1752 = vld [vmem:[#allocation10 + $0xd0] sm:$0xff]
    %v1753 = vld [vmem:[#allocation10 + $0xd8] sm:$0xff]
    %v1754 = vld [vmem:[#allocation10 + $0xe0] sm:$0xff]
    %v1755 = vld [vmem:[#allocation10 + $0xe8] sm:$0xff]
    %v1756 = vld [vmem:[#allocation10 + $0xf0] sm:$0xff]
    %v1757 = vld [vmem:[#allocation10 + $0xf8] sm:$0xff]
    %v1758 = vld [vmem:[#allocation10 + $0x100] sm:$0xff]
    %v1759 = vld [vmem:[#allocation10 + $0x108] sm:$0xff]
    %v1760 = vld [vmem:[#allocation10 + $0x110] sm:$0xff]
    %v1761 = vld [vmem:[#allocation10 + $0x118] sm:$0xff]
    %v1762 = vld [vmem:[#allocation10 + $0x120] sm:$0xff]
    %v1763 = vld [vmem:[#allocation10 + $0x128] sm:$0xff]
    %v1764 = vld [vmem:[#allocation10 + $0x130] sm:$0xff]
    %v1765 = vld [vmem:[#allocation10 + $0x138] sm:$0xff]
    %v1766 = vld [vmem:[#allocation10 + $0x140] sm:$0xff]
    %v1767 = vld [vmem:[#allocation10 + $0x148] sm:$0xff]
    %v1768 = vld [vmem:[#allocation10 + $0x150] sm:$0xff]
    %v1769 = vld [vmem:[#allocation10 + $0x158] sm:$0xff]
    %v1770 = vld [vmem:[#allocation10 + $0x160] sm:$0xff]
    %v1771 = vld [vmem:[#allocation10 + $0x168] sm:$0xff]
    %v1772 = vld [vmem:[#allocation10 + $0x170] sm:$0xff]
    %v1773 = vld [vmem:[#allocation10 + $0x178] sm:$0xff]
    %v1774 = vld [vmem:[#allocation10 + $0x180] sm:$0xff]
    %v1775 = vld [vmem:[#allocation10 + $0x188] sm:$0xff]
    %v1776 = vld [vmem:[#allocation10 + $0x190] sm:$0xff]
    %v1777 = vld [vmem:[#allocation10 + $0x198] sm:$0xff]
    %v1778 = vld [vmem:[#allocation10 + $0x1a0] sm:$0xff]
    %v1779 = vld [vmem:[#allocation10 + $0x1a8] sm:$0xff]
    %v1780 = vld [vmem:[#allocation10 + $0x1b0] sm:$0xff]
    %v1781 = vld [vmem:[#allocation10 + $0x1b8] sm:$0xff]
    %v1782 = vld [vmem:[#allocation10 + $0x1c0] sm:$0xff]
    %v1783 = vld [vmem:[#allocation10 + $0x1c8] sm:$0xff]
    %v1784 = vld [vmem:[#allocation10 + $0x1d0] sm:$0xff]
    %v1785 = vld [vmem:[#allocation10 + $0x1d8] sm:$0xff]
    %v1786 = vld [vmem:[#allocation10 + $0x1e0] sm:$0xff]
    %v1787 = vld [vmem:[#allocation10 + $0x1e8] sm:$0xff]
    %v1788 = vld [vmem:[#allocation10 + $0x1f0] sm:$0xff]
    %v1789 = vld [vmem:[#allocation10 + $0x1f8] sm:$0xff]
    %v1790 = vld [vmem:[#allocation10 + $0x200] sm:$0xff]
    %v1791 = vld [vmem:[#allocation10 + $0x208] sm:$0xff]
    %v1792 = vld [vmem:[#allocation10 + $0x210] sm:$0xff]
    %v1793 = vld [vmem:[#allocation10 + $0x218] sm:$0xff]
    %v1794 = vld [vmem:[#allocation10 + $0x220] sm:$0xff]
    %v1795 = vld [vmem:[#allocation10 + $0x228] sm:$0xff]
    %v1796 = vld [vmem:[#allocation10 + $0x230] sm:$0xff]
    %v1797 = vld [vmem:[#allocation10 + $0x238] sm:$0xff]
    %v1798 = vld [vmem:[#allocation10 + $0x240] sm:$0xff]
    %v1799 = vld [vmem:[#allocation10 + $0x248] sm:$0xff]
    %v1800 = vld [vmem:[#allocation10 + $0x250] sm:$0xff]
    %v1801 = vld [vmem:[#allocation10 + $0x258] sm:$0xff]
    %v1802 = vld [vmem:[#allocation10 + $0x260] sm:$0xff]
    %v1803 = vld [vmem:[#allocation10 + $0x268] sm:$0xff]
    %v1804 = vld [vmem:[#allocation10 + $0x270] sm:$0xff]
    %v1805 = vld [vmem:[#allocation10 + $0x278] sm:$0xff]
    %v1806 = vld [vmem:[#allocation10 + $0x280] sm:$0xff]
    %v1807 = vld [vmem:[#allocation10 + $0x288] sm:$0xff]
    %v1808 = vld [vmem:[#allocation10 + $0x290] sm:$0xff]
    %v1809 = vld [vmem:[#allocation10 + $0x298] sm:$0xff]
    %v1810 = vld [vmem:[#allocation10 + $0x2a0] sm:$0xff]
    %v1811 = vld [vmem:[#allocation10 + $0x2a8] sm:$0xff]
    %v1812 = vld [vmem:[#allocation10 + $0x2b0] sm:$0xff]
    %v1813 = vld [vmem:[#allocation10 + $0x2b8] sm:$0xff]
    %v1814 = vld [vmem:[#allocation10 + $0x2c0] sm:$0xff]
    %v1815 = vld [vmem:[#allocation10 + $0x2c8] sm:$0xff]
    %v1816 = vld [vmem:[#allocation10 + $0x2d0] sm:$0xff]
    %v1817 = vld [vmem:[#allocation10 + $0x2d8] sm:$0xff]
    %v1818 = vld [vmem:[#allocation10 + $0x2e0] sm:$0xff]
    %v1819 = vld [vmem:[#allocation10 + $0x2e8] sm:$0xff]
    %v1820 = vld [vmem:[#allocation10 + $0x2f0] sm:$0xff]
    %v1821 = vld [vmem:[#allocation10 + $0x2f8] sm:$0xff]
    %v1822 = vld [vmem:[#allocation10 + $0x300] sm:$0xff]
    %v1823 = vld [vmem:[#allocation10 + $0x308] sm:$0xff]
    %v1824 = vld [vmem:[#allocation10 + $0x310] sm:$0xff]
    %v1825 = vld [vmem:[#allocation10 + $0x318] sm:$0xff]
    %v1826 = vld [vmem:[#allocation10 + $0x320] sm:$0xff]
    %v1827 = vld [vmem:[#allocation10 + $0x328] sm:$0xff]
    %v1828 = vld [vmem:[#allocation10 + $0x330] sm:$0xff]
    %v1829 = vld [vmem:[#allocation10 + $0x338] sm:$0xff]
    %v1830 = vld [vmem:[#allocation10 + $0x340] sm:$0xff]
    %v1831 = vld [vmem:[#allocation10 + $0x348] sm:$0xff]
    %v1832 = vld [vmem:[#allocation10 + $0x350] sm:$0xff]
    %v1833 = vld [vmem:[#allocation10 + $0x358] sm:$0xff]
    %v1834 = vld [vmem:[#allocation10 + $0x360] sm:$0xff]
    %v1835 = vld [vmem:[#allocation10 + $0x368] sm:$0xff]
    %v1836 = vld [vmem:[#allocation10 + $0x370] sm:$0xff]
    %v1837 = vld [vmem:[#allocation10 + $0x378] sm:$0xff]
    %v1838 = vld [vmem:[#allocation10 + $0x380] sm:$0xff]
    %v1839 = vld [vmem:[#allocation10 + $0x388] sm:$0xff]
    %v1840 = vld [vmem:[#allocation10 + $0x390] sm:$0xff]
    %v1841 = vld [vmem:[#allocation10 + $0x398] sm:$0xff]
    %v1842 = vld [vmem:[#allocation10 + $0x3a0] sm:$0xff]
    %v1843 = vld [vmem:[#allocation10 + $0x3a8] sm:$0xff]
    %v1844 = vld [vmem:[#allocation10 + $0x3b0] sm:$0xff]
    %v1845 = vld [vmem:[#allocation10 + $0x3b8] sm:$0xff]
    %v1846 = vld [vmem:[#allocation10 + $0x3c0] sm:$0xff]
    %v1847 = vld [vmem:[#allocation10 + $0x3c8] sm:$0xff]
    %v1848 = vld [vmem:[#allocation10 + $0x3d0] sm:$0xff]
    %v1849 = vld [vmem:[#allocation10 + $0x3d8] sm:$0xff]
    %v1850 = vld [vmem:[#allocation10 + $0x3e0] sm:$0xff]
    %v1851 = vld [vmem:[#allocation10 + $0x3e8] sm:$0xff]
    %v1852 = vld [vmem:[#allocation10 + $0x3f0] sm:$0xff]
    %v1853 = vld [vmem:[#allocation10 + $0x3f8] sm:$0xff]
    %v1854 = vld [vmem:[%s5] sm:$0xf]
    %v1856 = vperm.slane %v1854, 0
    %v1857 = vperm.slane %v1854, 1
    %v1858 = vperm.slane %v1854, 2
    %v1859 = vperm.slane %v1854, 3
    %v1992 = vunpack.c.l.b16 %v1726
    %v1993 = vunpack.c.h.b16 %v1726
    %v1994 = vunpack.c.l.b16 %v1727
    %v1995 = vunpack.c.h.b16 %v1727
    %v1996 = vunpack.c.l.b16 %v1728
    %v1997 = vunpack.c.h.b16 %v1728
    %v1998 = vunpack.c.l.b16 %v1729
    %v1999 = vunpack.c.h.b16 %v1729
    %v2000 = vunpack.c.l.b16 %v1730
    %v2001 = vunpack.c.h.b16 %v1730
    %v2002 = vunpack.c.l.b16 %v1731
    %v2003 = vunpack.c.h.b16 %v1731
    %v2004 = vunpack.c.l.b16 %v1732
    %v2005 = vunpack.c.h.b16 %v1732
    %v2006 = vunpack.c.l.b16 %v1733
    %v2007 = vunpack.c.h.b16 %v1733
    %v2008 = vunpack.c.l.b16 %v1734
    %v2009 = vunpack.c.h.b16 %v1734
    %v2010 = vunpack.c.l.b16 %v1735
    %v2011 = vunpack.c.h.b16 %v1735
    %v2012 = vunpack.c.l.b16 %v1736
    %v2013 = vunpack.c.h.b16 %v1736
    %v2014 = vunpack.c.l.b16 %v1737
    %v2015 = vunpack.c.h.b16 %v1737
    %v2016 = vunpack.c.l.b16 %v1738
    %v2017 = vunpack.c.h.b16 %v1738
    %v2018 = vunpack.c.l.b16 %v1739
    %v2019 = vunpack.c.h.b16 %v1739
    %v2020 = vunpack.c.l.b16 %v1740
    %v2021 = vunpack.c.h.b16 %v1740
    %v2022 = vunpack.c.l.b16 %v1741
    %v2023 = vunpack.c.h.b16 %v1741
    %v2024 = vunpack.c.l.b16 %v1742
    %v2025 = vunpack.c.h.b16 %v1742
    %v2026 = vunpack.c.l.b16 %v1743
    %v2027 = vunpack.c.h.b16 %v1743
    %v2028 = vunpack.c.l.b16 %v1744
    %v2029 = vunpack.c.h.b16 %v1744
    %v2030 = vunpack.c.l.b16 %v1745
    %v2031 = vunpack.c.h.b16 %v1745
    %v2032 = vunpack.c.l.b16 %v1746
    %v2033 = vunpack.c.h.b16 %v1746
    %v2034 = vunpack.c.l.b16 %v1747
    %v2035 = vunpack.c.h.b16 %v1747
    %v2036 = vunpack.c.l.b16 %v1748
    %v2037 = vunpack.c.h.b16 %v1748
    %v2038 = vunpack.c.l.b16 %v1749
    %v2039 = vunpack.c.h.b16 %v1749
    %v2040 = vunpack.c.l.b16 %v1750
    %v2041 = vunpack.c.h.b16 %v1750
    %v2042 = vunpack.c.l.b16 %v1751
    %v2043 = vunpack.c.h.b16 %v1751
    %v2044 = vunpack.c.l.b16 %v1752
    %v2045 = vunpack.c.h.b16 %v1752
    %v2046 = vunpack.c.l.b16 %v1753
    %v2047 = vunpack.c.h.b16 %v1753
    %v2048 = vunpack.c.l.b16 %v1754
    %v2049 = vunpack.c.h.b16 %v1754
    %v2050 = vunpack.c.l.b16 %v1755
    %v2051 = vunpack.c.h.b16 %v1755
    %v2052 = vunpack.c.l.b16 %v1756
    %v2053 = vunpack.c.h.b16 %v1756
    %v2054 = vunpack.c.l.b16 %v1757
    %v2055 = vunpack.c.h.b16 %v1757
    %v2056 = vunpack.c.l.b16 %v1758
    %v2057 = vunpack.c.h.b16 %v1758
    %v2058 = vunpack.c.l.b16 %v1759
    %v2059 = vunpack.c.h.b16 %v1759
    %v2060 = vunpack.c.l.b16 %v1760
    %v2061 = vunpack.c.h.b16 %v1760
    %v2062 = vunpack.c.l.b16 %v1761
    %v2063 = vunpack.c.h.b16 %v1761
    %v2064 = vunpack.c.l.b16 %v1762
    %v2065 = vunpack.c.h.b16 %v1762
    %v2066 = vunpack.c.l.b16 %v1763
    %v2067 = vunpack.c.h.b16 %v1763
    %v2068 = vunpack.c.l.b16 %v1764
    %v2069 = vunpack.c.h.b16 %v1764
    %v2070 = vunpack.c.l.b16 %v1765
    %v2071 = vunpack.c.h.b16 %v1765
    %v2072 = vunpack.c.l.b16 %v1766
    %v2073 = vunpack.c.h.b16 %v1766
    %v2074 = vunpack.c.l.b16 %v1767
    %v2075 = vunpack.c.h.b16 %v1767
    %v2076 = vunpack.c.l.b16 %v1768
    %v2077 = vunpack.c.h.b16 %v1768
    %v2078 = vunpack.c.l.b16 %v1769
    %v2079 = vunpack.c.h.b16 %v1769
    %v2080 = vunpack.c.l.b16 %v1770
    %v2081 = vunpack.c.h.b16 %v1770
    %v2082 = vunpack.c.l.b16 %v1771
    %v2083 = vunpack.c.h.b16 %v1771
    %v2084 = vunpack.c.l.b16 %v1772
    %v2085 = vunpack.c.h.b16 %v1772
    %v2086 = vunpack.c.l.b16 %v1773
    %v2087 = vunpack.c.h.b16 %v1773
    %v2088 = vunpack.c.l.b16 %v1774
    %v2089 = vunpack.c.h.b16 %v1774
    %v2090 = vunpack.c.l.b16 %v1775
    %v2091 = vunpack.c.h.b16 %v1775
    %v2092 = vunpack.c.l.b16 %v1776
    %v2093 = vunpack.c.h.b16 %v1776
    %v2094 = vunpack.c.l.b16 %v1777
    %v2095 = vunpack.c.h.b16 %v1777
    %v2096 = vunpack.c.l.b16 %v1778
    %v2097 = vunpack.c.h.b16 %v1778
    %v2098 = vunpack.c.l.b16 %v1779
    %v2099 = vunpack.c.h.b16 %v1779
    %v2100 = vunpack.c.l.b16 %v1780
    %v2101 = vunpack.c.h.b16 %v1780
    %v2102 = vunpack.c.l.b16 %v1781
    %v2103 = vunpack.c.h.b16 %v1781
    %v2104 = vunpack.c.l.b16 %v1782
    %v2105 = vunpack.c.h.b16 %v1782
    %v2106 = vunpack.c.l.b16 %v1783
    %v2107 = vunpack.c.h.b16 %v1783
    %v2108 = vunpack.c.l.b16 %v1784
    %v2109 = vunpack.c.h.b16 %v1784
    %v2110 = vunpack.c.l.b16 %v1785
    %v2111 = vunpack.c.h.b16 %v1785
    %v2112 = vunpack.c.l.b16 %v1786
    %v2113 = vunpack.c.h.b16 %v1786
    %v2114 = vunpack.c.l.b16 %v1787
    %v2115 = vunpack.c.h.b16 %v1787
    %v2116 = vunpack.c.l.b16 %v1788
    %v2117 = vunpack.c.h.b16 %v1788
    %v2118 = vunpack.c.l.b16 %v1789
    %v2119 = vunpack.c.h.b16 %v1789
    %v2120 = vunpack.c.l.b16 %v1790
    %v2121 = vunpack.c.h.b16 %v1790
    %v2122 = vunpack.c.l.b16 %v1791
    %v2123 = vunpack.c.h.b16 %v1791
    %v2124 = vunpack.c.l.b16 %v1792
    %v2125 = vunpack.c.h.b16 %v1792
    %v2126 = vunpack.c.l.b16 %v1793
    %v2127 = vunpack.c.h.b16 %v1793
    %v2128 = vunpack.c.l.b16 %v1794
    %v2129 = vunpack.c.h.b16 %v1794
    %v2130 = vunpack.c.l.b16 %v1795
    %v2131 = vunpack.c.h.b16 %v1795
    %v2132 = vunpack.c.l.b16 %v1796
    %v2133 = vunpack.c.h.b16 %v1796
    %v2134 = vunpack.c.l.b16 %v1797
    %v2135 = vunpack.c.h.b16 %v1797
    %v2136 = vunpack.c.l.b16 %v1798
    %v2137 = vunpack.c.h.b16 %v1798
    %v2138 = vunpack.c.l.b16 %v1799
    %v2139 = vunpack.c.h.b16 %v1799
    %v2140 = vunpack.c.l.b16 %v1800
    %v2141 = vunpack.c.h.b16 %v1800
    %v2142 = vunpack.c.l.b16 %v1801
    %v2143 = vunpack.c.h.b16 %v1801
    %v2144 = vunpack.c.l.b16 %v1802
    %v2145 = vunpack.c.h.b16 %v1802
    %v2146 = vunpack.c.l.b16 %v1803
    %v2147 = vunpack.c.h.b16 %v1803
    %v2148 = vunpack.c.l.b16 %v1804
    %v2149 = vunpack.c.h.b16 %v1804
    %v2150 = vunpack.c.l.b16 %v1805
    %v2151 = vunpack.c.h.b16 %v1805
    %v2152 = vunpack.c.l.b16 %v1806
    %v2153 = vunpack.c.h.b16 %v1806
    %v2154 = vunpack.c.l.b16 %v1807
    %v2155 = vunpack.c.h.b16 %v1807
    %v2156 = vunpack.c.l.b16 %v1808
    %v2157 = vunpack.c.h.b16 %v1808
    %v2158 = vunpack.c.l.b16 %v1809
    %v2159 = vunpack.c.h.b16 %v1809
    %v2160 = vunpack.c.l.b16 %v1810
    %v2161 = vunpack.c.h.b16 %v1810
    %v2162 = vunpack.c.l.b16 %v1811
    %v2163 = vunpack.c.h.b16 %v1811
    %v2164 = vunpack.c.l.b16 %v1812
    %v2165 = vunpack.c.h.b16 %v1812
    %v2166 = vunpack.c.l.b16 %v1813
    %v2167 = vunpack.c.h.b16 %v1813
    %v2168 = vunpack.c.l.b16 %v1814
    %v2169 = vunpack.c.h.b16 %v1814
    %v2170 = vunpack.c.l.b16 %v1815
    %v2171 = vunpack.c.h.b16 %v1815
    %v2172 = vunpack.c.l.b16 %v1816
    %v2173 = vunpack.c.h.b16 %v1816
    %v2174 = vunpack.c.l.b16 %v1817
    %v2175 = vunpack.c.h.b16 %v1817
    %v2176 = vunpack.c.l.b16 %v1818
    %v2177 = vunpack.c.h.b16 %v1818
    %v2178 = vunpack.c.l.b16 %v1819
    %v2179 = vunpack.c.h.b16 %v1819
    %v2180 = vunpack.c.l.b16 %v1820
    %v2181 = vunpack.c.h.b16 %v1820
    %v2182 = vunpack.c.l.b16 %v1821
    %v2183 = vunpack.c.h.b16 %v1821
    %v2184 = vunpack.c.l.b16 %v1822
    %v2185 = vunpack.c.h.b16 %v1822
    %v2186 = vunpack.c.l.b16 %v1823
    %v2187 = vunpack.c.h.b16 %v1823
    %v2188 = vunpack.c.l.b16 %v1824
    %v2189 = vunpack.c.h.b16 %v1824
    %v2190 = vunpack.c.l.b16 %v1825
    %v2191 = vunpack.c.h.b16 %v1825
    %v2192 = vunpack.c.l.b16 %v1826
    %v2193 = vunpack.c.h.b16 %v1826
    %v2194 = vunpack.c.l.b16 %v1827
    %v2195 = vunpack.c.h.b16 %v1827
    %v2196 = vunpack.c.l.b16 %v1828
    %v2197 = vunpack.c.h.b16 %v1828
    %v2198 = vunpack.c.l.b16 %v1829
    %v2199 = vunpack.c.h.b16 %v1829
    %v2200 = vunpack.c.l.b16 %v1830
    %v2201 = vunpack.c.h.b16 %v1830
    %v2202 = vunpack.c.l.b16 %v1831
    %v2203 = vunpack.c.h.b16 %v1831
    %v2204 = vunpack.c.l.b16 %v1832
    %v2205 = vunpack.c.h.b16 %v1832
    %v2206 = vunpack.c.l.b16 %v1833
    %v2207 = vunpack.c.h.b16 %v1833
    %v2208 = vunpack.c.l.b16 %v1834
    %v2209 = vunpack.c.h.b16 %v1834
    %v2210 = vunpack.c.l.b16 %v1835
    %v2211 = vunpack.c.h.b16 %v1835
    %v2212 = vunpack.c.l.b16 %v1836
    %v2213 = vunpack.c.h.b16 %v1836
    %v2214 = vunpack.c.l.b16 %v1837
    %v2215 = vunpack.c.h.b16 %v1837
    %v2216 = vunpack.c.l.b16 %v1838
    %v2217 = vunpack.c.h.b16 %v1838
    %v2218 = vunpack.c.l.b16 %v1839
    %v2219 = vunpack.c.h.b16 %v1839
    %v2220 = vunpack.c.l.b16 %v1840
    %v2221 = vunpack.c.h.b16 %v1840
    %v2222 = vunpack.c.l.b16 %v1841
    %v2223 = vunpack.c.h.b16 %v1841
    %v2224 = vunpack.c.l.b16 %v1842
    %v2225 = vunpack.c.h.b16 %v1842
    %v2226 = vunpack.c.l.b16 %v1843
    %v2227 = vunpack.c.h.b16 %v1843
    %v2228 = vunpack.c.l.b16 %v1844
    %v2229 = vunpack.c.h.b16 %v1844
    %v2230 = vunpack.c.l.b16 %v1845
    %v2231 = vunpack.c.h.b16 %v1845
    %v2232 = vunpack.c.l.b16 %v1846
    %v2233 = vunpack.c.h.b16 %v1846
    %v2234 = vunpack.c.l.b16 %v1847
    %v2235 = vunpack.c.h.b16 %v1847
    %v2236 = vunpack.c.l.b16 %v1848
    %v2237 = vunpack.c.h.b16 %v1848
    %v2238 = vunpack.c.l.b16 %v1849
    %v2239 = vunpack.c.h.b16 %v1849
    %v2240 = vunpack.c.l.b16 %v1850
    %v2241 = vunpack.c.h.b16 %v1850
    %v2242 = vunpack.c.l.b16 %v1851
    %v2243 = vunpack.c.h.b16 %v1851
    %v2244 = vunpack.c.l.b16 %v1852
    %v2245 = vunpack.c.h.b16 %v1852
    %v2246 = vunpack.c.l.b16 %v1853
    %v2247 = vunpack.c.h.b16 %v1853
    %v2248 = vpack.c.b16 %v1996, %v1992
    %v2249 = vpack.c.b16 %v1997, %v1993
    %v2250 = vpack.c.b16 %v1998, %v1994
    %v2251 = vpack.c.b16 %v1999, %v1995
    %v2252 = vpack.c.b16 %v2004, %v2000
    %v2253 = vpack.c.b16 %v2005, %v2001
    %v2254 = vpack.c.b16 %v2006, %v2002
    %v2255 = vpack.c.b16 %v2007, %v2003
    %v2256 = vpack.c.b16 %v2012, %v2008
    %v2257 = vpack.c.b16 %v2013, %v2009
    %v2258 = vpack.c.b16 %v2014, %v2010
    %v2259 = vpack.c.b16 %v2015, %v2011
    %v2260 = vpack.c.b16 %v2020, %v2016
    %v2261 = vpack.c.b16 %v2021, %v2017
    %v2262 = vpack.c.b16 %v2022, %v2018
    %v2263 = vpack.c.b16 %v2023, %v2019
    %v2264 = vpack.c.b16 %v2028, %v2024
    %v2265 = vpack.c.b16 %v2029, %v2025
    %v2266 = vpack.c.b16 %v2030, %v2026
    %v2267 = vpack.c.b16 %v2031, %v2027
    %v2268 = vpack.c.b16 %v2036, %v2032
    %v2269 = vpack.c.b16 %v2037, %v2033
    %v2270 = vpack.c.b16 %v2038, %v2034
    %v2271 = vpack.c.b16 %v2039, %v2035
    %v2272 = vpack.c.b16 %v2044, %v2040
    %v2273 = vpack.c.b16 %v2045, %v2041
    %v2274 = vpack.c.b16 %v2046, %v2042
    %v2275 = vpack.c.b16 %v2047, %v2043
    %v2276 = vpack.c.b16 %v2052, %v2048
    %v2277 = vpack.c.b16 %v2053, %v2049
    %v2278 = vpack.c.b16 %v2054, %v2050
    %v2279 = vpack.c.b16 %v2055, %v2051
    %v2280 = vpack.c.b16 %v2060, %v2056
    %v2281 = vpack.c.b16 %v2061, %v2057
    %v2282 = vpack.c.b16 %v2062, %v2058
    %v2283 = vpack.c.b16 %v2063, %v2059
    %v2284 = vpack.c.b16 %v2068, %v2064
    %v2285 = vpack.c.b16 %v2069, %v2065
    %v2286 = vpack.c.b16 %v2070, %v2066
    %v2287 = vpack.c.b16 %v2071, %v2067
    %v2288 = vpack.c.b16 %v2076, %v2072
    %v2289 = vpack.c.b16 %v2077, %v2073
    %v2290 = vpack.c.b16 %v2078, %v2074
    %v2291 = vpack.c.b16 %v2079, %v2075
    %v2292 = vpack.c.b16 %v2084, %v2080
    %v2293 = vpack.c.b16 %v2085, %v2081
    %v2294 = vpack.c.b16 %v2086, %v2082
    %v2295 = vpack.c.b16 %v2087, %v2083
    %v2296 = vpack.c.b16 %v2092, %v2088
    %v2297 = vpack.c.b16 %v2093, %v2089
    %v2298 = vpack.c.b16 %v2094, %v2090
    %v2299 = vpack.c.b16 %v2095, %v2091
    %v2300 = vpack.c.b16 %v2100, %v2096
    %v2301 = vpack.c.b16 %v2101, %v2097
    %v2302 = vpack.c.b16 %v2102, %v2098
    %v2303 = vpack.c.b16 %v2103, %v2099
    %v2304 = vpack.c.b16 %v2108, %v2104
    %v2305 = vpack.c.b16 %v2109, %v2105
    %v2306 = vpack.c.b16 %v2110, %v2106
    %v2307 = vpack.c.b16 %v2111, %v2107
    %v2308 = vpack.c.b16 %v2116, %v2112
    %v2309 = vpack.c.b16 %v2117, %v2113
    %v2310 = vpack.c.b16 %v2118, %v2114
    %v2311 = vpack.c.b16 %v2119, %v2115
    %v2312 = vpack.c.b16 %v2124, %v2120
    %v2313 = vpack.c.b16 %v2125, %v2121
    %v2314 = vpack.c.b16 %v2126, %v2122
    %v2315 = vpack.c.b16 %v2127, %v2123
    %v2316 = vpack.c.b16 %v2132, %v2128
    %v2317 = vpack.c.b16 %v2133, %v2129
    %v2318 = vpack.c.b16 %v2134, %v2130
    %v2319 = vpack.c.b16 %v2135, %v2131
    %v2320 = vpack.c.b16 %v2140, %v2136
    %v2321 = vpack.c.b16 %v2141, %v2137
    %v2322 = vpack.c.b16 %v2142, %v2138
    %v2323 = vpack.c.b16 %v2143, %v2139
    %v2324 = vpack.c.b16 %v2148, %v2144
    %v2325 = vpack.c.b16 %v2149, %v2145
    %v2326 = vpack.c.b16 %v2150, %v2146
    %v2327 = vpack.c.b16 %v2151, %v2147
    %v2328 = vpack.c.b16 %v2156, %v2152
    %v2329 = vpack.c.b16 %v2157, %v2153
    %v2330 = vpack.c.b16 %v2158, %v2154
    %v2331 = vpack.c.b16 %v2159, %v2155
    %v2332 = vpack.c.b16 %v2164, %v2160
    %v2333 = vpack.c.b16 %v2165, %v2161
    %v2334 = vpack.c.b16 %v2166, %v2162
    %v2335 = vpack.c.b16 %v2167, %v2163
    %v2336 = vpack.c.b16 %v2172, %v2168
    %v2337 = vpack.c.b16 %v2173, %v2169
    %v2338 = vpack.c.b16 %v2174, %v2170
    %v2339 = vpack.c.b16 %v2175, %v2171
    %v2340 = vpack.c.b16 %v2180, %v2176
    %v2341 = vpack.c.b16 %v2181, %v2177
    %v2342 = vpack.c.b16 %v2182, %v2178
    %v2343 = vpack.c.b16 %v2183, %v2179
    %v2344 = vpack.c.b16 %v2188, %v2184
    %v2345 = vpack.c.b16 %v2189, %v2185
    %v2346 = vpack.c.b16 %v2190, %v2186
    %v2347 = vpack.c.b16 %v2191, %v2187
    %v2348 = vpack.c.b16 %v2196, %v2192
    %v2349 = vpack.c.b16 %v2197, %v2193
    %v2350 = vpack.c.b16 %v2198, %v2194
    %v2351 = vpack.c.b16 %v2199, %v2195
    %v2352 = vpack.c.b16 %v2204, %v2200
    %v2353 = vpack.c.b16 %v2205, %v2201
    %v2354 = vpack.c.b16 %v2206, %v2202
    %v2355 = vpack.c.b16 %v2207, %v2203
    %v2356 = vpack.c.b16 %v2212, %v2208
    %v2357 = vpack.c.b16 %v2213, %v2209
    %v2358 = vpack.c.b16 %v2214, %v2210
    %v2359 = vpack.c.b16 %v2215, %v2211
    %v2360 = vpack.c.b16 %v2220, %v2216
    %v2361 = vpack.c.b16 %v2221, %v2217
    %v2362 = vpack.c.b16 %v2222, %v2218
    %v2363 = vpack.c.b16 %v2223, %v2219
    %v2364 = vpack.c.b16 %v2228, %v2224
    %v2365 = vpack.c.b16 %v2229, %v2225
    %v2366 = vpack.c.b16 %v2230, %v2226
    %v2367 = vpack.c.b16 %v2231, %v2227
    %v2368 = vpack.c.b16 %v2236, %v2232
    %v2369 = vpack.c.b16 %v2237, %v2233
    %v2370 = vpack.c.b16 %v2238, %v2234
    %v2371 = vpack.c.b16 %v2239, %v2235
    %v2372 = vpack.c.b16 %v2244, %v2240
    %v2373 = vpack.c.b16 %v2245, %v2241
    %v2374 = vpack.c.b16 %v2246, %v2242
    %v2375 = vpack.c.b16 %v2247, %v2243
    %2504 = vmatpush.bf16.msra.mxu0 %v2276
    %2505 = vmatpush.bf16.msra.mxu0 %v2272
    %2506 = vmatpush.bf16.msra.mxu0 %v2268
    %2507 = vmatpush.bf16.msra.mxu0 %v2264
    %2508 = vmatpush.bf16.msra.mxu0 %v2260
    %2509 = vmatpush.bf16.msra.mxu0 %v2256
    %2510 = vmatpush.bf16.msra.mxu0 %v2252
    %2511 = vmatpush.bf16.msra.mxu0 %v2248
    %2512 = vmatmul.bf16.gmra.mxu0 %v1722
    %v2513 = vpop.f32.mrf.mxu0
    %v2514 = vadd.f32 %v1856, %v2513
    %v2515 = vpop.f32.mrf.mxu0
    %2516 = vdwg.mxu0
    %2517 = vmatpush.bf16.msra.mxu0 %v2308
    %2518 = vmatpush.bf16.msra.mxu0 %v2304
    %2519 = vmatpush.bf16.msra.mxu0 %v2300
    %2520 = vmatpush.bf16.msra.mxu0 %v2296
    %2521 = vmatpush.bf16.msra.mxu0 %v2292
    %2522 = vmatpush.bf16.msra.mxu0 %v2288
    %2523 = vmatpush.bf16.msra.mxu0 %v2284
    %2524 = vmatpush.bf16.msra.mxu0 %v2280
    %2525 = vmatmul.bf16.gmra.mxu0 %v1723
    %v2526 = vpop.f32.mrf.mxu0
    %v2527 = vadd.f32 %v2514, %v2526
    %v2528 = vpop.f32.mrf.mxu0
    %2529 = vdwg.mxu0
    %2530 = vmatpush.bf16.msra.mxu0 %v2340
    %2531 = vmatpush.bf16.msra.mxu0 %v2336
    %2532 = vmatpush.bf16.msra.mxu0 %v2332
    %2533 = vmatpush.bf16.msra.mxu0 %v2328
    %2534 = vmatpush.bf16.msra.mxu0 %v2324
    %2535 = vmatpush.bf16.msra.mxu0 %v2320
    %2536 = vmatpush.bf16.msra.mxu0 %v2316
    %2537 = vmatpush.bf16.msra.mxu0 %v2312
    %2538 = vmatmul.bf16.gmra.mxu0 %v1724
    %v2539 = vpop.f32.mrf.mxu0
    %v2540 = vadd.f32 %v2527, %v2539
    %v2541 = vpop.f32.mrf.mxu0
    %2542 = vdwg.mxu0
    %2543 = vmatpush.bf16.msra.mxu0 %v2372
    %2544 = vmatpush.bf16.msra.mxu0 %v2368
    %2545 = vmatpush.bf16.msra.mxu0 %v2364
    %2546 = vmatpush.bf16.msra.mxu0 %v2360
    %2547 = vmatpush.bf16.msra.mxu0 %v2356
    %2548 = vmatpush.bf16.msra.mxu0 %v2352
    %2549 = vmatpush.bf16.msra.mxu0 %v2348
    %2550 = vmatpush.bf16.msra.mxu0 %v2344
    %2551 = vmatmul.bf16.gmra.mxu0 %v1725
    %v2552 = vpop.f32.mrf.mxu0
    %v2553 = vadd.f32 %v2540, %v2552
    %v2554 = vpop.f32.mrf.mxu0
    %2555 = vdwg.mxu0
    %2556 = vmatpush.bf16.msra.mxu0 %v2277
    %2557 = vmatpush.bf16.msra.mxu0 %v2273
    %2558 = vmatpush.bf16.msra.mxu0 %v2269
    %2559 = vmatpush.bf16.msra.mxu0 %v2265
    %2560 = vmatpush.bf16.msra.mxu0 %v2261
    %2561 = vmatpush.bf16.msra.mxu0 %v2257
    %2562 = vmatpush.bf16.msra.mxu0 %v2253
    %2563 = vmatpush.bf16.msra.mxu0 %v2249
    %2564 = vmatmul.bf16.gmra.mxu0 %v1722
    %v2565 = vpop.f32.mrf.mxu0
    %v2566 = vadd.f32 %v1857, %v2565
    %v2567 = vpop.f32.mrf.mxu0
    %2568 = vdwg.mxu0
    %2569 = vmatpush.bf16.msra.mxu0 %v2309
    %2570 = vmatpush.bf16.msra.mxu0 %v2305
    %2571 = vmatpush.bf16.msra.mxu0 %v2301
    %2572 = vmatpush.bf16.msra.mxu0 %v2297
    %2573 = vmatpush.bf16.msra.mxu0 %v2293
    %2574 = vmatpush.bf16.msra.mxu0 %v2289
    %2575 = vmatpush.bf16.msra.mxu0 %v2285
    %2576 = vmatpush.bf16.msra.mxu0 %v2281
    %2577 = vmatmul.bf16.gmra.mxu0 %v1723
    %v2578 = vpop.f32.mrf.mxu0
    %v2579 = vadd.f32 %v2566, %v2578
    %v2580 = vpop.f32.mrf.mxu0
    %2581 = vdwg.mxu0
    %2582 = vmatpush.bf16.msra.mxu0 %v2341
    %2583 = vmatpush.bf16.msra.mxu0 %v2337
    %2584 = vmatpush.bf16.msra.mxu0 %v2333
    %2585 = vmatpush.bf16.msra.mxu0 %v2329
    %2586 = vmatpush.bf16.msra.mxu0 %v2325
    %2587 = vmatpush.bf16.msra.mxu0 %v2321
    %2588 = vmatpush.bf16.msra.mxu0 %v2317
    %2589 = vmatpush.bf16.msra.mxu0 %v2313
    %2590 = vmatmul.bf16.gmra.mxu0 %v1724
    %v2591 = vpop.f32.mrf.mxu0
    %v2592 = vadd.f32 %v2579, %v2591
    %v2593 = vpop.f32.mrf.mxu0
    %2594 = vdwg.mxu0
    %2595 = vmatpush.bf16.msra.mxu0 %v2373
    %2596 = vmatpush.bf16.msra.mxu0 %v2369
    %2597 = vmatpush.bf16.msra.mxu0 %v2365
    %2598 = vmatpush.bf16.msra.mxu0 %v2361
    %2599 = vmatpush.bf16.msra.mxu0 %v2357
    %2600 = vmatpush.bf16.msra.mxu0 %v2353
    %2601 = vmatpush.bf16.msra.mxu0 %v2349
    %2602 = vmatpush.bf16.msra.mxu0 %v2345
    %2603 = vmatmul.bf16.gmra.mxu0 %v1725
    %v2604 = vpop.f32.mrf.mxu0
    %v2605 = vadd.f32 %v2592, %v2604
    %v2606 = vpop.f32.mrf.mxu0
    %2607 = vdwg.mxu0
    %2608 = vmatpush.bf16.msra.mxu0 %v2278
    %2609 = vmatpush.bf16.msra.mxu0 %v2274
    %2610 = vmatpush.bf16.msra.mxu0 %v2270
    %2611 = vmatpush.bf16.msra.mxu0 %v2266
    %2612 = vmatpush.bf16.msra.mxu0 %v2262
    %2613 = vmatpush.bf16.msra.mxu0 %v2258
    %2614 = vmatpush.bf16.msra.mxu0 %v2254
    %2615 = vmatpush.bf16.msra.mxu0 %v2250
    %2616 = vmatmul.bf16.gmra.mxu0 %v1722
    %v2617 = vpop.f32.mrf.mxu0
    %v2618 = vadd.f32 %v1858, %v2617
    %v2619 = vpop.f32.mrf.mxu0
    %2620 = vdwg.mxu0
    %2621 = vmatpush.bf16.msra.mxu0 %v2310
    %2622 = vmatpush.bf16.msra.mxu0 %v2306
    %2623 = vmatpush.bf16.msra.mxu0 %v2302
    %2624 = vmatpush.bf16.msra.mxu0 %v2298
    %2625 = vmatpush.bf16.msra.mxu0 %v2294
    %2626 = vmatpush.bf16.msra.mxu0 %v2290
    %2627 = vmatpush.bf16.msra.mxu0 %v2286
    %2628 = vmatpush.bf16.msra.mxu0 %v2282
    %2629 = vmatmul.bf16.gmra.mxu0 %v1723
    %v2630 = vpop.f32.mrf.mxu0
    %v2631 = vadd.f32 %v2618, %v2630
    %v2632 = vpop.f32.mrf.mxu0
    %2633 = vdwg.mxu0
    %2634 = vmatpush.bf16.msra.mxu0 %v2342
    %2635 = vmatpush.bf16.msra.mxu0 %v2338
    %2636 = vmatpush.bf16.msra.mxu0 %v2334
    %2637 = vmatpush.bf16.msra.mxu0 %v2330
    %2638 = vmatpush.bf16.msra.mxu0 %v2326
    %2639 = vmatpush.bf16.msra.mxu0 %v2322
    %2640 = vmatpush.bf16.msra.mxu0 %v2318
    %2641 = vmatpush.bf16.msra.mxu0 %v2314
    %2642 = vmatmul.bf16.gmra.mxu0 %v1724
    %v2643 = vpop.f32.mrf.mxu0
    %v2644 = vadd.f32 %v2631, %v2643
    %v2645 = vpop.f32.mrf.mxu0
    %2646 = vdwg.mxu0
    %2647 = vmatpush.bf16.msra.mxu0 %v2374
    %2648 = vmatpush.bf16.msra.mxu0 %v2370
    %2649 = vmatpush.bf16.msra.mxu0 %v2366
    %2650 = vmatpush.bf16.msra.mxu0 %v2362
    %2651 = vmatpush.bf16.msra.mxu0 %v2358
    %2652 = vmatpush.bf16.msra.mxu0 %v2354
    %2653 = vmatpush.bf16.msra.mxu0 %v2350
    %2654 = vmatpush.bf16.msra.mxu0 %v2346
    %2655 = vmatmul.bf16.gmra.mxu0 %v1725
    %v2656 = vpop.f32.mrf.mxu0
    %v2657 = vadd.f32 %v2644, %v2656
    %v2658 = vpop.f32.mrf.mxu0
    %2659 = vdwg.mxu0
    %2660 = vmatpush.bf16.msra.mxu0 %v2279
    %2661 = vmatpush.bf16.msra.mxu0 %v2275
    %2662 = vmatpush.bf16.msra.mxu0 %v2271
    %2663 = vmatpush.bf16.msra.mxu0 %v2267
    %2664 = vmatpush.bf16.msra.mxu0 %v2263
    %2665 = vmatpush.bf16.msra.mxu0 %v2259
    %2666 = vmatpush.bf16.msra.mxu0 %v2255
    %2667 = vmatpush.bf16.msra.mxu0 %v2251
    %2668 = vmatmul.bf16.gmra.mxu0 %v1722
    %v2669 = vpop.f32.mrf.mxu0
    %v2670 = vadd.f32 %v1859, %v2669
    %v2671 = vpop.f32.mrf.mxu0
    %2672 = vdwg.mxu0
    %2673 = vmatpush.bf16.msra.mxu0 %v2311
    %2674 = vmatpush.bf16.msra.mxu0 %v2307
    %2675 = vmatpush.bf16.msra.mxu0 %v2303
    %2676 = vmatpush.bf16.msra.mxu0 %v2299
    %2677 = vmatpush.bf16.msra.mxu0 %v2295
    %2678 = vmatpush.bf16.msra.mxu0 %v2291
    %2679 = vmatpush.bf16.msra.mxu0 %v2287
    %2680 = vmatpush.bf16.msra.mxu0 %v2283
    %2681 = vmatmul.bf16.gmra.mxu0 %v1723
    %v2682 = vpop.f32.mrf.mxu0
    %v2683 = vadd.f32 %v2670, %v2682
    %v2684 = vpop.f32.mrf.mxu0
    %2685 = vdwg.mxu0
    %2686 = vmatpush.bf16.msra.mxu0 %v2343
    %2687 = vmatpush.bf16.msra.mxu0 %v2339
    %2688 = vmatpush.bf16.msra.mxu0 %v2335
    %2689 = vmatpush.bf16.msra.mxu0 %v2331
    %2690 = vmatpush.bf16.msra.mxu0 %v2327
    %2691 = vmatpush.bf16.msra.mxu0 %v2323
    %2692 = vmatpush.bf16.msra.mxu0 %v2319
    %2693 = vmatpush.bf16.msra.mxu0 %v2315
    %2694 = vmatmul.bf16.gmra.mxu0 %v1724
    %v2695 = vpop.f32.mrf.mxu0
    %v2696 = vadd.f32 %v2683, %v2695
    %v2697 = vpop.f32.mrf.mxu0
    %2698 = vdwg.mxu0
    %2699 = vmatpush.bf16.msra.mxu0 %v2375
    %2700 = vmatpush.bf16.msra.mxu0 %v2371
    %2701 = vmatpush.bf16.msra.mxu0 %v2367
    %2702 = vmatpush.bf16.msra.mxu0 %v2363
    %2703 = vmatpush.bf16.msra.mxu0 %v2359
    %2704 = vmatpush.bf16.msra.mxu0 %v2355
    %2705 = vmatpush.bf16.msra.mxu0 %v2351
    %2706 = vmatpush.bf16.msra.mxu0 %v2347
    %2707 = vmatmul.bf16.gmra.mxu0 %v1725
    %v2708 = vpop.f32.mrf.mxu0
    %v2709 = vadd.f32 %v2696, %v2708
    %v2710 = vpop.f32.mrf.mxu0
    %2711 = vdwg.mxu0
    %v2712 = vmax.f32 %v2553, 0.0
    %v2713 = vmax.f32 %v2605, 0.0
    %v2714 = vmax.f32 %v2657, 0.0
    %v2715 = vmax.f32 %v2709, 0.0
    %v2716 = vpack.c.bf16 %v2712, %v2712
    %v2717 = vpack.c.bf16 %v2713, %v2713
    %v2718 = vpack.c.bf16 %v2714, %v2714
    %v2719 = vpack.c.bf16 %v2715, %v2715
    %v2720 = vld [vmem:[#allocation11] sm:$0xff]
    %v2721 = vld [vmem:[#allocation11 + $0x8] sm:$0xff]
    %v2722 = vld [vmem:[#allocation11 + $0x10] sm:$0xff]
    %v2723 = vld [vmem:[#allocation11 + $0x18] sm:$0xff]
    %v2724 = vld [vmem:[#allocation11 + $0x20] sm:$0xff]
    %v2725 = vld [vmem:[#allocation11 + $0x28] sm:$0xff]
    %v2726 = vld [vmem:[#allocation11 + $0x30] sm:$0xff]
    %v2727 = vld [vmem:[#allocation11 + $0x38] sm:$0xff]
    %v2728 = vld [vmem:[#allocation11 + $0x40] sm:$0xff]
    %v2729 = vld [vmem:[#allocation11 + $0x48] sm:$0xff]
    %v2730 = vld [vmem:[#allocation11 + $0x50] sm:$0xff]
    %v2731 = vld [vmem:[#allocation11 + $0x58] sm:$0xff]
    %v2732 = vld [vmem:[#allocation11 + $0x60] sm:$0xff]
    %v2733 = vld [vmem:[#allocation11 + $0x68] sm:$0xff]
    %v2734 = vld [vmem:[#allocation11 + $0x70] sm:$0xff]
    %v2735 = vld [vmem:[#allocation11 + $0x78] sm:$0xff]
    %v2736 = vld [vmem:[#allocation11 + $0x80] sm:$0xff]
    %v2737 = vld [vmem:[#allocation11 + $0x88] sm:$0xff]
    %v2738 = vld [vmem:[#allocation11 + $0x90] sm:$0xff]
    %v2739 = vld [vmem:[#allocation11 + $0x98] sm:$0xff]
    %v2740 = vld [vmem:[#allocation11 + $0xa0] sm:$0xff]
    %v2741 = vld [vmem:[#allocation11 + $0xa8] sm:$0xff]
    %v2742 = vld [vmem:[#allocation11 + $0xb0] sm:$0xff]
    %v2743 = vld [vmem:[#allocation11 + $0xb8] sm:$0xff]
    %v2744 = vld [vmem:[#allocation11 + $0xc0] sm:$0xff]
    %v2745 = vld [vmem:[#allocation11 + $0xc8] sm:$0xff]
    %v2746 = vld [vmem:[#allocation11 + $0xd0] sm:$0xff]
    %v2747 = vld [vmem:[#allocation11 + $0xd8] sm:$0xff]
    %v2748 = vld [vmem:[#allocation11 + $0xe0] sm:$0xff]
    %v2749 = vld [vmem:[#allocation11 + $0xe8] sm:$0xff]
    %v2750 = vld [vmem:[#allocation11 + $0xf0] sm:$0xff]
    %v2751 = vld [vmem:[#allocation11 + $0xf8] sm:$0xff]
    %v2752 = vld [vmem:[#allocation11 + $0x100] sm:$0xff]
    %v2753 = vld [vmem:[#allocation11 + $0x108] sm:$0xff]
    %v2754 = vld [vmem:[#allocation11 + $0x110] sm:$0xff]
    %v2755 = vld [vmem:[#allocation11 + $0x118] sm:$0xff]
    %v2756 = vld [vmem:[#allocation11 + $0x120] sm:$0xff]
    %v2757 = vld [vmem:[#allocation11 + $0x128] sm:$0xff]
    %v2758 = vld [vmem:[#allocation11 + $0x130] sm:$0xff]
    %v2759 = vld [vmem:[#allocation11 + $0x138] sm:$0xff]
    %v2760 = vld [vmem:[#allocation11 + $0x140] sm:$0xff]
    %v2761 = vld [vmem:[#allocation11 + $0x148] sm:$0xff]
    %v2762 = vld [vmem:[#allocation11 + $0x150] sm:$0xff]
    %v2763 = vld [vmem:[#allocation11 + $0x158] sm:$0xff]
    %v2764 = vld [vmem:[#allocation11 + $0x160] sm:$0xff]
    %v2765 = vld [vmem:[#allocation11 + $0x168] sm:$0xff]
    %v2766 = vld [vmem:[#allocation11 + $0x170] sm:$0xff]
    %v2767 = vld [vmem:[#allocation11 + $0x178] sm:$0xff]
    %v2768 = vld [vmem:[#allocation11 + $0x180] sm:$0xff]
    %v2769 = vld [vmem:[#allocation11 + $0x188] sm:$0xff]
    %v2770 = vld [vmem:[#allocation11 + $0x190] sm:$0xff]
    %v2771 = vld [vmem:[#allocation11 + $0x198] sm:$0xff]
    %v2772 = vld [vmem:[#allocation11 + $0x1a0] sm:$0xff]
    %v2773 = vld [vmem:[#allocation11 + $0x1a8] sm:$0xff]
    %v2774 = vld [vmem:[#allocation11 + $0x1b0] sm:$0xff]
    %v2775 = vld [vmem:[#allocation11 + $0x1b8] sm:$0xff]
    %v2776 = vld [vmem:[#allocation11 + $0x1c0] sm:$0xff]
    %v2777 = vld [vmem:[#allocation11 + $0x1c8] sm:$0xff]
    %v2778 = vld [vmem:[#allocation11 + $0x1d0] sm:$0xff]
    %v2779 = vld [vmem:[#allocation11 + $0x1d8] sm:$0xff]
    %v2780 = vld [vmem:[#allocation11 + $0x1e0] sm:$0xff]
    %v2781 = vld [vmem:[#allocation11 + $0x1e8] sm:$0xff]
    %v2782 = vld [vmem:[#allocation11 + $0x1f0] sm:$0xff]
    %v2783 = vld [vmem:[#allocation11 + $0x1f8] sm:$0xff]
    %v2784 = vld [vmem:[#allocation13] sm:$0x3]
    %v2786 = vperm.slane %v2784, 0
    %v2787 = vperm.slane %v2784, 1
    %v2854 = vunpack.c.l.b16 %v2720
    %v2855 = vunpack.c.h.b16 %v2720
    %v2856 = vunpack.c.l.b16 %v2721
    %v2857 = vunpack.c.h.b16 %v2721
    %v2858 = vunpack.c.l.b16 %v2722
    %v2859 = vunpack.c.h.b16 %v2722
    %v2860 = vunpack.c.l.b16 %v2723
    %v2861 = vunpack.c.h.b16 %v2723
    %v2862 = vunpack.c.l.b16 %v2724
    %v2863 = vunpack.c.h.b16 %v2724
    %v2864 = vunpack.c.l.b16 %v2725
    %v2865 = vunpack.c.h.b16 %v2725
    %v2866 = vunpack.c.l.b16 %v2726
    %v2867 = vunpack.c.h.b16 %v2726
    %v2868 = vunpack.c.l.b16 %v2727
    %v2869 = vunpack.c.h.b16 %v2727
    %v2870 = vunpack.c.l.b16 %v2728
    %v2871 = vunpack.c.h.b16 %v2728
    %v2872 = vunpack.c.l.b16 %v2729
    %v2873 = vunpack.c.h.b16 %v2729
    %v2874 = vunpack.c.l.b16 %v2730
    %v2875 = vunpack.c.h.b16 %v2730
    %v2876 = vunpack.c.l.b16 %v2731
    %v2877 = vunpack.c.h.b16 %v2731
    %v2878 = vunpack.c.l.b16 %v2732
    %v2879 = vunpack.c.h.b16 %v2732
    %v2880 = vunpack.c.l.b16 %v2733
    %v2881 = vunpack.c.h.b16 %v2733
    %v2882 = vunpack.c.l.b16 %v2734
    %v2883 = vunpack.c.h.b16 %v2734
    %v2884 = vunpack.c.l.b16 %v2735
    %v2885 = vunpack.c.h.b16 %v2735
    %v2886 = vunpack.c.l.b16 %v2736
    %v2887 = vunpack.c.h.b16 %v2736
    %v2888 = vunpack.c.l.b16 %v2737
    %v2889 = vunpack.c.h.b16 %v2737
    %v2890 = vunpack.c.l.b16 %v2738
    %v2891 = vunpack.c.h.b16 %v2738
    %v2892 = vunpack.c.l.b16 %v2739
    %v2893 = vunpack.c.h.b16 %v2739
    %v2894 = vunpack.c.l.b16 %v2740
    %v2895 = vunpack.c.h.b16 %v2740
    %v2896 = vunpack.c.l.b16 %v2741
    %v2897 = vunpack.c.h.b16 %v2741
    %v2898 = vunpack.c.l.b16 %v2742
    %v2899 = vunpack.c.h.b16 %v2742
    %v2900 = vunpack.c.l.b16 %v2743
    %v2901 = vunpack.c.h.b16 %v2743
    %v2902 = vunpack.c.l.b16 %v2744
    %v2903 = vunpack.c.h.b16 %v2744
    %v2904 = vunpack.c.l.b16 %v2745
    %v2905 = vunpack.c.h.b16 %v2745
    %v2906 = vunpack.c.l.b16 %v2746
    %v2907 = vunpack.c.h.b16 %v2746
    %v2908 = vunpack.c.l.b16 %v2747
    %v2909 = vunpack.c.h.b16 %v2747
    %v2910 = vunpack.c.l.b16 %v2748
    %v2911 = vunpack.c.h.b16 %v2748
    %v2912 = vunpack.c.l.b16 %v2749
    %v2913 = vunpack.c.h.b16 %v2749
    %v2914 = vunpack.c.l.b16 %v2750
    %v2915 = vunpack.c.h.b16 %v2750
    %v2916 = vunpack.c.l.b16 %v2751
    %v2917 = vunpack.c.h.b16 %v2751
    %v2918 = vunpack.c.l.b16 %v2752
    %v2919 = vunpack.c.h.b16 %v2752
    %v2920 = vunpack.c.l.b16 %v2753
    %v2921 = vunpack.c.h.b16 %v2753
    %v2922 = vunpack.c.l.b16 %v2754
    %v2923 = vunpack.c.h.b16 %v2754
    %v2924 = vunpack.c.l.b16 %v2755
    %v2925 = vunpack.c.h.b16 %v2755
    %v2926 = vunpack.c.l.b16 %v2756
    %v2927 = vunpack.c.h.b16 %v2756
    %v2928 = vunpack.c.l.b16 %v2757
    %v2929 = vunpack.c.h.b16 %v2757
    %v2930 = vunpack.c.l.b16 %v2758
    %v2931 = vunpack.c.h.b16 %v2758
    %v2932 = vunpack.c.l.b16 %v2759
    %v2933 = vunpack.c.h.b16 %v2759
    %v2934 = vunpack.c.l.b16 %v2760
    %v2935 = vunpack.c.h.b16 %v2760
    %v2936 = vunpack.c.l.b16 %v2761
    %v2937 = vunpack.c.h.b16 %v2761
    %v2938 = vunpack.c.l.b16 %v2762
    %v2939 = vunpack.c.h.b16 %v2762
    %v2940 = vunpack.c.l.b16 %v2763
    %v2941 = vunpack.c.h.b16 %v2763
    %v2942 = vunpack.c.l.b16 %v2764
    %v2943 = vunpack.c.h.b16 %v2764
    %v2944 = vunpack.c.l.b16 %v2765
    %v2945 = vunpack.c.h.b16 %v2765
    %v2946 = vunpack.c.l.b16 %v2766
    %v2947 = vunpack.c.h.b16 %v2766
    %v2948 = vunpack.c.l.b16 %v2767
    %v2949 = vunpack.c.h.b16 %v2767
    %v2950 = vunpack.c.l.b16 %v2768
    %v2951 = vunpack.c.h.b16 %v2768
    %v2952 = vunpack.c.l.b16 %v2769
    %v2953 = vunpack.c.h.b16 %v2769
    %v2954 = vunpack.c.l.b16 %v2770
    %v2955 = vunpack.c.h.b16 %v2770
    %v2956 = vunpack.c.l.b16 %v2771
    %v2957 = vunpack.c.h.b16 %v2771
    %v2958 = vunpack.c.l.b16 %v2772
    %v2959 = vunpack.c.h.b16 %v2772
    %v2960 = vunpack.c.l.b16 %v2773
    %v2961 = vunpack.c.h.b16 %v2773
    %v2962 = vunpack.c.l.b16 %v2774
    %v2963 = vunpack.c.h.b16 %v2774
    %v2964 = vunpack.c.l.b16 %v2775
    %v2965 = vunpack.c.h.b16 %v2775
    %v2966 = vunpack.c.l.b16 %v2776
    %v2967 = vunpack.c.h.b16 %v2776
    %v2968 = vunpack.c.l.b16 %v2777
    %v2969 = vunpack.c.h.b16 %v2777
    %v2970 = vunpack.c.l.b16 %v2778
    %v2971 = vunpack.c.h.b16 %v2778
    %v2972 = vunpack.c.l.b16 %v2779
    %v2973 = vunpack.c.h.b16 %v2779
    %v2974 = vunpack.c.l.b16 %v2780
    %v2975 = vunpack.c.h.b16 %v2780
    %v2976 = vunpack.c.l.b16 %v2781
    %v2977 = vunpack.c.h.b16 %v2781
    %v2978 = vunpack.c.l.b16 %v2782
    %v2979 = vunpack.c.h.b16 %v2782
    %v2980 = vunpack.c.l.b16 %v2783
    %v2981 = vunpack.c.h.b16 %v2783
    %v2982 = vpack.c.b16 %v2856, %v2854
    %v2983 = vpack.c.b16 %v2857, %v2855
    %v2984 = vpack.c.b16 %v2860, %v2858
    %v2985 = vpack.c.b16 %v2861, %v2859
    %v2986 = vpack.c.b16 %v2864, %v2862
    %v2987 = vpack.c.b16 %v2865, %v2863
    %v2988 = vpack.c.b16 %v2868, %v2866
    %v2989 = vpack.c.b16 %v2869, %v2867
    %v2990 = vpack.c.b16 %v2872, %v2870
    %v2991 = vpack.c.b16 %v2873, %v2871
    %v2992 = vpack.c.b16 %v2876, %v2874
    %v2993 = vpack.c.b16 %v2877, %v2875
    %v2994 = vpack.c.b16 %v2880, %v2878
    %v2995 = vpack.c.b16 %v2881, %v2879
    %v2996 = vpack.c.b16 %v2884, %v2882
    %v2997 = vpack.c.b16 %v2885, %v2883
    %v2998 = vpack.c.b16 %v2888, %v2886
    %v2999 = vpack.c.b16 %v2889, %v2887
    %v3000 = vpack.c.b16 %v2892, %v2890
    %v3001 = vpack.c.b16 %v2893, %v2891
    %v3002 = vpack.c.b16 %v2896, %v2894
    %v3003 = vpack.c.b16 %v2897, %v2895
    %v3004 = vpack.c.b16 %v2900, %v2898
    %v3005 = vpack.c.b16 %v2901, %v2899
    %v3006 = vpack.c.b16 %v2904, %v2902
    %v3007 = vpack.c.b16 %v2905, %v2903
    %v3008 = vpack.c.b16 %v2908, %v2906
    %v3009 = vpack.c.b16 %v2909, %v2907
    %v3010 = vpack.c.b16 %v2912, %v2910
    %v3011 = vpack.c.b16 %v2913, %v2911
    %v3012 = vpack.c.b16 %v2916, %v2914
    %v3013 = vpack.c.b16 %v2917, %v2915
    %v3014 = vpack.c.b16 %v2920, %v2918
    %v3015 = vpack.c.b16 %v2921, %v2919
    %v3016 = vpack.c.b16 %v2924, %v2922
    %v3017 = vpack.c.b16 %v2925, %v2923
    %v3018 = vpack.c.b16 %v2928, %v2926
    %v3019 = vpack.c.b16 %v2929, %v2927
    %v3020 = vpack.c.b16 %v2932, %v2930
    %v3021 = vpack.c.b16 %v2933, %v2931
    %v3022 = vpack.c.b16 %v2936, %v2934
    %v3023 = vpack.c.b16 %v2937, %v2935
    %v3024 = vpack.c.b16 %v2940, %v2938
    %v3025 = vpack.c.b16 %v2941, %v2939
    %v3026 = vpack.c.b16 %v2944, %v2942
    %v3027 = vpack.c.b16 %v2945, %v2943
    %v3028 = vpack.c.b16 %v2948, %v2946
    %v3029 = vpack.c.b16 %v2949, %v2947
    %v3030 = vpack.c.b16 %v2952, %v2950
    %v3031 = vpack.c.b16 %v2953, %v2951
    %v3032 = vpack.c.b16 %v2956, %v2954
    %v3033 = vpack.c.b16 %v2957, %v2955
    %v3034 = vpack.c.b16 %v2960, %v2958
    %v3035 = vpack.c.b16 %v2961, %v2959
    %v3036 = vpack.c.b16 %v2964, %v2962
    %v3037 = vpack.c.b16 %v2965, %v2963
    %v3038 = vpack.c.b16 %v2968, %v2966
    %v3039 = vpack.c.b16 %v2969, %v2967
    %v3040 = vpack.c.b16 %v2972, %v2970
    %v3041 = vpack.c.b16 %v2973, %v2971
    %v3042 = vpack.c.b16 %v2976, %v2974
    %v3043 = vpack.c.b16 %v2977, %v2975
    %v3044 = vpack.c.b16 %v2980, %v2978
    %v3045 = vpack.c.b16 %v2981, %v2979
    %3110 = vmatpush.bf16.msra.mxu0 %v2996
    %3111 = vmatpush.bf16.msra.mxu0 %v2994
    %3112 = vmatpush.bf16.msra.mxu0 %v2992
    %3113 = vmatpush.bf16.msra.mxu0 %v2990
    %3114 = vmatpush.bf16.msra.mxu0 %v2988
    %3115 = vmatpush.bf16.msra.mxu0 %v2986
    %3116 = vmatpush.bf16.msra.mxu0 %v2984
    %3117 = vmatpush.bf16.msra.mxu0 %v2982
    %3118 = vmatmul.bf16.gmra.mxu0 %v2716
    %v3119 = vpop.f32.mrf.mxu0
    %v3120 = vadd.f32 %v2786, %v3119
    %v3121 = vpop.f32.mrf.mxu0
    %3122 = vdwg.mxu0
    %3123 = vmatpush.bf16.msra.mxu0 %v3012
    %3124 = vmatpush.bf16.msra.mxu0 %v3010
    %3125 = vmatpush.bf16.msra.mxu0 %v3008
    %3126 = vmatpush.bf16.msra.mxu0 %v3006
    %3127 = vmatpush.bf16.msra.mxu0 %v3004
    %3128 = vmatpush.bf16.msra.mxu0 %v3002
    %3129 = vmatpush.bf16.msra.mxu0 %v3000
    %3130 = vmatpush.bf16.msra.mxu0 %v2998
    %3131 = vmatmul.bf16.gmra.mxu0 %v2717
    %v3132 = vpop.f32.mrf.mxu0
    %v3133 = vadd.f32 %v3120, %v3132
    %v3134 = vpop.f32.mrf.mxu0
    %3135 = vdwg.mxu0
    %3136 = vmatpush.bf16.msra.mxu0 %v3028
    %3137 = vmatpush.bf16.msra.mxu0 %v3026
    %3138 = vmatpush.bf16.msra.mxu0 %v3024
    %3139 = vmatpush.bf16.msra.mxu0 %v3022
    %3140 = vmatpush.bf16.msra.mxu0 %v3020
    %3141 = vmatpush.bf16.msra.mxu0 %v3018
    %3142 = vmatpush.bf16.msra.mxu0 %v3016
    %3143 = vmatpush.bf16.msra.mxu0 %v3014
    %3144 = vmatmul.bf16.gmra.mxu0 %v2718
    %v3145 = vpop.f32.mrf.mxu0
    %v3146 = vadd.f32 %v3133, %v3145
    %v3147 = vpop.f32.mrf.mxu0
    %3148 = vdwg.mxu0
    %3149 = vmatpush.bf16.msra.mxu0 %v3044
    %3150 = vmatpush.bf16.msra.mxu0 %v3042
    %3151 = vmatpush.bf16.msra.mxu0 %v3040
    %3152 = vmatpush.bf16.msra.mxu0 %v3038
    %3153 = vmatpush.bf16.msra.mxu0 %v3036
    %3154 = vmatpush.bf16.msra.mxu0 %v3034
    %3155 = vmatpush.bf16.msra.mxu0 %v3032
    %3156 = vmatpush.bf16.msra.mxu0 %v3030
    %3157 = vmatmul.bf16.gmra.mxu0 %v2719
    %v3158 = vpop.f32.mrf.mxu0
    %v3159 = vadd.f32 %v3146, %v3158
    %v3160 = vpop.f32.mrf.mxu0
    %3161 = vdwg.mxu0
    %3162 = vmatpush.bf16.msra.mxu0 %v2997
    %3163 = vmatpush.bf16.msra.mxu0 %v2995
    %3164 = vmatpush.bf16.msra.mxu0 %v2993
    %3165 = vmatpush.bf16.msra.mxu0 %v2991
    %3166 = vmatpush.bf16.msra.mxu0 %v2989
    %3167 = vmatpush.bf16.msra.mxu0 %v2987
    %3168 = vmatpush.bf16.msra.mxu0 %v2985
    %3169 = vmatpush.bf16.msra.mxu0 %v2983
    %3170 = vmatmul.bf16.gmra.mxu0 %v2716
    %v3171 = vpop.f32.mrf.mxu0
    %v3172 = vadd.f32 %v2787, %v3171
    %v3173 = vpop.f32.mrf.mxu0
    %3174 = vdwg.mxu0
    %3175 = vmatpush.bf16.msra.mxu0 %v3013
    %3176 = vmatpush.bf16.msra.mxu0 %v3011
    %3177 = vmatpush.bf16.msra.mxu0 %v3009
    %3178 = vmatpush.bf16.msra.mxu0 %v3007
    %3179 = vmatpush.bf16.msra.mxu0 %v3005
    %3180 = vmatpush.bf16.msra.mxu0 %v3003
    %3181 = vmatpush.bf16.msra.mxu0 %v3001
    %3182 = vmatpush.bf16.msra.mxu0 %v2999
    %3183 = vmatmul.bf16.gmra.mxu0 %v2717
    %v3184 = vpop.f32.mrf.mxu0
    %v3185 = vadd.f32 %v3172, %v3184
    %v3186 = vpop.f32.mrf.mxu0
    %3187 = vdwg.mxu0
    %3188 = vmatpush.bf16.msra.mxu0 %v3029
    %3189 = vmatpush.bf16.msra.mxu0 %v3027
    %3190 = vmatpush.bf16.msra.mxu0 %v3025
    %3191 = vmatpush.bf16.msra.mxu0 %v3023
    %3192 = vmatpush.bf16.msra.mxu0 %v3021
    %3193 = vmatpush.bf16.msra.mxu0 %v3019
    %3194 = vmatpush.bf16.msra.mxu0 %v3017
    %3195 = vmatpush.bf16.msra.mxu0 %v3015
    %3196 = vmatmul.bf16.gmra.mxu0 %v2718
    %v3197 = vpop.f32.mrf.mxu0
    %v3198 = vadd.f32 %v3185, %v3197
    %v3199 = vpop.f32.mrf.mxu0
    %3200 = vdwg.mxu0
    %3201 = vmatpush.bf16.msra.mxu0 %v3045
    %3202 = vmatpush.bf16.msra.mxu0 %v3043
    %3203 = vmatpush.bf16.msra.mxu0 %v3041
    %3204 = vmatpush.bf16.msra.mxu0 %v3039
    %3205 = vmatpush.bf16.msra.mxu0 %v3037
    %3206 = vmatpush.bf16.msra.mxu0 %v3035
    %3207 = vmatpush.bf16.msra.mxu0 %v3033
    %3208 = vmatpush.bf16.msra.mxu0 %v3031
    %3209 = vmatmul.bf16.gmra.mxu0 %v2719
    %v3210 = vpop.f32.mrf.mxu0
    %v3211 = vadd.f32 %v3198, %v3210
    %v3212 = vpop.f32.mrf.mxu0
    %3213 = vdwg.mxu0
    %v3214 = vld [vmem:[#allocation5] sm:$0x3]
    %v3215 = vmul.f32 %v3211, 0.5
    %v3216 = vmul.f32 %v3215, 1.442695
    %v3217 = vpow.pop %v3216
    %v3218 = vmul.f32 %v3214, %v3217
    %v3219 = vadd.f32 %v3159, %v3218
    %v3220 = vpack.c.bf16 %v3219, %v3219
    %v3221 = vld [vmem:[#allocation14] sm:$0xff]
    %v3222 = vld [vmem:[#allocation14 + $0x8] sm:$0xff]
    %v3223 = vld [vmem:[#allocation14 + $0x10] sm:$0xff]
    %v3224 = vld [vmem:[#allocation14 + $0x18] sm:$0xff]
    %v3225 = vld [vmem:[#allocation14 + $0x20] sm:$0xff]
    %v3226 = vld [vmem:[#allocation14 + $0x28] sm:$0xff]
    %v3227 = vld [vmem:[#allocation14 + $0x30] sm:$0xff]
    %v3228 = vld [vmem:[#allocation14 + $0x38] sm:$0xff]
    %v3229 = vld [vmem:[#allocation14 + $0x40] sm:$0xff]
    %v3230 = vld [vmem:[#allocation14 + $0x48] sm:$0xff]
    %v3231 = vld [vmem:[#allocation14 + $0x50] sm:$0xff]
    %v3232 = vld [vmem:[#allocation14 + $0x58] sm:$0xff]
    %v3233 = vld [vmem:[#allocation14 + $0x60] sm:$0xff]
    %v3234 = vld [vmem:[#allocation14 + $0x68] sm:$0xff]
    %v3235 = vld [vmem:[#allocation14 + $0x70] sm:$0xff]
    %v3236 = vld [vmem:[#allocation14 + $0x78] sm:$0xff]
    %v3237 = vld [vmem:[#allocation14 + $0x80] sm:$0xff]
    %v3238 = vld [vmem:[#allocation14 + $0x88] sm:$0xff]
    %v3239 = vld [vmem:[#allocation14 + $0x90] sm:$0xff]
    %v3240 = vld [vmem:[#allocation14 + $0x98] sm:$0xff]
    %v3241 = vld [vmem:[#allocation14 + $0xa0] sm:$0xff]
    %v3242 = vld [vmem:[#allocation14 + $0xa8] sm:$0xff]
    %v3243 = vld [vmem:[#allocation14 + $0xb0] sm:$0xff]
    %v3244 = vld [vmem:[#allocation14 + $0xb8] sm:$0xff]
    %v3245 = vld [vmem:[#allocation14 + $0xc0] sm:$0xff]
    %v3246 = vld [vmem:[#allocation14 + $0xc8] sm:$0xff]
    %v3247 = vld [vmem:[#allocation14 + $0xd0] sm:$0xff]
    %v3248 = vld [vmem:[#allocation14 + $0xd8] sm:$0xff]
    %v3249 = vld [vmem:[#allocation14 + $0xe0] sm:$0xff]
    %v3250 = vld [vmem:[#allocation14 + $0xe8] sm:$0xff]
    %v3251 = vld [vmem:[#allocation14 + $0xf0] sm:$0xff]
    %v3252 = vld [vmem:[#allocation14 + $0xf8] sm:$0xff]
    %v3253 = vld [vmem:[#allocation16] sm:$0xf]
    %v3255 = vperm.slane %v3253, 0
    %v3256 = vperm.slane %v3253, 1
    %v3257 = vperm.slane %v3253, 2
    %v3258 = vperm.slane %v3253, 3
    %v3295 = vunpack.c.l.b16 %v3221
    %v3296 = vunpack.c.h.b16 %v3221
    %v3297 = vunpack.c.l.b16 %v3222
    %v3298 = vunpack.c.h.b16 %v3222
    %v3299 = vunpack.c.l.b16 %v3223
    %v3300 = vunpack.c.h.b16 %v3223
    %v3301 = vunpack.c.l.b16 %v3224
    %v3302 = vunpack.c.h.b16 %v3224
    %v3303 = vunpack.c.l.b16 %v3225
    %v3304 = vunpack.c.h.b16 %v3225
    %v3305 = vunpack.c.l.b16 %v3226
    %v3306 = vunpack.c.h.b16 %v3226
    %v3307 = vunpack.c.l.b16 %v3227
    %v3308 = vunpack.c.h.b16 %v3227
    %v3309 = vunpack.c.l.b16 %v3228
    %v3310 = vunpack.c.h.b16 %v3228
    %v3311 = vunpack.c.l.b16 %v3229
    %v3312 = vunpack.c.h.b16 %v3229
    %v3313 = vunpack.c.l.b16 %v3230
    %v3314 = vunpack.c.h.b16 %v3230
    %v3315 = vunpack.c.l.b16 %v3231
    %v3316 = vunpack.c.h.b16 %v3231
    %v3317 = vunpack.c.l.b16 %v3232
    %v3318 = vunpack.c.h.b16 %v3232
    %v3319 = vunpack.c.l.b16 %v3233
    %v3320 = vunpack.c.h.b16 %v3233
    %v3321 = vunpack.c.l.b16 %v3234
    %v3322 = vunpack.c.h.b16 %v3234
    %v3323 = vunpack.c.l.b16 %v3235
    %v3324 = vunpack.c.h.b16 %v3235
    %v3325 = vunpack.c.l.b16 %v3236
    %v3326 = vunpack.c.h.b16 %v3236
    %v3327 = vunpack.c.l.b16 %v3237
    %v3328 = vunpack.c.h.b16 %v3237
    %v3329 = vunpack.c.l.b16 %v3238
    %v3330 = vunpack.c.h.b16 %v3238
    %v3331 = vunpack.c.l.b16 %v3239
    %v3332 = vunpack.c.h.b16 %v3239
    %v3333 = vunpack.c.l.b16 %v3240
    %v3334 = vunpack.c.h.b16 %v3240
    %v3335 = vunpack.c.l.b16 %v3241
    %v3336 = vunpack.c.h.b16 %v3241
    %v3337 = vunpack.c.l.b16 %v3242
    %v3338 = vunpack.c.h.b16 %v3242
    %v3339 = vunpack.c.l.b16 %v3243
    %v3340 = vunpack.c.h.b16 %v3243
    %v3341 = vunpack.c.l.b16 %v3244
    %v3342 = vunpack.c.h.b16 %v3244
    %v3343 = vunpack.c.l.b16 %v3245
    %v3344 = vunpack.c.h.b16 %v3245
    %v3345 = vunpack.c.l.b16 %v3246
    %v3346 = vunpack.c.h.b16 %v3246
    %v3347 = vunpack.c.l.b16 %v3247
    %v3348 = vunpack.c.h.b16 %v3247
    %v3349 = vunpack.c.l.b16 %v3248
    %v3350 = vunpack.c.h.b16 %v3248
    %v3351 = vunpack.c.l.b16 %v3249
    %v3352 = vunpack.c.h.b16 %v3249
    %v3353 = vunpack.c.l.b16 %v3250
    %v3354 = vunpack.c.h.b16 %v3250
    %v3355 = vunpack.c.l.b16 %v3251
    %v3356 = vunpack.c.h.b16 %v3251
    %v3357 = vunpack.c.l.b16 %v3252
    %v3358 = vunpack.c.h.b16 %v3252
    %v3359 = vpack.c.b16 %v3299, %v3295
    %v3360 = vpack.c.b16 %v3300, %v3296
    %v3361 = vpack.c.b16 %v3301, %v3297
    %v3362 = vpack.c.b16 %v3302, %v3298
    %v3363 = vpack.c.b16 %v3307, %v3303
    %v3364 = vpack.c.b16 %v3308, %v3304
    %v3365 = vpack.c.b16 %v3309, %v3305
    %v3366 = vpack.c.b16 %v3310, %v3306
    %v3367 = vpack.c.b16 %v3315, %v3311
    %v3368 = vpack.c.b16 %v3316, %v3312
    %v3369 = vpack.c.b16 %v3317, %v3313
    %v3370 = vpack.c.b16 %v3318, %v3314
    %v3371 = vpack.c.b16 %v3323, %v3319
    %v3372 = vpack.c.b16 %v3324, %v3320
    %v3373 = vpack.c.b16 %v3325, %v3321
    %v3374 = vpack.c.b16 %v3326, %v3322
    %v3375 = vpack.c.b16 %v3331, %v3327
    %v3376 = vpack.c.b16 %v3332, %v3328
    %v3377 = vpack.c.b16 %v3333, %v3329
    %v3378 = vpack.c.b16 %v3334, %v3330
    %v3379 = vpack.c.b16 %v3339, %v3335
    %v3380 = vpack.c.b16 %v3340, %v3336
    %v3381 = vpack.c.b16 %v3341, %v3337
    %v3382 = vpack.c.b16 %v3342, %v3338
    %v3383 = vpack.c.b16 %v3347, %v3343
    %v3384 = vpack.c.b16 %v3348, %v3344
    %v3385 = vpack.c.b16 %v3349, %v3345
    %v3386 = vpack.c.b16 %v3350, %v3346
    %v3387 = vpack.c.b16 %v3355, %v3351
    %v3388 = vpack.c.b16 %v3356, %v3352
    %v3389 = vpack.c.b16 %v3357, %v3353
    %v3390 = vpack.c.b16 %v3358, %v3354
    %3423 = vmatpush.bf16.msra.mxu0 %v3387
    %3424 = vmatpush.bf16.msra.mxu0 %v3383
    %3425 = vmatpush.bf16.msra.mxu0 %v3379
    %3426 = vmatpush.bf16.msra.mxu0 %v3375
    %3427 = vmatpush.bf16.msra.mxu0 %v3371
    %3428 = vmatpush.bf16.msra.mxu0 %v3367
    %3429 = vmatpush.bf16.msra.mxu0 %v3363
    %3430 = vmatpush.bf16.msra.mxu0 %v3359
    %3431 = vmatmul.bf16.gmra.mxu0 %v3220
    %v3432 = vpop.f32.mrf.mxu0
    %v3433 = vadd.f32 %v3255, %v3432
    %v3434 = vpop.f32.mrf.mxu0
    %3435 = vdwg.mxu0
    %3436 = vmatpush.bf16.msra.mxu0 %v3388
    %3437 = vmatpush.bf16.msra.mxu0 %v3384
    %3438 = vmatpush.bf16.msra.mxu0 %v3380
    %3439 = vmatpush.bf16.msra.mxu0 %v3376
    %3440 = vmatpush.bf16.msra.mxu0 %v3372
    %3441 = vmatpush.bf16.msra.mxu0 %v3368
    %3442 = vmatpush.bf16.msra.mxu0 %v3364
    %3443 = vmatpush.bf16.msra.mxu0 %v3360
    %3444 = vmatmul.bf16.gmra.mxu0 %v3220
    %v3445 = vpop.f32.mrf.mxu0
    %v3446 = vadd.f32 %v3256, %v3445
    %v3447 = vpop.f32.mrf.mxu0
    %3448 = vdwg.mxu0
    %3449 = vmatpush.bf16.msra.mxu0 %v3389
    %3450 = vmatpush.bf16.msra.mxu0 %v3385
    %3451 = vmatpush.bf16.msra.mxu0 %v3381
    %3452 = vmatpush.bf16.msra.mxu0 %v3377
    %3453 = vmatpush.bf16.msra.mxu0 %v3373
    %3454 = vmatpush.bf16.msra.mxu0 %v3369
    %3455 = vmatpush.bf16.msra.mxu0 %v3365
    %3456 = vmatpush.bf16.msra.mxu0 %v3361
    %3457 = vmatmul.bf16.gmra.mxu0 %v3220
    %v3458 = vpop.f32.mrf.mxu0
    %v3459 = vadd.f32 %v3257, %v3458
    %v3460 = vpop.f32.mrf.mxu0
    %3461 = vdwg.mxu0
    %3462 = vmatpush.bf16.msra.mxu0 %v3390
    %3463 = vmatpush.bf16.msra.mxu0 %v3386
    %3464 = vmatpush.bf16.msra.mxu0 %v3382
    %3465 = vmatpush.bf16.msra.mxu0 %v3378
    %3466 = vmatpush.bf16.msra.mxu0 %v3374
    %3467 = vmatpush.bf16.msra.mxu0 %v3370
    %3468 = vmatpush.bf16.msra.mxu0 %v3366
    %3469 = vmatpush.bf16.msra.mxu0 %v3362
    %3470 = vmatmul.bf16.gmra.mxu0 %v3220
    %v3471 = vpop.f32.mrf.mxu0
    %v3472 = vadd.f32 %v3258, %v3471
    %v3473 = vpop.f32.mrf.mxu0
    %3474 = vdwg.mxu0
    %v3475 = vmax.f32 %v3433, 0.0
    %v3476 = vmax.f32 %v3446, 0.0
    %v3477 = vmax.f32 %v3459, 0.0
    %v3478 = vmax.f32 %v3472, 0.0
    %v3479 = vpack.c.bf16 %v3475, %v3475
    %v3480 = vpack.c.bf16 %v3476, %v3476
    %v3481 = vpack.c.bf16 %v3477, %v3477
    %v3482 = vpack.c.bf16 %v3478, %v3478
    %v3483 = vld [vmem:[#allocation17] sm:$0xff]
    %v3484 = vld [vmem:[#allocation17 + $0x8] sm:$0xff]
    %v3485 = vld [vmem:[#allocation17 + $0x10] sm:$0xff]
    %v3486 = vld [vmem:[#allocation17 + $0x18] sm:$0xff]
    %v3487 = vld [vmem:[#allocation17 + $0x20] sm:$0xff]
    %v3488 = vld [vmem:[#allocation17 + $0x28] sm:$0xff]
    %v3489 = vld [vmem:[#allocation17 + $0x30] sm:$0xff]
    %v3490 = vld [vmem:[#allocation17 + $0x38] sm:$0xff]
    %v3491 = vld [vmem:[#allocation17 + $0x40] sm:$0xff]
    %v3492 = vld [vmem:[#allocation17 + $0x48] sm:$0xff]
    %v3493 = vld [vmem:[#allocation17 + $0x50] sm:$0xff]
    %v3494 = vld [vmem:[#allocation17 + $0x58] sm:$0xff]
    %v3495 = vld [vmem:[#allocation17 + $0x60] sm:$0xff]
    %v3496 = vld [vmem:[#allocation17 + $0x68] sm:$0xff]
    %v3497 = vld [vmem:[#allocation17 + $0x70] sm:$0xff]
    %v3498 = vld [vmem:[#allocation17 + $0x78] sm:$0xff]
    %v3499 = vld [vmem:[#allocation17 + $0x80] sm:$0xff]
    %v3500 = vld [vmem:[#allocation17 + $0x88] sm:$0xff]
    %v3501 = vld [vmem:[#allocation17 + $0x90] sm:$0xff]
    %v3502 = vld [vmem:[#allocation17 + $0x98] sm:$0xff]
    %v3503 = vld [vmem:[#allocation17 + $0xa0] sm:$0xff]
    %v3504 = vld [vmem:[#allocation17 + $0xa8] sm:$0xff]
    %v3505 = vld [vmem:[#allocation17 + $0xb0] sm:$0xff]
    %v3506 = vld [vmem:[#allocation17 + $0xb8] sm:$0xff]
    %v3507 = vld [vmem:[#allocation17 + $0xc0] sm:$0xff]
    %v3508 = vld [vmem:[#allocation17 + $0xc8] sm:$0xff]
    %v3509 = vld [vmem:[#allocation17 + $0xd0] sm:$0xff]
    %v3510 = vld [vmem:[#allocation17 + $0xd8] sm:$0xff]
    %v3511 = vld [vmem:[#allocation17 + $0xe0] sm:$0xff]
    %v3512 = vld [vmem:[#allocation17 + $0xe8] sm:$0xff]
    %v3513 = vld [vmem:[#allocation17 + $0xf0] sm:$0xff]
    %v3514 = vld [vmem:[#allocation17 + $0xf8] sm:$0xff]
    %v3515 = vld [vmem:[#allocation17 + $0x100] sm:$0xff]
    %v3516 = vld [vmem:[#allocation17 + $0x108] sm:$0xff]
    %v3517 = vld [vmem:[#allocation17 + $0x110] sm:$0xff]
    %v3518 = vld [vmem:[#allocation17 + $0x118] sm:$0xff]
    %v3519 = vld [vmem:[#allocation17 + $0x120] sm:$0xff]
    %v3520 = vld [vmem:[#allocation17 + $0x128] sm:$0xff]
    %v3521 = vld [vmem:[#allocation17 + $0x130] sm:$0xff]
    %v3522 = vld [vmem:[#allocation17 + $0x138] sm:$0xff]
    %v3523 = vld [vmem:[#allocation17 + $0x140] sm:$0xff]
    %v3524 = vld [vmem:[#allocation17 + $0x148] sm:$0xff]
    %v3525 = vld [vmem:[#allocation17 + $0x150] sm:$0xff]
    %v3526 = vld [vmem:[#allocation17 + $0x158] sm:$0xff]
    %v3527 = vld [vmem:[#allocation17 + $0x160] sm:$0xff]
    %v3528 = vld [vmem:[#allocation17 + $0x168] sm:$0xff]
    %v3529 = vld [vmem:[#allocation17 + $0x170] sm:$0xff]
    %v3530 = vld [vmem:[#allocation17 + $0x178] sm:$0xff]
    %v3531 = vld [vmem:[#allocation17 + $0x180] sm:$0xff]
    %v3532 = vld [vmem:[#allocation17 + $0x188] sm:$0xff]
    %v3533 = vld [vmem:[#allocation17 + $0x190] sm:$0xff]
    %v3534 = vld [vmem:[#allocation17 + $0x198] sm:$0xff]
    %v3535 = vld [vmem:[#allocation17 + $0x1a0] sm:$0xff]
    %v3536 = vld [vmem:[#allocation17 + $0x1a8] sm:$0xff]
    %v3537 = vld [vmem:[#allocation17 + $0x1b0] sm:$0xff]
    %v3538 = vld [vmem:[#allocation17 + $0x1b8] sm:$0xff]
    %v3539 = vld [vmem:[#allocation17 + $0x1c0] sm:$0xff]
    %v3540 = vld [vmem:[#allocation17 + $0x1c8] sm:$0xff]
    %v3541 = vld [vmem:[#allocation17 + $0x1d0] sm:$0xff]
    %v3542 = vld [vmem:[#allocation17 + $0x1d8] sm:$0xff]
    %v3543 = vld [vmem:[#allocation17 + $0x1e0] sm:$0xff]
    %v3544 = vld [vmem:[#allocation17 + $0x1e8] sm:$0xff]
    %v3545 = vld [vmem:[#allocation17 + $0x1f0] sm:$0xff]
    %v3546 = vld [vmem:[#allocation17 + $0x1f8] sm:$0xff]
    %v3547 = vld [vmem:[#allocation17 + $0x200] sm:$0xff]
    %v3548 = vld [vmem:[#allocation17 + $0x208] sm:$0xff]
    %v3549 = vld [vmem:[#allocation17 + $0x210] sm:$0xff]
    %v3550 = vld [vmem:[#allocation17 + $0x218] sm:$0xff]
    %v3551 = vld [vmem:[#allocation17 + $0x220] sm:$0xff]
    %v3552 = vld [vmem:[#allocation17 + $0x228] sm:$0xff]
    %v3553 = vld [vmem:[#allocation17 + $0x230] sm:$0xff]
    %v3554 = vld [vmem:[#allocation17 + $0x238] sm:$0xff]
    %v3555 = vld [vmem:[#allocation17 + $0x240] sm:$0xff]
    %v3556 = vld [vmem:[#allocation17 + $0x248] sm:$0xff]
    %v3557 = vld [vmem:[#allocation17 + $0x250] sm:$0xff]
    %v3558 = vld [vmem:[#allocation17 + $0x258] sm:$0xff]
    %v3559 = vld [vmem:[#allocation17 + $0x260] sm:$0xff]
    %v3560 = vld [vmem:[#allocation17 + $0x268] sm:$0xff]
    %v3561 = vld [vmem:[#allocation17 + $0x270] sm:$0xff]
    %v3562 = vld [vmem:[#allocation17 + $0x278] sm:$0xff]
    %v3563 = vld [vmem:[#allocation17 + $0x280] sm:$0xff]
    %v3564 = vld [vmem:[#allocation17 + $0x288] sm:$0xff]
    %v3565 = vld [vmem:[#allocation17 + $0x290] sm:$0xff]
    %v3566 = vld [vmem:[#allocation17 + $0x298] sm:$0xff]
    %v3567 = vld [vmem:[#allocation17 + $0x2a0] sm:$0xff]
    %v3568 = vld [vmem:[#allocation17 + $0x2a8] sm:$0xff]
    %v3569 = vld [vmem:[#allocation17 + $0x2b0] sm:$0xff]
    %v3570 = vld [vmem:[#allocation17 + $0x2b8] sm:$0xff]
    %v3571 = vld [vmem:[#allocation17 + $0x2c0] sm:$0xff]
    %v3572 = vld [vmem:[#allocation17 + $0x2c8] sm:$0xff]
    %v3573 = vld [vmem:[#allocation17 + $0x2d0] sm:$0xff]
    %v3574 = vld [vmem:[#allocation17 + $0x2d8] sm:$0xff]
    %v3575 = vld [vmem:[#allocation17 + $0x2e0] sm:$0xff]
    %v3576 = vld [vmem:[#allocation17 + $0x2e8] sm:$0xff]
    %v3577 = vld [vmem:[#allocation17 + $0x2f0] sm:$0xff]
    %v3578 = vld [vmem:[#allocation17 + $0x2f8] sm:$0xff]
    %v3579 = vld [vmem:[#allocation17 + $0x300] sm:$0xff]
    %v3580 = vld [vmem:[#allocation17 + $0x308] sm:$0xff]
    %v3581 = vld [vmem:[#allocation17 + $0x310] sm:$0xff]
    %v3582 = vld [vmem:[#allocation17 + $0x318] sm:$0xff]
    %v3583 = vld [vmem:[#allocation17 + $0x320] sm:$0xff]
    %v3584 = vld [vmem:[#allocation17 + $0x328] sm:$0xff]
    %v3585 = vld [vmem:[#allocation17 + $0x330] sm:$0xff]
    %v3586 = vld [vmem:[#allocation17 + $0x338] sm:$0xff]
    %v3587 = vld [vmem:[#allocation17 + $0x340] sm:$0xff]
    %v3588 = vld [vmem:[#allocation17 + $0x348] sm:$0xff]
    %v3589 = vld [vmem:[#allocation17 + $0x350] sm:$0xff]
    %v3590 = vld [vmem:[#allocation17 + $0x358] sm:$0xff]
    %v3591 = vld [vmem:[#allocation17 + $0x360] sm:$0xff]
    %v3592 = vld [vmem:[#allocation17 + $0x368] sm:$0xff]
    %v3593 = vld [vmem:[#allocation17 + $0x370] sm:$0xff]
    %v3594 = vld [vmem:[#allocation17 + $0x378] sm:$0xff]
    %v3595 = vld [vmem:[#allocation17 + $0x380] sm:$0xff]
    %v3596 = vld [vmem:[#allocation17 + $0x388] sm:$0xff]
    %v3597 = vld [vmem:[#allocation17 + $0x390] sm:$0xff]
    %v3598 = vld [vmem:[#allocation17 + $0x398] sm:$0xff]
    %v3599 = vld [vmem:[#allocation17 + $0x3a0] sm:$0xff]
    %v3600 = vld [vmem:[#allocation17 + $0x3a8] sm:$0xff]
    %v3601 = vld [vmem:[#allocation17 + $0x3b0] sm:$0xff]
    %v3602 = vld [vmem:[#allocation17 + $0x3b8] sm:$0xff]
    %v3603 = vld [vmem:[#allocation17 + $0x3c0] sm:$0xff]
    %v3604 = vld [vmem:[#allocation17 + $0x3c8] sm:$0xff]
    %v3605 = vld [vmem:[#allocation17 + $0x3d0] sm:$0xff]
    %v3606 = vld [vmem:[#allocation17 + $0x3d8] sm:$0xff]
    %v3607 = vld [vmem:[#allocation17 + $0x3e0] sm:$0xff]
    %v3608 = vld [vmem:[#allocation17 + $0x3e8] sm:$0xff]
    %v3609 = vld [vmem:[#allocation17 + $0x3f0] sm:$0xff]
    %v3610 = vld [vmem:[#allocation17 + $0x3f8] sm:$0xff]
    %v3611 = vld [vmem:[#allocation19] sm:$0xf]
    %v3613 = vperm.slane %v3611, 0
    %v3614 = vperm.slane %v3611, 1
    %v3615 = vperm.slane %v3611, 2
    %v3616 = vperm.slane %v3611, 3
    %v3749 = vunpack.c.l.b16 %v3483
    %v3750 = vunpack.c.h.b16 %v3483
    %v3751 = vunpack.c.l.b16 %v3484
    %v3752 = vunpack.c.h.b16 %v3484
    %v3753 = vunpack.c.l.b16 %v3485
    %v3754 = vunpack.c.h.b16 %v3485
    %v3755 = vunpack.c.l.b16 %v3486
    %v3756 = vunpack.c.h.b16 %v3486
    %v3757 = vunpack.c.l.b16 %v3487
    %v3758 = vunpack.c.h.b16 %v3487
    %v3759 = vunpack.c.l.b16 %v3488
    %v3760 = vunpack.c.h.b16 %v3488
    %v3761 = vunpack.c.l.b16 %v3489
    %v3762 = vunpack.c.h.b16 %v3489
    %v3763 = vunpack.c.l.b16 %v3490
    %v3764 = vunpack.c.h.b16 %v3490
    %v3765 = vunpack.c.l.b16 %v3491
    %v3766 = vunpack.c.h.b16 %v3491
    %v3767 = vunpack.c.l.b16 %v3492
    %v3768 = vunpack.c.h.b16 %v3492
    %v3769 = vunpack.c.l.b16 %v3493
    %v3770 = vunpack.c.h.b16 %v3493
    %v3771 = vunpack.c.l.b16 %v3494
    %v3772 = vunpack.c.h.b16 %v3494
    %v3773 = vunpack.c.l.b16 %v3495
    %v3774 = vunpack.c.h.b16 %v3495
    %v3775 = vunpack.c.l.b16 %v3496
    %v3776 = vunpack.c.h.b16 %v3496
    %v3777 = vunpack.c.l.b16 %v3497
    %v3778 = vunpack.c.h.b16 %v3497
    %v3779 = vunpack.c.l.b16 %v3498
    %v3780 = vunpack.c.h.b16 %v3498
    %v3781 = vunpack.c.l.b16 %v3499
    %v3782 = vunpack.c.h.b16 %v3499
    %v3783 = vunpack.c.l.b16 %v3500
    %v3784 = vunpack.c.h.b16 %v3500
    %v3785 = vunpack.c.l.b16 %v3501
    %v3786 = vunpack.c.h.b16 %v3501
    %v3787 = vunpack.c.l.b16 %v3502
    %v3788 = vunpack.c.h.b16 %v3502
    %v3789 = vunpack.c.l.b16 %v3503
    %v3790 = vunpack.c.h.b16 %v3503
    %v3791 = vunpack.c.l.b16 %v3504
    %v3792 = vunpack.c.h.b16 %v3504
    %v3793 = vunpack.c.l.b16 %v3505
    %v3794 = vunpack.c.h.b16 %v3505
    %v3795 = vunpack.c.l.b16 %v3506
    %v3796 = vunpack.c.h.b16 %v3506
    %v3797 = vunpack.c.l.b16 %v3507
    %v3798 = vunpack.c.h.b16 %v3507
    %v3799 = vunpack.c.l.b16 %v3508
    %v3800 = vunpack.c.h.b16 %v3508
    %v3801 = vunpack.c.l.b16 %v3509
    %v3802 = vunpack.c.h.b16 %v3509
    %v3803 = vunpack.c.l.b16 %v3510
    %v3804 = vunpack.c.h.b16 %v3510
    %v3805 = vunpack.c.l.b16 %v3511
    %v3806 = vunpack.c.h.b16 %v3511
    %v3807 = vunpack.c.l.b16 %v3512
    %v3808 = vunpack.c.h.b16 %v3512
    %v3809 = vunpack.c.l.b16 %v3513
    %v3810 = vunpack.c.h.b16 %v3513
    %v3811 = vunpack.c.l.b16 %v3514
    %v3812 = vunpack.c.h.b16 %v3514
    %v3813 = vunpack.c.l.b16 %v3515
    %v3814 = vunpack.c.h.b16 %v3515
    %v3815 = vunpack.c.l.b16 %v3516
    %v3816 = vunpack.c.h.b16 %v3516
    %v3817 = vunpack.c.l.b16 %v3517
    %v3818 = vunpack.c.h.b16 %v3517
    %v3819 = vunpack.c.l.b16 %v3518
    %v3820 = vunpack.c.h.b16 %v3518
    %v3821 = vunpack.c.l.b16 %v3519
    %v3822 = vunpack.c.h.b16 %v3519
    %v3823 = vunpack.c.l.b16 %v3520
    %v3824 = vunpack.c.h.b16 %v3520
    %v3825 = vunpack.c.l.b16 %v3521
    %v3826 = vunpack.c.h.b16 %v3521
    %v3827 = vunpack.c.l.b16 %v3522
    %v3828 = vunpack.c.h.b16 %v3522
    %v3829 = vunpack.c.l.b16 %v3523
    %v3830 = vunpack.c.h.b16 %v3523
    %v3831 = vunpack.c.l.b16 %v3524
    %v3832 = vunpack.c.h.b16 %v3524
    %v3833 = vunpack.c.l.b16 %v3525
    %v3834 = vunpack.c.h.b16 %v3525
    %v3835 = vunpack.c.l.b16 %v3526
    %v3836 = vunpack.c.h.b16 %v3526
    %v3837 = vunpack.c.l.b16 %v3527
    %v3838 = vunpack.c.h.b16 %v3527
    %v3839 = vunpack.c.l.b16 %v3528
    %v3840 = vunpack.c.h.b16 %v3528
    %v3841 = vunpack.c.l.b16 %v3529
    %v3842 = vunpack.c.h.b16 %v3529
    %v3843 = vunpack.c.l.b16 %v3530
    %v3844 = vunpack.c.h.b16 %v3530
    %v3845 = vunpack.c.l.b16 %v3531
    %v3846 = vunpack.c.h.b16 %v3531
    %v3847 = vunpack.c.l.b16 %v3532
    %v3848 = vunpack.c.h.b16 %v3532
    %v3849 = vunpack.c.l.b16 %v3533
    %v3850 = vunpack.c.h.b16 %v3533
    %v3851 = vunpack.c.l.b16 %v3534
    %v3852 = vunpack.c.h.b16 %v3534
    %v3853 = vunpack.c.l.b16 %v3535
    %v3854 = vunpack.c.h.b16 %v3535
    %v3855 = vunpack.c.l.b16 %v3536
    %v3856 = vunpack.c.h.b16 %v3536
    %v3857 = vunpack.c.l.b16 %v3537
    %v3858 = vunpack.c.h.b16 %v3537
    %v3859 = vunpack.c.l.b16 %v3538
    %v3860 = vunpack.c.h.b16 %v3538
    %v3861 = vunpack.c.l.b16 %v3539
    %v3862 = vunpack.c.h.b16 %v3539
    %v3863 = vunpack.c.l.b16 %v3540
    %v3864 = vunpack.c.h.b16 %v3540
    %v3865 = vunpack.c.l.b16 %v3541
    %v3866 = vunpack.c.h.b16 %v3541
    %v3867 = vunpack.c.l.b16 %v3542
    %v3868 = vunpack.c.h.b16 %v3542
    %v3869 = vunpack.c.l.b16 %v3543
    %v3870 = vunpack.c.h.b16 %v3543
    %v3871 = vunpack.c.l.b16 %v3544
    %v3872 = vunpack.c.h.b16 %v3544
    %v3873 = vunpack.c.l.b16 %v3545
    %v3874 = vunpack.c.h.b16 %v3545
    %v3875 = vunpack.c.l.b16 %v3546
    %v3876 = vunpack.c.h.b16 %v3546
    %v3877 = vunpack.c.l.b16 %v3547
    %v3878 = vunpack.c.h.b16 %v3547
    %v3879 = vunpack.c.l.b16 %v3548
    %v3880 = vunpack.c.h.b16 %v3548
    %v3881 = vunpack.c.l.b16 %v3549
    %v3882 = vunpack.c.h.b16 %v3549
    %v3883 = vunpack.c.l.b16 %v3550
    %v3884 = vunpack.c.h.b16 %v3550
    %v3885 = vunpack.c.l.b16 %v3551
    %v3886 = vunpack.c.h.b16 %v3551
    %v3887 = vunpack.c.l.b16 %v3552
    %v3888 = vunpack.c.h.b16 %v3552
    %v3889 = vunpack.c.l.b16 %v3553
    %v3890 = vunpack.c.h.b16 %v3553
    %v3891 = vunpack.c.l.b16 %v3554
    %v3892 = vunpack.c.h.b16 %v3554
    %v3893 = vunpack.c.l.b16 %v3555
    %v3894 = vunpack.c.h.b16 %v3555
    %v3895 = vunpack.c.l.b16 %v3556
    %v3896 = vunpack.c.h.b16 %v3556
    %v3897 = vunpack.c.l.b16 %v3557
    %v3898 = vunpack.c.h.b16 %v3557
    %v3899 = vunpack.c.l.b16 %v3558
    %v3900 = vunpack.c.h.b16 %v3558
    %v3901 = vunpack.c.l.b16 %v3559
    %v3902 = vunpack.c.h.b16 %v3559
    %v3903 = vunpack.c.l.b16 %v3560
    %v3904 = vunpack.c.h.b16 %v3560
    %v3905 = vunpack.c.l.b16 %v3561
    %v3906 = vunpack.c.h.b16 %v3561
    %v3907 = vunpack.c.l.b16 %v3562
    %v3908 = vunpack.c.h.b16 %v3562
    %v3909 = vunpack.c.l.b16 %v3563
    %v3910 = vunpack.c.h.b16 %v3563
    %v3911 = vunpack.c.l.b16 %v3564
    %v3912 = vunpack.c.h.b16 %v3564
    %v3913 = vunpack.c.l.b16 %v3565
    %v3914 = vunpack.c.h.b16 %v3565
    %v3915 = vunpack.c.l.b16 %v3566
    %v3916 = vunpack.c.h.b16 %v3566
    %v3917 = vunpack.c.l.b16 %v3567
    %v3918 = vunpack.c.h.b16 %v3567
    %v3919 = vunpack.c.l.b16 %v3568
    %v3920 = vunpack.c.h.b16 %v3568
    %v3921 = vunpack.c.l.b16 %v3569
    %v3922 = vunpack.c.h.b16 %v3569
    %v3923 = vunpack.c.l.b16 %v3570
    %v3924 = vunpack.c.h.b16 %v3570
    %v3925 = vunpack.c.l.b16 %v3571
    %v3926 = vunpack.c.h.b16 %v3571
    %v3927 = vunpack.c.l.b16 %v3572
    %v3928 = vunpack.c.h.b16 %v3572
    %v3929 = vunpack.c.l.b16 %v3573
    %v3930 = vunpack.c.h.b16 %v3573
    %v3931 = vunpack.c.l.b16 %v3574
    %v3932 = vunpack.c.h.b16 %v3574
    %v3933 = vunpack.c.l.b16 %v3575
    %v3934 = vunpack.c.h.b16 %v3575
    %v3935 = vunpack.c.l.b16 %v3576
    %v3936 = vunpack.c.h.b16 %v3576
    %v3937 = vunpack.c.l.b16 %v3577
    %v3938 = vunpack.c.h.b16 %v3577
    %v3939 = vunpack.c.l.b16 %v3578
    %v3940 = vunpack.c.h.b16 %v3578
    %v3941 = vunpack.c.l.b16 %v3579
    %v3942 = vunpack.c.h.b16 %v3579
    %v3943 = vunpack.c.l.b16 %v3580
    %v3944 = vunpack.c.h.b16 %v3580
    %v3945 = vunpack.c.l.b16 %v3581
    %v3946 = vunpack.c.h.b16 %v3581
    %v3947 = vunpack.c.l.b16 %v3582
    %v3948 = vunpack.c.h.b16 %v3582
    %v3949 = vunpack.c.l.b16 %v3583
    %v3950 = vunpack.c.h.b16 %v3583
    %v3951 = vunpack.c.l.b16 %v3584
    %v3952 = vunpack.c.h.b16 %v3584
    %v3953 = vunpack.c.l.b16 %v3585
    %v3954 = vunpack.c.h.b16 %v3585
    %v3955 = vunpack.c.l.b16 %v3586
    %v3956 = vunpack.c.h.b16 %v3586
    %v3957 = vunpack.c.l.b16 %v3587
    %v3958 = vunpack.c.h.b16 %v3587
    %v3959 = vunpack.c.l.b16 %v3588
    %v3960 = vunpack.c.h.b16 %v3588
    %v3961 = vunpack.c.l.b16 %v3589
    %v3962 = vunpack.c.h.b16 %v3589
    %v3963 = vunpack.c.l.b16 %v3590
    %v3964 = vunpack.c.h.b16 %v3590
    %v3965 = vunpack.c.l.b16 %v3591
    %v3966 = vunpack.c.h.b16 %v3591
    %v3967 = vunpack.c.l.b16 %v3592
    %v3968 = vunpack.c.h.b16 %v3592
    %v3969 = vunpack.c.l.b16 %v3593
    %v3970 = vunpack.c.h.b16 %v3593
    %v3971 = vunpack.c.l.b16 %v3594
    %v3972 = vunpack.c.h.b16 %v3594
    %v3973 = vunpack.c.l.b16 %v3595
    %v3974 = vunpack.c.h.b16 %v3595
    %v3975 = vunpack.c.l.b16 %v3596
    %v3976 = vunpack.c.h.b16 %v3596
    %v3977 = vunpack.c.l.b16 %v3597
    %v3978 = vunpack.c.h.b16 %v3597
    %v3979 = vunpack.c.l.b16 %v3598
    %v3980 = vunpack.c.h.b16 %v3598
    %v3981 = vunpack.c.l.b16 %v3599
    %v3982 = vunpack.c.h.b16 %v3599
    %v3983 = vunpack.c.l.b16 %v3600
    %v3984 = vunpack.c.h.b16 %v3600
    %v3985 = vunpack.c.l.b16 %v3601
    %v3986 = vunpack.c.h.b16 %v3601
    %v3987 = vunpack.c.l.b16 %v3602
    %v3988 = vunpack.c.h.b16 %v3602
    %v3989 = vunpack.c.l.b16 %v3603
    %v3990 = vunpack.c.h.b16 %v3603
    %v3991 = vunpack.c.l.b16 %v3604
    %v3992 = vunpack.c.h.b16 %v3604
    %v3993 = vunpack.c.l.b16 %v3605
    %v3994 = vunpack.c.h.b16 %v3605
    %v3995 = vunpack.c.l.b16 %v3606
    %v3996 = vunpack.c.h.b16 %v3606
    %v3997 = vunpack.c.l.b16 %v3607
    %v3998 = vunpack.c.h.b16 %v3607
    %v3999 = vunpack.c.l.b16 %v3608
    %v4000 = vunpack.c.h.b16 %v3608
    %v4001 = vunpack.c.l.b16 %v3609
    %v4002 = vunpack.c.h.b16 %v3609
    %v4003 = vunpack.c.l.b16 %v3610
    %v4004 = vunpack.c.h.b16 %v3610
    %v4005 = vpack.c.b16 %v3753, %v3749
    %v4006 = vpack.c.b16 %v3754, %v3750
    %v4007 = vpack.c.b16 %v3755, %v3751
    %v4008 = vpack.c.b16 %v3756, %v3752
    %v4009 = vpack.c.b16 %v3761, %v3757
    %v4010 = vpack.c.b16 %v3762, %v3758
    %v4011 = vpack.c.b16 %v3763, %v3759
    %v4012 = vpack.c.b16 %v3764, %v3760
    %v4013 = vpack.c.b16 %v3769, %v3765
    %v4014 = vpack.c.b16 %v3770, %v3766
    %v4015 = vpack.c.b16 %v3771, %v3767
    %v4016 = vpack.c.b16 %v3772, %v3768
    %v4017 = vpack.c.b16 %v3777, %v3773
    %v4018 = vpack.c.b16 %v3778, %v3774
    %v4019 = vpack.c.b16 %v3779, %v3775
    %v4020 = vpack.c.b16 %v3780, %v3776
    %v4021 = vpack.c.b16 %v3785, %v3781
    %v4022 = vpack.c.b16 %v3786, %v3782
    %v4023 = vpack.c.b16 %v3787, %v3783
    %v4024 = vpack.c.b16 %v3788, %v3784
    %v4025 = vpack.c.b16 %v3793, %v3789
    %v4026 = vpack.c.b16 %v3794, %v3790
    %v4027 = vpack.c.b16 %v3795, %v3791
    %v4028 = vpack.c.b16 %v3796, %v3792
    %v4029 = vpack.c.b16 %v3801, %v3797
    %v4030 = vpack.c.b16 %v3802, %v3798
    %v4031 = vpack.c.b16 %v3803, %v3799
    %v4032 = vpack.c.b16 %v3804, %v3800
    %v4033 = vpack.c.b16 %v3809, %v3805
    %v4034 = vpack.c.b16 %v3810, %v3806
    %v4035 = vpack.c.b16 %v3811, %v3807
    %v4036 = vpack.c.b16 %v3812, %v3808
    %v4037 = vpack.c.b16 %v3817, %v3813
    %v4038 = vpack.c.b16 %v3818, %v3814
    %v4039 = vpack.c.b16 %v3819, %v3815
    %v4040 = vpack.c.b16 %v3820, %v3816
    %v4041 = vpack.c.b16 %v3825, %v3821
    %v4042 = vpack.c.b16 %v3826, %v3822
    %v4043 = vpack.c.b16 %v3827, %v3823
    %v4044 = vpack.c.b16 %v3828, %v3824
    %v4045 = vpack.c.b16 %v3833, %v3829
    %v4046 = vpack.c.b16 %v3834, %v3830
    %v4047 = vpack.c.b16 %v3835, %v3831
    %v4048 = vpack.c.b16 %v3836, %v3832
    %v4049 = vpack.c.b16 %v3841, %v3837
    %v4050 = vpack.c.b16 %v3842, %v3838
    %v4051 = vpack.c.b16 %v3843, %v3839
    %v4052 = vpack.c.b16 %v3844, %v3840
    %v4053 = vpack.c.b16 %v3849, %v3845
    %v4054 = vpack.c.b16 %v3850, %v3846
    %v4055 = vpack.c.b16 %v3851, %v3847
    %v4056 = vpack.c.b16 %v3852, %v3848
    %v4057 = vpack.c.b16 %v3857, %v3853
    %v4058 = vpack.c.b16 %v3858, %v3854
    %v4059 = vpack.c.b16 %v3859, %v3855
    %v4060 = vpack.c.b16 %v3860, %v3856
    %v4061 = vpack.c.b16 %v3865, %v3861
    %v4062 = vpack.c.b16 %v3866, %v3862
    %v4063 = vpack.c.b16 %v3867, %v3863
    %v4064 = vpack.c.b16 %v3868, %v3864
    %v4065 = vpack.c.b16 %v3873, %v3869
    %v4066 = vpack.c.b16 %v3874, %v3870
    %v4067 = vpack.c.b16 %v3875, %v3871
    %v4068 = vpack.c.b16 %v3876, %v3872
    %v4069 = vpack.c.b16 %v3881, %v3877
    %v4070 = vpack.c.b16 %v3882, %v3878
    %v4071 = vpack.c.b16 %v3883, %v3879
    %v4072 = vpack.c.b16 %v3884, %v3880
    %v4073 = vpack.c.b16 %v3889, %v3885
    %v4074 = vpack.c.b16 %v3890, %v3886
    %v4075 = vpack.c.b16 %v3891, %v3887
    %v4076 = vpack.c.b16 %v3892, %v3888
    %v4077 = vpack.c.b16 %v3897, %v3893
    %v4078 = vpack.c.b16 %v3898, %v3894
    %v4079 = vpack.c.b16 %v3899, %v3895
    %v4080 = vpack.c.b16 %v3900, %v3896
    %v4081 = vpack.c.b16 %v3905, %v3901
    %v4082 = vpack.c.b16 %v3906, %v3902
    %v4083 = vpack.c.b16 %v3907, %v3903
    %v4084 = vpack.c.b16 %v3908, %v3904
    %v4085 = vpack.c.b16 %v3913, %v3909
    %v4086 = vpack.c.b16 %v3914, %v3910
    %v4087 = vpack.c.b16 %v3915, %v3911
    %v4088 = vpack.c.b16 %v3916, %v3912
    %v4089 = vpack.c.b16 %v3921, %v3917
    %v4090 = vpack.c.b16 %v3922, %v3918
    %v4091 = vpack.c.b16 %v3923, %v3919
    %v4092 = vpack.c.b16 %v3924, %v3920
    %v4093 = vpack.c.b16 %v3929, %v3925
    %v4094 = vpack.c.b16 %v3930, %v3926
    %v4095 = vpack.c.b16 %v3931, %v3927
    %v4096 = vpack.c.b16 %v3932, %v3928
    %v4097 = vpack.c.b16 %v3937, %v3933
    %v4098 = vpack.c.b16 %v3938, %v3934
    %v4099 = vpack.c.b16 %v3939, %v3935
    %v4100 = vpack.c.b16 %v3940, %v3936
    %v4101 = vpack.c.b16 %v3945, %v3941
    %v4102 = vpack.c.b16 %v3946, %v3942
    %v4103 = vpack.c.b16 %v3947, %v3943
    %v4104 = vpack.c.b16 %v3948, %v3944
    %v4105 = vpack.c.b16 %v3953, %v3949
    %v4106 = vpack.c.b16 %v3954, %v3950
    %v4107 = vpack.c.b16 %v3955, %v3951
    %v4108 = vpack.c.b16 %v3956, %v3952
    %v4109 = vpack.c.b16 %v3961, %v3957
    %v4110 = vpack.c.b16 %v3962, %v3958
    %v4111 = vpack.c.b16 %v3963, %v3959
    %v4112 = vpack.c.b16 %v3964, %v3960
    %v4113 = vpack.c.b16 %v3969, %v3965
    %v4114 = vpack.c.b16 %v3970, %v3966
    %v4115 = vpack.c.b16 %v3971, %v3967
    %v4116 = vpack.c.b16 %v3972, %v3968
    %v4117 = vpack.c.b16 %v3977, %v3973
    %v4118 = vpack.c.b16 %v3978, %v3974
    %v4119 = vpack.c.b16 %v3979, %v3975
    %v4120 = vpack.c.b16 %v3980, %v3976
    %v4121 = vpack.c.b16 %v3985, %v3981
    %v4122 = vpack.c.b16 %v3986, %v3982
    %v4123 = vpack.c.b16 %v3987, %v3983
    %v4124 = vpack.c.b16 %v3988, %v3984
    %v4125 = vpack.c.b16 %v3993, %v3989
    %v4126 = vpack.c.b16 %v3994, %v3990
    %v4127 = vpack.c.b16 %v3995, %v3991
    %v4128 = vpack.c.b16 %v3996, %v3992
    %v4129 = vpack.c.b16 %v4001, %v3997
    %v4130 = vpack.c.b16 %v4002, %v3998
    %v4131 = vpack.c.b16 %v4003, %v3999
    %v4132 = vpack.c.b16 %v4004, %v4000
    %4261 = vmatpush.bf16.msra.mxu0 %v4033
    %4262 = vmatpush.bf16.msra.mxu0 %v4029
    %4263 = vmatpush.bf16.msra.mxu0 %v4025
    %4264 = vmatpush.bf16.msra.mxu0 %v4021
    %4265 = vmatpush.bf16.msra.mxu0 %v4017
    %4266 = vmatpush.bf16.msra.mxu0 %v4013
    %4267 = vmatpush.bf16.msra.mxu0 %v4009
    %4268 = vmatpush.bf16.msra.mxu0 %v4005
    %4269 = vmatmul.bf16.gmra.mxu0 %v3479
    %v4270 = vpop.f32.mrf.mxu0
    %v4271 = vadd.f32 %v3613, %v4270
    %v4272 = vpop.f32.mrf.mxu0
    %4273 = vdwg.mxu0
    %4274 = vmatpush.bf16.msra.mxu0 %v4065
    %4275 = vmatpush.bf16.msra.mxu0 %v4061
    %4276 = vmatpush.bf16.msra.mxu0 %v4057
    %4277 = vmatpush.bf16.msra.mxu0 %v4053
    %4278 = vmatpush.bf16.msra.mxu0 %v4049
    %4279 = vmatpush.bf16.msra.mxu0 %v4045
    %4280 = vmatpush.bf16.msra.mxu0 %v4041
    %4281 = vmatpush.bf16.msra.mxu0 %v4037
    %4282 = vmatmul.bf16.gmra.mxu0 %v3480
    %v4283 = vpop.f32.mrf.mxu0
    %v4284 = vadd.f32 %v4271, %v4283
    %v4285 = vpop.f32.mrf.mxu0
    %4286 = vdwg.mxu0
    %4287 = vmatpush.bf16.msra.mxu0 %v4097
    %4288 = vmatpush.bf16.msra.mxu0 %v4093
    %4289 = vmatpush.bf16.msra.mxu0 %v4089
    %4290 = vmatpush.bf16.msra.mxu0 %v4085
    %4291 = vmatpush.bf16.msra.mxu0 %v4081
    %4292 = vmatpush.bf16.msra.mxu0 %v4077
    %4293 = vmatpush.bf16.msra.mxu0 %v4073
    %4294 = vmatpush.bf16.msra.mxu0 %v4069
    %4295 = vmatmul.bf16.gmra.mxu0 %v3481
    %v4296 = vpop.f32.mrf.mxu0
    %v4297 = vadd.f32 %v4284, %v4296
    %v4298 = vpop.f32.mrf.mxu0
    %4299 = vdwg.mxu0
    %4300 = vmatpush.bf16.msra.mxu0 %v4129
    %4301 = vmatpush.bf16.msra.mxu0 %v4125
    %4302 = vmatpush.bf16.msra.mxu0 %v4121
    %4303 = vmatpush.bf16.msra.mxu0 %v4117
    %4304 = vmatpush.bf16.msra.mxu0 %v4113
    %4305 = vmatpush.bf16.msra.mxu0 %v4109
    %4306 = vmatpush.bf16.msra.mxu0 %v4105
    %4307 = vmatpush.bf16.msra.mxu0 %v4101
    %4308 = vmatmul.bf16.gmra.mxu0 %v3482
    %v4309 = vpop.f32.mrf.mxu0
    %v4310 = vadd.f32 %v4297, %v4309
    %v4311 = vpop.f32.mrf.mxu0
    %4312 = vdwg.mxu0
    %4313 = vmatpush.bf16.msra.mxu0 %v4034
    %4314 = vmatpush.bf16.msra.mxu0 %v4030
    %4315 = vmatpush.bf16.msra.mxu0 %v4026
    %4316 = vmatpush.bf16.msra.mxu0 %v4022
    %4317 = vmatpush.bf16.msra.mxu0 %v4018
    %4318 = vmatpush.bf16.msra.mxu0 %v4014
    %4319 = vmatpush.bf16.msra.mxu0 %v4010
    %4320 = vmatpush.bf16.msra.mxu0 %v4006
    %4321 = vmatmul.bf16.gmra.mxu0 %v3479
    %v4322 = vpop.f32.mrf.mxu0
    %v4323 = vadd.f32 %v3614, %v4322
    %v4324 = vpop.f32.mrf.mxu0
    %4325 = vdwg.mxu0
    %4326 = vmatpush.bf16.msra.mxu0 %v4066
    %4327 = vmatpush.bf16.msra.mxu0 %v4062
    %4328 = vmatpush.bf16.msra.mxu0 %v4058
    %4329 = vmatpush.bf16.msra.mxu0 %v4054
    %4330 = vmatpush.bf16.msra.mxu0 %v4050
    %4331 = vmatpush.bf16.msra.mxu0 %v4046
    %4332 = vmatpush.bf16.msra.mxu0 %v4042
    %4333 = vmatpush.bf16.msra.mxu0 %v4038
    %4334 = vmatmul.bf16.gmra.mxu0 %v3480
    %v4335 = vpop.f32.mrf.mxu0
    %v4336 = vadd.f32 %v4323, %v4335
    %v4337 = vpop.f32.mrf.mxu0
    %4338 = vdwg.mxu0
    %4339 = vmatpush.bf16.msra.mxu0 %v4098
    %4340 = vmatpush.bf16.msra.mxu0 %v4094
    %4341 = vmatpush.bf16.msra.mxu0 %v4090
    %4342 = vmatpush.bf16.msra.mxu0 %v4086
    %4343 = vmatpush.bf16.msra.mxu0 %v4082
    %4344 = vmatpush.bf16.msra.mxu0 %v4078
    %4345 = vmatpush.bf16.msra.mxu0 %v4074
    %4346 = vmatpush.bf16.msra.mxu0 %v4070
    %4347 = vmatmul.bf16.gmra.mxu0 %v3481
    %v4348 = vpop.f32.mrf.mxu0
    %v4349 = vadd.f32 %v4336, %v4348
    %v4350 = vpop.f32.mrf.mxu0
    %4351 = vdwg.mxu0
    %4352 = vmatpush.bf16.msra.mxu0 %v4130
    %4353 = vmatpush.bf16.msra.mxu0 %v4126
    %4354 = vmatpush.bf16.msra.mxu0 %v4122
    %4355 = vmatpush.bf16.msra.mxu0 %v4118
    %4356 = vmatpush.bf16.msra.mxu0 %v4114
    %4357 = vmatpush.bf16.msra.mxu0 %v4110
    %4358 = vmatpush.bf16.msra.mxu0 %v4106
    %4359 = vmatpush.bf16.msra.mxu0 %v4102
    %4360 = vmatmul.bf16.gmra.mxu0 %v3482
    %v4361 = vpop.f32.mrf.mxu0
    %v4362 = vadd.f32 %v4349, %v4361
    %v4363 = vpop.f32.mrf.mxu0
    %4364 = vdwg.mxu0
    %4365 = vmatpush.bf16.msra.mxu0 %v4035
    %4366 = vmatpush.bf16.msra.mxu0 %v4031
    %4367 = vmatpush.bf16.msra.mxu0 %v4027
    %4368 = vmatpush.bf16.msra.mxu0 %v4023
    %4369 = vmatpush.bf16.msra.mxu0 %v4019
    %4370 = vmatpush.bf16.msra.mxu0 %v4015
    %4371 = vmatpush.bf16.msra.mxu0 %v4011
    %4372 = vmatpush.bf16.msra.mxu0 %v4007
    %4373 = vmatmul.bf16.gmra.mxu0 %v3479
    %v4374 = vpop.f32.mrf.mxu0
    %v4375 = vadd.f32 %v3615, %v4374
    %v4376 = vpop.f32.mrf.mxu0
    %4377 = vdwg.mxu0
    %4378 = vmatpush.bf16.msra.mxu0 %v4067
    %4379 = vmatpush.bf16.msra.mxu0 %v4063
    %4380 = vmatpush.bf16.msra.mxu0 %v4059
    %4381 = vmatpush.bf16.msra.mxu0 %v4055
    %4382 = vmatpush.bf16.msra.mxu0 %v4051
    %4383 = vmatpush.bf16.msra.mxu0 %v4047
    %4384 = vmatpush.bf16.msra.mxu0 %v4043
    %4385 = vmatpush.bf16.msra.mxu0 %v4039
    %4386 = vmatmul.bf16.gmra.mxu0 %v3480
    %v4387 = vpop.f32.mrf.mxu0
    %v4388 = vadd.f32 %v4375, %v4387
    %v4389 = vpop.f32.mrf.mxu0
    %4390 = vdwg.mxu0
    %4391 = vmatpush.bf16.msra.mxu0 %v4099
    %4392 = vmatpush.bf16.msra.mxu0 %v4095
    %4393 = vmatpush.bf16.msra.mxu0 %v4091
    %4394 = vmatpush.bf16.msra.mxu0 %v4087
    %4395 = vmatpush.bf16.msra.mxu0 %v4083
    %4396 = vmatpush.bf16.msra.mxu0 %v4079
    %4397 = vmatpush.bf16.msra.mxu0 %v4075
    %4398 = vmatpush.bf16.msra.mxu0 %v4071
    %4399 = vmatmul.bf16.gmra.mxu0 %v3481
    %v4400 = vpop.f32.mrf.mxu0
    %v4401 = vadd.f32 %v4388, %v4400
    %v4402 = vpop.f32.mrf.mxu0
    %4403 = vdwg.mxu0
    %4404 = vmatpush.bf16.msra.mxu0 %v4131
    %4405 = vmatpush.bf16.msra.mxu0 %v4127
    %4406 = vmatpush.bf16.msra.mxu0 %v4123
    %4407 = vmatpush.bf16.msra.mxu0 %v4119
    %4408 = vmatpush.bf16.msra.mxu0 %v4115
    %4409 = vmatpush.bf16.msra.mxu0 %v4111
    %4410 = vmatpush.bf16.msra.mxu0 %v4107
    %4411 = vmatpush.bf16.msra.mxu0 %v4103
    %4412 = vmatmul.bf16.gmra.mxu0 %v3482
    %v4413 = vpop.f32.mrf.mxu0
    %v4414 = vadd.f32 %v4401, %v4413
    %v4415 = vpop.f32.mrf.mxu0
    %4416 = vdwg.mxu0
    %4417 = vmatpush.bf16.msra.mxu0 %v4036
    %4418 = vmatpush.bf16.msra.mxu0 %v4032
    %4419 = vmatpush.bf16.msra.mxu0 %v4028
    %4420 = vmatpush.bf16.msra.mxu0 %v4024
    %4421 = vmatpush.bf16.msra.mxu0 %v4020
    %4422 = vmatpush.bf16.msra.mxu0 %v4016
    %4423 = vmatpush.bf16.msra.mxu0 %v4012
    %4424 = vmatpush.bf16.msra.mxu0 %v4008
    %4425 = vmatmul.bf16.gmra.mxu0 %v3479
    %v4426 = vpop.f32.mrf.mxu0
    %v4427 = vadd.f32 %v3616, %v4426
    %v4428 = vpop.f32.mrf.mxu0
    %4429 = vdwg.mxu0
    %4430 = vmatpush.bf16.msra.mxu0 %v4068
    %4431 = vmatpush.bf16.msra.mxu0 %v4064
    %4432 = vmatpush.bf16.msra.mxu0 %v4060
    %4433 = vmatpush.bf16.msra.mxu0 %v4056
    %4434 = vmatpush.bf16.msra.mxu0 %v4052
    %4435 = vmatpush.bf16.msra.mxu0 %v4048
    %4436 = vmatpush.bf16.msra.mxu0 %v4044
    %4437 = vmatpush.bf16.msra.mxu0 %v4040
    %4438 = vmatmul.bf16.gmra.mxu0 %v3480
    %v4439 = vpop.f32.mrf.mxu0
    %v4440 = vadd.f32 %v4427, %v4439
    %v4441 = vpop.f32.mrf.mxu0
    %4442 = vdwg.mxu0
    %4443 = vmatpush.bf16.msra.mxu0 %v4100
    %4444 = vmatpush.bf16.msra.mxu0 %v4096
    %4445 = vmatpush.bf16.msra.mxu0 %v4092
    %4446 = vmatpush.bf16.msra.mxu0 %v4088
    %4447 = vmatpush.bf16.msra.mxu0 %v4084
    %4448 = vmatpush.bf16.msra.mxu0 %v4080
    %4449 = vmatpush.bf16.msra.mxu0 %v4076
    %4450 = vmatpush.bf16.msra.mxu0 %v4072
    %4451 = vmatmul.bf16.gmra.mxu0 %v3481
    %v4452 = vpop.f32.mrf.mxu0
    %v4453 = vadd.f32 %v4440, %v4452
    %v4454 = vpop.f32.mrf.mxu0
    %4455 = vdwg.mxu0
    %4456 = vmatpush.bf16.msra.mxu0 %v4132
    %4457 = vmatpush.bf16.msra.mxu0 %v4128
    %4458 = vmatpush.bf16.msra.mxu0 %v4124
    %4459 = vmatpush.bf16.msra.mxu0 %v4120
    %4460 = vmatpush.bf16.msra.mxu0 %v4116
    %4461 = vmatpush.bf16.msra.mxu0 %v4112
    %4462 = vmatpush.bf16.msra.mxu0 %v4108
    %4463 = vmatpush.bf16.msra.mxu0 %v4104
    %4464 = vmatmul.bf16.gmra.mxu0 %v3482
    %v4465 = vpop.f32.mrf.mxu0
    %v4466 = vadd.f32 %v4453, %v4465
    %v4467 = vpop.f32.mrf.mxu0
    %4468 = vdwg.mxu0
    %v4469 = vmax.f32 %v4310, 0.0
    %v4470 = vmax.f32 %v4362, 0.0
    %v4471 = vmax.f32 %v4414, 0.0
    %v4472 = vmax.f32 %v4466, 0.0
    %v4473 = vpack.c.bf16 %v4469, %v4469
    %v4474 = vpack.c.bf16 %v4470, %v4470
    %v4475 = vpack.c.bf16 %v4471, %v4471
    %v4476 = vpack.c.bf16 %v4472, %v4472
    %v4477 = vld [vmem:[#allocation20] sm:$0xff]
    %v4478 = vld [vmem:[#allocation20 + $0x8] sm:$0xff]
    %v4479 = vld [vmem:[#allocation20 + $0x10] sm:$0xff]
    %v4480 = vld [vmem:[#allocation20 + $0x18] sm:$0xff]
    %v4481 = vld [vmem:[#allocation20 + $0x20] sm:$0xff]
    %v4482 = vld [vmem:[#allocation20 + $0x28] sm:$0xff]
    %v4483 = vld [vmem:[#allocation20 + $0x30] sm:$0xff]
    %v4484 = vld [vmem:[#allocation20 + $0x38] sm:$0xff]
    %v4485 = vld [vmem:[#allocation20 + $0x40] sm:$0xff]
    %v4486 = vld [vmem:[#allocation20 + $0x48] sm:$0xff]
    %v4487 = vld [vmem:[#allocation20 + $0x50] sm:$0xff]
    %v4488 = vld [vmem:[#allocation20 + $0x58] sm:$0xff]
    %v4489 = vld [vmem:[#allocation20 + $0x60] sm:$0xff]
    %v4490 = vld [vmem:[#allocation20 + $0x68] sm:$0xff]
    %v4491 = vld [vmem:[#allocation20 + $0x70] sm:$0xff]
    %v4492 = vld [vmem:[#allocation20 + $0x78] sm:$0xff]
    %v4493 = vld [vmem:[#allocation20 + $0x80] sm:$0xff]
    %v4494 = vld [vmem:[#allocation20 + $0x88] sm:$0xff]
    %v4495 = vld [vmem:[#allocation20 + $0x90] sm:$0xff]
    %v4496 = vld [vmem:[#allocation20 + $0x98] sm:$0xff]
    %v4497 = vld [vmem:[#allocation20 + $0xa0] sm:$0xff]
    %v4498 = vld [vmem:[#allocation20 + $0xa8] sm:$0xff]
    %v4499 = vld [vmem:[#allocation20 + $0xb0] sm:$0xff]
    %v4500 = vld [vmem:[#allocation20 + $0xb8] sm:$0xff]
    %v4501 = vld [vmem:[#allocation20 + $0xc0] sm:$0xff]
    %v4502 = vld [vmem:[#allocation20 + $0xc8] sm:$0xff]
    %v4503 = vld [vmem:[#allocation20 + $0xd0] sm:$0xff]
    %v4504 = vld [vmem:[#allocation20 + $0xd8] sm:$0xff]
    %v4505 = vld [vmem:[#allocation20 + $0xe0] sm:$0xff]
    %v4506 = vld [vmem:[#allocation20 + $0xe8] sm:$0xff]
    %v4507 = vld [vmem:[#allocation20 + $0xf0] sm:$0xff]
    %v4508 = vld [vmem:[#allocation20 + $0xf8] sm:$0xff]
    %v4509 = vld [vmem:[#allocation20 + $0x100] sm:$0xff]
    %v4510 = vld [vmem:[#allocation20 + $0x108] sm:$0xff]
    %v4511 = vld [vmem:[#allocation20 + $0x110] sm:$0xff]
    %v4512 = vld [vmem:[#allocation20 + $0x118] sm:$0xff]
    %v4513 = vld [vmem:[#allocation20 + $0x120] sm:$0xff]
    %v4514 = vld [vmem:[#allocation20 + $0x128] sm:$0xff]
    %v4515 = vld [vmem:[#allocation20 + $0x130] sm:$0xff]
    %v4516 = vld [vmem:[#allocation20 + $0x138] sm:$0xff]
    %v4517 = vld [vmem:[#allocation20 + $0x140] sm:$0xff]
    %v4518 = vld [vmem:[#allocation20 + $0x148] sm:$0xff]
    %v4519 = vld [vmem:[#allocation20 + $0x150] sm:$0xff]
    %v4520 = vld [vmem:[#allocation20 + $0x158] sm:$0xff]
    %v4521 = vld [vmem:[#allocation20 + $0x160] sm:$0xff]
    %v4522 = vld [vmem:[#allocation20 + $0x168] sm:$0xff]
    %v4523 = vld [vmem:[#allocation20 + $0x170] sm:$0xff]
    %v4524 = vld [vmem:[#allocation20 + $0x178] sm:$0xff]
    %v4525 = vld [vmem:[#allocation20 + $0x180] sm:$0xff]
    %v4526 = vld [vmem:[#allocation20 + $0x188] sm:$0xff]
    %v4527 = vld [vmem:[#allocation20 + $0x190] sm:$0xff]
    %v4528 = vld [vmem:[#allocation20 + $0x198] sm:$0xff]
    %v4529 = vld [vmem:[#allocation20 + $0x1a0] sm:$0xff]
    %v4530 = vld [vmem:[#allocation20 + $0x1a8] sm:$0xff]
    %v4531 = vld [vmem:[#allocation20 + $0x1b0] sm:$0xff]
    %v4532 = vld [vmem:[#allocation20 + $0x1b8] sm:$0xff]
    %v4533 = vld [vmem:[#allocation20 + $0x1c0] sm:$0xff]
    %v4534 = vld [vmem:[#allocation20 + $0x1c8] sm:$0xff]
    %v4535 = vld [vmem:[#allocation20 + $0x1d0] sm:$0xff]
    %v4536 = vld [vmem:[#allocation20 + $0x1d8] sm:$0xff]
    %v4537 = vld [vmem:[#allocation20 + $0x1e0] sm:$0xff]
    %v4538 = vld [vmem:[#allocation20 + $0x1e8] sm:$0xff]
    %v4539 = vld [vmem:[#allocation20 + $0x1f0] sm:$0xff]
    %v4540 = vld [vmem:[#allocation20 + $0x1f8] sm:$0xff]
    %v4541 = vld [vmem:[#allocation20 + $0x200] sm:$0xff]
    %v4542 = vld [vmem:[#allocation20 + $0x208] sm:$0xff]
    %v4543 = vld [vmem:[#allocation20 + $0x210] sm:$0xff]
    %v4544 = vld [vmem:[#allocation20 + $0x218] sm:$0xff]
    %v4545 = vld [vmem:[#allocation20 + $0x220] sm:$0xff]
    %v4546 = vld [vmem:[#allocation20 + $0x228] sm:$0xff]
    %v4547 = vld [vmem:[#allocation20 + $0x230] sm:$0xff]
    %v4548 = vld [vmem:[#allocation20 + $0x238] sm:$0xff]
    %v4549 = vld [vmem:[#allocation20 + $0x240] sm:$0xff]
    %v4550 = vld [vmem:[#allocation20 + $0x248] sm:$0xff]
    %v4551 = vld [vmem:[#allocation20 + $0x250] sm:$0xff]
    %v4552 = vld [vmem:[#allocation20 + $0x258] sm:$0xff]
    %v4553 = vld [vmem:[#allocation20 + $0x260] sm:$0xff]
    %v4554 = vld [vmem:[#allocation20 + $0x268] sm:$0xff]
    %v4555 = vld [vmem:[#allocation20 + $0x270] sm:$0xff]
    %v4556 = vld [vmem:[#allocation20 + $0x278] sm:$0xff]
    %v4557 = vld [vmem:[#allocation20 + $0x280] sm:$0xff]
    %v4558 = vld [vmem:[#allocation20 + $0x288] sm:$0xff]
    %v4559 = vld [vmem:[#allocation20 + $0x290] sm:$0xff]
    %v4560 = vld [vmem:[#allocation20 + $0x298] sm:$0xff]
    %v4561 = vld [vmem:[#allocation20 + $0x2a0] sm:$0xff]
    %v4562 = vld [vmem:[#allocation20 + $0x2a8] sm:$0xff]
    %v4563 = vld [vmem:[#allocation20 + $0x2b0] sm:$0xff]
    %v4564 = vld [vmem:[#allocation20 + $0x2b8] sm:$0xff]
    %v4565 = vld [vmem:[#allocation20 + $0x2c0] sm:$0xff]
    %v4566 = vld [vmem:[#allocation20 + $0x2c8] sm:$0xff]
    %v4567 = vld [vmem:[#allocation20 + $0x2d0] sm:$0xff]
    %v4568 = vld [vmem:[#allocation20 + $0x2d8] sm:$0xff]
    %v4569 = vld [vmem:[#allocation20 + $0x2e0] sm:$0xff]
    %v4570 = vld [vmem:[#allocation20 + $0x2e8] sm:$0xff]
    %v4571 = vld [vmem:[#allocation20 + $0x2f0] sm:$0xff]
    %v4572 = vld [vmem:[#allocation20 + $0x2f8] sm:$0xff]
    %v4573 = vld [vmem:[#allocation20 + $0x300] sm:$0xff]
    %v4574 = vld [vmem:[#allocation20 + $0x308] sm:$0xff]
    %v4575 = vld [vmem:[#allocation20 + $0x310] sm:$0xff]
    %v4576 = vld [vmem:[#allocation20 + $0x318] sm:$0xff]
    %v4577 = vld [vmem:[#allocation20 + $0x320] sm:$0xff]
    %v4578 = vld [vmem:[#allocation20 + $0x328] sm:$0xff]
    %v4579 = vld [vmem:[#allocation20 + $0x330] sm:$0xff]
    %v4580 = vld [vmem:[#allocation20 + $0x338] sm:$0xff]
    %v4581 = vld [vmem:[#allocation20 + $0x340] sm:$0xff]
    %v4582 = vld [vmem:[#allocation20 + $0x348] sm:$0xff]
    %v4583 = vld [vmem:[#allocation20 + $0x350] sm:$0xff]
    %v4584 = vld [vmem:[#allocation20 + $0x358] sm:$0xff]
    %v4585 = vld [vmem:[#allocation20 + $0x360] sm:$0xff]
    %v4586 = vld [vmem:[#allocation20 + $0x368] sm:$0xff]
    %v4587 = vld [vmem:[#allocation20 + $0x370] sm:$0xff]
    %v4588 = vld [vmem:[#allocation20 + $0x378] sm:$0xff]
    %v4589 = vld [vmem:[#allocation20 + $0x380] sm:$0xff]
    %v4590 = vld [vmem:[#allocation20 + $0x388] sm:$0xff]
    %v4591 = vld [vmem:[#allocation20 + $0x390] sm:$0xff]
    %v4592 = vld [vmem:[#allocation20 + $0x398] sm:$0xff]
    %v4593 = vld [vmem:[#allocation20 + $0x3a0] sm:$0xff]
    %v4594 = vld [vmem:[#allocation20 + $0x3a8] sm:$0xff]
    %v4595 = vld [vmem:[#allocation20 + $0x3b0] sm:$0xff]
    %v4596 = vld [vmem:[#allocation20 + $0x3b8] sm:$0xff]
    %v4597 = vld [vmem:[#allocation20 + $0x3c0] sm:$0xff]
    %v4598 = vld [vmem:[#allocation20 + $0x3c8] sm:$0xff]
    %v4599 = vld [vmem:[#allocation20 + $0x3d0] sm:$0xff]
    %v4600 = vld [vmem:[#allocation20 + $0x3d8] sm:$0xff]
    %v4601 = vld [vmem:[#allocation20 + $0x3e0] sm:$0xff]
    %v4602 = vld [vmem:[#allocation20 + $0x3e8] sm:$0xff]
    %v4603 = vld [vmem:[#allocation20 + $0x3f0] sm:$0xff]
    %v4604 = vld [vmem:[#allocation20 + $0x3f8] sm:$0xff]
    %v4605 = vld [vmem:[#allocation20 + $0x400] sm:$0xff]
    %v4606 = vld [vmem:[#allocation20 + $0x408] sm:$0xff]
    %v4607 = vld [vmem:[#allocation20 + $0x410] sm:$0xff]
    %v4608 = vld [vmem:[#allocation20 + $0x418] sm:$0xff]
    %v4609 = vld [vmem:[#allocation20 + $0x420] sm:$0xff]
    %v4610 = vld [vmem:[#allocation20 + $0x428] sm:$0xff]
    %v4611 = vld [vmem:[#allocation20 + $0x430] sm:$0xff]
    %v4612 = vld [vmem:[#allocation20 + $0x438] sm:$0xff]
    %v4613 = vld [vmem:[#allocation20 + $0x440] sm:$0xff]
    %v4614 = vld [vmem:[#allocation20 + $0x448] sm:$0xff]
    %v4615 = vld [vmem:[#allocation20 + $0x450] sm:$0xff]
    %v4616 = vld [vmem:[#allocation20 + $0x458] sm:$0xff]
    %v4617 = vld [vmem:[#allocation20 + $0x460] sm:$0xff]
    %v4618 = vld [vmem:[#allocation20 + $0x468] sm:$0xff]
    %v4619 = vld [vmem:[#allocation20 + $0x470] sm:$0xff]
    %v4620 = vld [vmem:[#allocation20 + $0x478] sm:$0xff]
    %v4621 = vld [vmem:[#allocation20 + $0x480] sm:$0xff]
    %v4622 = vld [vmem:[#allocation20 + $0x488] sm:$0xff]
    %v4623 = vld [vmem:[#allocation20 + $0x490] sm:$0xff]
    %v4624 = vld [vmem:[#allocation20 + $0x498] sm:$0xff]
    %v4625 = vld [vmem:[#allocation20 + $0x4a0] sm:$0xff]
    %v4626 = vld [vmem:[#allocation20 + $0x4a8] sm:$0xff]
    %v4627 = vld [vmem:[#allocation20 + $0x4b0] sm:$0xff]
    %v4628 = vld [vmem:[#allocation20 + $0x4b8] sm:$0xff]
    %v4629 = vld [vmem:[#allocation20 + $0x4c0] sm:$0xff]
    %v4630 = vld [vmem:[#allocation20 + $0x4c8] sm:$0xff]
    %v4631 = vld [vmem:[#allocation20 + $0x4d0] sm:$0xff]
    %v4632 = vld [vmem:[#allocation20 + $0x4d8] sm:$0xff]
    %v4633 = vld [vmem:[#allocation20 + $0x4e0] sm:$0xff]
    %v4634 = vld [vmem:[#allocation20 + $0x4e8] sm:$0xff]
    %v4635 = vld [vmem:[#allocation20 + $0x4f0] sm:$0xff]
    %v4636 = vld [vmem:[#allocation20 + $0x4f8] sm:$0xff]
    %v4637 = vld [vmem:[#allocation20 + $0x500] sm:$0xff]
    %v4638 = vld [vmem:[#allocation20 + $0x508] sm:$0xff]
    %v4639 = vld [vmem:[#allocation20 + $0x510] sm:$0xff]
    %v4640 = vld [vmem:[#allocation20 + $0x518] sm:$0xff]
    %v4641 = vld [vmem:[#allocation20 + $0x520] sm:$0xff]
    %v4642 = vld [vmem:[#allocation20 + $0x528] sm:$0xff]
    %v4643 = vld [vmem:[#allocation20 + $0x530] sm:$0xff]
    %v4644 = vld [vmem:[#allocation20 + $0x538] sm:$0xff]
    %v4645 = vld [vmem:[#allocation20 + $0x540] sm:$0xff]
    %v4646 = vld [vmem:[#allocation20 + $0x548] sm:$0xff]
    %v4647 = vld [vmem:[#allocation20 + $0x550] sm:$0xff]
    %v4648 = vld [vmem:[#allocation20 + $0x558] sm:$0xff]
    %v4649 = vld [vmem:[#allocation20 + $0x560] sm:$0xff]
    %v4650 = vld [vmem:[#allocation20 + $0x568] sm:$0xff]
    %v4651 = vld [vmem:[#allocation20 + $0x570] sm:$0xff]
    %v4652 = vld [vmem:[#allocation20 + $0x578] sm:$0xff]
    %v4653 = vld [vmem:[#allocation20 + $0x580] sm:$0xff]
    %v4654 = vld [vmem:[#allocation20 + $0x588] sm:$0xff]
    %v4655 = vld [vmem:[#allocation20 + $0x590] sm:$0xff]
    %v4656 = vld [vmem:[#allocation20 + $0x598] sm:$0xff]
    %v4657 = vld [vmem:[#allocation20 + $0x5a0] sm:$0xff]
    %v4658 = vld [vmem:[#allocation20 + $0x5a8] sm:$0xff]
    %v4659 = vld [vmem:[#allocation20 + $0x5b0] sm:$0xff]
    %v4660 = vld [vmem:[#allocation20 + $0x5b8] sm:$0xff]
    %v4661 = vld [vmem:[#allocation20 + $0x5c0] sm:$0xff]
    %v4662 = vld [vmem:[#allocation20 + $0x5c8] sm:$0xff]
    %v4663 = vld [vmem:[#allocation20 + $0x5d0] sm:$0xff]
    %v4664 = vld [vmem:[#allocation20 + $0x5d8] sm:$0xff]
    %v4665 = vld [vmem:[#allocation20 + $0x5e0] sm:$0xff]
    %v4666 = vld [vmem:[#allocation20 + $0x5e8] sm:$0xff]
    %v4667 = vld [vmem:[#allocation20 + $0x5f0] sm:$0xff]
    %v4668 = vld [vmem:[#allocation20 + $0x5f8] sm:$0xff]
    %v4669 = vld [vmem:[%s13] sm:$0x3f]
    %v4671 = vperm.slane %v4669, 0
    %v4672 = vperm.slane %v4669, 1
    %v4673 = vperm.slane %v4669, 2
    %v4674 = vperm.slane %v4669, 3
    %v4675 = vperm.slane %v4669, 4
    %v4676 = vperm.slane %v4669, 5
    %v4875 = vunpack.c.l.b16 %v4477
    %v4876 = vunpack.c.h.b16 %v4477
    %v4877 = vunpack.c.l.b16 %v4478
    %v4878 = vunpack.c.h.b16 %v4478
    %v4879 = vunpack.c.l.b16 %v4479
    %v4880 = vunpack.c.h.b16 %v4479
    %v4881 = vunpack.c.l.b16 %v4480
    %v4882 = vunpack.c.h.b16 %v4480
    %v4883 = vunpack.c.l.b16 %v4481
    %v4884 = vunpack.c.h.b16 %v4481
    %v4885 = vunpack.c.l.b16 %v4482
    %v4886 = vunpack.c.h.b16 %v4482
    %v4887 = vunpack.c.l.b16 %v4483
    %v4888 = vunpack.c.h.b16 %v4483
    %v4889 = vunpack.c.l.b16 %v4484
    %v4890 = vunpack.c.h.b16 %v4484
    %v4891 = vunpack.c.l.b16 %v4485
    %v4892 = vunpack.c.h.b16 %v4485
    %v4893 = vunpack.c.l.b16 %v4486
    %v4894 = vunpack.c.h.b16 %v4486
    %v4895 = vunpack.c.l.b16 %v4487
    %v4896 = vunpack.c.h.b16 %v4487
    %v4897 = vunpack.c.l.b16 %v4488
    %v4898 = vunpack.c.h.b16 %v4488
    %v4899 = vunpack.c.l.b16 %v4489
    %v4900 = vunpack.c.h.b16 %v4489
    %v4901 = vunpack.c.l.b16 %v4490
    %v4902 = vunpack.c.h.b16 %v4490
    %v4903 = vunpack.c.l.b16 %v4491
    %v4904 = vunpack.c.h.b16 %v4491
    %v4905 = vunpack.c.l.b16 %v4492
    %v4906 = vunpack.c.h.b16 %v4492
    %v4907 = vunpack.c.l.b16 %v4493
    %v4908 = vunpack.c.h.b16 %v4493
    %v4909 = vunpack.c.l.b16 %v4494
    %v4910 = vunpack.c.h.b16 %v4494
    %v4911 = vunpack.c.l.b16 %v4495
    %v4912 = vunpack.c.h.b16 %v4495
    %v4913 = vunpack.c.l.b16 %v4496
    %v4914 = vunpack.c.h.b16 %v4496
    %v4915 = vunpack.c.l.b16 %v4497
    %v4916 = vunpack.c.h.b16 %v4497
    %v4917 = vunpack.c.l.b16 %v4498
    %v4918 = vunpack.c.h.b16 %v4498
    %v4919 = vunpack.c.l.b16 %v4499
    %v4920 = vunpack.c.h.b16 %v4499
    %v4921 = vunpack.c.l.b16 %v4500
    %v4922 = vunpack.c.h.b16 %v4500
    %v4923 = vunpack.c.l.b16 %v4501
    %v4924 = vunpack.c.h.b16 %v4501
    %v4925 = vunpack.c.l.b16 %v4502
    %v4926 = vunpack.c.h.b16 %v4502
    %v4927 = vunpack.c.l.b16 %v4503
    %v4928 = vunpack.c.h.b16 %v4503
    %v4929 = vunpack.c.l.b16 %v4504
    %v4930 = vunpack.c.h.b16 %v4504
    %v4931 = vunpack.c.l.b16 %v4505
    %v4932 = vunpack.c.h.b16 %v4505
    %v4933 = vunpack.c.l.b16 %v4506
    %v4934 = vunpack.c.h.b16 %v4506
    %v4935 = vunpack.c.l.b16 %v4507
    %v4936 = vunpack.c.h.b16 %v4507
    %v4937 = vunpack.c.l.b16 %v4508
    %v4938 = vunpack.c.h.b16 %v4508
    %v4939 = vunpack.c.l.b16 %v4509
    %v4940 = vunpack.c.h.b16 %v4509
    %v4941 = vunpack.c.l.b16 %v4510
    %v4942 = vunpack.c.h.b16 %v4510
    %v4943 = vunpack.c.l.b16 %v4511
    %v4944 = vunpack.c.h.b16 %v4511
    %v4945 = vunpack.c.l.b16 %v4512
    %v4946 = vunpack.c.h.b16 %v4512
    %v4947 = vunpack.c.l.b16 %v4513
    %v4948 = vunpack.c.h.b16 %v4513
    %v4949 = vunpack.c.l.b16 %v4514
    %v4950 = vunpack.c.h.b16 %v4514
    %v4951 = vunpack.c.l.b16 %v4515
    %v4952 = vunpack.c.h.b16 %v4515
    %v4953 = vunpack.c.l.b16 %v4516
    %v4954 = vunpack.c.h.b16 %v4516
    %v4955 = vunpack.c.l.b16 %v4517
    %v4956 = vunpack.c.h.b16 %v4517
    %v4957 = vunpack.c.l.b16 %v4518
    %v4958 = vunpack.c.h.b16 %v4518
    %v4959 = vunpack.c.l.b16 %v4519
    %v4960 = vunpack.c.h.b16 %v4519
    %v4961 = vunpack.c.l.b16 %v4520
    %v4962 = vunpack.c.h.b16 %v4520
    %v4963 = vunpack.c.l.b16 %v4521
    %v4964 = vunpack.c.h.b16 %v4521
    %v4965 = vunpack.c.l.b16 %v4522
    %v4966 = vunpack.c.h.b16 %v4522
    %v4967 = vunpack.c.l.b16 %v4523
    %v4968 = vunpack.c.h.b16 %v4523
    %v4969 = vunpack.c.l.b16 %v4524
    %v4970 = vunpack.c.h.b16 %v4524
    %v4971 = vunpack.c.l.b16 %v4525
    %v4972 = vunpack.c.h.b16 %v4525
    %v4973 = vunpack.c.l.b16 %v4526
    %v4974 = vunpack.c.h.b16 %v4526
    %v4975 = vunpack.c.l.b16 %v4527
    %v4976 = vunpack.c.h.b16 %v4527
    %v4977 = vunpack.c.l.b16 %v4528
    %v4978 = vunpack.c.h.b16 %v4528
    %v4979 = vunpack.c.l.b16 %v4529
    %v4980 = vunpack.c.h.b16 %v4529
    %v4981 = vunpack.c.l.b16 %v4530
    %v4982 = vunpack.c.h.b16 %v4530
    %v4983 = vunpack.c.l.b16 %v4531
    %v4984 = vunpack.c.h.b16 %v4531
    %v4985 = vunpack.c.l.b16 %v4532
    %v4986 = vunpack.c.h.b16 %v4532
    %v4987 = vunpack.c.l.b16 %v4533
    %v4988 = vunpack.c.h.b16 %v4533
    %v4989 = vunpack.c.l.b16 %v4534
    %v4990 = vunpack.c.h.b16 %v4534
    %v4991 = vunpack.c.l.b16 %v4535
    %v4992 = vunpack.c.h.b16 %v4535
    %v4993 = vunpack.c.l.b16 %v4536
    %v4994 = vunpack.c.h.b16 %v4536
    %v4995 = vunpack.c.l.b16 %v4537
    %v4996 = vunpack.c.h.b16 %v4537
    %v4997 = vunpack.c.l.b16 %v4538
    %v4998 = vunpack.c.h.b16 %v4538
    %v4999 = vunpack.c.l.b16 %v4539
    %v5000 = vunpack.c.h.b16 %v4539
    %v5001 = vunpack.c.l.b16 %v4540
    %v5002 = vunpack.c.h.b16 %v4540
    %v5003 = vunpack.c.l.b16 %v4541
    %v5004 = vunpack.c.h.b16 %v4541
    %v5005 = vunpack.c.l.b16 %v4542
    %v5006 = vunpack.c.h.b16 %v4542
    %v5007 = vunpack.c.l.b16 %v4543
    %v5008 = vunpack.c.h.b16 %v4543
    %v5009 = vunpack.c.l.b16 %v4544
    %v5010 = vunpack.c.h.b16 %v4544
    %v5011 = vunpack.c.l.b16 %v4545
    %v5012 = vunpack.c.h.b16 %v4545
    %v5013 = vunpack.c.l.b16 %v4546
    %v5014 = vunpack.c.h.b16 %v4546
    %v5015 = vunpack.c.l.b16 %v4547
    %v5016 = vunpack.c.h.b16 %v4547
    %v5017 = vunpack.c.l.b16 %v4548
    %v5018 = vunpack.c.h.b16 %v4548
    %v5019 = vunpack.c.l.b16 %v4549
    %v5020 = vunpack.c.h.b16 %v4549
    %v5021 = vunpack.c.l.b16 %v4550
    %v5022 = vunpack.c.h.b16 %v4550
    %v5023 = vunpack.c.l.b16 %v4551
    %v5024 = vunpack.c.h.b16 %v4551
    %v5025 = vunpack.c.l.b16 %v4552
    %v5026 = vunpack.c.h.b16 %v4552
    %v5027 = vunpack.c.l.b16 %v4553
    %v5028 = vunpack.c.h.b16 %v4553
    %v5029 = vunpack.c.l.b16 %v4554
    %v5030 = vunpack.c.h.b16 %v4554
    %v5031 = vunpack.c.l.b16 %v4555
    %v5032 = vunpack.c.h.b16 %v4555
    %v5033 = vunpack.c.l.b16 %v4556
    %v5034 = vunpack.c.h.b16 %v4556
    %v5035 = vunpack.c.l.b16 %v4557
    %v5036 = vunpack.c.h.b16 %v4557
    %v5037 = vunpack.c.l.b16 %v4558
    %v5038 = vunpack.c.h.b16 %v4558
    %v5039 = vunpack.c.l.b16 %v4559
    %v5040 = vunpack.c.h.b16 %v4559
    %v5041 = vunpack.c.l.b16 %v4560
    %v5042 = vunpack.c.h.b16 %v4560
    %v5043 = vunpack.c.l.b16 %v4561
    %v5044 = vunpack.c.h.b16 %v4561
    %v5045 = vunpack.c.l.b16 %v4562
    %v5046 = vunpack.c.h.b16 %v4562
    %v5047 = vunpack.c.l.b16 %v4563
    %v5048 = vunpack.c.h.b16 %v4563
    %v5049 = vunpack.c.l.b16 %v4564
    %v5050 = vunpack.c.h.b16 %v4564
    %v5051 = vunpack.c.l.b16 %v4565
    %v5052 = vunpack.c.h.b16 %v4565
    %v5053 = vunpack.c.l.b16 %v4566
    %v5054 = vunpack.c.h.b16 %v4566
    %v5055 = vunpack.c.l.b16 %v4567
    %v5056 = vunpack.c.h.b16 %v4567
    %v5057 = vunpack.c.l.b16 %v4568
    %v5058 = vunpack.c.h.b16 %v4568
    %v5059 = vunpack.c.l.b16 %v4569
    %v5060 = vunpack.c.h.b16 %v4569
    %v5061 = vunpack.c.l.b16 %v4570
    %v5062 = vunpack.c.h.b16 %v4570
    %v5063 = vunpack.c.l.b16 %v4571
    %v5064 = vunpack.c.h.b16 %v4571
    %v5065 = vunpack.c.l.b16 %v4572
    %v5066 = vunpack.c.h.b16 %v4572
    %v5067 = vunpack.c.l.b16 %v4573
    %v5068 = vunpack.c.h.b16 %v4573
    %v5069 = vunpack.c.l.b16 %v4574
    %v5070 = vunpack.c.h.b16 %v4574
    %v5071 = vunpack.c.l.b16 %v4575
    %v5072 = vunpack.c.h.b16 %v4575
    %v5073 = vunpack.c.l.b16 %v4576
    %v5074 = vunpack.c.h.b16 %v4576
    %v5075 = vunpack.c.l.b16 %v4577
    %v5076 = vunpack.c.h.b16 %v4577
    %v5077 = vunpack.c.l.b16 %v4578
    %v5078 = vunpack.c.h.b16 %v4578
    %v5079 = vunpack.c.l.b16 %v4579
    %v5080 = vunpack.c.h.b16 %v4579
    %v5081 = vunpack.c.l.b16 %v4580
    %v5082 = vunpack.c.h.b16 %v4580
    %v5083 = vunpack.c.l.b16 %v4581
    %v5084 = vunpack.c.h.b16 %v4581
    %v5085 = vunpack.c.l.b16 %v4582
    %v5086 = vunpack.c.h.b16 %v4582
    %v5087 = vunpack.c.l.b16 %v4583
    %v5088 = vunpack.c.h.b16 %v4583
    %v5089 = vunpack.c.l.b16 %v4584
    %v5090 = vunpack.c.h.b16 %v4584
    %v5091 = vunpack.c.l.b16 %v4585
    %v5092 = vunpack.c.h.b16 %v4585
    %v5093 = vunpack.c.l.b16 %v4586
    %v5094 = vunpack.c.h.b16 %v4586
    %v5095 = vunpack.c.l.b16 %v4587
    %v5096 = vunpack.c.h.b16 %v4587
    %v5097 = vunpack.c.l.b16 %v4588
    %v5098 = vunpack.c.h.b16 %v4588
    %v5099 = vunpack.c.l.b16 %v4589
    %v5100 = vunpack.c.h.b16 %v4589
    %v5101 = vunpack.c.l.b16 %v4590
    %v5102 = vunpack.c.h.b16 %v4590
    %v5103 = vunpack.c.l.b16 %v4591
    %v5104 = vunpack.c.h.b16 %v4591
    %v5105 = vunpack.c.l.b16 %v4592
    %v5106 = vunpack.c.h.b16 %v4592
    %v5107 = vunpack.c.l.b16 %v4593
    %v5108 = vunpack.c.h.b16 %v4593
    %v5109 = vunpack.c.l.b16 %v4594
    %v5110 = vunpack.c.h.b16 %v4594
    %v5111 = vunpack.c.l.b16 %v4595
    %v5112 = vunpack.c.h.b16 %v4595
    %v5113 = vunpack.c.l.b16 %v4596
    %v5114 = vunpack.c.h.b16 %v4596
    %v5115 = vunpack.c.l.b16 %v4597
    %v5116 = vunpack.c.h.b16 %v4597
    %v5117 = vunpack.c.l.b16 %v4598
    %v5118 = vunpack.c.h.b16 %v4598
    %v5119 = vunpack.c.l.b16 %v4599
    %v5120 = vunpack.c.h.b16 %v4599
    %v5121 = vunpack.c.l.b16 %v4600
    %v5122 = vunpack.c.h.b16 %v4600
    %v5123 = vunpack.c.l.b16 %v4601
    %v5124 = vunpack.c.h.b16 %v4601
    %v5125 = vunpack.c.l.b16 %v4602
    %v5126 = vunpack.c.h.b16 %v4602
    %v5127 = vunpack.c.l.b16 %v4603
    %v5128 = vunpack.c.h.b16 %v4603
    %v5129 = vunpack.c.l.b16 %v4604
    %v5130 = vunpack.c.h.b16 %v4604
    %v5131 = vunpack.c.l.b16 %v4605
    %v5132 = vunpack.c.h.b16 %v4605
    %v5133 = vunpack.c.l.b16 %v4606
    %v5134 = vunpack.c.h.b16 %v4606
    %v5135 = vunpack.c.l.b16 %v4607
    %v5136 = vunpack.c.h.b16 %v4607
    %v5137 = vunpack.c.l.b16 %v4608
    %v5138 = vunpack.c.h.b16 %v4608
    %v5139 = vunpack.c.l.b16 %v4609
    %v5140 = vunpack.c.h.b16 %v4609
    %v5141 = vunpack.c.l.b16 %v4610
    %v5142 = vunpack.c.h.b16 %v4610
    %v5143 = vunpack.c.l.b16 %v4611
    %v5144 = vunpack.c.h.b16 %v4611
    %v5145 = vunpack.c.l.b16 %v4612
    %v5146 = vunpack.c.h.b16 %v4612
    %v5147 = vunpack.c.l.b16 %v4613
    %v5148 = vunpack.c.h.b16 %v4613
    %v5149 = vunpack.c.l.b16 %v4614
    %v5150 = vunpack.c.h.b16 %v4614
    %v5151 = vunpack.c.l.b16 %v4615
    %v5152 = vunpack.c.h.b16 %v4615
    %v5153 = vunpack.c.l.b16 %v4616
    %v5154 = vunpack.c.h.b16 %v4616
    %v5155 = vunpack.c.l.b16 %v4617
    %v5156 = vunpack.c.h.b16 %v4617
    %v5157 = vunpack.c.l.b16 %v4618
    %v5158 = vunpack.c.h.b16 %v4618
    %v5159 = vunpack.c.l.b16 %v4619
    %v5160 = vunpack.c.h.b16 %v4619
    %v5161 = vunpack.c.l.b16 %v4620
    %v5162 = vunpack.c.h.b16 %v4620
    %v5163 = vunpack.c.l.b16 %v4621
    %v5164 = vunpack.c.h.b16 %v4621
    %v5165 = vunpack.c.l.b16 %v4622
    %v5166 = vunpack.c.h.b16 %v4622
    %v5167 = vunpack.c.l.b16 %v4623
    %v5168 = vunpack.c.h.b16 %v4623
    %v5169 = vunpack.c.l.b16 %v4624
    %v5170 = vunpack.c.h.b16 %v4624
    %v5171 = vunpack.c.l.b16 %v4625
    %v5172 = vunpack.c.h.b16 %v4625
    %v5173 = vunpack.c.l.b16 %v4626
    %v5174 = vunpack.c.h.b16 %v4626
    %v5175 = vunpack.c.l.b16 %v4627
    %v5176 = vunpack.c.h.b16 %v4627
    %v5177 = vunpack.c.l.b16 %v4628
    %v5178 = vunpack.c.h.b16 %v4628
    %v5179 = vunpack.c.l.b16 %v4629
    %v5180 = vunpack.c.h.b16 %v4629
    %v5181 = vunpack.c.l.b16 %v4630
    %v5182 = vunpack.c.h.b16 %v4630
    %v5183 = vunpack.c.l.b16 %v4631
    %v5184 = vunpack.c.h.b16 %v4631
    %v5185 = vunpack.c.l.b16 %v4632
    %v5186 = vunpack.c.h.b16 %v4632
    %v5187 = vunpack.c.l.b16 %v4633
    %v5188 = vunpack.c.h.b16 %v4633
    %v5189 = vunpack.c.l.b16 %v4634
    %v5190 = vunpack.c.h.b16 %v4634
    %v5191 = vunpack.c.l.b16 %v4635
    %v5192 = vunpack.c.h.b16 %v4635
    %v5193 = vunpack.c.l.b16 %v4636
    %v5194 = vunpack.c.h.b16 %v4636
    %v5195 = vunpack.c.l.b16 %v4637
    %v5196 = vunpack.c.h.b16 %v4637
    %v5197 = vunpack.c.l.b16 %v4638
    %v5198 = vunpack.c.h.b16 %v4638
    %v5199 = vunpack.c.l.b16 %v4639
    %v5200 = vunpack.c.h.b16 %v4639
    %v5201 = vunpack.c.l.b16 %v4640
    %v5202 = vunpack.c.h.b16 %v4640
    %v5203 = vunpack.c.l.b16 %v4641
    %v5204 = vunpack.c.h.b16 %v4641
    %v5205 = vunpack.c.l.b16 %v4642
    %v5206 = vunpack.c.h.b16 %v4642
    %v5207 = vunpack.c.l.b16 %v4643
    %v5208 = vunpack.c.h.b16 %v4643
    %v5209 = vunpack.c.l.b16 %v4644
    %v5210 = vunpack.c.h.b16 %v4644
    %v5211 = vunpack.c.l.b16 %v4645
    %v5212 = vunpack.c.h.b16 %v4645
    %v5213 = vunpack.c.l.b16 %v4646
    %v5214 = vunpack.c.h.b16 %v4646
    %v5215 = vunpack.c.l.b16 %v4647
    %v5216 = vunpack.c.h.b16 %v4647
    %v5217 = vunpack.c.l.b16 %v4648
    %v5218 = vunpack.c.h.b16 %v4648
    %v5219 = vunpack.c.l.b16 %v4649
    %v5220 = vunpack.c.h.b16 %v4649
    %v5221 = vunpack.c.l.b16 %v4650
    %v5222 = vunpack.c.h.b16 %v4650
    %v5223 = vunpack.c.l.b16 %v4651
    %v5224 = vunpack.c.h.b16 %v4651
    %v5225 = vunpack.c.l.b16 %v4652
    %v5226 = vunpack.c.h.b16 %v4652
    %v5227 = vunpack.c.l.b16 %v4653
    %v5228 = vunpack.c.h.b16 %v4653
    %v5229 = vunpack.c.l.b16 %v4654
    %v5230 = vunpack.c.h.b16 %v4654
    %v5231 = vunpack.c.l.b16 %v4655
    %v5232 = vunpack.c.h.b16 %v4655
    %v5233 = vunpack.c.l.b16 %v4656
    %v5234 = vunpack.c.h.b16 %v4656
    %v5235 = vunpack.c.l.b16 %v4657
    %v5236 = vunpack.c.h.b16 %v4657
    %v5237 = vunpack.c.l.b16 %v4658
    %v5238 = vunpack.c.h.b16 %v4658
    %v5239 = vunpack.c.l.b16 %v4659
    %v5240 = vunpack.c.h.b16 %v4659
    %v5241 = vunpack.c.l.b16 %v4660
    %v5242 = vunpack.c.h.b16 %v4660
    %v5243 = vunpack.c.l.b16 %v4661
    %v5244 = vunpack.c.h.b16 %v4661
    %v5245 = vunpack.c.l.b16 %v4662
    %v5246 = vunpack.c.h.b16 %v4662
    %v5247 = vunpack.c.l.b16 %v4663
    %v5248 = vunpack.c.h.b16 %v4663
    %v5249 = vunpack.c.l.b16 %v4664
    %v5250 = vunpack.c.h.b16 %v4664
    %v5251 = vunpack.c.l.b16 %v4665
    %v5252 = vunpack.c.h.b16 %v4665
    %v5253 = vunpack.c.l.b16 %v4666
    %v5254 = vunpack.c.h.b16 %v4666
    %v5255 = vunpack.c.l.b16 %v4667
    %v5256 = vunpack.c.h.b16 %v4667
    %v5257 = vunpack.c.l.b16 %v4668
    %v5258 = vunpack.c.h.b16 %v4668
    %v5259 = vpack.c.b16 %v4881, %v4875
    %v5260 = vpack.c.b16 %v4882, %v4876
    %v5261 = vpack.c.b16 %v4883, %v4877
    %v5262 = vpack.c.b16 %v4884, %v4878
    %v5263 = vpack.c.b16 %v4885, %v4879
    %v5264 = vpack.c.b16 %v4886, %v4880
    %v5265 = vpack.c.b16 %v4893, %v4887
    %v5266 = vpack.c.b16 %v4894, %v4888
    %v5267 = vpack.c.b16 %v4895, %v4889
    %v5268 = vpack.c.b16 %v4896, %v4890
    %v5269 = vpack.c.b16 %v4897, %v4891
    %v5270 = vpack.c.b16 %v4898, %v4892
    %v5271 = vpack.c.b16 %v4905, %v4899
    %v5272 = vpack.c.b16 %v4906, %v4900
    %v5273 = vpack.c.b16 %v4907, %v4901
    %v5274 = vpack.c.b16 %v4908, %v4902
    %v5275 = vpack.c.b16 %v4909, %v4903
    %v5276 = vpack.c.b16 %v4910, %v4904
    %v5277 = vpack.c.b16 %v4917, %v4911
    %v5278 = vpack.c.b16 %v4918, %v4912
    %v5279 = vpack.c.b16 %v4919, %v4913
    %v5280 = vpack.c.b16 %v4920, %v4914
    %v5281 = vpack.c.b16 %v4921, %v4915
    %v5282 = vpack.c.b16 %v4922, %v4916
    %v5283 = vpack.c.b16 %v4929, %v4923
    %v5284 = vpack.c.b16 %v4930, %v4924
    %v5285 = vpack.c.b16 %v4931, %v4925
    %v5286 = vpack.c.b16 %v4932, %v4926
    %v5287 = vpack.c.b16 %v4933, %v4927
    %v5288 = vpack.c.b16 %v4934, %v4928
    %v5289 = vpack.c.b16 %v4941, %v4935
    %v5290 = vpack.c.b16 %v4942, %v4936
    %v5291 = vpack.c.b16 %v4943, %v4937
    %v5292 = vpack.c.b16 %v4944, %v4938
    %v5293 = vpack.c.b16 %v4945, %v4939
    %v5294 = vpack.c.b16 %v4946, %v4940
    %v5295 = vpack.c.b16 %v4953, %v4947
    %v5296 = vpack.c.b16 %v4954, %v4948
    %v5297 = vpack.c.b16 %v4955, %v4949
    %v5298 = vpack.c.b16 %v4956, %v4950
    %v5299 = vpack.c.b16 %v4957, %v4951
    %v5300 = vpack.c.b16 %v4958, %v4952
    %v5301 = vpack.c.b16 %v4965, %v4959
    %v5302 = vpack.c.b16 %v4966, %v4960
    %v5303 = vpack.c.b16 %v4967, %v4961
    %v5304 = vpack.c.b16 %v4968, %v4962
    %v5305 = vpack.c.b16 %v4969, %v4963
    %v5306 = vpack.c.b16 %v4970, %v4964
    %v5307 = vpack.c.b16 %v4977, %v4971
    %v5308 = vpack.c.b16 %v4978, %v4972
    %v5309 = vpack.c.b16 %v4979, %v4973
    %v5310 = vpack.c.b16 %v4980, %v4974
    %v5311 = vpack.c.b16 %v4981, %v4975
    %v5312 = vpack.c.b16 %v4982, %v4976
    %v5313 = vpack.c.b16 %v4989, %v4983
    %v5314 = vpack.c.b16 %v4990, %v4984
    %v5315 = vpack.c.b16 %v4991, %v4985
    %v5316 = vpack.c.b16 %v4992, %v4986
    %v5317 = vpack.c.b16 %v4993, %v4987
    %v5318 = vpack.c.b16 %v4994, %v4988
    %v5319 = vpack.c.b16 %v5001, %v4995
    %v5320 = vpack.c.b16 %v5002, %v4996
    %v5321 = vpack.c.b16 %v5003, %v4997
    %v5322 = vpack.c.b16 %v5004, %v4998
    %v5323 = vpack.c.b16 %v5005, %v4999
    %v5324 = vpack.c.b16 %v5006, %v5000
    %v5325 = vpack.c.b16 %v5013, %v5007
    %v5326 = vpack.c.b16 %v5014, %v5008
    %v5327 = vpack.c.b16 %v5015, %v5009
    %v5328 = vpack.c.b16 %v5016, %v5010
    %v5329 = vpack.c.b16 %v5017, %v5011
    %v5330 = vpack.c.b16 %v5018, %v5012
    %v5331 = vpack.c.b16 %v5025, %v5019
    %v5332 = vpack.c.b16 %v5026, %v5020
    %v5333 = vpack.c.b16 %v5027, %v5021
    %v5334 = vpack.c.b16 %v5028, %v5022
    %v5335 = vpack.c.b16 %v5029, %v5023
    %v5336 = vpack.c.b16 %v5030, %v5024
    %v5337 = vpack.c.b16 %v5037, %v5031
    %v5338 = vpack.c.b16 %v5038, %v5032
    %v5339 = vpack.c.b16 %v5039, %v5033
    %v5340 = vpack.c.b16 %v5040, %v5034
    %v5341 = vpack.c.b16 %v5041, %v5035
    %v5342 = vpack.c.b16 %v5042, %v5036
    %v5343 = vpack.c.b16 %v5049, %v5043
    %v5344 = vpack.c.b16 %v5050, %v5044
    %v5345 = vpack.c.b16 %v5051, %v5045
    %v5346 = vpack.c.b16 %v5052, %v5046
    %v5347 = vpack.c.b16 %v5053, %v5047
    %v5348 = vpack.c.b16 %v5054, %v5048
    %v5349 = vpack.c.b16 %v5061, %v5055
    %v5350 = vpack.c.b16 %v5062, %v5056
    %v5351 = vpack.c.b16 %v5063, %v5057
    %v5352 = vpack.c.b16 %v5064, %v5058
    %v5353 = vpack.c.b16 %v5065, %v5059
    %v5354 = vpack.c.b16 %v5066, %v5060
    %v5355 = vpack.c.b16 %v5073, %v5067
    %v5356 = vpack.c.b16 %v5074, %v5068
    %v5357 = vpack.c.b16 %v5075, %v5069
    %v5358 = vpack.c.b16 %v5076, %v5070
    %v5359 = vpack.c.b16 %v5077, %v5071
    %v5360 = vpack.c.b16 %v5078, %v5072
    %v5361 = vpack.c.b16 %v5085, %v5079
    %v5362 = vpack.c.b16 %v5086, %v5080
    %v5363 = vpack.c.b16 %v5087, %v5081
    %v5364 = vpack.c.b16 %v5088, %v5082
    %v5365 = vpack.c.b16 %v5089, %v5083
    %v5366 = vpack.c.b16 %v5090, %v5084
    %v5367 = vpack.c.b16 %v5097, %v5091
    %v5368 = vpack.c.b16 %v5098, %v5092
    %v5369 = vpack.c.b16 %v5099, %v5093
    %v5370 = vpack.c.b16 %v5100, %v5094
    %v5371 = vpack.c.b16 %v5101, %v5095
    %v5372 = vpack.c.b16 %v5102, %v5096
    %v5373 = vpack.c.b16 %v5109, %v5103
    %v5374 = vpack.c.b16 %v5110, %v5104
    %v5375 = vpack.c.b16 %v5111, %v5105
    %v5376 = vpack.c.b16 %v5112, %v5106
    %v5377 = vpack.c.b16 %v5113, %v5107
    %v5378 = vpack.c.b16 %v5114, %v5108
    %v5379 = vpack.c.b16 %v5121, %v5115
    %v5380 = vpack.c.b16 %v5122, %v5116
    %v5381 = vpack.c.b16 %v5123, %v5117
    %v5382 = vpack.c.b16 %v5124, %v5118
    %v5383 = vpack.c.b16 %v5125, %v5119
    %v5384 = vpack.c.b16 %v5126, %v5120
    %v5385 = vpack.c.b16 %v5133, %v5127
    %v5386 = vpack.c.b16 %v5134, %v5128
    %v5387 = vpack.c.b16 %v5135, %v5129
    %v5388 = vpack.c.b16 %v5136, %v5130
    %v5389 = vpack.c.b16 %v5137, %v5131
    %v5390 = vpack.c.b16 %v5138, %v5132
    %v5391 = vpack.c.b16 %v5145, %v5139
    %v5392 = vpack.c.b16 %v5146, %v5140
    %v5393 = vpack.c.b16 %v5147, %v5141
    %v5394 = vpack.c.b16 %v5148, %v5142
    %v5395 = vpack.c.b16 %v5149, %v5143
    %v5396 = vpack.c.b16 %v5150, %v5144
    %v5397 = vpack.c.b16 %v5157, %v5151
    %v5398 = vpack.c.b16 %v5158, %v5152
    %v5399 = vpack.c.b16 %v5159, %v5153
    %v5400 = vpack.c.b16 %v5160, %v5154
    %v5401 = vpack.c.b16 %v5161, %v5155
    %v5402 = vpack.c.b16 %v5162, %v5156
    %v5403 = vpack.c.b16 %v5169, %v5163
    %v5404 = vpack.c.b16 %v5170, %v5164
    %v5405 = vpack.c.b16 %v5171, %v5165
    %v5406 = vpack.c.b16 %v5172, %v5166
    %v5407 = vpack.c.b16 %v5173, %v5167
    %v5408 = vpack.c.b16 %v5174, %v5168
    %v5409 = vpack.c.b16 %v5181, %v5175
    %v5410 = vpack.c.b16 %v5182, %v5176
    %v5411 = vpack.c.b16 %v5183, %v5177
    %v5412 = vpack.c.b16 %v5184, %v5178
    %v5413 = vpack.c.b16 %v5185, %v5179
    %v5414 = vpack.c.b16 %v5186, %v5180
    %v5415 = vpack.c.b16 %v5193, %v5187
    %v5416 = vpack.c.b16 %v5194, %v5188
    %v5417 = vpack.c.b16 %v5195, %v5189
    %v5418 = vpack.c.b16 %v5196, %v5190
    %v5419 = vpack.c.b16 %v5197, %v5191
    %v5420 = vpack.c.b16 %v5198, %v5192
    %v5421 = vpack.c.b16 %v5205, %v5199
    %v5422 = vpack.c.b16 %v5206, %v5200
    %v5423 = vpack.c.b16 %v5207, %v5201
    %v5424 = vpack.c.b16 %v5208, %v5202
    %v5425 = vpack.c.b16 %v5209, %v5203
    %v5426 = vpack.c.b16 %v5210, %v5204
    %v5427 = vpack.c.b16 %v5217, %v5211
    %v5428 = vpack.c.b16 %v5218, %v5212
    %v5429 = vpack.c.b16 %v5219, %v5213
    %v5430 = vpack.c.b16 %v5220, %v5214
    %v5431 = vpack.c.b16 %v5221, %v5215
    %v5432 = vpack.c.b16 %v5222, %v5216
    %v5433 = vpack.c.b16 %v5229, %v5223
    %v5434 = vpack.c.b16 %v5230, %v5224
    %v5435 = vpack.c.b16 %v5231, %v5225
    %v5436 = vpack.c.b16 %v5232, %v5226
    %v5437 = vpack.c.b16 %v5233, %v5227
    %v5438 = vpack.c.b16 %v5234, %v5228
    %v5439 = vpack.c.b16 %v5241, %v5235
    %v5440 = vpack.c.b16 %v5242, %v5236
    %v5441 = vpack.c.b16 %v5243, %v5237
    %v5442 = vpack.c.b16 %v5244, %v5238
    %v5443 = vpack.c.b16 %v5245, %v5239
    %v5444 = vpack.c.b16 %v5246, %v5240
    %v5445 = vpack.c.b16 %v5253, %v5247
    %v5446 = vpack.c.b16 %v5254, %v5248
    %v5447 = vpack.c.b16 %v5255, %v5249
    %v5448 = vpack.c.b16 %v5256, %v5250
    %v5449 = vpack.c.b16 %v5257, %v5251
    %v5450 = vpack.c.b16 %v5258, %v5252
    %5643 = vmatpush.bf16.msra.mxu0 %v5301
    %5644 = vmatpush.bf16.msra.mxu0 %v5295
    %5645 = vmatpush.bf16.msra.mxu0 %v5289
    %5646 = vmatpush.bf16.msra.mxu0 %v5283
    %5647 = vmatpush.bf16.msra.mxu0 %v5277
    %5648 = vmatpush.bf16.msra.mxu0 %v5271
    %5649 = vmatpush.bf16.msra.mxu0 %v5265
    %5650 = vmatpush.bf16.msra.mxu0 %v5259
    %5651 = vmatmul.bf16.gmra.mxu0 %v4473
    %v5652 = vpop.f32.mrf.mxu0
    %v5653 = vadd.f32 %v4671, %v5652
    %v5654 = vpop.f32.mrf.mxu0
    %5655 = vdwg.mxu0
    %5656 = vmatpush.bf16.msra.mxu0 %v5349
    %5657 = vmatpush.bf16.msra.mxu0 %v5343
    %5658 = vmatpush.bf16.msra.mxu0 %v5337
    %5659 = vmatpush.bf16.msra.mxu0 %v5331
    %5660 = vmatpush.bf16.msra.mxu0 %v5325
    %5661 = vmatpush.bf16.msra.mxu0 %v5319
    %5662 = vmatpush.bf16.msra.mxu0 %v5313
    %5663 = vmatpush.bf16.msra.mxu0 %v5307
    %5664 = vmatmul.bf16.gmra.mxu0 %v4474
    %v5665 = vpop.f32.mrf.mxu0
    %v5666 = vadd.f32 %v5653, %v5665
    %v5667 = vpop.f32.mrf.mxu0
    %5668 = vdwg.mxu0
    %5669 = vmatpush.bf16.msra.mxu0 %v5397
    %5670 = vmatpush.bf16.msra.mxu0 %v5391
    %5671 = vmatpush.bf16.msra.mxu0 %v5385
    %5672 = vmatpush.bf16.msra.mxu0 %v5379
    %5673 = vmatpush.bf16.msra.mxu0 %v5373
    %5674 = vmatpush.bf16.msra.mxu0 %v5367
    %5675 = vmatpush.bf16.msra.mxu0 %v5361
    %5676 = vmatpush.bf16.msra.mxu0 %v5355
    %5677 = vmatmul.bf16.gmra.mxu0 %v4475
    %v5678 = vpop.f32.mrf.mxu0
    %v5679 = vadd.f32 %v5666, %v5678
    %v5680 = vpop.f32.mrf.mxu0
    %5681 = vdwg.mxu0
    %5682 = vmatpush.bf16.msra.mxu0 %v5445
    %5683 = vmatpush.bf16.msra.mxu0 %v5439
    %5684 = vmatpush.bf16.msra.mxu0 %v5433
    %5685 = vmatpush.bf16.msra.mxu0 %v5427
    %5686 = vmatpush.bf16.msra.mxu0 %v5421
    %5687 = vmatpush.bf16.msra.mxu0 %v5415
    %5688 = vmatpush.bf16.msra.mxu0 %v5409
    %5689 = vmatpush.bf16.msra.mxu0 %v5403
    %5690 = vmatmul.bf16.gmra.mxu0 %v4476
    %v5691 = vpop.f32.mrf.mxu0
    %v5692 = vadd.f32 %v5679, %v5691
    %v5693 = vpop.f32.mrf.mxu0
    %5694 = vdwg.mxu0
    %5695 = vmatpush.bf16.msra.mxu0 %v5302
    %5696 = vmatpush.bf16.msra.mxu0 %v5296
    %5697 = vmatpush.bf16.msra.mxu0 %v5290
    %5698 = vmatpush.bf16.msra.mxu0 %v5284
    %5699 = vmatpush.bf16.msra.mxu0 %v5278
    %5700 = vmatpush.bf16.msra.mxu0 %v5272
    %5701 = vmatpush.bf16.msra.mxu0 %v5266
    %5702 = vmatpush.bf16.msra.mxu0 %v5260
    %5703 = vmatmul.bf16.gmra.mxu0 %v4473
    %v5704 = vpop.f32.mrf.mxu0
    %v5705 = vadd.f32 %v4672, %v5704
    %v5706 = vpop.f32.mrf.mxu0
    %5707 = vdwg.mxu0
    %5708 = vmatpush.bf16.msra.mxu0 %v5350
    %5709 = vmatpush.bf16.msra.mxu0 %v5344
    %5710 = vmatpush.bf16.msra.mxu0 %v5338
    %5711 = vmatpush.bf16.msra.mxu0 %v5332
    %5712 = vmatpush.bf16.msra.mxu0 %v5326
    %5713 = vmatpush.bf16.msra.mxu0 %v5320
    %5714 = vmatpush.bf16.msra.mxu0 %v5314
    %5715 = vmatpush.bf16.msra.mxu0 %v5308
    %5716 = vmatmul.bf16.gmra.mxu0 %v4474
    %v5717 = vpop.f32.mrf.mxu0
    %v5718 = vadd.f32 %v5705, %v5717
    %v5719 = vpop.f32.mrf.mxu0
    %5720 = vdwg.mxu0
    %5721 = vmatpush.bf16.msra.mxu0 %v5398
    %5722 = vmatpush.bf16.msra.mxu0 %v5392
    %5723 = vmatpush.bf16.msra.mxu0 %v5386
    %5724 = vmatpush.bf16.msra.mxu0 %v5380
    %5725 = vmatpush.bf16.msra.mxu0 %v5374
    %5726 = vmatpush.bf16.msra.mxu0 %v5368
    %5727 = vmatpush.bf16.msra.mxu0 %v5362
    %5728 = vmatpush.bf16.msra.mxu0 %v5356
    %5729 = vmatmul.bf16.gmra.mxu0 %v4475
    %v5730 = vpop.f32.mrf.mxu0
    %v5731 = vadd.f32 %v5718, %v5730
    %v5732 = vpop.f32.mrf.mxu0
    %5733 = vdwg.mxu0
    %5734 = vmatpush.bf16.msra.mxu0 %v5446
    %5735 = vmatpush.bf16.msra.mxu0 %v5440
    %5736 = vmatpush.bf16.msra.mxu0 %v5434
    %5737 = vmatpush.bf16.msra.mxu0 %v5428
    %5738 = vmatpush.bf16.msra.mxu0 %v5422
    %5739 = vmatpush.bf16.msra.mxu0 %v5416
    %5740 = vmatpush.bf16.msra.mxu0 %v5410
    %5741 = vmatpush.bf16.msra.mxu0 %v5404
    %5742 = vmatmul.bf16.gmra.mxu0 %v4476
    %v5743 = vpop.f32.mrf.mxu0
    %v5744 = vadd.f32 %v5731, %v5743
    %v5745 = vpop.f32.mrf.mxu0
    %5746 = vdwg.mxu0
    %5747 = vmatpush.bf16.msra.mxu0 %v5303
    %5748 = vmatpush.bf16.msra.mxu0 %v5297
    %5749 = vmatpush.bf16.msra.mxu0 %v5291
    %5750 = vmatpush.bf16.msra.mxu0 %v5285
    %5751 = vmatpush.bf16.msra.mxu0 %v5279
    %5752 = vmatpush.bf16.msra.mxu0 %v5273
    %5753 = vmatpush.bf16.msra.mxu0 %v5267
    %5754 = vmatpush.bf16.msra.mxu0 %v5261
    %5755 = vmatmul.bf16.gmra.mxu0 %v4473
    %v5756 = vpop.f32.mrf.mxu0
    %v5757 = vadd.f32 %v4673, %v5756
    %v5758 = vpop.f32.mrf.mxu0
    %5759 = vdwg.mxu0
    %5760 = vmatpush.bf16.msra.mxu0 %v5351
    %5761 = vmatpush.bf16.msra.mxu0 %v5345
    %5762 = vmatpush.bf16.msra.mxu0 %v5339
    %5763 = vmatpush.bf16.msra.mxu0 %v5333
    %5764 = vmatpush.bf16.msra.mxu0 %v5327
    %5765 = vmatpush.bf16.msra.mxu0 %v5321
    %5766 = vmatpush.bf16.msra.mxu0 %v5315
    %5767 = vmatpush.bf16.msra.mxu0 %v5309
    %5768 = vmatmul.bf16.gmra.mxu0 %v4474
    %v5769 = vpop.f32.mrf.mxu0
    %v5770 = vadd.f32 %v5757, %v5769
    %v5771 = vpop.f32.mrf.mxu0
    %5772 = vdwg.mxu0
    %5773 = vmatpush.bf16.msra.mxu0 %v5399
    %5774 = vmatpush.bf16.msra.mxu0 %v5393
    %5775 = vmatpush.bf16.msra.mxu0 %v5387
    %5776 = vmatpush.bf16.msra.mxu0 %v5381
    %5777 = vmatpush.bf16.msra.mxu0 %v5375
    %5778 = vmatpush.bf16.msra.mxu0 %v5369
    %5779 = vmatpush.bf16.msra.mxu0 %v5363
    %5780 = vmatpush.bf16.msra.mxu0 %v5357
    %5781 = vmatmul.bf16.gmra.mxu0 %v4475
    %v5782 = vpop.f32.mrf.mxu0
    %v5783 = vadd.f32 %v5770, %v5782
    %v5784 = vpop.f32.mrf.mxu0
    %5785 = vdwg.mxu0
    %5786 = vmatpush.bf16.msra.mxu0 %v5447
    %5787 = vmatpush.bf16.msra.mxu0 %v5441
    %5788 = vmatpush.bf16.msra.mxu0 %v5435
    %5789 = vmatpush.bf16.msra.mxu0 %v5429
    %5790 = vmatpush.bf16.msra.mxu0 %v5423
    %5791 = vmatpush.bf16.msra.mxu0 %v5417
    %5792 = vmatpush.bf16.msra.mxu0 %v5411
    %5793 = vmatpush.bf16.msra.mxu0 %v5405
    %5794 = vmatmul.bf16.gmra.mxu0 %v4476
    %v5795 = vpop.f32.mrf.mxu0
    %v5796 = vadd.f32 %v5783, %v5795
    %v5797 = vpop.f32.mrf.mxu0
    %5798 = vdwg.mxu0
    %5799 = vmatpush.bf16.msra.mxu0 %v5304
    %5800 = vmatpush.bf16.msra.mxu0 %v5298
    %5801 = vmatpush.bf16.msra.mxu0 %v5292
    %5802 = vmatpush.bf16.msra.mxu0 %v5286
    %5803 = vmatpush.bf16.msra.mxu0 %v5280
    %5804 = vmatpush.bf16.msra.mxu0 %v5274
    %5805 = vmatpush.bf16.msra.mxu0 %v5268
    %5806 = vmatpush.bf16.msra.mxu0 %v5262
    %5807 = vmatmul.bf16.gmra.mxu0 %v4473
    %v5808 = vpop.f32.mrf.mxu0
    %v5809 = vadd.f32 %v4674, %v5808
    %v5810 = vpop.f32.mrf.mxu0
    %5811 = vdwg.mxu0
    %5812 = vmatpush.bf16.msra.mxu0 %v5352
    %5813 = vmatpush.bf16.msra.mxu0 %v5346
    %5814 = vmatpush.bf16.msra.mxu0 %v5340
    %5815 = vmatpush.bf16.msra.mxu0 %v5334
    %5816 = vmatpush.bf16.msra.mxu0 %v5328
    %5817 = vmatpush.bf16.msra.mxu0 %v5322
    %5818 = vmatpush.bf16.msra.mxu0 %v5316
    %5819 = vmatpush.bf16.msra.mxu0 %v5310
    %5820 = vmatmul.bf16.gmra.mxu0 %v4474
    %v5821 = vpop.f32.mrf.mxu0
    %v5822 = vadd.f32 %v5809, %v5821
    %v5823 = vpop.f32.mrf.mxu0
    %5824 = vdwg.mxu0
    %5825 = vmatpush.bf16.msra.mxu0 %v5400
    %5826 = vmatpush.bf16.msra.mxu0 %v5394
    %5827 = vmatpush.bf16.msra.mxu0 %v5388
    %5828 = vmatpush.bf16.msra.mxu0 %v5382
    %5829 = vmatpush.bf16.msra.mxu0 %v5376
    %5830 = vmatpush.bf16.msra.mxu0 %v5370
    %5831 = vmatpush.bf16.msra.mxu0 %v5364
    %5832 = vmatpush.bf16.msra.mxu0 %v5358
    %5833 = vmatmul.bf16.gmra.mxu0 %v4475
    %v5834 = vpop.f32.mrf.mxu0
    %v5835 = vadd.f32 %v5822, %v5834
    %v5836 = vpop.f32.mrf.mxu0
    %5837 = vdwg.mxu0
    %5838 = vmatpush.bf16.msra.mxu0 %v5448
    %5839 = vmatpush.bf16.msra.mxu0 %v5442
    %5840 = vmatpush.bf16.msra.mxu0 %v5436
    %5841 = vmatpush.bf16.msra.mxu0 %v5430
    %5842 = vmatpush.bf16.msra.mxu0 %v5424
    %5843 = vmatpush.bf16.msra.mxu0 %v5418
    %5844 = vmatpush.bf16.msra.mxu0 %v5412
    %5845 = vmatpush.bf16.msra.mxu0 %v5406
    %5846 = vmatmul.bf16.gmra.mxu0 %v4476
    %v5847 = vpop.f32.mrf.mxu0
    %v5848 = vadd.f32 %v5835, %v5847
    %v5849 = vpop.f32.mrf.mxu0
    %5850 = vdwg.mxu0
    %5851 = vmatpush.bf16.msra.mxu0 %v5305
    %5852 = vmatpush.bf16.msra.mxu0 %v5299
    %5853 = vmatpush.bf16.msra.mxu0 %v5293
    %5854 = vmatpush.bf16.msra.mxu0 %v5287
    %5855 = vmatpush.bf16.msra.mxu0 %v5281
    %5856 = vmatpush.bf16.msra.mxu0 %v5275
    %5857 = vmatpush.bf16.msra.mxu0 %v5269
    %5858 = vmatpush.bf16.msra.mxu0 %v5263
    %5859 = vmatmul.bf16.gmra.mxu0 %v4473
    %v5860 = vpop.f32.mrf.mxu0
    %v5861 = vadd.f32 %v4675, %v5860
    %v5862 = vpop.f32.mrf.mxu0
    %5863 = vdwg.mxu0
    %5864 = vmatpush.bf16.msra.mxu0 %v5353
    %5865 = vmatpush.bf16.msra.mxu0 %v5347
    %5866 = vmatpush.bf16.msra.mxu0 %v5341
    %5867 = vmatpush.bf16.msra.mxu0 %v5335
    %5868 = vmatpush.bf16.msra.mxu0 %v5329
    %5869 = vmatpush.bf16.msra.mxu0 %v5323
    %5870 = vmatpush.bf16.msra.mxu0 %v5317
    %5871 = vmatpush.bf16.msra.mxu0 %v5311
    %5872 = vmatmul.bf16.gmra.mxu0 %v4474
    %v5873 = vpop.f32.mrf.mxu0
    %v5874 = vadd.f32 %v5861, %v5873
    %v5875 = vpop.f32.mrf.mxu0
    %5876 = vdwg.mxu0
    %5877 = vmatpush.bf16.msra.mxu0 %v5401
    %5878 = vmatpush.bf16.msra.mxu0 %v5395
    %5879 = vmatpush.bf16.msra.mxu0 %v5389
    %5880 = vmatpush.bf16.msra.mxu0 %v5383
    %5881 = vmatpush.bf16.msra.mxu0 %v5377
    %5882 = vmatpush.bf16.msra.mxu0 %v5371
    %5883 = vmatpush.bf16.msra.mxu0 %v5365
    %5884 = vmatpush.bf16.msra.mxu0 %v5359
    %5885 = vmatmul.bf16.gmra.mxu0 %v4475
    %v5886 = vpop.f32.mrf.mxu0
    %v5887 = vadd.f32 %v5874, %v5886
    %v5888 = vpop.f32.mrf.mxu0
    %5889 = vdwg.mxu0
    %5890 = vmatpush.bf16.msra.mxu0 %v5449
    %5891 = vmatpush.bf16.msra.mxu0 %v5443
    %5892 = vmatpush.bf16.msra.mxu0 %v5437
    %5893 = vmatpush.bf16.msra.mxu0 %v5431
    %5894 = vmatpush.bf16.msra.mxu0 %v5425
    %5895 = vmatpush.bf16.msra.mxu0 %v5419
    %5896 = vmatpush.bf16.msra.mxu0 %v5413
    %5897 = vmatpush.bf16.msra.mxu0 %v5407
    %5898 = vmatmul.bf16.gmra.mxu0 %v4476
    %v5899 = vpop.f32.mrf.mxu0
    %v5900 = vadd.f32 %v5887, %v5899
    %v5901 = vpop.f32.mrf.mxu0
    %5902 = vdwg.mxu0
    %5903 = vmatpush.bf16.msra.mxu0 %v5306
    %5904 = vmatpush.bf16.msra.mxu0 %v5300
    %5905 = vmatpush.bf16.msra.mxu0 %v5294
    %5906 = vmatpush.bf16.msra.mxu0 %v5288
    %5907 = vmatpush.bf16.msra.mxu0 %v5282
    %5908 = vmatpush.bf16.msra.mxu0 %v5276
    %5909 = vmatpush.bf16.msra.mxu0 %v5270
    %5910 = vmatpush.bf16.msra.mxu0 %v5264
    %5911 = vmatmul.bf16.gmra.mxu0 %v4473
    %v5912 = vpop.f32.mrf.mxu0
    %v5913 = vadd.f32 %v4676, %v5912
    %v5914 = vpop.f32.mrf.mxu0
    %5915 = vdwg.mxu0
    %5916 = vmatpush.bf16.msra.mxu0 %v5354
    %5917 = vmatpush.bf16.msra.mxu0 %v5348
    %5918 = vmatpush.bf16.msra.mxu0 %v5342
    %5919 = vmatpush.bf16.msra.mxu0 %v5336
    %5920 = vmatpush.bf16.msra.mxu0 %v5330
    %5921 = vmatpush.bf16.msra.mxu0 %v5324
    %5922 = vmatpush.bf16.msra.mxu0 %v5318
    %5923 = vmatpush.bf16.msra.mxu0 %v5312
    %5924 = vmatmul.bf16.gmra.mxu0 %v4474
    %v5925 = vpop.f32.mrf.mxu0
    %v5926 = vadd.f32 %v5913, %v5925
    %v5927 = vpop.f32.mrf.mxu0
    %5928 = vdwg.mxu0
    %5929 = vmatpush.bf16.msra.mxu0 %v5402
    %5930 = vmatpush.bf16.msra.mxu0 %v5396
    %5931 = vmatpush.bf16.msra.mxu0 %v5390
    %5932 = vmatpush.bf16.msra.mxu0 %v5384
    %5933 = vmatpush.bf16.msra.mxu0 %v5378
    %5934 = vmatpush.bf16.msra.mxu0 %v5372
    %5935 = vmatpush.bf16.msra.mxu0 %v5366
    %5936 = vmatpush.bf16.msra.mxu0 %v5360
    %5937 = vmatmul.bf16.gmra.mxu0 %v4475
    %v5938 = vpop.f32.mrf.mxu0
    %v5939 = vadd.f32 %v5926, %v5938
    %v5940 = vpop.f32.mrf.mxu0
    %5941 = vdwg.mxu0
    %5942 = vmatpush.bf16.msra.mxu0 %v5450
    %5943 = vmatpush.bf16.msra.mxu0 %v5444
    %5944 = vmatpush.bf16.msra.mxu0 %v5438
    %5945 = vmatpush.bf16.msra.mxu0 %v5432
    %5946 = vmatpush.bf16.msra.mxu0 %v5426
    %5947 = vmatpush.bf16.msra.mxu0 %v5420
    %5948 = vmatpush.bf16.msra.mxu0 %v5414
    %5949 = vmatpush.bf16.msra.mxu0 %v5408
    %5950 = vmatmul.bf16.gmra.mxu0 %v4476
    %v5951 = vpop.f32.mrf.mxu0
    %v5952 = vadd.f32 %v5939, %v5951
    %v5953 = vpop.f32.mrf.mxu0
    %5954 = vdwg.mxu0
    %v5955 = vsub.f32 0.0, %v5692
    %v5956 = vsub.f32 0.0, %v5744
    %v5957 = vsub.f32 0.0, %v5796
    %v5958 = vsub.f32 0.0, %v5848
    %v5959 = vsub.f32 0.0, %v5900
    %v5960 = vsub.f32 0.0, %v5952
    %v5961 = vmul.f32 %v5955, 1.442695
    %v5962 = vpow.pop %v5961
    %v5963 = vmul.f32 %v5956, 1.442695
    %v5964 = vpow.pop %v5963
    %v5965 = vmul.f32 %v5957, 1.442695
    %v5966 = vpow.pop %v5965
    %v5967 = vmul.f32 %v5958, 1.442695
    %v5968 = vpow.pop %v5967
    %v5969 = vmul.f32 %v5959, 1.442695
    %v5970 = vpow.pop %v5969
    %v5971 = vmul.f32 %v5960, 1.442695
    %v5972 = vpow.pop %v5971
    %v5973 = vadd.f32 %v5962, 1.0
    %v5974 = vadd.f32 %v5964, 1.0
    %v5975 = vadd.f32 %v5966, 1.0
    %v5976 = vadd.f32 %v5968, 1.0
    %v5977 = vadd.f32 %v5970, 1.0
    %v5978 = vadd.f32 %v5972, 1.0
    %v5979 = vrcp.pop %v5973
    %v5980 = vrcp.pop %v5974
    %v5981 = vrcp.pop %v5975
    %v5982 = vrcp.pop %v5976
    %v5983 = vrcp.pop %v5977
    %v5984 = vrcp.pop %v5978
    %v5985 = vpack.c.bf16 %v5980, %v5979
    %v5986 = vpack.c.bf16 %v5982, %v5981
    %v5987 = vpack.c.bf16 %v5984, %v5983
    %v5991 = vrot.slane %v5985, 3
    %v5992 = vrot.slane %v5986, 6
    %v5993 = vrot.slane %v5986, 1
    %v5994 = vrot.slane %v5987, 4
    %v5995 = vrot.slane %v5987, 7
    %vm5996 = vcmask 1040384
    %v5999 = vsel %vm5996, %v5985, %v5991
    %vm6000 = vcmask 1041408
    %v6002 = vsel %vm6000, %v5999, %v5992
    %vm6003 = vcmask 1043459
    %v6006 = vsel %vm6003, %v5993, %v5994
    %vm6007 = vcmask 1044483
    %v6009 = vsel %vm6007, %v6006, %v5995
    %vm6010 = vcmask 1042432
    %v6011 = vsel %vm6010, %v6002, %v6009
    %6013 = vst [vmem:[#allocation22] sm:$0x3f] %v6011
    %6014 = vst [vmem:[#allocation23] sm:$0x3] %v3159
    %6015 = vst [vmem:[#allocation25] sm:$0x3] %v3211
    %6016 = vst [vmem:[#allocation26] sm:$0x3] %v3219
    // Predicated region
    $region106: #{tpu_custom_call.1} parent=1 // pred_check
      _
    $region107: #{tpu_custom_call.1} parent=1 // pred_check_branch
      %6018 = sbr.rel (0) target = $region109
    $region108: #{tpu_custom_call.1} parent=1 // pred_region
      %6020 = vsyncadd [#allocation4], 0
      %s6022 = sshll.u32 [#allocation22], 4
      %s6023 = int_to_ptr.vmem [resolvable:$true] %s6022
      %s6024 = sshll.u32 %s14, 4
      %s6025 = int_to_ptr.hbm [resolvable:$true] %s6024
      %6027 = dma.vmem_to_hbm [thread:$0]  %s6023, 96, %s6025, [#allocation4]
    $region109: #{tpu_custom_call.1} parent=1 // pred_fallthru
      _
    // Predicated region
    $region110: #{tpu_custom_call.1} parent=1 // pred_check
      _
    $region111: #{tpu_custom_call.1} parent=1 // pred_check_branch
      %6029 = sbr.rel (0) target = $region113
    $region112: #{tpu_custom_call.1} parent=1 // pred_region
      %6031 = vsyncadd [#allocation24], 0
      %s6033 = sshll.u32 [#allocation23], 4
      %s6034 = int_to_ptr.vmem [resolvable:$true] %s6033
      %s6035 = sshll.u32 %s15, 4
      %s6036 = int_to_ptr.hbm [resolvable:$true] %s6035
      %6038 = dma.vmem_to_hbm [thread:$0]  %s6034, 32, %s6036, [#allocation24]
    $region113: #{tpu_custom_call.1} parent=1 // pred_fallthru
      _
    // Predicated region
    $region114: #{tpu_custom_call.1} parent=1 // pred_check
      _
    $region115: #{tpu_custom_call.1} parent=1 // pred_check_branch
      %6040 = sbr.rel (0) target = $region117
    $region116: #{tpu_custom_call.1} parent=1 // pred_region
      %6042 = vsyncadd [#allocation24], 0
      %s6044 = sshll.u32 [#allocation25], 4
      %s6045 = int_to_ptr.vmem [resolvable:$true] %s6044
      %s6046 = sshll.u32 %s16, 4
      %s6047 = int_to_ptr.hbm [resolvable:$true] %s6046
      %6049 = dma.vmem_to_hbm [thread:$0]  %s6045, 32, %s6047, [#allocation24]
    $region117: #{tpu_custom_call.1} parent=1 // pred_fallthru
      _
    // Predicated region
    $region118: #{tpu_custom_call.1} parent=1 // pred_check
      _
    $region119: #{tpu_custom_call.1} parent=1 // pred_check_branch
      %6051 = sbr.rel (0) target = $region121
    $region120: #{tpu_custom_call.1} parent=1 // pred_region
      %6053 = vsyncadd [#allocation27], 0
      %s6055 = sshll.u32 [#allocation26], 4
      %s6056 = int_to_ptr.vmem [resolvable:$true] %s6055
      %s6057 = sshll.u32 %s17, 4
      %s6058 = int_to_ptr.hbm [resolvable:$true] %s6057
      %6060 = dma.vmem_to_hbm [thread:$0]  %s6056, 32, %s6058, [#allocation27]
    $region121: #{tpu_custom_call.1} parent=1 // pred_fallthru
      _
    // Predicated region
    $region122: #{tpu_custom_call.1} parent=1 // pred_check
      _
    $region123: #{tpu_custom_call.1} parent=1 // pred_check_branch
      %6062 = sbr.rel (0) target = $region125
    $region124: #{tpu_custom_call.1} parent=1 // pred_region
      %6064 = dma.done [#allocation4], 96
    $region125: #{tpu_custom_call.1} parent=1 // pred_fallthru
      _
    // Predicated region
    $region126: #{tpu_custom_call.1} parent=1 // pred_check
      _
    $region127: #{tpu_custom_call.1} parent=1 // pred_check_branch
      %6066 = sbr.rel (0) target = $region129
    $region128: #{tpu_custom_call.1} parent=1 // pred_region
      %6068 = dma.done [#allocation24], 32
    $region129: #{tpu_custom_call.1} parent=1 // pred_fallthru
      _
    // Predicated region
    $region130: #{tpu_custom_call.1} parent=1 // pred_check
      _
    $region131: #{tpu_custom_call.1} parent=1 // pred_check_branch
      %6070 = sbr.rel (0) target = $region133
    $region132: #{tpu_custom_call.1} parent=1 // pred_region
      %6072 = dma.done [#allocation24], 32
    $region133: #{tpu_custom_call.1} parent=1 // pred_fallthru
      _
    // Predicated region
    $region134: #{tpu_custom_call.1} parent=1 // pred_check
      _
    $region135: #{tpu_custom_call.1} parent=1 // pred_check_branch
      %6074 = sbr.rel (0) target = $region137
    $region136: #{tpu_custom_call.1} parent=1 // pred_region
      %6076 = dma.done [#allocation27], 32
    $region137: #{tpu_custom_call.1} parent=1 // pred_fallthru
      _
    %6077 = vsyncpa [#allocation3], 1
    %6078 = vsyncpa [#allocation6], 1
    %6079 = vsyncpa [#allocation9], 1
    %6080 = vsyncpa [#allocation12], 1
    %6081 = vsyncpa [#allocation15], 1
    %6082 = vsyncpa [#allocation18], 1
    %6083 = vsyncpa [#allocation21], 1
    %6084 = vsyncpa [#allocation4], 1
    %6085 = vsyncpa [#allocation24], 1
    %6086 = vsyncpa [#allocation27], 1

// kernel: tpu_custom_call.1
$region0: #{tpu_custom_call.1}
  #allocation0 [shape = 'u32[]', space=smem, size = 0x4, offset = 0x4, fixed_abs, tag = 'smem constant byte address 0x4 - core index']
  #allocation1 [shape = 'u32[72,128]{1,0:T(1,128)}', space=vmem, size = 0x9000, scoped, tag = 'internal scratch']
  %s0 = inlined_call_operand.hbm [shape: bf16[2,768], index: 0, kind: input, shape index: {}]
  %s1 = inlined_call_operand.hbm [shape: f32[2,128], index: 1, kind: input, shape index: {}]
  %s2 = inlined_call_operand.hbm [shape: bf16[768,512], index: 2, kind: input, shape index: {}]
  %s3 = inlined_call_operand.hbm [shape: f32[1,512], index: 3, kind: input, shape index: {}]
  %s4 = inlined_call_operand.hbm [shape: bf16[512,512], index: 4, kind: input, shape index: {}]
  %s5 = inlined_call_operand.vmem [shape: f32[1,512], index: 5, kind: input, shape index: {}]
  %s6 = inlined_call_operand.hbm [shape: bf16[512,256], index: 6, kind: input, shape index: {}]
  %s7 = inlined_call_operand.hbm [shape: f32[1,256], index: 7, kind: input, shape index: {}]
  %s8 = inlined_call_operand.hbm [shape: bf16[128,512], index: 8, kind: input, shape index: {}]
  %s9 = inlined_call_operand.hbm [shape: f32[1,512], index: 9, kind: input, shape index: {}]
  %s10 = inlined_call_operand.hbm [shape: bf16[512,512], index: 10, kind: input, shape index: {}]
  %s11 = inlined_call_operand.hbm [shape: f32[1,512], index: 11, kind: input, shape index: {}]
  %s12 = inlined_call_operand.hbm [shape: bf16[512,768], index: 12, kind: input, shape index: {}]
  %s13 = inlined_call_operand.vmem [shape: f32[1,768], index: 13, kind: input, shape index: {}]
  %s14 = inlined_call_operand.hbm [shape: bf16[2,768], index: 14, kind: output, shape index: {0}]
  %s15 = inlined_call_operand.hbm [shape: f32[2,128], index: 15, kind: output, shape index: {1}]
  %s16 = inlined_call_operand.hbm [shape: f32[2,128], index: 16, kind: output, shape index: {2}]
  %s17 = inlined_call_operand.hbm [shape: f32[2,128], index: 17, kind: output, shape index: {3}]
  %18 = xla_tuple %s14, %s15, %s16, %s17
  %s19 = sld [smem:[#allocation0]]
  $region138: #{tpu_custom_call.1} parent=0
    _
  %s21 = ssub.s32 1, %s19
  %s22 = scalar_select 0, %s21, %s19
  $region1: #{tpu_custom_call.1} parent=0
    #allocation2 [shape = 'u8[3072]{0}', space=vmem, size = 0xc00, scoped, tag = 'input window, operand 0, single buffered']
    #allocation3 [shape = 's32[1]{0}', space=sflag, size = 0x4, scoped, tag = 'scoped memory for tpu_custom_call.1']
    #allocation4 [shape = 's32[1]{0}', space=sflag, size = 0x4, scoped, tag = 'scoped memory for tpu_custom_call.1']
    #allocation5 [shape = 'u8[1024]{0}', space=vmem, size = 0x400, scoped, tag = 'input window, operand 1, single buffered']
    #allocation6 [shape = 's32[1]{0}', space=sflag, size = 0x4, scoped, tag = 'scoped memory for tpu_custom_call.1']
    #allocation7 [shape = 'u8[786432]{0}', space=vmem, size = 0xc0000, scoped, tag = 'input window, operand 2, single buffered']
    #allocation8 [shape = 'u8[2048]{0}', space=vmem, size = 0x800, scoped, tag = 'input window, operand 3, single buffered']
    #allocation9 [shape = 's32[1]{0}', space=sflag, size = 0x4, scoped, tag = 'scoped memory for tpu_custom_call.1']
    #allocation10 [shape = 'u8[524288]{0}', space=vmem, size = 0x80000, scoped, tag = 'input window, operand 4, single buffered']
    #allocation11 [shape = 'u8[262144]{0}', space=vmem, size = 0x40000, scoped, tag = 'input window, operand 6, single buffered']
    #allocation12 [shape = 's32[1]{0}', space=sflag, size = 0x4, scoped, tag = 'scoped memory for tpu_custom_call.1']
    #allocation13 [shape = 'u8[1024]{0}', space=vmem, size = 0x400, scoped, tag = 'input window, operand 7, single buffered']
    #allocation14 [shape = 'u8[131072]{0}', space=vmem, size = 0x20000, scoped, tag = 'input window, operand 8, single buffered']
    #allocation15 [shape = 's32[1]{0}', space=sflag, size = 0x4, scoped, tag = 'scoped memory for tpu_custom_call.1']
    #allocation16 [shape = 'u8[2048]{0}', space=vmem, size = 0x800, scoped, tag = 'input window, operand 9, single buffered']
    #allocation17 [shape = 'u8[524288]{0}', space=vmem, size = 0x80000, scoped, tag = 'input window, operand 10, single buffered']
    #allocation18 [shape = 's32[1]{0}', space=sflag, size = 0x4, scoped, tag = 'scoped memory for tpu_custom_call.1']
    #allocation19 [shape = 'u8[2048]{0}', space=vmem, size = 0x800, scoped, tag = 'input window, operand 11, single buffered']
    #allocation20 [shape = 'u8[786432]{0}', space=vmem, size = 0xc0000, scoped, tag = 'input window, operand 12, single buffered']
    #allocation21 [shape = 's32[1]{0}', space=sflag, size = 0x4, scoped, tag = 'scoped memory for tpu_custom_call.1']
    #allocation22 [shape = 'u8[3072]{0}', space=vmem, size = 0xc00, scoped, tag = 'output window, operand 0, single buffered']
    #allocation23 [shape = 'u8[1024]{0}', space=vmem, size = 0x400, scoped, tag = 'output window, operand 1, single buffered']
    #allocation24 [shape = 's32[1]{0}', space=sflag, size = 0x4, scoped, tag = 'scoped memory for tpu_custom_call.1']
    #allocation25 [shape = 'u8[1024]{0}', space=vmem, size = 0x400, scoped, tag = 'output window, operand 2, single buffered']
    #allocation26 [shape = 'u8[1024]{0}', space=vmem, size = 0x400, scoped, tag = 'output window, operand 3, single buffered']
    #allocation27 [shape = 's32[1]{0}', space=sflag, size = 0x4, scoped, tag = 'scoped memory for tpu_custom_call.1']
    %23 = vsyncpa [#allocation3], 0
    %24 = vsyncpa [#allocation6], 0
    %25 = vsyncpa [#allocation9], 0
    %26 = vsyncpa [#allocation12], 0
    %27 = vsyncpa [#allocation15], 0
    %28 = vsyncpa [#allocation18], 0
    %29 = vsyncpa [#allocation21], 0
    %30 = vsyncpa [#allocation4], 0
    %31 = vsyncpa [#allocation24], 0
    %32 = vsyncpa [#allocation27], 0
    // Predicated region
    $region2: #{tpu_custom_call.1} parent=1 // pred_check
      _
    $region3: #{tpu_custom_call.1} parent=1 // pred_check_branch
      %34 = sbr.rel (0) target = $region5
    $region4: #{tpu_custom_call.1} parent=1 // pred_region
      %36 = vsyncadd [#allocation3], 0
      %s38 = sshll.u32 %s0, 4
      %s39 = int_to_ptr.hbm [resolvable:$true] %s38
      %s40 = sshll.u32 [#allocation2], 4
      %s41 = int_to_ptr.vmem [resolvable:$true] %s40
      %43 = dma.hbm_to_vmem [thread:$0]  %s39, 96, %s41, [#allocation3]
    $region5: #{tpu_custom_call.1} parent=1 // pred_fallthru
      _
    // Predicated region
    $region6: #{tpu_custom_call.1} parent=1 // pred_check
      _
    $region7: #{tpu_custom_call.1} parent=1 // pred_check_branch
      %45 = sbr.rel (0) target = $region9
    $region8: #{tpu_custom_call.1} parent=1 // pred_region
      %47 = vsyncadd [#allocation6], 0
      %s49 = sshll.u32 %s1, 4
      %s50 = int_to_ptr.hbm [resolvable:$true] %s49
      %s51 = sshll.u32 [#allocation5], 4
      %s52 = int_to_ptr.vmem [resolvable:$true] %s51
      %54 = dma.hbm_to_vmem [thread:$0]  %s50, 32, %s52, [#allocation6]
    $region9: #{tpu_custom_call.1} parent=1 // pred_fallthru
      _
    // Predicated region
    $region10: #{tpu_custom_call.1} parent=1 // pred_check
      _
    $region11: #{tpu_custom_call.1} parent=1 // pred_check_branch
      %56 = sbr.rel (0) target = $region13
    $region12: #{tpu_custom_call.1} parent=1 // pred_region
      %58 = vsyncadd [#allocation6], 0
      %s59 = sshll.u32 %s2, 4
      %s60 = int_to_ptr.hbm [resolvable:$true] %s59
      %s61 = sshll.u32 [#allocation7], 4
      %s62 = int_to_ptr.vmem [resolvable:$true] %s61
      %67 = dma.hbm_to_vmem [thread:$0]  %s60, 24576, %s62, [#allocation6], 256, 256, 16
    $region13: #{tpu_custom_call.1} parent=1 // pred_fallthru
      _
    // Predicated region
    $region14: #{tpu_custom_call.1} parent=1 // pred_check
      _
    $region15: #{tpu_custom_call.1} parent=1 // pred_check_branch
      %69 = sbr.rel (0) target = $region17
    $region16: #{tpu_custom_call.1} parent=1 // pred_region
      %71 = vsyncadd [#allocation9], 0
      %s73 = sshll.u32 %s3, 4
      %s74 = int_to_ptr.hbm [resolvable:$true] %s73
      %s75 = sshll.u32 [#allocation8], 4
      %s76 = int_to_ptr.vmem [resolvable:$true] %s75
      %78 = dma.hbm_to_vmem [thread:$0]  %s74, 64, %s76, [#allocation9]
    $region17: #{tpu_custom_call.1} parent=1 // pred_fallthru
      _
    // Predicated region
    $region18: #{tpu_custom_call.1} parent=1 // pred_check
      _
    $region19: #{tpu_custom_call.1} parent=1 // pred_check_branch
      %80 = sbr.rel (0) target = $region21
    $region20: #{tpu_custom_call.1} parent=1 // pred_region
      %82 = vsyncadd [#allocation9], 0
      %s83 = sshll.u32 %s4, 4
      %s84 = int_to_ptr.hbm [resolvable:$true] %s83
      %s85 = sshll.u32 [#allocation10], 4
      %s86 = int_to_ptr.vmem [resolvable:$true] %s85
      %91 = dma.hbm_to_vmem [thread:$0]  %s84, 16384, %s86, [#allocation9], 256, 256, 16
    $region21: #{tpu_custom_call.1} parent=1 // pred_fallthru
      _
    // Predicated region
    $region22: #{tpu_custom_call.1} parent=1 // pred_check
      _
    $region23: #{tpu_custom_call.1} parent=1 // pred_check_branch
      %93 = sbr.rel (0) target = $region25
    $region24: #{tpu_custom_call.1} parent=1 // pred_region
      _
    $region25: #{tpu_custom_call.1} parent=1 // pred_fallthru
      _
    // Predicated region
    $region26: #{tpu_custom_call.1} parent=1 // pred_check
      _
    $region27: #{tpu_custom_call.1} parent=1 // pred_check_branch
      %95 = sbr.rel (0) target = $region29
    $region28: #{tpu_custom_call.1} parent=1 // pred_region
      %97 = vsyncadd [#allocation12], 0
      %s98 = sshll.u32 %s6, 4
      %s99 = int_to_ptr.hbm [resolvable:$true] %s98
      %s100 = sshll.u32 [#allocation11], 4
      %s101 = int_to_ptr.vmem [resolvable:$true] %s100
      %106 = dma.hbm_to_vmem [thread:$0]  %s99, 8192, %s101, [#allocation12], 128, 128, 8
    $region29: #{tpu_custom_call.1} parent=1 // pred_fallthru
      _
    // Predicated region
    $region30: #{tpu_custom_call.1} parent=1 // pred_check
      _
    $region31: #{tpu_custom_call.1} parent=1 // pred_check_branch
      %108 = sbr.rel (0) target = $region33
    $region32: #{tpu_custom_call.1} parent=1 // pred_region
      %110 = vsyncadd [#allocation12], 0
      %s112 = sshll.u32 %s7, 4
      %s113 = int_to_ptr.hbm [resolvable:$true] %s112
      %s114 = sshll.u32 [#allocation13], 4
      %s115 = int_to_ptr.vmem [resolvable:$true] %s114
      %117 = dma.hbm_to_vmem [thread:$0]  %s113, 32, %s115, [#allocation12]
    $region33: #{tpu_custom_call.1} parent=1 // pred_fallthru
      _
    // Predicated region
    $region34: #{tpu_custom_call.1} parent=1 // pred_check
      _
    $region35: #{tpu_custom_call.1} parent=1 // pred_check_branch
      %119 = sbr.rel (0) target = $region37
    $region36: #{tpu_custom_call.1} parent=1 // pred_region
      %121 = vsyncadd [#allocation15], 0
      %s122 = sshll.u32 %s8, 4
      %s123 = int_to_ptr.hbm [resolvable:$true] %s122
      %s124 = sshll.u32 [#allocation14], 4
      %s125 = int_to_ptr.vmem [resolvable:$true] %s124
      %130 = dma.hbm_to_vmem [thread:$0]  %s123, 4096, %s125, [#allocation15], 256, 256, 16
    $region37: #{tpu_custom_call.1} parent=1 // pred_fallthru
      _
    // Predicated region
    $region38: #{tpu_custom_call.1} parent=1 // pred_check
      _
    $region39: #{tpu_custom_call.1} parent=1 // pred_check_branch
      %132 = sbr.rel (0) target = $region41
    $region40: #{tpu_custom_call.1} parent=1 // pred_region
      %134 = vsyncadd [#allocation15], 0
      %s136 = sshll.u32 %s9, 4
      %s137 = int_to_ptr.hbm [resolvable:$true] %s136
      %s138 = sshll.u32 [#allocation16], 4
      %s139 = int_to_ptr.vmem [resolvable:$true] %s138
      %141 = dma.hbm_to_vmem [thread:$0]  %s137, 64, %s139, [#allocation15]
    $region41: #{tpu_custom_call.1} parent=1 // pred_fallthru
      _
    // Predicated region
    $region42: #{tpu_custom_call.1} parent=1 // pred_check
      _
    $region43: #{tpu_custom_call.1} parent=1 // pred_check_branch
      %143 = sbr.rel (0) target = $region45
    $region44: #{tpu_custom_call.1} parent=1 // pred_region
      %145 = vsyncadd [#allocation18], 0
      %s146 = sshll.u32 %s10, 4
      %s147 = int_to_ptr.hbm [resolvable:$true] %s146
      %s148 = sshll.u32 [#allocation17], 4
      %s149 = int_to_ptr.vmem [resolvable:$true] %s148
      %154 = dma.hbm_to_vmem [thread:$0]  %s147, 16384, %s149, [#allocation18], 256, 256, 16
    $region45: #{tpu_custom_call.1} parent=1 // pred_fallthru
      _
    // Predicated region
    $region46: #{tpu_custom_call.1} parent=1 // pred_check
      _
    $region47: #{tpu_custom_call.1} parent=1 // pred_check_branch
      %156 = sbr.rel (0) target = $region49
    $region48: #{tpu_custom_call.1} parent=1 // pred_region
      %158 = vsyncadd [#allocation18], 0
      %s160 = sshll.u32 %s11, 4
      %s161 = int_to_ptr.hbm [resolvable:$true] %s160
      %s162 = sshll.u32 [#allocation19], 4
      %s163 = int_to_ptr.vmem [resolvable:$true] %s162
      %165 = dma.hbm_to_vmem [thread:$0]  %s161, 64, %s163, [#allocation18]
    $region49: #{tpu_custom_call.1} parent=1 // pred_fallthru
      _
    // Predicated region
    $region50: #{tpu_custom_call.1} parent=1 // pred_check
      _
    $region51: #{tpu_custom_call.1} parent=1 // pred_check_branch
      %167 = sbr.rel (0) target = $region53
    $region52: #{tpu_custom_call.1} parent=1 // pred_region
      %169 = vsyncadd [#allocation21], 0
      %s170 = sshll.u32 %s12, 4
      %s171 = int_to_ptr.hbm [resolvable:$true] %s170
      %s172 = sshll.u32 [#allocation20], 4
      %s173 = int_to_ptr.vmem [resolvable:$true] %s172
      %178 = dma.hbm_to_vmem [thread:$0]  %s171, 24576, %s173, [#allocation21], 384, 384, 24
    $region53: #{tpu_custom_call.1} parent=1 // pred_fallthru
      _
    // Predicated region
    $region54: #{tpu_custom_call.1} parent=1 // pred_check
      _
    $region55: #{tpu_custom_call.1} parent=1 // pred_check_branch
      %180 = sbr.rel (0) target = $region57
    $region56: #{tpu_custom_call.1} parent=1 // pred_region
      _
    $region57: #{tpu_custom_call.1} parent=1 // pred_fallthru
      _
    // Predicated region
    $region58: #{tpu_custom_call.1} parent=1 // pred_check
      _
    $region59: #{tpu_custom_call.1} parent=1 // pred_check_branch
      %182 = sbr.rel (0) target = $region61
    $region60: #{tpu_custom_call.1} parent=1 // pred_region
      %184 = dma.done [#allocation3], 96
    $region61: #{tpu_custom_call.1} parent=1 // pred_fallthru
      _
    // Predicated region
    $region62: #{tpu_custom_call.1} parent=1 // pred_check
      _
    $region63: #{tpu_custom_call.1} parent=1 // pred_check_branch
      %186 = sbr.rel (0) target = $region65
    $region64: #{tpu_custom_call.1} parent=1 // pred_region
      %188 = dma.done [#allocation6], 32
    $region65: #{tpu_custom_call.1} parent=1 // pred_fallthru
      _
    // Predicated region
    $region66: #{tpu_custom_call.1} parent=1 // pred_check
      _
    $region67: #{tpu_custom_call.1} parent=1 // pred_check_branch
      %190 = sbr.rel (0) target = $region69
    $region68: #{tpu_custom_call.1} parent=1 // pred_region
      %192 = dma.done [#allocation6], 24576
    $region69: #{tpu_custom_call.1} parent=1 // pred_fallthru
      _
    // Predicated region
    $region70: #{tpu_custom_call.1} parent=1 // pred_check
      _
    $region71: #{tpu_custom_call.1} parent=1 // pred_check_branch
      %194 = sbr.rel (0) target = $region73
    $region72: #{tpu_custom_call.1} parent=1 // pred_region
      %196 = dma.done [#allocation9], 64
    $region73: #{tpu_custom_call.1} parent=1 // pred_fallthru
      _
    // Predicated region
    $region74: #{tpu_custom_call.1} parent=1 // pred_check
      _
    $region75: #{tpu_custom_call.1} parent=1 // pred_check_branch
      %198 = sbr.rel (0) target = $region77
    $region76: #{tpu_custom_call.1} parent=1 // pred_region
      %200 = dma.done [#allocation9], 16384
    $region77: #{tpu_custom_call.1} parent=1 // pred_fallthru
      _
    // Predicated region
    $region78: #{tpu_custom_call.1} parent=1 // pred_check
      _
    $region79: #{tpu_custom_call.1} parent=1 // pred_check_branch
      %202 = sbr.rel (0) target = $region81
    $region80: #{tpu_custom_call.1} parent=1 // pred_region
      %204 = dma.done [#allocation12], 8192
    $region81: #{tpu_custom_call.1} parent=1 // pred_fallthru
      _
    // Predicated region
    $region82: #{tpu_custom_call.1} parent=1 // pred_check
      _
    $region83: #{tpu_custom_call.1} parent=1 // pred_check_branch
      %206 = sbr.rel (0) target = $region85
    $region84: #{tpu_custom_call.1} parent=1 // pred_region
      %208 = dma.done [#allocation12], 32
    $region85: #{tpu_custom_call.1} parent=1 // pred_fallthru
      _
    // Predicated region
    $region86: #{tpu_custom_call.1} parent=1 // pred_check
      _
    $region87: #{tpu_custom_call.1} parent=1 // pred_check_branch
      %210 = sbr.rel (0) target = $region89
    $region88: #{tpu_custom_call.1} parent=1 // pred_region
      %212 = dma.done [#allocation15], 4096
    $region89: #{tpu_custom_call.1} parent=1 // pred_fallthru
      _
    // Predicated region
    $region90: #{tpu_custom_call.1} parent=1 // pred_check
      _
    $region91: #{tpu_custom_call.1} parent=1 // pred_check_branch
      %214 = sbr.rel (0) target = $region93
    $region92: #{tpu_custom_call.1} parent=1 // pred_region
      %216 = dma.done [#allocation15], 64
    $region93: #{tpu_custom_call.1} parent=1 // pred_fallthru
      _
    // Predicated region
    $region94: #{tpu_custom_call.1} parent=1 // pred_check
      _
    $region95: #{tpu_custom_call.1} parent=1 // pred_check_branch
      %218 = sbr.rel (0) target = $region97
    $region96: #{tpu_custom_call.1} parent=1 // pred_region
      %220 = dma.done [#allocation18], 16384
    $region97: #{tpu_custom_call.1} parent=1 // pred_fallthru
      _
    // Predicated region
    $region98: #{tpu_custom_call.1} parent=1 // pred_check
      _
    $region99: #{tpu_custom_call.1} parent=1 // pred_check_branch
      %222 = sbr.rel (0) target = $region101
    $region100: #{tpu_custom_call.1} parent=1 // pred_region
      %224 = dma.done [#allocation18], 64
    $region101: #{tpu_custom_call.1} parent=1 // pred_fallthru
      _
    // Predicated region
    $region102: #{tpu_custom_call.1} parent=1 // pred_check
      _
    $region103: #{tpu_custom_call.1} parent=1 // pred_check_branch
      %226 = sbr.rel (0) target = $region105
    $region104: #{tpu_custom_call.1} parent=1 // pred_region
      %228 = dma.done [#allocation21], 24576
    $region105: #{tpu_custom_call.1} parent=1 // pred_fallthru
      _
    %v229 = vld [vmem:[#allocation2] sm:$0x3f]
    %v230 = vld [vmem:[#allocation7] sm:$0xff]
    %v231 = vld [vmem:[#allocation7 + $0x8] sm:$0xff]
    %v232 = vld [vmem:[#allocation7 + $0x10] sm:$0xff]
    %v233 = vld [vmem:[#allocation7 + $0x18] sm:$0xff]
    %v234 = vld [vmem:[#allocation7 + $0x20] sm:$0xff]
    %v235 = vld [vmem:[#allocation7 + $0x28] sm:$0xff]
    %v236 = vld [vmem:[#allocation7 + $0x30] sm:$0xff]
    %v237 = vld [vmem:[#allocation7 + $0x38] sm:$0xff]
    %v238 = vld [vmem:[#allocation7 + $0x40] sm:$0xff]
    %v239 = vld [vmem:[#allocation7 + $0x48] sm:$0xff]
    %v240 = vld [vmem:[#allocation7 + $0x50] sm:$0xff]
    %v241 = vld [vmem:[#allocation7 + $0x58] sm:$0xff]
    %v242 = vld [vmem:[#allocation7 + $0x60] sm:$0xff]
    %v243 = vld [vmem:[#allocation7 + $0x68] sm:$0xff]
    %v244 = vld [vmem:[#allocation7 + $0x70] sm:$0xff]
    %v245 = vld [vmem:[#allocation7 + $0x78] sm:$0xff]
    %v246 = vld [vmem:[#allocation7 + $0x80] sm:$0xff]
    %v247 = vld [vmem:[#allocation7 + $0x88] sm:$0xff]
    %v248 = vld [vmem:[#allocation7 + $0x90] sm:$0xff]
    %v249 = vld [vmem:[#allocation7 + $0x98] sm:$0xff]
    %v250 = vld [vmem:[#allocation7 + $0xa0] sm:$0xff]
    %v251 = vld [vmem:[#allocation7 + $0xa8] sm:$0xff]
    %v252 = vld [vmem:[#allocation7 + $0xb0] sm:$0xff]
    %v253 = vld [vmem:[#allocation7 + $0xb8] sm:$0xff]
    %v254 = vld [vmem:[#allocation7 + $0xc0] sm:$0xff]
    %v255 = vld [vmem:[#allocation7 + $0xc8] sm:$0xff]
    %v256 = vld [vmem:[#allocation7 + $0xd0] sm:$0xff]
    %v257 = vld [vmem:[#allocation7 + $0xd8] sm:$0xff]
    %v258 = vld [vmem:[#allocation7 + $0xe0] sm:$0xff]
    %v259 = vld [vmem:[#allocation7 + $0xe8] sm:$0xff]
    %v260 = vld [vmem:[#allocation7 + $0xf0] sm:$0xff]
    %v261 = vld [vmem:[#allocation7 + $0xf8] sm:$0xff]
    %v262 = vld [vmem:[#allocation7 + $0x100] sm:$0xff]
    %v263 = vld [vmem:[#allocation7 + $0x108] sm:$0xff]
    %v264 = vld [vmem:[#allocation7 + $0x110] sm:$0xff]
    %v265 = vld [vmem:[#allocation7 + $0x118] sm:$0xff]
    %v266 = vld [vmem:[#allocation7 + $0x120] sm:$0xff]
    %v267 = vld [vmem:[#allocation7 + $0x128] sm:$0xff]
    %v268 = vld [vmem:[#allocation7 + $0x130] sm:$0xff]
    %v269 = vld [vmem:[#allocation7 + $0x138] sm:$0xff]
    %v270 = vld [vmem:[#allocation7 + $0x140] sm:$0xff]
    %v271 = vld [vmem:[#allocation7 + $0x148] sm:$0xff]
    %v272 = vld [vmem:[#allocation7 + $0x150] sm:$0xff]
    %v273 = vld [vmem:[#allocation7 + $0x158] sm:$0xff]
    %v274 = vld [vmem:[#allocation7 + $0x160] sm:$0xff]
    %v275 = vld [vmem:[#allocation7 + $0x168] sm:$0xff]
    %v276 = vld [vmem:[#allocation7 + $0x170] sm:$0xff]
    %v277 = vld [vmem:[#allocation7 + $0x178] sm:$0xff]
    %v278 = vld [vmem:[#allocation7 + $0x180] sm:$0xff]
    %v279 = vld [vmem:[#allocation7 + $0x188] sm:$0xff]
    %v280 = vld [vmem:[#allocation7 + $0x190] sm:$0xff]
    %v281 = vld [vmem:[#allocation7 + $0x198] sm:$0xff]
    %v282 = vld [vmem:[#allocation7 + $0x1a0] sm:$0xff]
    %v283 = vld [vmem:[#allocation7 + $0x1a8] sm:$0xff]
    %v284 = vld [vmem:[#allocation7 + $0x1b0] sm:$0xff]
    %v285 = vld [vmem:[#allocation7 + $0x1b8] sm:$0xff]
    %v286 = vld [vmem:[#allocation7 + $0x1c0] sm:$0xff]
    %v287 = vld [vmem:[#allocation7 + $0x1c8] sm:$0xff]
    %v288 = vld [vmem:[#allocation7 + $0x1d0] sm:$0xff]
    %v289 = vld [vmem:[#allocation7 + $0x1d8] sm:$0xff]
    %v290 = vld [vmem:[#allocation7 + $0x1e0] sm:$0xff]
    %v291 = vld [vmem:[#allocation7 + $0x1e8] sm:$0xff]
    %v292 = vld [vmem:[#allocation7 + $0x1f0] sm:$0xff]
    %v293 = vld [vmem:[#allocation7 + $0x1f8] sm:$0xff]
    %v294 = vld [vmem:[#allocation7 + $0x200] sm:$0xff]
    %v295 = vld [vmem:[#allocation7 + $0x208] sm:$0xff]
    %v296 = vld [vmem:[#allocation7 + $0x210] sm:$0xff]
    %v297 = vld [vmem:[#allocation7 + $0x218] sm:$0xff]
    %v298 = vld [vmem:[#allocation7 + $0x220] sm:$0xff]
    %v299 = vld [vmem:[#allocation7 + $0x228] sm:$0xff]
    %v300 = vld [vmem:[#allocation7 + $0x230] sm:$0xff]
    %v301 = vld [vmem:[#allocation7 + $0x238] sm:$0xff]
    %v302 = vld [vmem:[#allocation7 + $0x240] sm:$0xff]
    %v303 = vld [vmem:[#allocation7 + $0x248] sm:$0xff]
    %v304 = vld [vmem:[#allocation7 + $0x250] sm:$0xff]
    %v305 = vld [vmem:[#allocation7 + $0x258] sm:$0xff]
    %v306 = vld [vmem:[#allocation7 + $0x260] sm:$0xff]
    %v307 = vld [vmem:[#allocation7 + $0x268] sm:$0xff]
    %v308 = vld [vmem:[#allocation7 + $0x270] sm:$0xff]
    %v309 = vld [vmem:[#allocation7 + $0x278] sm:$0xff]
    %v310 = vld [vmem:[#allocation7 + $0x280] sm:$0xff]
    %v311 = vld [vmem:[#allocation7 + $0x288] sm:$0xff]
    %v312 = vld [vmem:[#allocation7 + $0x290] sm:$0xff]
    %v313 = vld [vmem:[#allocation7 + $0x298] sm:$0xff]
    %v314 = vld [vmem:[#allocation7 + $0x2a0] sm:$0xff]
    %v315 = vld [vmem:[#allocation7 + $0x2a8] sm:$0xff]
    %v316 = vld [vmem:[#allocation7 + $0x2b0] sm:$0xff]
    %v317 = vld [vmem:[#allocation7 + $0x2b8] sm:$0xff]
    %v318 = vld [vmem:[#allocation7 + $0x2c0] sm:$0xff]
    %v319 = vld [vmem:[#allocation7 + $0x2c8] sm:$0xff]
    %v320 = vld [vmem:[#allocation7 + $0x2d0] sm:$0xff]
    %v321 = vld [vmem:[#allocation7 + $0x2d8] sm:$0xff]
    %v322 = vld [vmem:[#allocation7 + $0x2e0] sm:$0xff]
    %v323 = vld [vmem:[#allocation7 + $0x2e8] sm:$0xff]
    %v324 = vld [vmem:[#allocation7 + $0x2f0] sm:$0xff]
    %v325 = vld [vmem:[#allocation7 + $0x2f8] sm:$0xff]
    %v326 = vld [vmem:[#allocation7 + $0x300] sm:$0xff]
    %v327 = vld [vmem:[#allocation7 + $0x308] sm:$0xff]
    %v328 = vld [vmem:[#allocation7 + $0x310] sm:$0xff]
    %v329 = vld [vmem:[#allocation7 + $0x318] sm:$0xff]
    %v330 = vld [vmem:[#allocation7 + $0x320] sm:$0xff]
    %v331 = vld [vmem:[#allocation7 + $0x328] sm:$0xff]
    %v332 = vld [vmem:[#allocation7 + $0x330] sm:$0xff]
    %v333 = vld [vmem:[#allocation7 + $0x338] sm:$0xff]
    %v334 = vld [vmem:[#allocation7 + $0x340] sm:$0xff]
    %v335 = vld [vmem:[#allocation7 + $0x348] sm:$0xff]
    %v336 = vld [vmem:[#allocation7 + $0x350] sm:$0xff]
    %v337 = vld [vmem:[#allocation7 + $0x358] sm:$0xff]
    %v338 = vld [vmem:[#allocation7 + $0x360] sm:$0xff]
    %v339 = vld [vmem:[#allocation7 + $0x368] sm:$0xff]
    %v340 = vld [vmem:[#allocation7 + $0x370] sm:$0xff]
    %v341 = vld [vmem:[#allocation7 + $0x378] sm:$0xff]
    %v342 = vld [vmem:[#allocation7 + $0x380] sm:$0xff]
    %v343 = vld [vmem:[#allocation7 + $0x388] sm:$0xff]
    %v344 = vld [vmem:[#allocation7 + $0x390] sm:$0xff]
    %v345 = vld [vmem:[#allocation7 + $0x398] sm:$0xff]
    %v346 = vld [vmem:[#allocation7 + $0x3a0] sm:$0xff]
    %v347 = vld [vmem:[#allocation7 + $0x3a8] sm:$0xff]
    %v348 = vld [vmem:[#allocation7 + $0x3b0] sm:$0xff]
    %v349 = vld [vmem:[#allocation7 + $0x3b8] sm:$0xff]
    %v350 = vld [vmem:[#allocation7 + $0x3c0] sm:$0xff]
    %v351 = vld [vmem:[#allocation7 + $0x3c8] sm:$0xff]
    %v352 = vld [vmem:[#allocation7 + $0x3d0] sm:$0xff]
    %v353 = vld [vmem:[#allocation7 + $0x3d8] sm:$0xff]
    %v354 = vld [vmem:[#allocation7 + $0x3e0] sm:$0xff]
    %v355 = vld [vmem:[#allocation7 + $0x3e8] sm:$0xff]
    %v356 = vld [vmem:[#allocation7 + $0x3f0] sm:$0xff]
    %v357 = vld [vmem:[#allocation7 + $0x3f8] sm:$0xff]
    %v358 = vld [vmem:[#allocation7 + $0x400] sm:$0xff]
    %v359 = vld [vmem:[#allocation7 + $0x408] sm:$0xff]
    %v360 = vld [vmem:[#allocation7 + $0x410] sm:$0xff]
    %v361 = vld [vmem:[#allocation7 + $0x418] sm:$0xff]
    %v362 = vld [vmem:[#allocation7 + $0x420] sm:$0xff]
    %v363 = vld [vmem:[#allocation7 + $0x428] sm:$0xff]
    %v364 = vld [vmem:[#allocation7 + $0x430] sm:$0xff]
    %v365 = vld [vmem:[#allocation7 + $0x438] sm:$0xff]
    %v366 = vld [vmem:[#allocation7 + $0x440] sm:$0xff]
    %v367 = vld [vmem:[#allocation7 + $0x448] sm:$0xff]
    %v368 = vld [vmem:[#allocation7 + $0x450] sm:$0xff]
    %v369 = vld [vmem:[#allocation7 + $0x458] sm:$0xff]
    %v370 = vld [vmem:[#allocation7 + $0x460] sm:$0xff]
    %v371 = vld [vmem:[#allocation7 + $0x468] sm:$0xff]
    %v372 = vld [vmem:[#allocation7 + $0x470] sm:$0xff]
    %v373 = vld [vmem:[#allocation7 + $0x478] sm:$0xff]
    %v374 = vld [vmem:[#allocation7 + $0x480] sm:$0xff]
    %v375 = vld [vmem:[#allocation7 + $0x488] sm:$0xff]
    %v376 = vld [vmem:[#allocation7 + $0x490] sm:$0xff]
    %v377 = vld [vmem:[#allocation7 + $0x498] sm:$0xff]
    %v378 = vld [vmem:[#allocation7 + $0x4a0] sm:$0xff]
    %v379 = vld [vmem:[#allocation7 + $0x4a8] sm:$0xff]
    %v380 = vld [vmem:[#allocation7 + $0x4b0] sm:$0xff]
    %v381 = vld [vmem:[#allocation7 + $0x4b8] sm:$0xff]
    %v382 = vld [vmem:[#allocation7 + $0x4c0] sm:$0xff]
    %v383 = vld [vmem:[#allocation7 + $0x4c8] sm:$0xff]
    %v384 = vld [vmem:[#allocation7 + $0x4d0] sm:$0xff]
    %v385 = vld [vmem:[#allocation7 + $0x4d8] sm:$0xff]
    %v386 = vld [vmem:[#allocation7 + $0x4e0] sm:$0xff]
    %v387 = vld [vmem:[#allocation7 + $0x4e8] sm:$0xff]
    %v388 = vld [vmem:[#allocation7 + $0x4f0] sm:$0xff]
    %v389 = vld [vmem:[#allocation7 + $0x4f8] sm:$0xff]
    %v390 = vld [vmem:[#allocation7 + $0x500] sm:$0xff]
    %v391 = vld [vmem:[#allocation7 + $0x508] sm:$0xff]
    %v392 = vld [vmem:[#allocation7 + $0x510] sm:$0xff]
    %v393 = vld [vmem:[#allocation7 + $0x518] sm:$0xff]
    %v394 = vld [vmem:[#allocation7 + $0x520] sm:$0xff]
    %v395 = vld [vmem:[#allocation7 + $0x528] sm:$0xff]
    %v396 = vld [vmem:[#allocation7 + $0x530] sm:$0xff]
    %v397 = vld [vmem:[#allocation7 + $0x538] sm:$0xff]
    %v398 = vld [vmem:[#allocation7 + $0x540] sm:$0xff]
    %v399 = vld [vmem:[#allocation7 + $0x548] sm:$0xff]
    %v400 = vld [vmem:[#allocation7 + $0x550] sm:$0xff]
    %v401 = vld [vmem:[#allocation7 + $0x558] sm:$0xff]
    %v402 = vld [vmem:[#allocation7 + $0x560] sm:$0xff]
    %v403 = vld [vmem:[#allocation7 + $0x568] sm:$0xff]
    %v404 = vld [vmem:[#allocation7 + $0x570] sm:$0xff]
    %v405 = vld [vmem:[#allocation7 + $0x578] sm:$0xff]
    %v406 = vld [vmem:[#allocation7 + $0x580] sm:$0xff]
    %v407 = vld [vmem:[#allocation7 + $0x588] sm:$0xff]
    %v408 = vld [vmem:[#allocation7 + $0x590] sm:$0xff]
    %v409 = vld [vmem:[#allocation7 + $0x598] sm:$0xff]
    %v410 = vld [vmem:[#allocation7 + $0x5a0] sm:$0xff]
    %v411 = vld [vmem:[#allocation7 + $0x5a8] sm:$0xff]
    %v412 = vld [vmem:[#allocation7 + $0x5b0] sm:$0xff]
    %v413 = vld [vmem:[#allocation7 + $0x5b8] sm:$0xff]
    %v414 = vld [vmem:[#allocation7 + $0x5c0] sm:$0xff]
    %v415 = vld [vmem:[#allocation7 + $0x5c8] sm:$0xff]
    %v416 = vld [vmem:[#allocation7 + $0x5d0] sm:$0xff]
    %v417 = vld [vmem:[#allocation7 + $0x5d8] sm:$0xff]
    %v418 = vld [vmem:[#allocation7 + $0x5e0] sm:$0xff]
    %v419 = vld [vmem:[#allocation7 + $0x5e8] sm:$0xff]
    %v420 = vld [vmem:[#allocation7 + $0x5f0] sm:$0xff]
    %v421 = vld [vmem:[#allocation7 + $0x5f8] sm:$0xff]
    %v422 = vld [vmem:[#allocation8] sm:$0xf]
    %v424 = vperm.slane %v422, 0
    %v425 = vperm.slane %v422, 1
    %v426 = vperm.slane %v422, 2
    %v427 = vperm.slane %v422, 3
    %433 = vst [vmem:[#allocation1] ss:$9 sm:$0xff] %v229
    %v434 = vld [vmem:[#allocation1] sm:$0xff]
    %v435 = vld [vmem:[#allocation1 + $0x9] sm:$0xff]
    %v436 = vld [vmem:[#allocation1 + $0x12] sm:$0xff]
    %v437 = vld [vmem:[#allocation1 + $0x1b] sm:$0xff]
    %v438 = vld [vmem:[#allocation1 + $0x24] sm:$0xff]
    %v439 = vld [vmem:[#allocation1 + $0x2d] sm:$0xff]
    %v638 = vunpack.c.l.b16 %v230
    %v639 = vunpack.c.h.b16 %v230
    %v640 = vunpack.c.l.b16 %v231
    %v641 = vunpack.c.h.b16 %v231
    %v642 = vunpack.c.l.b16 %v232
    %v643 = vunpack.c.h.b16 %v232
    %v644 = vunpack.c.l.b16 %v233
    %v645 = vunpack.c.h.b16 %v233
    %v646 = vunpack.c.l.b16 %v234
    %v647 = vunpack.c.h.b16 %v234
    %v648 = vunpack.c.l.b16 %v235
    %v649 = vunpack.c.h.b16 %v235
    %v650 = vunpack.c.l.b16 %v236
    %v651 = vunpack.c.h.b16 %v236
    %v652 = vunpack.c.l.b16 %v237
    %v653 = vunpack.c.h.b16 %v237
    %v654 = vunpack.c.l.b16 %v238
    %v655 = vunpack.c.h.b16 %v238
    %v656 = vunpack.c.l.b16 %v239
    %v657 = vunpack.c.h.b16 %v239
    %v658 = vunpack.c.l.b16 %v240
    %v659 = vunpack.c.h.b16 %v240
    %v660 = vunpack.c.l.b16 %v241
    %v661 = vunpack.c.h.b16 %v241
    %v662 = vunpack.c.l.b16 %v242
    %v663 = vunpack.c.h.b16 %v242
    %v664 = vunpack.c.l.b16 %v243
    %v665 = vunpack.c.h.b16 %v243
    %v666 = vunpack.c.l.b16 %v244
    %v667 = vunpack.c.h.b16 %v244
    %v668 = vunpack.c.l.b16 %v245
    %v669 = vunpack.c.h.b16 %v245
    %v670 = vunpack.c.l.b16 %v246
    %v671 = vunpack.c.h.b16 %v246
    %v672 = vunpack.c.l.b16 %v247
    %v673 = vunpack.c.h.b16 %v247
    %v674 = vunpack.c.l.b16 %v248
    %v675 = vunpack.c.h.b16 %v248
    %v676 = vunpack.c.l.b16 %v249
    %v677 = vunpack.c.h.b16 %v249
    %v678 = vunpack.c.l.b16 %v250
    %v679 = vunpack.c.h.b16 %v250
    %v680 = vunpack.c.l.b16 %v251
    %v681 = vunpack.c.h.b16 %v251
    %v682 = vunpack.c.l.b16 %v252
    %v683 = vunpack.c.h.b16 %v252
    %v684 = vunpack.c.l.b16 %v253
    %v685 = vunpack.c.h.b16 %v253
    %v686 = vunpack.c.l.b16 %v254
    %v687 = vunpack.c.h.b16 %v254
    %v688 = vunpack.c.l.b16 %v255
    %v689 = vunpack.c.h.b16 %v255
    %v690 = vunpack.c.l.b16 %v256
    %v691 = vunpack.c.h.b16 %v256
    %v692 = vunpack.c.l.b16 %v257
    %v693 = vunpack.c.h.b16 %v257
    %v694 = vunpack.c.l.b16 %v258
    %v695 = vunpack.c.h.b16 %v258
    %v696 = vunpack.c.l.b16 %v259
    %v697 = vunpack.c.h.b16 %v259
    %v698 = vunpack.c.l.b16 %v260
    %v699 = vunpack.c.h.b16 %v260
    %v700 = vunpack.c.l.b16 %v261
    %v701 = vunpack.c.h.b16 %v261
    %v702 = vunpack.c.l.b16 %v262
    %v703 = vunpack.c.h.b16 %v262
    %v704 = vunpack.c.l.b16 %v263
    %v705 = vunpack.c.h.b16 %v263
    %v706 = vunpack.c.l.b16 %v264
    %v707 = vunpack.c.h.b16 %v264
    %v708 = vunpack.c.l.b16 %v265
    %v709 = vunpack.c.h.b16 %v265
    %v710 = vunpack.c.l.b16 %v266
    %v711 = vunpack.c.h.b16 %v266
    %v712 = vunpack.c.l.b16 %v267
    %v713 = vunpack.c.h.b16 %v267
    %v714 = vunpack.c.l.b16 %v268
    %v715 = vunpack.c.h.b16 %v268
    %v716 = vunpack.c.l.b16 %v269
    %v717 = vunpack.c.h.b16 %v269
    %v718 = vunpack.c.l.b16 %v270
    %v719 = vunpack.c.h.b16 %v270
    %v720 = vunpack.c.l.b16 %v271
    %v721 = vunpack.c.h.b16 %v271
    %v722 = vunpack.c.l.b16 %v272
    %v723 = vunpack.c.h.b16 %v272
    %v724 = vunpack.c.l.b16 %v273
    %v725 = vunpack.c.h.b16 %v273
    %v726 = vunpack.c.l.b16 %v274
    %v727 = vunpack.c.h.b16 %v274
    %v728 = vunpack.c.l.b16 %v275
    %v729 = vunpack.c.h.b16 %v275
    %v730 = vunpack.c.l.b16 %v276
    %v731 = vunpack.c.h.b16 %v276
    %v732 = vunpack.c.l.b16 %v277
    %v733 = vunpack.c.h.b16 %v277
    %v734 = vunpack.c.l.b16 %v278
    %v735 = vunpack.c.h.b16 %v278
    %v736 = vunpack.c.l.b16 %v279
    %v737 = vunpack.c.h.b16 %v279
    %v738 = vunpack.c.l.b16 %v280
    %v739 = vunpack.c.h.b16 %v280
    %v740 = vunpack.c.l.b16 %v281
    %v741 = vunpack.c.h.b16 %v281
    %v742 = vunpack.c.l.b16 %v282
    %v743 = vunpack.c.h.b16 %v282
    %v744 = vunpack.c.l.b16 %v283
    %v745 = vunpack.c.h.b16 %v283
    %v746 = vunpack.c.l.b16 %v284
    %v747 = vunpack.c.h.b16 %v284
    %v748 = vunpack.c.l.b16 %v285
    %v749 = vunpack.c.h.b16 %v285
    %v750 = vunpack.c.l.b16 %v286
    %v751 = vunpack.c.h.b16 %v286
    %v752 = vunpack.c.l.b16 %v287
    %v753 = vunpack.c.h.b16 %v287
    %v754 = vunpack.c.l.b16 %v288
    %v755 = vunpack.c.h.b16 %v288
    %v756 = vunpack.c.l.b16 %v289
    %v757 = vunpack.c.h.b16 %v289
    %v758 = vunpack.c.l.b16 %v290
    %v759 = vunpack.c.h.b16 %v290
    %v760 = vunpack.c.l.b16 %v291
    %v761 = vunpack.c.h.b16 %v291
    %v762 = vunpack.c.l.b16 %v292
    %v763 = vunpack.c.h.b16 %v292
    %v764 = vunpack.c.l.b16 %v293
    %v765 = vunpack.c.h.b16 %v293
    %v766 = vunpack.c.l.b16 %v294
    %v767 = vunpack.c.h.b16 %v294
    %v768 = vunpack.c.l.b16 %v295
    %v769 = vunpack.c.h.b16 %v295
    %v770 = vunpack.c.l.b16 %v296
    %v771 = vunpack.c.h.b16 %v296
    %v772 = vunpack.c.l.b16 %v297
    %v773 = vunpack.c.h.b16 %v297
    %v774 = vunpack.c.l.b16 %v298
    %v775 = vunpack.c.h.b16 %v298
    %v776 = vunpack.c.l.b16 %v299
    %v777 = vunpack.c.h.b16 %v299
    %v778 = vunpack.c.l.b16 %v300
    %v779 = vunpack.c.h.b16 %v300
    %v780 = vunpack.c.l.b16 %v301
    %v781 = vunpack.c.h.b16 %v301
    %v782 = vunpack.c.l.b16 %v302
    %v783 = vunpack.c.h.b16 %v302
    %v784 = vunpack.c.l.b16 %v303
    %v785 = vunpack.c.h.b16 %v303
    %v786 = vunpack.c.l.b16 %v304
    %v787 = vunpack.c.h.b16 %v304
    %v788 = vunpack.c.l.b16 %v305
    %v789 = vunpack.c.h.b16 %v305
    %v790 = vunpack.c.l.b16 %v306
    %v791 = vunpack.c.h.b16 %v306
    %v792 = vunpack.c.l.b16 %v307
    %v793 = vunpack.c.h.b16 %v307
    %v794 = vunpack.c.l.b16 %v308
    %v795 = vunpack.c.h.b16 %v308
    %v796 = vunpack.c.l.b16 %v309
    %v797 = vunpack.c.h.b16 %v309
    %v798 = vunpack.c.l.b16 %v310
    %v799 = vunpack.c.h.b16 %v310
    %v800 = vunpack.c.l.b16 %v311
    %v801 = vunpack.c.h.b16 %v311
    %v802 = vunpack.c.l.b16 %v312
    %v803 = vunpack.c.h.b16 %v312
    %v804 = vunpack.c.l.b16 %v313
    %v805 = vunpack.c.h.b16 %v313
    %v806 = vunpack.c.l.b16 %v314
    %v807 = vunpack.c.h.b16 %v314
    %v808 = vunpack.c.l.b16 %v315
    %v809 = vunpack.c.h.b16 %v315
    %v810 = vunpack.c.l.b16 %v316
    %v811 = vunpack.c.h.b16 %v316
    %v812 = vunpack.c.l.b16 %v317
    %v813 = vunpack.c.h.b16 %v317
    %v814 = vunpack.c.l.b16 %v318
    %v815 = vunpack.c.h.b16 %v318
    %v816 = vunpack.c.l.b16 %v319
    %v817 = vunpack.c.h.b16 %v319
    %v818 = vunpack.c.l.b16 %v320
    %v819 = vunpack.c.h.b16 %v320
    %v820 = vunpack.c.l.b16 %v321
    %v821 = vunpack.c.h.b16 %v321
    %v822 = vunpack.c.l.b16 %v322
    %v823 = vunpack.c.h.b16 %v322
    %v824 = vunpack.c.l.b16 %v323
    %v825 = vunpack.c.h.b16 %v323
    %v826 = vunpack.c.l.b16 %v324
    %v827 = vunpack.c.h.b16 %v324
    %v828 = vunpack.c.l.b16 %v325
    %v829 = vunpack.c.h.b16 %v325
    %v830 = vunpack.c.l.b16 %v326
    %v831 = vunpack.c.h.b16 %v326
    %v832 = vunpack.c.l.b16 %v327
    %v833 = vunpack.c.h.b16 %v327
    %v834 = vunpack.c.l.b16 %v328
    %v835 = vunpack.c.h.b16 %v328
    %v836 = vunpack.c.l.b16 %v329
    %v837 = vunpack.c.h.b16 %v329
    %v838 = vunpack.c.l.b16 %v330
    %v839 = vunpack.c.h.b16 %v330
    %v840 = vunpack.c.l.b16 %v331
    %v841 = vunpack.c.h.b16 %v331
    %v842 = vunpack.c.l.b16 %v332
    %v843 = vunpack.c.h.b16 %v332
    %v844 = vunpack.c.l.b16 %v333
    %v845 = vunpack.c.h.b16 %v333
    %v846 = vunpack.c.l.b16 %v334
    %v847 = vunpack.c.h.b16 %v334
    %v848 = vunpack.c.l.b16 %v335
    %v849 = vunpack.c.h.b16 %v335
    %v850 = vunpack.c.l.b16 %v336
    %v851 = vunpack.c.h.b16 %v336
    %v852 = vunpack.c.l.b16 %v337
    %v853 = vunpack.c.h.b16 %v337
    %v854 = vunpack.c.l.b16 %v338
    %v855 = vunpack.c.h.b16 %v338
    %v856 = vunpack.c.l.b16 %v339
    %v857 = vunpack.c.h.b16 %v339
    %v858 = vunpack.c.l.b16 %v340
    %v859 = vunpack.c.h.b16 %v340
    %v860 = vunpack.c.l.b16 %v341
    %v861 = vunpack.c.h.b16 %v341
    %v862 = vunpack.c.l.b16 %v342
    %v863 = vunpack.c.h.b16 %v342
    %v864 = vunpack.c.l.b16 %v343
    %v865 = vunpack.c.h.b16 %v343
    %v866 = vunpack.c.l.b16 %v344
    %v867 = vunpack.c.h.b16 %v344
    %v868 = vunpack.c.l.b16 %v345
    %v869 = vunpack.c.h.b16 %v345
    %v870 = vunpack.c.l.b16 %v346
    %v871 = vunpack.c.h.b16 %v346
    %v872 = vunpack.c.l.b16 %v347
    %v873 = vunpack.c.h.b16 %v347
    %v874 = vunpack.c.l.b16 %v348
    %v875 = vunpack.c.h.b16 %v348
    %v876 = vunpack.c.l.b16 %v349
    %v877 = vunpack.c.h.b16 %v349
    %v878 = vunpack.c.l.b16 %v350
    %v879 = vunpack.c.h.b16 %v350
    %v880 = vunpack.c.l.b16 %v351
    %v881 = vunpack.c.h.b16 %v351
    %v882 = vunpack.c.l.b16 %v352
    %v883 = vunpack.c.h.b16 %v352
    %v884 = vunpack.c.l.b16 %v353
    %v885 = vunpack.c.h.b16 %v353
    %v886 = vunpack.c.l.b16 %v354
    %v887 = vunpack.c.h.b16 %v354
    %v888 = vunpack.c.l.b16 %v355
    %v889 = vunpack.c.h.b16 %v355
    %v890 = vunpack.c.l.b16 %v356
    %v891 = vunpack.c.h.b16 %v356
    %v892 = vunpack.c.l.b16 %v357
    %v893 = vunpack.c.h.b16 %v357
    %v894 = vunpack.c.l.b16 %v358
    %v895 = vunpack.c.h.b16 %v358
    %v896 = vunpack.c.l.b16 %v359
    %v897 = vunpack.c.h.b16 %v359
    %v898 = vunpack.c.l.b16 %v360
    %v899 = vunpack.c.h.b16 %v360
    %v900 = vunpack.c.l.b16 %v361
    %v901 = vunpack.c.h.b16 %v361
    %v902 = vunpack.c.l.b16 %v362
    %v903 = vunpack.c.h.b16 %v362
    %v904 = vunpack.c.l.b16 %v363
    %v905 = vunpack.c.h.b16 %v363
    %v906 = vunpack.c.l.b16 %v364
    %v907 = vunpack.c.h.b16 %v364
    %v908 = vunpack.c.l.b16 %v365
    %v909 = vunpack.c.h.b16 %v365
    %v910 = vunpack.c.l.b16 %v366
    %v911 = vunpack.c.h.b16 %v366
    %v912 = vunpack.c.l.b16 %v367
    %v913 = vunpack.c.h.b16 %v367
    %v914 = vunpack.c.l.b16 %v368
    %v915 = vunpack.c.h.b16 %v368
    %v916 = vunpack.c.l.b16 %v369
    %v917 = vunpack.c.h.b16 %v369
    %v918 = vunpack.c.l.b16 %v370
    %v919 = vunpack.c.h.b16 %v370
    %v920 = vunpack.c.l.b16 %v371
    %v921 = vunpack.c.h.b16 %v371
    %v922 = vunpack.c.l.b16 %v372
    %v923 = vunpack.c.h.b16 %v372
    %v924 = vunpack.c.l.b16 %v373
    %v925 = vunpack.c.h.b16 %v373
    %v926 = vunpack.c.l.b16 %v374
    %v927 = vunpack.c.h.b16 %v374
    %v928 = vunpack.c.l.b16 %v375
    %v929 = vunpack.c.h.b16 %v375
    %v930 = vunpack.c.l.b16 %v376
    %v931 = vunpack.c.h.b16 %v376
    %v932 = vunpack.c.l.b16 %v377
    %v933 = vunpack.c.h.b16 %v377
    %v934 = vunpack.c.l.b16 %v378
    %v935 = vunpack.c.h.b16 %v378
    %v936 = vunpack.c.l.b16 %v379
    %v937 = vunpack.c.h.b16 %v379
    %v938 = vunpack.c.l.b16 %v380
    %v939 = vunpack.c.h.b16 %v380
    %v940 = vunpack.c.l.b16 %v381
    %v941 = vunpack.c.h.b16 %v381
    %v942 = vunpack.c.l.b16 %v382
    %v943 = vunpack.c.h.b16 %v382
    %v944 = vunpack.c.l.b16 %v383
    %v945 = vunpack.c.h.b16 %v383
    %v946 = vunpack.c.l.b16 %v384
    %v947 = vunpack.c.h.b16 %v384
    %v948 = vunpack.c.l.b16 %v385
    %v949 = vunpack.c.h.b16 %v385
    %v950 = vunpack.c.l.b16 %v386
    %v951 = vunpack.c.h.b16 %v386
    %v952 = vunpack.c.l.b16 %v387
    %v953 = vunpack.c.h.b16 %v387
    %v954 = vunpack.c.l.b16 %v388
    %v955 = vunpack.c.h.b16 %v388
    %v956 = vunpack.c.l.b16 %v389
    %v957 = vunpack.c.h.b16 %v389
    %v958 = vunpack.c.l.b16 %v390
    %v959 = vunpack.c.h.b16 %v390
    %v960 = vunpack.c.l.b16 %v391
    %v961 = vunpack.c.h.b16 %v391
    %v962 = vunpack.c.l.b16 %v392
    %v963 = vunpack.c.h.b16 %v392
    %v964 = vunpack.c.l.b16 %v393
    %v965 = vunpack.c.h.b16 %v393
    %v966 = vunpack.c.l.b16 %v394
    %v967 = vunpack.c.h.b16 %v394
    %v968 = vunpack.c.l.b16 %v395
    %v969 = vunpack.c.h.b16 %v395
    %v970 = vunpack.c.l.b16 %v396
    %v971 = vunpack.c.h.b16 %v396
    %v972 = vunpack.c.l.b16 %v397
    %v973 = vunpack.c.h.b16 %v397
    %v974 = vunpack.c.l.b16 %v398
    %v975 = vunpack.c.h.b16 %v398
    %v976 = vunpack.c.l.b16 %v399
    %v977 = vunpack.c.h.b16 %v399
    %v978 = vunpack.c.l.b16 %v400
    %v979 = vunpack.c.h.b16 %v400
    %v980 = vunpack.c.l.b16 %v401
    %v981 = vunpack.c.h.b16 %v401
    %v982 = vunpack.c.l.b16 %v402
    %v983 = vunpack.c.h.b16 %v402
    %v984 = vunpack.c.l.b16 %v403
    %v985 = vunpack.c.h.b16 %v403
    %v986 = vunpack.c.l.b16 %v404
    %v987 = vunpack.c.h.b16 %v404
    %v988 = vunpack.c.l.b16 %v405
    %v989 = vunpack.c.h.b16 %v405
    %v990 = vunpack.c.l.b16 %v406
    %v991 = vunpack.c.h.b16 %v406
    %v992 = vunpack.c.l.b16 %v407
    %v993 = vunpack.c.h.b16 %v407
    %v994 = vunpack.c.l.b16 %v408
    %v995 = vunpack.c.h.b16 %v408
    %v996 = vunpack.c.l.b16 %v409
    %v997 = vunpack.c.h.b16 %v409
    %v998 = vunpack.c.l.b16 %v410
    %v999 = vunpack.c.h.b16 %v410
    %v1000 = vunpack.c.l.b16 %v411
    %v1001 = vunpack.c.h.b16 %v411
    %v1002 = vunpack.c.l.b16 %v412
    %v1003 = vunpack.c.h.b16 %v412
    %v1004 = vunpack.c.l.b16 %v413
    %v1005 = vunpack.c.h.b16 %v413
    %v1006 = vunpack.c.l.b16 %v414
    %v1007 = vunpack.c.h.b16 %v414
    %v1008 = vunpack.c.l.b16 %v415
    %v1009 = vunpack.c.h.b16 %v415
    %v1010 = vunpack.c.l.b16 %v416
    %v1011 = vunpack.c.h.b16 %v416
    %v1012 = vunpack.c.l.b16 %v417
    %v1013 = vunpack.c.h.b16 %v417
    %v1014 = vunpack.c.l.b16 %v418
    %v1015 = vunpack.c.h.b16 %v418
    %v1016 = vunpack.c.l.b16 %v419
    %v1017 = vunpack.c.h.b16 %v419
    %v1018 = vunpack.c.l.b16 %v420
    %v1019 = vunpack.c.h.b16 %v420
    %v1020 = vunpack.c.l.b16 %v421
    %v1021 = vunpack.c.h.b16 %v421
    %v1022 = vpack.c.b16 %v642, %v638
    %v1023 = vpack.c.b16 %v643, %v639
    %v1024 = vpack.c.b16 %v644, %v640
    %v1025 = vpack.c.b16 %v645, %v641
    %v1026 = vpack.c.b16 %v650, %v646
    %v1027 = vpack.c.b16 %v651, %v647
    %v1028 = vpack.c.b16 %v652, %v648
    %v1029 = vpack.c.b16 %v653, %v649
    %v1030 = vpack.c.b16 %v658, %v654
    %v1031 = vpack.c.b16 %v659, %v655
    %v1032 = vpack.c.b16 %v660, %v656
    %v1033 = vpack.c.b16 %v661, %v657
    %v1034 = vpack.c.b16 %v666, %v662
    %v1035 = vpack.c.b16 %v667, %v663
    %v1036 = vpack.c.b16 %v668, %v664
    %v1037 = vpack.c.b16 %v669, %v665
    %v1038 = vpack.c.b16 %v674, %v670
    %v1039 = vpack.c.b16 %v675, %v671
    %v1040 = vpack.c.b16 %v676, %v672
    %v1041 = vpack.c.b16 %v677, %v673
    %v1042 = vpack.c.b16 %v682, %v678
    %v1043 = vpack.c.b16 %v683, %v679
    %v1044 = vpack.c.b16 %v684, %v680
    %v1045 = vpack.c.b16 %v685, %v681
    %v1046 = vpack.c.b16 %v690, %v686
    %v1047 = vpack.c.b16 %v691, %v687
    %v1048 = vpack.c.b16 %v692, %v688
    %v1049 = vpack.c.b16 %v693, %v689
    %v1050 = vpack.c.b16 %v698, %v694
    %v1051 = vpack.c.b16 %v699, %v695
    %v1052 = vpack.c.b16 %v700, %v696
    %v1053 = vpack.c.b16 %v701, %v697
    %v1054 = vpack.c.b16 %v706, %v702
    %v1055 = vpack.c.b16 %v707, %v703
    %v1056 = vpack.c.b16 %v708, %v704
    %v1057 = vpack.c.b16 %v709, %v705
    %v1058 = vpack.c.b16 %v714, %v710
    %v1059 = vpack.c.b16 %v715, %v711
    %v1060 = vpack.c.b16 %v716, %v712
    %v1061 = vpack.c.b16 %v717, %v713
    %v1062 = vpack.c.b16 %v722, %v718
    %v1063 = vpack.c.b16 %v723, %v719
    %v1064 = vpack.c.b16 %v724, %v720
    %v1065 = vpack.c.b16 %v725, %v721
    %v1066 = vpack.c.b16 %v730, %v726
    %v1067 = vpack.c.b16 %v731, %v727
    %v1068 = vpack.c.b16 %v732, %v728
    %v1069 = vpack.c.b16 %v733, %v729
    %v1070 = vpack.c.b16 %v738, %v734
    %v1071 = vpack.c.b16 %v739, %v735
    %v1072 = vpack.c.b16 %v740, %v736
    %v1073 = vpack.c.b16 %v741, %v737
    %v1074 = vpack.c.b16 %v746, %v742
    %v1075 = vpack.c.b16 %v747, %v743
    %v1076 = vpack.c.b16 %v748, %v744
    %v1077 = vpack.c.b16 %v749, %v745
    %v1078 = vpack.c.b16 %v754, %v750
    %v1079 = vpack.c.b16 %v755, %v751
    %v1080 = vpack.c.b16 %v756, %v752
    %v1081 = vpack.c.b16 %v757, %v753
    %v1082 = vpack.c.b16 %v762, %v758
    %v1083 = vpack.c.b16 %v763, %v759
    %v1084 = vpack.c.b16 %v764, %v760
    %v1085 = vpack.c.b16 %v765, %v761
    %v1086 = vpack.c.b16 %v770, %v766
    %v1087 = vpack.c.b16 %v771, %v767
    %v1088 = vpack.c.b16 %v772, %v768
    %v1089 = vpack.c.b16 %v773, %v769
    %v1090 = vpack.c.b16 %v778, %v774
    %v1091 = vpack.c.b16 %v779, %v775
    %v1092 = vpack.c.b16 %v780, %v776
    %v1093 = vpack.c.b16 %v781, %v777
    %v1094 = vpack.c.b16 %v786, %v782
    %v1095 = vpack.c.b16 %v787, %v783
    %v1096 = vpack.c.b16 %v788, %v784
    %v1097 = vpack.c.b16 %v789, %v785
    %v1098 = vpack.c.b16 %v794, %v790
    %v1099 = vpack.c.b16 %v795, %v791
    %v1100 = vpack.c.b16 %v796, %v792
    %v1101 = vpack.c.b16 %v797, %v793
    %v1102 = vpack.c.b16 %v802, %v798
    %v1103 = vpack.c.b16 %v803, %v799
    %v1104 = vpack.c.b16 %v804, %v800
    %v1105 = vpack.c.b16 %v805, %v801
    %v1106 = vpack.c.b16 %v810, %v806
    %v1107 = vpack.c.b16 %v811, %v807
    %v1108 = vpack.c.b16 %v812, %v808
    %v1109 = vpack.c.b16 %v813, %v809
    %v1110 = vpack.c.b16 %v818, %v814
    %v1111 = vpack.c.b16 %v819, %v815
    %v1112 = vpack.c.b16 %v820, %v816
    %v1113 = vpack.c.b16 %v821, %v817
    %v1114 = vpack.c.b16 %v826, %v822
    %v1115 = vpack.c.b16 %v827, %v823
    %v1116 = vpack.c.b16 %v828, %v824
    %v1117 = vpack.c.b16 %v829, %v825
    %v1118 = vpack.c.b16 %v834, %v830
    %v1119 = vpack.c.b16 %v835, %v831
    %v1120 = vpack.c.b16 %v836, %v832
    %v1121 = vpack.c.b16 %v837, %v833
    %v1122 = vpack.c.b16 %v842, %v838
    %v1123 = vpack.c.b16 %v843, %v839
    %v1124 = vpack.c.b16 %v844, %v840
    %v1125 = vpack.c.b16 %v845, %v841
    %v1126 = vpack.c.b16 %v850, %v846
    %v1127 = vpack.c.b16 %v851, %v847
    %v1128 = vpack.c.b16 %v852, %v848
    %v1129 = vpack.c.b16 %v853, %v849
    %v1130 = vpack.c.b16 %v858, %v854
    %v1131 = vpack.c.b16 %v859, %v855
    %v1132 = vpack.c.b16 %v860, %v856
    %v1133 = vpack.c.b16 %v861, %v857
    %v1134 = vpack.c.b16 %v866, %v862
    %v1135 = vpack.c.b16 %v867, %v863
    %v1136 = vpack.c.b16 %v868, %v864
    %v1137 = vpack.c.b16 %v869, %v865
    %v1138 = vpack.c.b16 %v874, %v870
    %v1139 = vpack.c.b16 %v875, %v871
    %v1140 = vpack.c.b16 %v876, %v872
    %v1141 = vpack.c.b16 %v877, %v873
    %v1142 = vpack.c.b16 %v882, %v878
    %v1143 = vpack.c.b16 %v883, %v879
    %v1144 = vpack.c.b16 %v884, %v880
    %v1145 = vpack.c.b16 %v885, %v881
    %v1146 = vpack.c.b16 %v890, %v886
    %v1147 = vpack.c.b16 %v891, %v887
    %v1148 = vpack.c.b16 %v892, %v888
    %v1149 = vpack.c.b16 %v893, %v889
    %v1150 = vpack.c.b16 %v898, %v894
    %v1151 = vpack.c.b16 %v899, %v895
    %v1152 = vpack.c.b16 %v900, %v896
    %v1153 = vpack.c.b16 %v901, %v897
    %v1154 = vpack.c.b16 %v906, %v902
    %v1155 = vpack.c.b16 %v907, %v903
    %v1156 = vpack.c.b16 %v908, %v904
    %v1157 = vpack.c.b16 %v909, %v905
    %v1158 = vpack.c.b16 %v914, %v910
    %v1159 = vpack.c.b16 %v915, %v911
    %v1160 = vpack.c.b16 %v916, %v912
    %v1161 = vpack.c.b16 %v917, %v913
    %v1162 = vpack.c.b16 %v922, %v918
    %v1163 = vpack.c.b16 %v923, %v919
    %v1164 = vpack.c.b16 %v924, %v920
    %v1165 = vpack.c.b16 %v925, %v921
    %v1166 = vpack.c.b16 %v930, %v926
    %v1167 = vpack.c.b16 %v931, %v927
    %v1168 = vpack.c.b16 %v932, %v928
    %v1169 = vpack.c.b16 %v933, %v929
    %v1170 = vpack.c.b16 %v938, %v934
    %v1171 = vpack.c.b16 %v939, %v935
    %v1172 = vpack.c.b16 %v940, %v936
    %v1173 = vpack.c.b16 %v941, %v937
    %v1174 = vpack.c.b16 %v946, %v942
    %v1175 = vpack.c.b16 %v947, %v943
    %v1176 = vpack.c.b16 %v948, %v944
    %v1177 = vpack.c.b16 %v949, %v945
    %v1178 = vpack.c.b16 %v954, %v950
    %v1179 = vpack.c.b16 %v955, %v951
    %v1180 = vpack.c.b16 %v956, %v952
    %v1181 = vpack.c.b16 %v957, %v953
    %v1182 = vpack.c.b16 %v962, %v958
    %v1183 = vpack.c.b16 %v963, %v959
    %v1184 = vpack.c.b16 %v964, %v960
    %v1185 = vpack.c.b16 %v965, %v961
    %v1186 = vpack.c.b16 %v970, %v966
    %v1187 = vpack.c.b16 %v971, %v967
    %v1188 = vpack.c.b16 %v972, %v968
    %v1189 = vpack.c.b16 %v973, %v969
    %v1190 = vpack.c.b16 %v978, %v974
    %v1191 = vpack.c.b16 %v979, %v975
    %v1192 = vpack.c.b16 %v980, %v976
    %v1193 = vpack.c.b16 %v981, %v977
    %v1194 = vpack.c.b16 %v986, %v982
    %v1195 = vpack.c.b16 %v987, %v983
    %v1196 = vpack.c.b16 %v988, %v984
    %v1197 = vpack.c.b16 %v989, %v985
    %v1198 = vpack.c.b16 %v994, %v990
    %v1199 = vpack.c.b16 %v995, %v991
    %v1200 = vpack.c.b16 %v996, %v992
    %v1201 = vpack.c.b16 %v997, %v993
    %v1202 = vpack.c.b16 %v1002, %v998
    %v1203 = vpack.c.b16 %v1003, %v999
    %v1204 = vpack.c.b16 %v1004, %v1000
    %v1205 = vpack.c.b16 %v1005, %v1001
    %v1206 = vpack.c.b16 %v1010, %v1006
    %v1207 = vpack.c.b16 %v1011, %v1007
    %v1208 = vpack.c.b16 %v1012, %v1008
    %v1209 = vpack.c.b16 %v1013, %v1009
    %v1210 = vpack.c.b16 %v1018, %v1014
    %v1211 = vpack.c.b16 %v1019, %v1015
    %v1212 = vpack.c.b16 %v1020, %v1016
    %v1213 = vpack.c.b16 %v1021, %v1017
    %1406 = vmatpush.bf16.msra.mxu0 %v1050
    %1407 = vmatpush.bf16.msra.mxu0 %v1046
    %1408 = vmatpush.bf16.msra.mxu0 %v1042
    %1409 = vmatpush.bf16.msra.mxu0 %v1038
    %1410 = vmatpush.bf16.msra.mxu0 %v1034
    %1411 = vmatpush.bf16.msra.mxu0 %v1030
    %1412 = vmatpush.bf16.msra.mxu0 %v1026
    %1413 = vmatpush.bf16.msra.mxu0 %v1022
    %1414 = vmatmul.bf16.gmra.mxu0 %v434
    %v1415 = vpop.f32.mrf.mxu0
    %v1416 = vadd.f32 %v424, %v1415
    %v1417 = vpop.f32.mrf.mxu0
    %1418 = vdwg.mxu0
    %1419 = vmatpush.bf16.msra.mxu0 %v1082
    %1420 = vmatpush.bf16.msra.mxu0 %v1078
    %1421 = vmatpush.bf16.msra.mxu0 %v1074
    %1422 = vmatpush.bf16.msra.mxu0 %v1070
    %1423 = vmatpush.bf16.msra.mxu0 %v1066
    %1424 = vmatpush.bf16.msra.mxu0 %v1062
    %1425 = vmatpush.bf16.msra.mxu0 %v1058
    %1426 = vmatpush.bf16.msra.mxu0 %v1054
    %1427 = vmatmul.bf16.gmra.mxu0 %v435
    %v1428 = vpop.f32.mrf.mxu0
    %v1429 = vadd.f32 %v1416, %v1428
    %v1430 = vpop.f32.mrf.mxu0
    %1431 = vdwg.mxu0
    %1432 = vmatpush.bf16.msra.mxu0 %v1114
    %1433 = vmatpush.bf16.msra.mxu0 %v1110
    %1434 = vmatpush.bf16.msra.mxu0 %v1106
    %1435 = vmatpush.bf16.msra.mxu0 %v1102
    %1436 = vmatpush.bf16.msra.mxu0 %v1098
    %1437 = vmatpush.bf16.msra.mxu0 %v1094
    %1438 = vmatpush.bf16.msra.mxu0 %v1090
    %1439 = vmatpush.bf16.msra.mxu0 %v1086
    %1440 = vmatmul.bf16.gmra.mxu0 %v436
    %v1441 = vpop.f32.mrf.mxu0
    %v1442 = vadd.f32 %v1429, %v1441
    %v1443 = vpop.f32.mrf.mxu0
    %1444 = vdwg.mxu0
    %1445 = vmatpush.bf16.msra.mxu0 %v1146
    %1446 = vmatpush.bf16.msra.mxu0 %v1142
    %1447 = vmatpush.bf16.msra.mxu0 %v1138
    %1448 = vmatpush.bf16.msra.mxu0 %v1134
    %1449 = vmatpush.bf16.msra.mxu0 %v1130
    %1450 = vmatpush.bf16.msra.mxu0 %v1126
    %1451 = vmatpush.bf16.msra.mxu0 %v1122
    %1452 = vmatpush.bf16.msra.mxu0 %v1118
    %1453 = vmatmul.bf16.gmra.mxu0 %v437
    %v1454 = vpop.f32.mrf.mxu0
    %v1455 = vadd.f32 %v1442, %v1454
    %v1456 = vpop.f32.mrf.mxu0
    %1457 = vdwg.mxu0
    %1458 = vmatpush.bf16.msra.mxu0 %v1178
    %1459 = vmatpush.bf16.msra.mxu0 %v1174
    %1460 = vmatpush.bf16.msra.mxu0 %v1170
    %1461 = vmatpush.bf16.msra.mxu0 %v1166
    %1462 = vmatpush.bf16.msra.mxu0 %v1162
    %1463 = vmatpush.bf16.msra.mxu0 %v1158
    %1464 = vmatpush.bf16.msra.mxu0 %v1154
    %1465 = vmatpush.bf16.msra.mxu0 %v1150
    %1466 = vmatmul.bf16.gmra.mxu0 %v438
    %v1467 = vpop.f32.mrf.mxu0
    %v1468 = vadd.f32 %v1455, %v1467
    %v1469 = vpop.f32.mrf.mxu0
    %1470 = vdwg.mxu0
    %1471 = vmatpush.bf16.msra.mxu0 %v1210
    %1472 = vmatpush.bf16.msra.mxu0 %v1206
    %1473 = vmatpush.bf16.msra.mxu0 %v1202
    %1474 = vmatpush.bf16.msra.mxu0 %v1198
    %1475 = vmatpush.bf16.msra.mxu0 %v1194
    %1476 = vmatpush.bf16.msra.mxu0 %v1190
    %1477 = vmatpush.bf16.msra.mxu0 %v1186
    %1478 = vmatpush.bf16.msra.mxu0 %v1182
    %1479 = vmatmul.bf16.gmra.mxu0 %v439
    %v1480 = vpop.f32.mrf.mxu0
    %v1481 = vadd.f32 %v1468, %v1480
    %v1482 = vpop.f32.mrf.mxu0
    %1483 = vdwg.mxu0
    %1484 = vmatpush.bf16.msra.mxu0 %v1051
    %1485 = vmatpush.bf16.msra.mxu0 %v1047
    %1486 = vmatpush.bf16.msra.mxu0 %v1043
    %1487 = vmatpush.bf16.msra.mxu0 %v1039
    %1488 = vmatpush.bf16.msra.mxu0 %v1035
    %1489 = vmatpush.bf16.msra.mxu0 %v1031
    %1490 = vmatpush.bf16.msra.mxu0 %v1027
    %1491 = vmatpush.bf16.msra.mxu0 %v1023
    %1492 = vmatmul.bf16.gmra.mxu0 %v434
    %v1493 = vpop.f32.mrf.mxu0
    %v1494 = vadd.f32 %v425, %v1493
    %v1495 = vpop.f32.mrf.mxu0
    %1496 = vdwg.mxu0
    %1497 = vmatpush.bf16.msra.mxu0 %v1083
    %1498 = vmatpush.bf16.msra.mxu0 %v1079
    %1499 = vmatpush.bf16.msra.mxu0 %v1075
    %1500 = vmatpush.bf16.msra.mxu0 %v1071
    %1501 = vmatpush.bf16.msra.mxu0 %v1067
    %1502 = vmatpush.bf16.msra.mxu0 %v1063
    %1503 = vmatpush.bf16.msra.mxu0 %v1059
    %1504 = vmatpush.bf16.msra.mxu0 %v1055
    %1505 = vmatmul.bf16.gmra.mxu0 %v435
    %v1506 = vpop.f32.mrf.mxu0
    %v1507 = vadd.f32 %v1494, %v1506
    %v1508 = vpop.f32.mrf.mxu0
    %1509 = vdwg.mxu0
    %1510 = vmatpush.bf16.msra.mxu0 %v1115
    %1511 = vmatpush.bf16.msra.mxu0 %v1111
    %1512 = vmatpush.bf16.msra.mxu0 %v1107
    %1513 = vmatpush.bf16.msra.mxu0 %v1103
    %1514 = vmatpush.bf16.msra.mxu0 %v1099
    %1515 = vmatpush.bf16.msra.mxu0 %v1095
    %1516 = vmatpush.bf16.msra.mxu0 %v1091
    %1517 = vmatpush.bf16.msra.mxu0 %v1087
    %1518 = vmatmul.bf16.gmra.mxu0 %v436
    %v1519 = vpop.f32.mrf.mxu0
    %v1520 = vadd.f32 %v1507, %v1519
    %v1521 = vpop.f32.mrf.mxu0
    %1522 = vdwg.mxu0
    %1523 = vmatpush.bf16.msra.mxu0 %v1147
    %1524 = vmatpush.bf16.msra.mxu0 %v1143
    %1525 = vmatpush.bf16.msra.mxu0 %v1139
    %1526 = vmatpush.bf16.msra.mxu0 %v1135
    %1527 = vmatpush.bf16.msra.mxu0 %v1131
    %1528 = vmatpush.bf16.msra.mxu0 %v1127
    %1529 = vmatpush.bf16.msra.mxu0 %v1123
    %1530 = vmatpush.bf16.msra.mxu0 %v1119
    %1531 = vmatmul.bf16.gmra.mxu0 %v437
    %v1532 = vpop.f32.mrf.mxu0
    %v1533 = vadd.f32 %v1520, %v1532
    %v1534 = vpop.f32.mrf.mxu0
    %1535 = vdwg.mxu0
    %1536 = vmatpush.bf16.msra.mxu0 %v1179
    %1537 = vmatpush.bf16.msra.mxu0 %v1175
    %1538 = vmatpush.bf16.msra.mxu0 %v1171
    %1539 = vmatpush.bf16.msra.mxu0 %v1167
    %1540 = vmatpush.bf16.msra.mxu0 %v1163
    %1541 = vmatpush.bf16.msra.mxu0 %v1159
    %1542 = vmatpush.bf16.msra.mxu0 %v1155
    %1543 = vmatpush.bf16.msra.mxu0 %v1151
    %1544 = vmatmul.bf16.gmra.mxu0 %v438
    %v1545 = vpop.f32.mrf.mxu0
    %v1546 = vadd.f32 %v1533, %v1545
    %v1547 = vpop.f32.mrf.mxu0
    %1548 = vdwg.mxu0
    %1549 = vmatpush.bf16.msra.mxu0 %v1211
    %1550 = vmatpush.bf16.msra.mxu0 %v1207
    %1551 = vmatpush.bf16.msra.mxu0 %v1203
    %1552 = vmatpush.bf16.msra.mxu0 %v1199
    %1553 = vmatpush.bf16.msra.mxu0 %v1195
    %1554 = vmatpush.bf16.msra.mxu0 %v1191
    %1555 = vmatpush.bf16.msra.mxu0 %v1187
    %1556 = vmatpush.bf16.msra.mxu0 %v1183
    %1557 = vmatmul.bf16.gmra.mxu0 %v439
    %v1558 = vpop.f32.mrf.mxu0
    %v1559 = vadd.f32 %v1546, %v1558
    %v1560 = vpop.f32.mrf.mxu0
    %1561 = vdwg.mxu0
    %1562 = vmatpush.bf16.msra.mxu0 %v1052
    %1563 = vmatpush.bf16.msra.mxu0 %v1048
    %1564 = vmatpush.bf16.msra.mxu0 %v1044
    %1565 = vmatpush.bf16.msra.mxu0 %v1040
    %1566 = vmatpush.bf16.msra.mxu0 %v1036
    %1567 = vmatpush.bf16.msra.mxu0 %v1032
    %1568 = vmatpush.bf16.msra.mxu0 %v1028
    %1569 = vmatpush.bf16.msra.mxu0 %v1024
    %1570 = vmatmul.bf16.gmra.mxu0 %v434
    %v1571 = vpop.f32.mrf.mxu0
    %v1572 = vadd.f32 %v426, %v1571
    %v1573 = vpop.f32.mrf.mxu0
    %1574 = vdwg.mxu0
    %1575 = vmatpush.bf16.msra.mxu0 %v1084
    %1576 = vmatpush.bf16.msra.mxu0 %v1080
    %1577 = vmatpush.bf16.msra.mxu0 %v1076
    %1578 = vmatpush.bf16.msra.mxu0 %v1072
    %1579 = vmatpush.bf16.msra.mxu0 %v1068
    %1580 = vmatpush.bf16.msra.mxu0 %v1064
    %1581 = vmatpush.bf16.msra.mxu0 %v1060
    %1582 = vmatpush.bf16.msra.mxu0 %v1056
    %1583 = vmatmul.bf16.gmra.mxu0 %v435
    %v1584 = vpop.f32.mrf.mxu0
    %v1585 = vadd.f32 %v1572, %v1584
    %v1586 = vpop.f32.mrf.mxu0
    %1587 = vdwg.mxu0
    %1588 = vmatpush.bf16.msra.mxu0 %v1116
    %1589 = vmatpush.bf16.msra.mxu0 %v1112
    %1590 = vmatpush.bf16.msra.mxu0 %v1108
    %1591 = vmatpush.bf16.msra.mxu0 %v1104
    %1592 = vmatpush.bf16.msra.mxu0 %v1100
    %1593 = vmatpush.bf16.msra.mxu0 %v1096
    %1594 = vmatpush.bf16.msra.mxu0 %v1092
    %1595 = vmatpush.bf16.msra.mxu0 %v1088
    %1596 = vmatmul.bf16.gmra.mxu0 %v436
    %v1597 = vpop.f32.mrf.mxu0
    %v1598 = vadd.f32 %v1585, %v1597
    %v1599 = vpop.f32.mrf.mxu0
    %1600 = vdwg.mxu0
    %1601 = vmatpush.bf16.msra.mxu0 %v1148
    %1602 = vmatpush.bf16.msra.mxu0 %v1144
    %1603 = vmatpush.bf16.msra.mxu0 %v1140
    %1604 = vmatpush.bf16.msra.mxu0 %v1136
    %1605 = vmatpush.bf16.msra.mxu0 %v1132
    %1606 = vmatpush.bf16.msra.mxu0 %v1128
    %1607 = vmatpush.bf16.msra.mxu0 %v1124
    %1608 = vmatpush.bf16.msra.mxu0 %v1120
    %1609 = vmatmul.bf16.gmra.mxu0 %v437
    %v1610 = vpop.f32.mrf.mxu0
    %v1611 = vadd.f32 %v1598, %v1610
    %v1612 = vpop.f32.mrf.mxu0
    %1613 = vdwg.mxu0
    %1614 = vmatpush.bf16.msra.mxu0 %v1180
    %1615 = vmatpush.bf16.msra.mxu0 %v1176
    %1616 = vmatpush.bf16.msra.mxu0 %v1172
    %1617 = vmatpush.bf16.msra.mxu0 %v1168
    %1618 = vmatpush.bf16.msra.mxu0 %v1164
    %1619 = vmatpush.bf16.msra.mxu0 %v1160
    %1620 = vmatpush.bf16.msra.mxu0 %v1156
    %1621 = vmatpush.bf16.msra.mxu0 %v1152
    %1622 = vmatmul.bf16.gmra.mxu0 %v438
    %v1623 = vpop.f32.mrf.mxu0
    %v1624 = vadd.f32 %v1611, %v1623
    %v1625 = vpop.f32.mrf.mxu0
    %1626 = vdwg.mxu0
    %1627 = vmatpush.bf16.msra.mxu0 %v1212
    %1628 = vmatpush.bf16.msra.mxu0 %v1208
    %1629 = vmatpush.bf16.msra.mxu0 %v1204
    %1630 = vmatpush.bf16.msra.mxu0 %v1200
    %1631 = vmatpush.bf16.msra.mxu0 %v1196
    %1632 = vmatpush.bf16.msra.mxu0 %v1192
    %1633 = vmatpush.bf16.msra.mxu0 %v1188
    %1634 = vmatpush.bf16.msra.mxu0 %v1184
    %1635 = vmatmul.bf16.gmra.mxu0 %v439
    %v1636 = vpop.f32.mrf.mxu0
    %v1637 = vadd.f32 %v1624, %v1636
    %v1638 = vpop.f32.mrf.mxu0
    %1639 = vdwg.mxu0
    %1640 = vmatpush.bf16.msra.mxu0 %v1053
    %1641 = vmatpush.bf16.msra.mxu0 %v1049
    %1642 = vmatpush.bf16.msra.mxu0 %v1045
    %1643 = vmatpush.bf16.msra.mxu0 %v1041
    %1644 = vmatpush.bf16.msra.mxu0 %v1037
    %1645 = vmatpush.bf16.msra.mxu0 %v1033
    %1646 = vmatpush.bf16.msra.mxu0 %v1029
    %1647 = vmatpush.bf16.msra.mxu0 %v1025
    %1648 = vmatmul.bf16.gmra.mxu0 %v434
    %v1649 = vpop.f32.mrf.mxu0
    %v1650 = vadd.f32 %v427, %v1649
    %v1651 = vpop.f32.mrf.mxu0
    %1652 = vdwg.mxu0
    %1653 = vmatpush.bf16.msra.mxu0 %v1085
    %1654 = vmatpush.bf16.msra.mxu0 %v1081
    %1655 = vmatpush.bf16.msra.mxu0 %v1077
    %1656 = vmatpush.bf16.msra.mxu0 %v1073
    %1657 = vmatpush.bf16.msra.mxu0 %v1069
    %1658 = vmatpush.bf16.msra.mxu0 %v1065
    %1659 = vmatpush.bf16.msra.mxu0 %v1061
    %1660 = vmatpush.bf16.msra.mxu0 %v1057
    %1661 = vmatmul.bf16.gmra.mxu0 %v435
    %v1662 = vpop.f32.mrf.mxu0
    %v1663 = vadd.f32 %v1650, %v1662
    %v1664 = vpop.f32.mrf.mxu0
    %1665 = vdwg.mxu0
    %1666 = vmatpush.bf16.msra.mxu0 %v1117
    %1667 = vmatpush.bf16.msra.mxu0 %v1113
    %1668 = vmatpush.bf16.msra.mxu0 %v1109
    %1669 = vmatpush.bf16.msra.mxu0 %v1105
    %1670 = vmatpush.bf16.msra.mxu0 %v1101
    %1671 = vmatpush.bf16.msra.mxu0 %v1097
    %1672 = vmatpush.bf16.msra.mxu0 %v1093
    %1673 = vmatpush.bf16.msra.mxu0 %v1089
    %1674 = vmatmul.bf16.gmra.mxu0 %v436
    %v1675 = vpop.f32.mrf.mxu0
    %v1676 = vadd.f32 %v1663, %v1675
    %v1677 = vpop.f32.mrf.mxu0
    %1678 = vdwg.mxu0
    %1679 = vmatpush.bf16.msra.mxu0 %v1149
    %1680 = vmatpush.bf16.msra.mxu0 %v1145
    %1681 = vmatpush.bf16.msra.mxu0 %v1141
    %1682 = vmatpush.bf16.msra.mxu0 %v1137
    %1683 = vmatpush.bf16.msra.mxu0 %v1133
    %1684 = vmatpush.bf16.msra.mxu0 %v1129
    %1685 = vmatpush.bf16.msra.mxu0 %v1125
    %1686 = vmatpush.bf16.msra.mxu0 %v1121
    %1687 = vmatmul.bf16.gmra.mxu0 %v437
    %v1688 = vpop.f32.mrf.mxu0
    %v1689 = vadd.f32 %v1676, %v1688
    %v1690 = vpop.f32.mrf.mxu0
    %1691 = vdwg.mxu0
    %1692 = vmatpush.bf16.msra.mxu0 %v1181
    %1693 = vmatpush.bf16.msra.mxu0 %v1177
    %1694 = vmatpush.bf16.msra.mxu0 %v1173
    %1695 = vmatpush.bf16.msra.mxu0 %v1169
    %1696 = vmatpush.bf16.msra.mxu0 %v1165
    %1697 = vmatpush.bf16.msra.mxu0 %v1161
    %1698 = vmatpush.bf16.msra.mxu0 %v1157
    %1699 = vmatpush.bf16.msra.mxu0 %v1153
    %1700 = vmatmul.bf16.gmra.mxu0 %v438
    %v1701 = vpop.f32.mrf.mxu0
    %v1702 = vadd.f32 %v1689, %v1701
    %v1703 = vpop.f32.mrf.mxu0
    %1704 = vdwg.mxu0
    %1705 = vmatpush.bf16.msra.mxu0 %v1213
    %1706 = vmatpush.bf16.msra.mxu0 %v1209
    %1707 = vmatpush.bf16.msra.mxu0 %v1205
    %1708 = vmatpush.bf16.msra.mxu0 %v1201
    %1709 = vmatpush.bf16.msra.mxu0 %v1197
    %1710 = vmatpush.bf16.msra.mxu0 %v1193
    %1711 = vmatpush.bf16.msra.mxu0 %v1189
    %1712 = vmatpush.bf16.msra.mxu0 %v1185
    %1713 = vmatmul.bf16.gmra.mxu0 %v439
    %v1714 = vpop.f32.mrf.mxu0
    %v1715 = vadd.f32 %v1702, %v1714
    %v1716 = vpop.f32.mrf.mxu0
    %1717 = vdwg.mxu0
    %v1718 = vmax.f32 %v1481, 0.0
    %v1719 = vmax.f32 %v1559, 0.0
    %v1720 = vmax.f32 %v1637, 0.0
    %v1721 = vmax.f32 %v1715, 0.0
    %v1722 = vpack.c.bf16 %v1718, %v1718
    %v1723 = vpack.c.bf16 %v1719, %v1719
    %v1724 = vpack.c.bf16 %v1720, %v1720
    %v1725 = vpack.c.bf16 %v1721, %v1721
    %v1726 = vld [vmem:[#allocation10] sm:$0xff]
    %v1727 = vld [vmem:[#allocation10 + $0x8] sm:$0xff]
    %v1728 = vld [vmem:[#allocation10 + $0x10] sm:$0xff]
    %v1729 = vld [vmem:[#allocation10 + $0x18] sm:$0xff]
    %v1730 = vld [vmem:[#allocation10 + $0x20] sm:$0xff]
    %v1731 = vld [vmem:[#allocation10 + $0x28] sm:$0xff]
    %v1732 = vld [vmem:[#allocation10 + $0x30] sm:$0xff]
    %v1733 = vld [vmem:[#allocation10 + $0x38] sm:$0xff]
    %v1734 = vld [vmem:[#allocation10 + $0x40] sm:$0xff]
    %v1735 = vld [vmem:[#allocation10 + $0x48] sm:$0xff]
    %v1736 = vld [vmem:[#allocation10 + $0x50] sm:$0xff]
    %v1737 = vld [vmem:[#allocation10 + $0x58] sm:$0xff]
    %v1738 = vld [vmem:[#allocation10 + $0x60] sm:$0xff]
    %v1739 = vld [vmem:[#allocation10 + $0x68] sm:$0xff]
    %v1740 = vld [vmem:[#allocation10 + $0x70] sm:$0xff]
    %v1741 = vld [vmem:[#allocation10 + $0x78] sm:$0xff]
    %v1742 = vld [vmem:[#allocation10 + $0x80] sm:$0xff]
    %v1743 = vld [vmem:[#allocation10 + $0x88] sm:$0xff]
    %v1744 = vld [vmem:[#allocation10 + $0x90] sm:$0xff]
    %v1745 = vld [vmem:[#allocation10 + $0x98] sm:$0xff]
    %v1746 = vld [vmem:[#allocation10 + $0xa0] sm:$0xff]
    %v1747 = vld [vmem:[#allocation10 + $0xa8] sm:$0xff]
    %v1748 = vld [vmem:[#allocation10 + $0xb0] sm:$0xff]
    %v1749 = vld [vmem:[#allocation10 + $0xb8] sm:$0xff]
    %v1750 = vld [vmem:[#allocation10 + $0xc0] sm:$0xff]
    %v1751 = vld [vmem:[#allocation10 + $0xc8] sm:$0xff]
    %v1752 = vld [vmem:[#allocation10 + $0xd0] sm:$0xff]
    %v1753 = vld [vmem:[#allocation10 + $0xd8] sm:$0xff]
    %v1754 = vld [vmem:[#allocation10 + $0xe0] sm:$0xff]
    %v1755 = vld [vmem:[#allocation10 + $0xe8] sm:$0xff]
    %v1756 = vld [vmem:[#allocation10 + $0xf0] sm:$0xff]
    %v1757 = vld [vmem:[#allocation10 + $0xf8] sm:$0xff]
    %v1758 = vld [vmem:[#allocation10 + $0x100] sm:$0xff]
    %v1759 = vld [vmem:[#allocation10 + $0x108] sm:$0xff]
    %v1760 = vld [vmem:[#allocation10 + $0x110] sm:$0xff]
    %v1761 = vld [vmem:[#allocation10 + $0x118] sm:$0xff]
    %v1762 = vld [vmem:[#allocation10 + $0x120] sm:$0xff]
    %v1763 = vld [vmem:[#allocation10 + $0x128] sm:$0xff]
    %v1764 = vld [vmem:[#allocation10 + $0x130] sm:$0xff]
    %v1765 = vld [vmem:[#allocation10 + $0x138] sm:$0xff]
    %v1766 = vld [vmem:[#allocation10 + $0x140] sm:$0xff]
    %v1767 = vld [vmem:[#allocation10 + $0x148] sm:$0xff]
    %v1768 = vld [vmem:[#allocation10 + $0x150] sm:$0xff]
    %v1769 = vld [vmem:[#allocation10 + $0x158] sm:$0xff]
    %v1770 = vld [vmem:[#allocation10 + $0x160] sm:$0xff]
    %v1771 = vld [vmem:[#allocation10 + $0x168] sm:$0xff]
    %v1772 = vld [vmem:[#allocation10 + $0x170] sm:$0xff]
    %v1773 = vld [vmem:[#allocation10 + $0x178] sm:$0xff]
    %v1774 = vld [vmem:[#allocation10 + $0x180] sm:$0xff]
    %v1775 = vld [vmem:[#allocation10 + $0x188] sm:$0xff]
    %v1776 = vld [vmem:[#allocation10 + $0x190] sm:$0xff]
    %v1777 = vld [vmem:[#allocation10 + $0x198] sm:$0xff]
    %v1778 = vld [vmem:[#allocation10 + $0x1a0] sm:$0xff]
    %v1779 = vld [vmem:[#allocation10 + $0x1a8] sm:$0xff]
    %v1780 = vld [vmem:[#allocation10 + $0x1b0] sm:$0xff]
    %v1781 = vld [vmem:[#allocation10 + $0x1b8] sm:$0xff]
    %v1782 = vld [vmem:[#allocation10 + $0x1c0] sm:$0xff]
    %v1783 = vld [vmem:[#allocation10 + $0x1c8] sm:$0xff]
    %v1784 = vld [vmem:[#allocation10 + $0x1d0] sm:$0xff]
    %v1785 = vld [vmem:[#allocation10 + $0x1d8] sm:$0xff]
    %v1786 = vld [vmem:[#allocation10 + $0x1e0] sm:$0xff]
    %v1787 = vld [vmem:[#allocation10 + $0x1e8] sm:$0xff]
    %v1788 = vld [vmem:[#allocation10 + $0x1f0] sm:$0xff]
    %v1789 = vld [vmem:[#allocation10 + $0x1f8] sm:$0xff]
    %v1790 = vld [vmem:[#allocation10 + $0x200] sm:$0xff]
    %v1791 = vld [vmem:[#allocation10 + $0x208] sm:$0xff]
    %v1792 = vld [vmem:[#allocation10 + $0x210] sm:$0xff]
    %v1793 = vld [vmem:[#allocation10 + $0x218] sm:$0xff]
    %v1794 = vld [vmem:[#allocation10 + $0x220] sm:$0xff]
    %v1795 = vld [vmem:[#allocation10 + $0x228] sm:$0xff]
    %v1796 = vld [vmem:[#allocation10 + $0x230] sm:$0xff]
    %v1797 = vld [vmem:[#allocation10 + $0x238] sm:$0xff]
    %v1798 = vld [vmem:[#allocation10 + $0x240] sm:$0xff]
    %v1799 = vld [vmem:[#allocation10 + $0x248] sm:$0xff]
    %v1800 = vld [vmem:[#allocation10 + $0x250] sm:$0xff]
    %v1801 = vld [vmem:[#allocation10 + $0x258] sm:$0xff]
    %v1802 = vld [vmem:[#allocation10 + $0x260] sm:$0xff]
    %v1803 = vld [vmem:[#allocation10 + $0x268] sm:$0xff]
    %v1804 = vld [vmem:[#allocation10 + $0x270] sm:$0xff]
    %v1805 = vld [vmem:[#allocation10 + $0x278] sm:$0xff]
    %v1806 = vld [vmem:[#allocation10 + $0x280] sm:$0xff]
    %v1807 = vld [vmem:[#allocation10 + $0x288] sm:$0xff]
    %v1808 = vld [vmem:[#allocation10 + $0x290] sm:$0xff]
    %v1809 = vld [vmem:[#allocation10 + $0x298] sm:$0xff]
    %v1810 = vld [vmem:[#allocation10 + $0x2a0] sm:$0xff]
    %v1811 = vld [vmem:[#allocation10 + $0x2a8] sm:$0xff]
    %v1812 = vld [vmem:[#allocation10 + $0x2b0] sm:$0xff]
    %v1813 = vld [vmem:[#allocation10 + $0x2b8] sm:$0xff]
    %v1814 = vld [vmem:[#allocation10 + $0x2c0] sm:$0xff]
    %v1815 = vld [vmem:[#allocation10 + $0x2c8] sm:$0xff]
    %v1816 = vld [vmem:[#allocation10 + $0x2d0] sm:$0xff]
    %v1817 = vld [vmem:[#allocation10 + $0x2d8] sm:$0xff]
    %v1818 = vld [vmem:[#allocation10 + $0x2e0] sm:$0xff]
    %v1819 = vld [vmem:[#allocation10 + $0x2e8] sm:$0xff]
    %v1820 = vld [vmem:[#allocation10 + $0x2f0] sm:$0xff]
    %v1821 = vld [vmem:[#allocation10 + $0x2f8] sm:$0xff]
    %v1822 = vld [vmem:[#allocation10 + $0x300] sm:$0xff]
    %v1823 = vld [vmem:[#allocation10 + $0x308] sm:$0xff]
    %v1824 = vld [vmem:[#allocation10 + $0x310] sm:$0xff]
    %v1825 = vld [vmem:[#allocation10 + $0x318] sm:$0xff]
    %v1826 = vld [vmem:[#allocation10 + $0x320] sm:$0xff]
    %v1827 = vld [vmem:[#allocation10 + $0x328] sm:$0xff]
    %v1828 = vld [vmem:[#allocation10 + $0x330] sm:$0xff]
    %v1829 = vld [vmem:[#allocation10 + $0x338] sm:$0xff]
    %v1830 = vld [vmem:[#allocation10 + $0x340] sm:$0xff]
    %v1831 = vld [vmem:[#allocation10 + $0x348] sm:$0xff]
    %v1832 = vld [vmem:[#allocation10 + $0x350] sm:$0xff]
    %v1833 = vld [vmem:[#allocation10 + $0x358] sm:$0xff]
    %v1834 = vld [vmem:[#allocation10 + $0x360] sm:$0xff]
    %v1835 = vld [vmem:[#allocation10 + $0x368] sm:$0xff]
    %v1836 = vld [vmem:[#allocation10 + $0x370] sm:$0xff]
    %v1837 = vld [vmem:[#allocation10 + $0x378] sm:$0xff]
    %v1838 = vld [vmem:[#allocation10 + $0x380] sm:$0xff]
    %v1839 = vld [vmem:[#allocation10 + $0x388] sm:$0xff]
    %v1840 = vld [vmem:[#allocation10 + $0x390] sm:$0xff]
    %v1841 = vld [vmem:[#allocation10 + $0x398] sm:$0xff]
    %v1842 = vld [vmem:[#allocation10 + $0x3a0] sm:$0xff]
    %v1843 = vld [vmem:[#allocation10 + $0x3a8] sm:$0xff]
    %v1844 = vld [vmem:[#allocation10 + $0x3b0] sm:$0xff]
    %v1845 = vld [vmem:[#allocation10 + $0x3b8] sm:$0xff]
    %v1846 = vld [vmem:[#allocation10 + $0x3c0] sm:$0xff]
    %v1847 = vld [vmem:[#allocation10 + $0x3c8] sm:$0xff]
    %v1848 = vld [vmem:[#allocation10 + $0x3d0] sm:$0xff]
    %v1849 = vld [vmem:[#allocation10 + $0x3d8] sm:$0xff]
    %v1850 = vld [vmem:[#allocation10 + $0x3e0] sm:$0xff]
    %v1851 = vld [vmem:[#allocation10 + $0x3e8] sm:$0xff]
    %v1852 = vld [vmem:[#allocation10 + $0x3f0] sm:$0xff]
    %v1853 = vld [vmem:[#allocation10 + $0x3f8] sm:$0xff]
    %v1854 = vld [vmem:[%s5] sm:$0xf]
    %v1856 = vperm.slane %v1854, 0
    %v1857 = vperm.slane %v1854, 1
    %v1858 = vperm.slane %v1854, 2
    %v1859 = vperm.slane %v1854, 3
    %v1992 = vunpack.c.l.b16 %v1726
    %v1993 = vunpack.c.h.b16 %v1726
    %v1994 = vunpack.c.l.b16 %v1727
    %v1995 = vunpack.c.h.b16 %v1727
    %v1996 = vunpack.c.l.b16 %v1728
    %v1997 = vunpack.c.h.b16 %v1728
    %v1998 = vunpack.c.l.b16 %v1729
    %v1999 = vunpack.c.h.b16 %v1729
    %v2000 = vunpack.c.l.b16 %v1730
    %v2001 = vunpack.c.h.b16 %v1730
    %v2002 = vunpack.c.l.b16 %v1731
    %v2003 = vunpack.c.h.b16 %v1731
    %v2004 = vunpack.c.l.b16 %v1732
    %v2005 = vunpack.c.h.b16 %v1732
    %v2006 = vunpack.c.l.b16 %v1733
    %v2007 = vunpack.c.h.b16 %v1733
    %v2008 = vunpack.c.l.b16 %v1734
    %v2009 = vunpack.c.h.b16 %v1734
    %v2010 = vunpack.c.l.b16 %v1735
    %v2011 = vunpack.c.h.b16 %v1735
    %v2012 = vunpack.c.l.b16 %v1736
    %v2013 = vunpack.c.h.b16 %v1736
    %v2014 = vunpack.c.l.b16 %v1737
    %v2015 = vunpack.c.h.b16 %v1737
    %v2016 = vunpack.c.l.b16 %v1738
    %v2017 = vunpack.c.h.b16 %v1738
    %v2018 = vunpack.c.l.b16 %v1739
    %v2019 = vunpack.c.h.b16 %v1739
    %v2020 = vunpack.c.l.b16 %v1740
    %v2021 = vunpack.c.h.b16 %v1740
    %v2022 = vunpack.c.l.b16 %v1741
    %v2023 = vunpack.c.h.b16 %v1741
    %v2024 = vunpack.c.l.b16 %v1742
    %v2025 = vunpack.c.h.b16 %v1742
    %v2026 = vunpack.c.l.b16 %v1743
    %v2027 = vunpack.c.h.b16 %v1743
    %v2028 = vunpack.c.l.b16 %v1744
    %v2029 = vunpack.c.h.b16 %v1744
    %v2030 = vunpack.c.l.b16 %v1745
    %v2031 = vunpack.c.h.b16 %v1745
    %v2032 = vunpack.c.l.b16 %v1746
    %v2033 = vunpack.c.h.b16 %v1746
    %v2034 = vunpack.c.l.b16 %v1747
    %v2035 = vunpack.c.h.b16 %v1747
    %v2036 = vunpack.c.l.b16 %v1748
    %v2037 = vunpack.c.h.b16 %v1748
    %v2038 = vunpack.c.l.b16 %v1749
    %v2039 = vunpack.c.h.b16 %v1749
    %v2040 = vunpack.c.l.b16 %v1750
    %v2041 = vunpack.c.h.b16 %v1750
    %v2042 = vunpack.c.l.b16 %v1751
    %v2043 = vunpack.c.h.b16 %v1751
    %v2044 = vunpack.c.l.b16 %v1752
    %v2045 = vunpack.c.h.b16 %v1752
    %v2046 = vunpack.c.l.b16 %v1753
    %v2047 = vunpack.c.h.b16 %v1753
    %v2048 = vunpack.c.l.b16 %v1754
    %v2049 = vunpack.c.h.b16 %v1754
    %v2050 = vunpack.c.l.b16 %v1755
    %v2051 = vunpack.c.h.b16 %v1755
    %v2052 = vunpack.c.l.b16 %v1756
    %v2053 = vunpack.c.h.b16 %v1756
    %v2054 = vunpack.c.l.b16 %v1757
    %v2055 = vunpack.c.h.b16 %v1757
    %v2056 = vunpack.c.l.b16 %v1758
    %v2057 = vunpack.c.h.b16 %v1758
    %v2058 = vunpack.c.l.b16 %v1759
    %v2059 = vunpack.c.h.b16 %v1759
    %v2060 = vunpack.c.l.b16 %v1760
    %v2061 = vunpack.c.h.b16 %v1760
    %v2062 = vunpack.c.l.b16 %v1761
    %v2063 = vunpack.c.h.b16 %v1761
    %v2064 = vunpack.c.l.b16 %v1762
    %v2065 = vunpack.c.h.b16 %v1762
    %v2066 = vunpack.c.l.b16 %v1763
    %v2067 = vunpack.c.h.b16 %v1763
    %v2068 = vunpack.c.l.b16 %v1764
    %v2069 = vunpack.c.h.b16 %v1764
    %v2070 = vunpack.c.l.b16 %v1765
    %v2071 = vunpack.c.h.b16 %v1765
    %v2072 = vunpack.c.l.b16 %v1766
    %v2073 = vunpack.c.h.b16 %v1766
    %v2074 = vunpack.c.l.b16 %v1767
    %v2075 = vunpack.c.h.b16 %v1767
    %v2076 = vunpack.c.l.b16 %v1768
    %v2077 = vunpack.c.h.b16 %v1768
    %v2078 = vunpack.c.l.b16 %v1769
    %v2079 = vunpack.c.h.b16 %v1769
    %v2080 = vunpack.c.l.b16 %v1770
    %v2081 = vunpack.c.h.b16 %v1770
    %v2082 = vunpack.c.l.b16 %v1771
    %v2083 = vunpack.c.h.b16 %v1771
    %v2084 = vunpack.c.l.b16 %v1772
    %v2085 = vunpack.c.h.b16 %v1772
    %v2086 = vunpack.c.l.b16 %v1773
    %v2087 = vunpack.c.h.b16 %v1773
    %v2088 = vunpack.c.l.b16 %v1774
    %v2089 = vunpack.c.h.b16 %v1774
    %v2090 = vunpack.c.l.b16 %v1775
    %v2091 = vunpack.c.h.b16 %v1775
    %v2092 = vunpack.c.l.b16 %v1776
    %v2093 = vunpack.c.h.b16 %v1776
    %v2094 = vunpack.c.l.b16 %v1777
    %v2095 = vunpack.c.h.b16 %v1777
    %v2096 = vunpack.c.l.b16 %v1778
    %v2097 = vunpack.c.h.b16 %v1778
    %v2098 = vunpack.c.l.b16 %v1779
    %v2099 = vunpack.c.h.b16 %v1779
    %v2100 = vunpack.c.l.b16 %v1780
    %v2101 = vunpack.c.h.b16 %v1780
    %v2102 = vunpack.c.l.b16 %v1781
    %v2103 = vunpack.c.h.b16 %v1781
    %v2104 = vunpack.c.l.b16 %v1782
    %v2105 = vunpack.c.h.b16 %v1782
    %v2106 = vunpack.c.l.b16 %v1783
    %v2107 = vunpack.c.h.b16 %v1783
    %v2108 = vunpack.c.l.b16 %v1784
    %v2109 = vunpack.c.h.b16 %v1784
    %v2110 = vunpack.c.l.b16 %v1785
    %v2111 = vunpack.c.h.b16 %v1785
    %v2112 = vunpack.c.l.b16 %v1786
    %v2113 = vunpack.c.h.b16 %v1786
    %v2114 = vunpack.c.l.b16 %v1787
    %v2115 = vunpack.c.h.b16 %v1787
    %v2116 = vunpack.c.l.b16 %v1788
    %v2117 = vunpack.c.h.b16 %v1788
    %v2118 = vunpack.c.l.b16 %v1789
    %v2119 = vunpack.c.h.b16 %v1789
    %v2120 = vunpack.c.l.b16 %v1790
    %v2121 = vunpack.c.h.b16 %v1790
    %v2122 = vunpack.c.l.b16 %v1791
    %v2123 = vunpack.c.h.b16 %v1791
    %v2124 = vunpack.c.l.b16 %v1792
    %v2125 = vunpack.c.h.b16 %v1792
    %v2126 = vunpack.c.l.b16 %v1793
    %v2127 = vunpack.c.h.b16 %v1793
    %v2128 = vunpack.c.l.b16 %v1794
    %v2129 = vunpack.c.h.b16 %v1794
    %v2130 = vunpack.c.l.b16 %v1795
    %v2131 = vunpack.c.h.b16 %v1795
    %v2132 = vunpack.c.l.b16 %v1796
    %v2133 = vunpack.c.h.b16 %v1796
    %v2134 = vunpack.c.l.b16 %v1797
    %v2135 = vunpack.c.h.b16 %v1797
    %v2136 = vunpack.c.l.b16 %v1798
    %v2137 = vunpack.c.h.b16 %v1798
    %v2138 = vunpack.c.l.b16 %v1799
    %v2139 = vunpack.c.h.b16 %v1799
    %v2140 = vunpack.c.l.b16 %v1800
    %v2141 = vunpack.c.h.b16 %v1800
    %v2142 = vunpack.c.l.b16 %v1801
    %v2143 = vunpack.c.h.b16 %v1801
    %v2144 = vunpack.c.l.b16 %v1802
    %v2145 = vunpack.c.h.b16 %v1802
    %v2146 = vunpack.c.l.b16 %v1803
    %v2147 = vunpack.c.h.b16 %v1803
    %v2148 = vunpack.c.l.b16 %v1804
    %v2149 = vunpack.c.h.b16 %v1804
    %v2150 = vunpack.c.l.b16 %v1805
    %v2151 = vunpack.c.h.b16 %v1805
    %v2152 = vunpack.c.l.b16 %v1806
    %v2153 = vunpack.c.h.b16 %v1806
    %v2154 = vunpack.c.l.b16 %v1807
    %v2155 = vunpack.c.h.b16 %v1807
    %v2156 = vunpack.c.l.b16 %v1808
    %v2157 = vunpack.c.h.b16 %v1808
    %v2158 = vunpack.c.l.b16 %v1809
    %v2159 = vunpack.c.h.b16 %v1809
    %v2160 = vunpack.c.l.b16 %v1810
    %v2161 = vunpack.c.h.b16 %v1810
    %v2162 = vunpack.c.l.b16 %v1811
    %v2163 = vunpack.c.h.b16 %v1811
    %v2164 = vunpack.c.l.b16 %v1812
    %v2165 = vunpack.c.h.b16 %v1812
    %v2166 = vunpack.c.l.b16 %v1813
    %v2167 = vunpack.c.h.b16 %v1813
    %v2168 = vunpack.c.l.b16 %v1814
    %v2169 = vunpack.c.h.b16 %v1814
    %v2170 = vunpack.c.l.b16 %v1815
    %v2171 = vunpack.c.h.b16 %v1815
    %v2172 = vunpack.c.l.b16 %v1816
    %v2173 = vunpack.c.h.b16 %v1816
    %v2174 = vunpack.c.l.b16 %v1817
    %v2175 = vunpack.c.h.b16 %v1817
    %v2176 = vunpack.c.l.b16 %v1818
    %v2177 = vunpack.c.h.b16 %v1818
    %v2178 = vunpack.c.l.b16 %v1819
    %v2179 = vunpack.c.h.b16 %v1819
    %v2180 = vunpack.c.l.b16 %v1820
    %v2181 = vunpack.c.h.b16 %v1820
    %v2182 = vunpack.c.l.b16 %v1821
    %v2183 = vunpack.c.h.b16 %v1821
    %v2184 = vunpack.c.l.b16 %v1822
    %v2185 = vunpack.c.h.b16 %v1822
    %v2186 = vunpack.c.l.b16 %v1823
    %v2187 = vunpack.c.h.b16 %v1823
    %v2188 = vunpack.c.l.b16 %v1824
    %v2189 = vunpack.c.h.b16 %v1824
    %v2190 = vunpack.c.l.b16 %v1825
    %v2191 = vunpack.c.h.b16 %v1825
    %v2192 = vunpack.c.l.b16 %v1826
    %v2193 = vunpack.c.h.b16 %v1826
    %v2194 = vunpack.c.l.b16 %v1827
    %v2195 = vunpack.c.h.b16 %v1827
    %v2196 = vunpack.c.l.b16 %v1828
    %v2197 = vunpack.c.h.b16 %v1828
    %v2198 = vunpack.c.l.b16 %v1829
    %v2199 = vunpack.c.h.b16 %v1829
    %v2200 = vunpack.c.l.b16 %v1830
    %v2201 = vunpack.c.h.b16 %v1830
    %v2202 = vunpack.c.l.b16 %v1831
    %v2203 = vunpack.c.h.b16 %v1831
    %v2204 = vunpack.c.l.b16 %v1832
    %v2205 = vunpack.c.h.b16 %v1832
    %v2206 = vunpack.c.l.b16 %v1833
    %v2207 = vunpack.c.h.b16 %v1833
    %v2208 = vunpack.c.l.b16 %v1834
    %v2209 = vunpack.c.h.b16 %v1834
    %v2210 = vunpack.c.l.b16 %v1835
    %v2211 = vunpack.c.h.b16 %v1835
    %v2212 = vunpack.c.l.b16 %v1836
    %v2213 = vunpack.c.h.b16 %v1836
    %v2214 = vunpack.c.l.b16 %v1837
    %v2215 = vunpack.c.h.b16 %v1837
    %v2216 = vunpack.c.l.b16 %v1838
    %v2217 = vunpack.c.h.b16 %v1838
    %v2218 = vunpack.c.l.b16 %v1839
    %v2219 = vunpack.c.h.b16 %v1839
    %v2220 = vunpack.c.l.b16 %v1840
    %v2221 = vunpack.c.h.b16 %v1840
    %v2222 = vunpack.c.l.b16 %v1841
    %v2223 = vunpack.c.h.b16 %v1841
    %v2224 = vunpack.c.l.b16 %v1842
    %v2225 = vunpack.c.h.b16 %v1842
    %v2226 = vunpack.c.l.b16 %v1843
    %v2227 = vunpack.c.h.b16 %v1843
    %v2228 = vunpack.c.l.b16 %v1844
    %v2229 = vunpack.c.h.b16 %v1844
    %v2230 = vunpack.c.l.b16 %v1845
    %v2231 = vunpack.c.h.b16 %v1845
    %v2232 = vunpack.c.l.b16 %v1846
    %v2233 = vunpack.c.h.b16 %v1846
    %v2234 = vunpack.c.l.b16 %v1847
    %v2235 = vunpack.c.h.b16 %v1847
    %v2236 = vunpack.c.l.b16 %v1848
    %v2237 = vunpack.c.h.b16 %v1848
    %v2238 = vunpack.c.l.b16 %v1849
    %v2239 = vunpack.c.h.b16 %v1849
    %v2240 = vunpack.c.l.b16 %v1850
    %v2241 = vunpack.c.h.b16 %v1850
    %v2242 = vunpack.c.l.b16 %v1851
    %v2243 = vunpack.c.h.b16 %v1851
    %v2244 = vunpack.c.l.b16 %v1852
    %v2245 = vunpack.c.h.b16 %v1852
    %v2246 = vunpack.c.l.b16 %v1853
    %v2247 = vunpack.c.h.b16 %v1853
    %v2248 = vpack.c.b16 %v1996, %v1992
    %v2249 = vpack.c.b16 %v1997, %v1993
    %v2250 = vpack.c.b16 %v1998, %v1994
    %v2251 = vpack.c.b16 %v1999, %v1995
    %v2252 = vpack.c.b16 %v2004, %v2000
    %v2253 = vpack.c.b16 %v2005, %v2001
    %v2254 = vpack.c.b16 %v2006, %v2002
    %v2255 = vpack.c.b16 %v2007, %v2003
    %v2256 = vpack.c.b16 %v2012, %v2008
    %v2257 = vpack.c.b16 %v2013, %v2009
    %v2258 = vpack.c.b16 %v2014, %v2010
    %v2259 = vpack.c.b16 %v2015, %v2011
    %v2260 = vpack.c.b16 %v2020, %v2016
    %v2261 = vpack.c.b16 %v2021, %v2017
    %v2262 = vpack.c.b16 %v2022, %v2018
    %v2263 = vpack.c.b16 %v2023, %v2019
    %v2264 = vpack.c.b16 %v2028, %v2024
    %v2265 = vpack.c.b16 %v2029, %v2025
    %v2266 = vpack.c.b16 %v2030, %v2026
    %v2267 = vpack.c.b16 %v2031, %v2027
    %v2268 = vpack.c.b16 %v2036, %v2032
    %v2269 = vpack.c.b16 %v2037, %v2033
    %v2270 = vpack.c.b16 %v2038, %v2034
    %v2271 = vpack.c.b16 %v2039, %v2035
    %v2272 = vpack.c.b16 %v2044, %v2040
    %v2273 = vpack.c.b16 %v2045, %v2041
    %v2274 = vpack.c.b16 %v2046, %v2042
    %v2275 = vpack.c.b16 %v2047, %v2043
    %v2276 = vpack.c.b16 %v2052, %v2048
    %v2277 = vpack.c.b16 %v2053, %v2049
    %v2278 = vpack.c.b16 %v2054, %v2050
    %v2279 = vpack.c.b16 %v2055, %v2051
    %v2280 = vpack.c.b16 %v2060, %v2056
    %v2281 = vpack.c.b16 %v2061, %v2057
    %v2282 = vpack.c.b16 %v2062, %v2058
    %v2283 = vpack.c.b16 %v2063, %v2059
    %v2284 = vpack.c.b16 %v2068, %v2064
    %v2285 = vpack.c.b16 %v2069, %v2065
    %v2286 = vpack.c.b16 %v2070, %v2066
    %v2287 = vpack.c.b16 %v2071, %v2067
    %v2288 = vpack.c.b16 %v2076, %v2072
    %v2289 = vpack.c.b16 %v2077, %v2073
    %v2290 = vpack.c.b16 %v2078, %v2074
    %v2291 = vpack.c.b16 %v2079, %v2075
    %v2292 = vpack.c.b16 %v2084, %v2080
    %v2293 = vpack.c.b16 %v2085, %v2081
    %v2294 = vpack.c.b16 %v2086, %v2082
    %v2295 = vpack.c.b16 %v2087, %v2083
    %v2296 = vpack.c.b16 %v2092, %v2088
    %v2297 = vpack.c.b16 %v2093, %v2089
    %v2298 = vpack.c.b16 %v2094, %v2090
    %v2299 = vpack.c.b16 %v2095, %v2091
    %v2300 = vpack.c.b16 %v2100, %v2096
    %v2301 = vpack.c.b16 %v2101, %v2097
    %v2302 = vpack.c.b16 %v2102, %v2098
    %v2303 = vpack.c.b16 %v2103, %v2099
    %v2304 = vpack.c.b16 %v2108, %v2104
    %v2305 = vpack.c.b16 %v2109, %v2105
    %v2306 = vpack.c.b16 %v2110, %v2106
    %v2307 = vpack.c.b16 %v2111, %v2107
    %v2308 = vpack.c.b16 %v2116, %v2112
    %v2309 = vpack.c.b16 %v2117, %v2113
    %v2310 = vpack.c.b16 %v2118, %v2114
    %v2311 = vpack.c.b16 %v2119, %v2115
    %v2312 = vpack.c.b16 %v2124, %v2120
    %v2313 = vpack.c.b16 %v2125, %v2121
    %v2314 = vpack.c.b16 %v2126, %v2122
    %v2315 = vpack.c.b16 %v2127, %v2123
    %v2316 = vpack.c.b16 %v2132, %v2128
    %v2317 = vpack.c.b16 %v2133, %v2129
    %v2318 = vpack.c.b16 %v2134, %v2130
    %v2319 = vpack.c.b16 %v2135, %v2131
    %v2320 = vpack.c.b16 %v2140, %v2136
    %v2321 = vpack.c.b16 %v2141, %v2137
    %v2322 = vpack.c.b16 %v2142, %v2138
    %v2323 = vpack.c.b16 %v2143, %v2139
    %v2324 = vpack.c.b16 %v2148, %v2144
    %v2325 = vpack.c.b16 %v2149, %v2145
    %v2326 = vpack.c.b16 %v2150, %v2146
    %v2327 = vpack.c.b16 %v2151, %v2147
    %v2328 = vpack.c.b16 %v2156, %v2152
    %v2329 = vpack.c.b16 %v2157, %v2153
    %v2330 = vpack.c.b16 %v2158, %v2154
    %v2331 = vpack.c.b16 %v2159, %v2155
    %v2332 = vpack.c.b16 %v2164, %v2160
    %v2333 = vpack.c.b16 %v2165, %v2161
    %v2334 = vpack.c.b16 %v2166, %v2162
    %v2335 = vpack.c.b16 %v2167, %v2163
    %v2336 = vpack.c.b16 %v2172, %v2168
    %v2337 = vpack.c.b16 %v2173, %v2169
    %v2338 = vpack.c.b16 %v2174, %v2170
    %v2339 = vpack.c.b16 %v2175, %v2171
    %v2340 = vpack.c.b16 %v2180, %v2176
    %v2341 = vpack.c.b16 %v2181, %v2177
    %v2342 = vpack.c.b16 %v2182, %v2178
    %v2343 = vpack.c.b16 %v2183, %v2179
    %v2344 = vpack.c.b16 %v2188, %v2184
    %v2345 = vpack.c.b16 %v2189, %v2185
    %v2346 = vpack.c.b16 %v2190, %v2186
    %v2347 = vpack.c.b16 %v2191, %v2187
    %v2348 = vpack.c.b16 %v2196, %v2192
    %v2349 = vpack.c.b16 %v2197, %v2193
    %v2350 = vpack.c.b16 %v2198, %v2194
    %v2351 = vpack.c.b16 %v2199, %v2195
    %v2352 = vpack.c.b16 %v2204, %v2200
    %v2353 = vpack.c.b16 %v2205, %v2201
    %v2354 = vpack.c.b16 %v2206, %v2202
    %v2355 = vpack.c.b16 %v2207, %v2203
    %v2356 = vpack.c.b16 %v2212, %v2208
    %v2357 = vpack.c.b16 %v2213, %v2209
    %v2358 = vpack.c.b16 %v2214, %v2210
    %v2359 = vpack.c.b16 %v2215, %v2211
    %v2360 = vpack.c.b16 %v2220, %v2216
    %v2361 = vpack.c.b16 %v2221, %v2217
    %v2362 = vpack.c.b16 %v2222, %v2218
    %v2363 = vpack.c.b16 %v2223, %v2219
    %v2364 = vpack.c.b16 %v2228, %v2224
    %v2365 = vpack.c.b16 %v2229, %v2225
    %v2366 = vpack.c.b16 %v2230, %v2226
    %v2367 = vpack.c.b16 %v2231, %v2227
    %v2368 = vpack.c.b16 %v2236, %v2232
    %v2369 = vpack.c.b16 %v2237, %v2233
    %v2370 = vpack.c.b16 %v2238, %v2234
    %v2371 = vpack.c.b16 %v2239, %v2235
    %v2372 = vpack.c.b16 %v2244, %v2240
    %v2373 = vpack.c.b16 %v2245, %v2241
    %v2374 = vpack.c.b16 %v2246, %v2242
    %v2375 = vpack.c.b16 %v2247, %v2243
    %2504 = vmatpush.bf16.msra.mxu0 %v2276
    %2505 = vmatpush.bf16.msra.mxu0 %v2272
    %2506 = vmatpush.bf16.msra.mxu0 %v2268
    %2507 = vmatpush.bf16.msra.mxu0 %v2264
    %2508 = vmatpush.bf16.msra.mxu0 %v2260
    %2509 = vmatpush.bf16.msra.mxu0 %v2256
    %2510 = vmatpush.bf16.msra.mxu0 %v2252
    %2511 = vmatpush.bf16.msra.mxu0 %v2248
    %2512 = vmatmul.bf16.gmra.mxu0 %v1722
    %v2513 = vpop.f32.mrf.mxu0
    %v2514 = vadd.f32 %v1856, %v2513
    %v2515 = vpop.f32.mrf.mxu0
    %2516 = vdwg.mxu0
    %2517 = vmatpush.bf16.msra.mxu0 %v2308
    %2518 = vmatpush.bf16.msra.mxu0 %v2304
    %2519 = vmatpush.bf16.msra.mxu0 %v2300
    %2520 = vmatpush.bf16.msra.mxu0 %v2296
    %2521 = vmatpush.bf16.msra.mxu0 %v2292
    %2522 = vmatpush.bf16.msra.mxu0 %v2288
    %2523 = vmatpush.bf16.msra.mxu0 %v2284
    %2524 = vmatpush.bf16.msra.mxu0 %v2280
    %2525 = vmatmul.bf16.gmra.mxu0 %v1723
    %v2526 = vpop.f32.mrf.mxu0
    %v2527 = vadd.f32 %v2514, %v2526
    %v2528 = vpop.f32.mrf.mxu0
    %2529 = vdwg.mxu0
    %2530 = vmatpush.bf16.msra.mxu0 %v2340
    %2531 = vmatpush.bf16.msra.mxu0 %v2336
    %2532 = vmatpush.bf16.msra.mxu0 %v2332
    %2533 = vmatpush.bf16.msra.mxu0 %v2328
    %2534 = vmatpush.bf16.msra.mxu0 %v2324
    %2535 = vmatpush.bf16.msra.mxu0 %v2320
    %2536 = vmatpush.bf16.msra.mxu0 %v2316
    %2537 = vmatpush.bf16.msra.mxu0 %v2312
    %2538 = vmatmul.bf16.gmra.mxu0 %v1724
    %v2539 = vpop.f32.mrf.mxu0
    %v2540 = vadd.f32 %v2527, %v2539
    %v2541 = vpop.f32.mrf.mxu0
    %2542 = vdwg.mxu0
    %2543 = vmatpush.bf16.msra.mxu0 %v2372
    %2544 = vmatpush.bf16.msra.mxu0 %v2368
    %2545 = vmatpush.bf16.msra.mxu0 %v2364
    %2546 = vmatpush.bf16.msra.mxu0 %v2360
    %2547 = vmatpush.bf16.msra.mxu0 %v2356
    %2548 = vmatpush.bf16.msra.mxu0 %v2352
    %2549 = vmatpush.bf16.msra.mxu0 %v2348
    %2550 = vmatpush.bf16.msra.mxu0 %v2344
    %2551 = vmatmul.bf16.gmra.mxu0 %v1725
    %v2552 = vpop.f32.mrf.mxu0
    %v2553 = vadd.f32 %v2540, %v2552
    %v2554 = vpop.f32.mrf.mxu0
    %2555 = vdwg.mxu0
    %2556 = vmatpush.bf16.msra.mxu0 %v2277
    %2557 = vmatpush.bf16.msra.mxu0 %v2273
    %2558 = vmatpush.bf16.msra.mxu0 %v2269
    %2559 = vmatpush.bf16.msra.mxu0 %v2265
    %2560 = vmatpush.bf16.msra.mxu0 %v2261
    %2561 = vmatpush.bf16.msra.mxu0 %v2257
    %2562 = vmatpush.bf16.msra.mxu0 %v2253
    %2563 = vmatpush.bf16.msra.mxu0 %v2249
    %2564 = vmatmul.bf16.gmra.mxu0 %v1722
    %v2565 = vpop.f32.mrf.mxu0
    %v2566 = vadd.f32 %v1857, %v2565
    %v2567 = vpop.f32.mrf.mxu0
    %2568 = vdwg.mxu0
    %2569 = vmatpush.bf16.msra.mxu0 %v2309
    %2570 = vmatpush.bf16.msra.mxu0 %v2305
    %2571 = vmatpush.bf16.msra.mxu0 %v2301
    %2572 = vmatpush.bf16.msra.mxu0 %v2297
    %2573 = vmatpush.bf16.msra.mxu0 %v2293
    %2574 = vmatpush.bf16.msra.mxu0 %v2289
    %2575 = vmatpush.bf16.msra.mxu0 %v2285
    %2576 = vmatpush.bf16.msra.mxu0 %v2281
    %2577 = vmatmul.bf16.gmra.mxu0 %v1723
    %v2578 = vpop.f32.mrf.mxu0
    %v2579 = vadd.f32 %v2566, %v2578
    %v2580 = vpop.f32.mrf.mxu0
    %2581 = vdwg.mxu0
    %2582 = vmatpush.bf16.msra.mxu0 %v2341
    %2583 = vmatpush.bf16.msra.mxu0 %v2337
    %2584 = vmatpush.bf16.msra.mxu0 %v2333
    %2585 = vmatpush.bf16.msra.mxu0 %v2329
    %2586 = vmatpush.bf16.msra.mxu0 %v2325
    %2587 = vmatpush.bf16.msra.mxu0 %v2321
    %2588 = vmatpush.bf16.msra.mxu0 %v2317
    %2589 = vmatpush.bf16.msra.mxu0 %v2313
    %2590 = vmatmul.bf16.gmra.mxu0 %v1724
    %v2591 = vpop.f32.mrf.mxu0
    %v2592 = vadd.f32 %v2579, %v2591
    %v2593 = vpop.f32.mrf.mxu0
    %2594 = vdwg.mxu0
    %2595 = vmatpush.bf16.msra.mxu0 %v2373
    %2596 = vmatpush.bf16.msra.mxu0 %v2369
    %2597 = vmatpush.bf16.msra.mxu0 %v2365
    %2598 = vmatpush.bf16.msra.mxu0 %v2361
    %2599 = vmatpush.bf16.msra.mxu0 %v2357
    %2600 = vmatpush.bf16.msra.mxu0 %v2353
    %2601 = vmatpush.bf16.msra.mxu0 %v2349
    %2602 = vmatpush.bf16.msra.mxu0 %v2345
    %2603 = vmatmul.bf16.gmra.mxu0 %v1725
    %v2604 = vpop.f32.mrf.mxu0
    %v2605 = vadd.f32 %v2592, %v2604
    %v2606 = vpop.f32.mrf.mxu0
    %2607 = vdwg.mxu0
    %2608 = vmatpush.bf16.msra.mxu0 %v2278
    %2609 = vmatpush.bf16.msra.mxu0 %v2274
    %2610 = vmatpush.bf16.msra.mxu0 %v2270
    %2611 = vmatpush.bf16.msra.mxu0 %v2266
    %2612 = vmatpush.bf16.msra.mxu0 %v2262
    %2613 = vmatpush.bf16.msra.mxu0 %v2258
    %2614 = vmatpush.bf16.msra.mxu0 %v2254
    %2615 = vmatpush.bf16.msra.mxu0 %v2250
    %2616 = vmatmul.bf16.gmra.mxu0 %v1722
    %v2617 = vpop.f32.mrf.mxu0
    %v2618 = vadd.f32 %v1858, %v2617
    %v2619 = vpop.f32.mrf.mxu0
    %2620 = vdwg.mxu0
    %2621 = vmatpush.bf16.msra.mxu0 %v2310
    %2622 = vmatpush.bf16.msra.mxu0 %v2306
    %2623 = vmatpush.bf16.msra.mxu0 %v2302
    %2624 = vmatpush.bf16.msra.mxu0 %v2298
    %2625 = vmatpush.bf16.msra.mxu0 %v2294
    %2626 = vmatpush.bf16.msra.mxu0 %v2290
    %2627 = vmatpush.bf16.msra.mxu0 %v2286
    %2628 = vmatpush.bf16.msra.mxu0 %v2282
    %2629 = vmatmul.bf16.gmra.mxu0 %v1723
    %v2630 = vpop.f32.mrf.mxu0
    %v2631 = vadd.f32 %v2618, %v2630
    %v2632 = vpop.f32.mrf.mxu0
    %2633 = vdwg.mxu0
    %2634 = vmatpush.bf16.msra.mxu0 %v2342
    %2635 = vmatpush.bf16.msra.mxu0 %v2338
    %2636 = vmatpush.bf16.msra.mxu0 %v2334
    %2637 = vmatpush.bf16.msra.mxu0 %v2330
    %2638 = vmatpush.bf16.msra.mxu0 %v2326
    %2639 = vmatpush.bf16.msra.mxu0 %v2322
    %2640 = vmatpush.bf16.msra.mxu0 %v2318
    %2641 = vmatpush.bf16.msra.mxu0 %v2314
    %2642 = vmatmul.bf16.gmra.mxu0 %v1724
    %v2643 = vpop.f32.mrf.mxu0
    %v2644 = vadd.f32 %v2631, %v2643
    %v2645 = vpop.f32.mrf.mxu0
    %2646 = vdwg.mxu0
    %2647 = vmatpush.bf16.msra.mxu0 %v2374
    %2648 = vmatpush.bf16.msra.mxu0 %v2370
    %2649 = vmatpush.bf16.msra.mxu0 %v2366
    %2650 = vmatpush.bf16.msra.mxu0 %v2362
    %2651 = vmatpush.bf16.msra.mxu0 %v2358
    %2652 = vmatpush.bf16.msra.mxu0 %v2354
    %2653 = vmatpush.bf16.msra.mxu0 %v2350
    %2654 = vmatpush.bf16.msra.mxu0 %v2346
    %2655 = vmatmul.bf16.gmra.mxu0 %v1725
    %v2656 = vpop.f32.mrf.mxu0
    %v2657 = vadd.f32 %v2644, %v2656
    %v2658 = vpop.f32.mrf.mxu0
    %2659 = vdwg.mxu0
    %2660 = vmatpush.bf16.msra.mxu0 %v2279
    %2661 = vmatpush.bf16.msra.mxu0 %v2275
    %2662 = vmatpush.bf16.msra.mxu0 %v2271
    %2663 = vmatpush.bf16.msra.mxu0 %v2267
    %2664 = vmatpush.bf16.msra.mxu0 %v2263
    %2665 = vmatpush.bf16.msra.mxu0 %v2259
    %2666 = vmatpush.bf16.msra.mxu0 %v2255
    %2667 = vmatpush.bf16.msra.mxu0 %v2251
    %2668 = vmatmul.bf16.gmra.mxu0 %v1722
    %v2669 = vpop.f32.mrf.mxu0
    %v2670 = vadd.f32 %v1859, %v2669
    %v2671 = vpop.f32.mrf.mxu0
    %2672 = vdwg.mxu0
    %2673 = vmatpush.bf16.msra.mxu0 %v2311
    %2674 = vmatpush.bf16.msra.mxu0 %v2307
    %2675 = vmatpush.bf16.msra.mxu0 %v2303
    %2676 = vmatpush.bf16.msra.mxu0 %v2299
    %2677 = vmatpush.bf16.msra.mxu0 %v2295
    %2678 = vmatpush.bf16.msra.mxu0 %v2291
    %2679 = vmatpush.bf16.msra.mxu0 %v2287
    %2680 = vmatpush.bf16.msra.mxu0 %v2283
    %2681 = vmatmul.bf16.gmra.mxu0 %v1723
    %v2682 = vpop.f32.mrf.mxu0
    %v2683 = vadd.f32 %v2670, %v2682
    %v2684 = vpop.f32.mrf.mxu0
    %2685 = vdwg.mxu0
    %2686 = vmatpush.bf16.msra.mxu0 %v2343
    %2687 = vmatpush.bf16.msra.mxu0 %v2339
    %2688 = vmatpush.bf16.msra.mxu0 %v2335
    %2689 = vmatpush.bf16.msra.mxu0 %v2331
    %2690 = vmatpush.bf16.msra.mxu0 %v2327
    %2691 = vmatpush.bf16.msra.mxu0 %v2323
    %2692 = vmatpush.bf16.msra.mxu0 %v2319
    %2693 = vmatpush.bf16.msra.mxu0 %v2315
    %2694 = vmatmul.bf16.gmra.mxu0 %v1724
    %v2695 = vpop.f32.mrf.mxu0
    %v2696 = vadd.f32 %v2683, %v2695
    %v2697 = vpop.f32.mrf.mxu0
    %2698 = vdwg.mxu0
    %2699 = vmatpush.bf16.msra.mxu0 %v2375
    %2700 = vmatpush.bf16.msra.mxu0 %v2371
    %2701 = vmatpush.bf16.msra.mxu0 %v2367
    %2702 = vmatpush.bf16.msra.mxu0 %v2363
    %2703 = vmatpush.bf16.msra.mxu0 %v2359
    %2704 = vmatpush.bf16.msra.mxu0 %v2355
    %2705 = vmatpush.bf16.msra.mxu0 %v2351
    %2706 = vmatpush.bf16.msra.mxu0 %v2347
    %2707 = vmatmul.bf16.gmra.mxu0 %v1725
    %v2708 = vpop.f32.mrf.mxu0
    %v2709 = vadd.f32 %v2696, %v2708
    %v2710 = vpop.f32.mrf.mxu0
    %2711 = vdwg.mxu0
    %v2712 = vmax.f32 %v2553, 0.0
    %v2713 = vmax.f32 %v2605, 0.0
    %v2714 = vmax.f32 %v2657, 0.0
    %v2715 = vmax.f32 %v2709, 0.0
    %v2716 = vpack.c.bf16 %v2712, %v2712
    %v2717 = vpack.c.bf16 %v2713, %v2713
    %v2718 = vpack.c.bf16 %v2714, %v2714
    %v2719 = vpack.c.bf16 %v2715, %v2715
    %v2720 = vld [vmem:[#allocation11] sm:$0xff]
    %v2721 = vld [vmem:[#allocation11 + $0x8] sm:$0xff]
    %v2722 = vld [vmem:[#allocation11 + $0x10] sm:$0xff]
    %v2723 = vld [vmem:[#allocation11 + $0x18] sm:$0xff]
    %v2724 = vld [vmem:[#allocation11 + $0x20] sm:$0xff]
    %v2725 = vld [vmem:[#allocation11 + $0x28] sm:$0xff]
    %v2726 = vld [vmem:[#allocation11 + $0x30] sm:$0xff]
    %v2727 = vld [vmem:[#allocation11 + $0x38] sm:$0xff]
    %v2728 = vld [vmem:[#allocation11 + $0x40] sm:$0xff]
    %v2729 = vld [vmem:[#allocation11 + $0x48] sm:$0xff]
    %v2730 = vld [vmem:[#allocation11 + $0x50] sm:$0xff]
    %v2731 = vld [vmem:[#allocation11 + $0x58] sm:$0xff]
    %v2732 = vld [vmem:[#allocation11 + $0x60] sm:$0xff]
    %v2733 = vld [vmem:[#allocation11 + $0x68] sm:$0xff]
    %v2734 = vld [vmem:[#allocation11 + $0x70] sm:$0xff]
    %v2735 = vld [vmem:[#allocation11 + $0x78] sm:$0xff]
    %v2736 = vld [vmem:[#allocation11 + $0x80] sm:$0xff]
    %v2737 = vld [vmem:[#allocation11 + $0x88] sm:$0xff]
    %v2738 = vld [vmem:[#allocation11 + $0x90] sm:$0xff]
    %v2739 = vld [vmem:[#allocation11 + $0x98] sm:$0xff]
    %v2740 = vld [vmem:[#allocation11 + $0xa0] sm:$0xff]
    %v2741 = vld [vmem:[#allocation11 + $0xa8] sm:$0xff]
    %v2742 = vld [vmem:[#allocation11 + $0xb0] sm:$0xff]
    %v2743 = vld [vmem:[#allocation11 + $0xb8] sm:$0xff]
    %v2744 = vld [vmem:[#allocation11 + $0xc0] sm:$0xff]
    %v2745 = vld [vmem:[#allocation11 + $0xc8] sm:$0xff]
    %v2746 = vld [vmem:[#allocation11 + $0xd0] sm:$0xff]
    %v2747 = vld [vmem:[#allocation11 + $0xd8] sm:$0xff]
    %v2748 = vld [vmem:[#allocation11 + $0xe0] sm:$0xff]
    %v2749 = vld [vmem:[#allocation11 + $0xe8] sm:$0xff]
    %v2750 = vld [vmem:[#allocation11 + $0xf0] sm:$0xff]
    %v2751 = vld [vmem:[#allocation11 + $0xf8] sm:$0xff]
    %v2752 = vld [vmem:[#allocation11 + $0x100] sm:$0xff]
    %v2753 = vld [vmem:[#allocation11 + $0x108] sm:$0xff]
    %v2754 = vld [vmem:[#allocation11 + $0x110] sm:$0xff]
    %v2755 = vld [vmem:[#allocation11 + $0x118] sm:$0xff]
    %v2756 = vld [vmem:[#allocation11 + $0x120] sm:$0xff]
    %v2757 = vld [vmem:[#allocation11 + $0x128] sm:$0xff]
    %v2758 = vld [vmem:[#allocation11 + $0x130] sm:$0xff]
    %v2759 = vld [vmem:[#allocation11 + $0x138] sm:$0xff]
    %v2760 = vld [vmem:[#allocation11 + $0x140] sm:$0xff]
    %v2761 = vld [vmem:[#allocation11 + $0x148] sm:$0xff]
    %v2762 = vld [vmem:[#allocation11 + $0x150] sm:$0xff]
    %v2763 = vld [vmem:[#allocation11 + $0x158] sm:$0xff]
    %v2764 = vld [vmem:[#allocation11 + $0x160] sm:$0xff]
    %v2765 = vld [vmem:[#allocation11 + $0x168] sm:$0xff]
    %v2766 = vld [vmem:[#allocation11 + $0x170] sm:$0xff]
    %v2767 = vld [vmem:[#allocation11 + $0x178] sm:$0xff]
    %v2768 = vld [vmem:[#allocation11 + $0x180] sm:$0xff]
    %v2769 = vld [vmem:[#allocation11 + $0x188] sm:$0xff]
    %v2770 = vld [vmem:[#allocation11 + $0x190] sm:$0xff]
    %v2771 = vld [vmem:[#allocation11 + $0x198] sm:$0xff]
    %v2772 = vld [vmem:[#allocation11 + $0x1a0] sm:$0xff]
    %v2773 = vld [vmem:[#allocation11 + $0x1a8] sm:$0xff]
    %v2774 = vld [vmem:[#allocation11 + $0x1b0] sm:$0xff]
    %v2775 = vld [vmem:[#allocation11 + $0x1b8] sm:$0xff]
    %v2776 = vld [vmem:[#allocation11 + $0x1c0] sm:$0xff]
    %v2777 = vld [vmem:[#allocation11 + $0x1c8] sm:$0xff]
    %v2778 = vld [vmem:[#allocation11 + $0x1d0] sm:$0xff]
    %v2779 = vld [vmem:[#allocation11 + $0x1d8] sm:$0xff]
    %v2780 = vld [vmem:[#allocation11 + $0x1e0] sm:$0xff]
    %v2781 = vld [vmem:[#allocation11 + $0x1e8] sm:$0xff]
    %v2782 = vld [vmem:[#allocation11 + $0x1f0] sm:$0xff]
    %v2783 = vld [vmem:[#allocation11 + $0x1f8] sm:$0xff]
    %v2784 = vld [vmem:[#allocation13] sm:$0x3]
    %v2786 = vperm.slane %v2784, 0
    %v2787 = vperm.slane %v2784, 1
    %v2854 = vunpack.c.l.b16 %v2720
    %v2855 = vunpack.c.h.b16 %v2720
    %v2856 = vunpack.c.l.b16 %v2721
    %v2857 = vunpack.c.h.b16 %v2721
    %v2858 = vunpack.c.l.b16 %v2722
    %v2859 = vunpack.c.h.b16 %v2722
    %v2860 = vunpack.c.l.b16 %v2723
    %v2861 = vunpack.c.h.b16 %v2723
    %v2862 = vunpack.c.l.b16 %v2724
    %v2863 = vunpack.c.h.b16 %v2724
    %v2864 = vunpack.c.l.b16 %v2725
    %v2865 = vunpack.c.h.b16 %v2725
    %v2866 = vunpack.c.l.b16 %v2726
    %v2867 = vunpack.c.h.b16 %v2726
    %v2868 = vunpack.c.l.b16 %v2727
    %v2869 = vunpack.c.h.b16 %v2727
    %v2870 = vunpack.c.l.b16 %v2728
    %v2871 = vunpack.c.h.b16 %v2728
    %v2872 = vunpack.c.l.b16 %v2729
    %v2873 = vunpack.c.h.b16 %v2729
    %v2874 = vunpack.c.l.b16 %v2730
    %v2875 = vunpack.c.h.b16 %v2730
    %v2876 = vunpack.c.l.b16 %v2731
    %v2877 = vunpack.c.h.b16 %v2731
    %v2878 = vunpack.c.l.b16 %v2732
    %v2879 = vunpack.c.h.b16 %v2732
    %v2880 = vunpack.c.l.b16 %v2733
    %v2881 = vunpack.c.h.b16 %v2733
    %v2882 = vunpack.c.l.b16 %v2734
    %v2883 = vunpack.c.h.b16 %v2734
    %v2884 = vunpack.c.l.b16 %v2735
    %v2885 = vunpack.c.h.b16 %v2735
    %v2886 = vunpack.c.l.b16 %v2736
    %v2887 = vunpack.c.h.b16 %v2736
    %v2888 = vunpack.c.l.b16 %v2737
    %v2889 = vunpack.c.h.b16 %v2737
    %v2890 = vunpack.c.l.b16 %v2738
    %v2891 = vunpack.c.h.b16 %v2738
    %v2892 = vunpack.c.l.b16 %v2739
    %v2893 = vunpack.c.h.b16 %v2739
    %v2894 = vunpack.c.l.b16 %v2740
    %v2895 = vunpack.c.h.b16 %v2740
    %v2896 = vunpack.c.l.b16 %v2741
    %v2897 = vunpack.c.h.b16 %v2741
    %v2898 = vunpack.c.l.b16 %v2742
    %v2899 = vunpack.c.h.b16 %v2742
    %v2900 = vunpack.c.l.b16 %v2743
    %v2901 = vunpack.c.h.b16 %v2743
    %v2902 = vunpack.c.l.b16 %v2744
    %v2903 = vunpack.c.h.b16 %v2744
    %v2904 = vunpack.c.l.b16 %v2745
    %v2905 = vunpack.c.h.b16 %v2745
    %v2906 = vunpack.c.l.b16 %v2746
    %v2907 = vunpack.c.h.b16 %v2746
    %v2908 = vunpack.c.l.b16 %v2747
    %v2909 = vunpack.c.h.b16 %v2747
    %v2910 = vunpack.c.l.b16 %v2748
    %v2911 = vunpack.c.h.b16 %v2748
    %v2912 = vunpack.c.l.b16 %v2749
    %v2913 = vunpack.c.h.b16 %v2749
    %v2914 = vunpack.c.l.b16 %v2750
    %v2915 = vunpack.c.h.b16 %v2750
    %v2916 = vunpack.c.l.b16 %v2751
    %v2917 = vunpack.c.h.b16 %v2751
    %v2918 = vunpack.c.l.b16 %v2752
    %v2919 = vunpack.c.h.b16 %v2752
    %v2920 = vunpack.c.l.b16 %v2753
    %v2921 = vunpack.c.h.b16 %v2753
    %v2922 = vunpack.c.l.b16 %v2754
    %v2923 = vunpack.c.h.b16 %v2754
    %v2924 = vunpack.c.l.b16 %v2755
    %v2925 = vunpack.c.h.b16 %v2755
    %v2926 = vunpack.c.l.b16 %v2756
    %v2927 = vunpack.c.h.b16 %v2756
    %v2928 = vunpack.c.l.b16 %v2757
    %v2929 = vunpack.c.h.b16 %v2757
    %v2930 = vunpack.c.l.b16 %v2758
    %v2931 = vunpack.c.h.b16 %v2758
    %v2932 = vunpack.c.l.b16 %v2759
    %v2933 = vunpack.c.h.b16 %v2759
    %v2934 = vunpack.c.l.b16 %v2760
    %v2935 = vunpack.c.h.b16 %v2760
    %v2936 = vunpack.c.l.b16 %v2761
    %v2937 = vunpack.c.h.b16 %v2761
    %v2938 = vunpack.c.l.b16 %v2762
    %v2939 = vunpack.c.h.b16 %v2762
    %v2940 = vunpack.c.l.b16 %v2763
    %v2941 = vunpack.c.h.b16 %v2763
    %v2942 = vunpack.c.l.b16 %v2764
    %v2943 = vunpack.c.h.b16 %v2764
    %v2944 = vunpack.c.l.b16 %v2765
    %v2945 = vunpack.c.h.b16 %v2765
    %v2946 = vunpack.c.l.b16 %v2766
    %v2947 = vunpack.c.h.b16 %v2766
    %v2948 = vunpack.c.l.b16 %v2767
    %v2949 = vunpack.c.h.b16 %v2767
    %v2950 = vunpack.c.l.b16 %v2768
    %v2951 = vunpack.c.h.b16 %v2768
    %v2952 = vunpack.c.l.b16 %v2769
    %v2953 = vunpack.c.h.b16 %v2769
    %v2954 = vunpack.c.l.b16 %v2770
    %v2955 = vunpack.c.h.b16 %v2770
    %v2956 = vunpack.c.l.b16 %v2771
    %v2957 = vunpack.c.h.b16 %v2771
    %v2958 = vunpack.c.l.b16 %v2772
    %v2959 = vunpack.c.h.b16 %v2772
    %v2960 = vunpack.c.l.b16 %v2773
    %v2961 = vunpack.c.h.b16 %v2773
    %v2962 = vunpack.c.l.b16 %v2774
    %v2963 = vunpack.c.h.b16 %v2774
    %v2964 = vunpack.c.l.b16 %v2775
    %v2965 = vunpack.c.h.b16 %v2775
    %v2966 = vunpack.c.l.b16 %v2776
    %v2967 = vunpack.c.h.b16 %v2776
    %v2968 = vunpack.c.l.b16 %v2777
    %v2969 = vunpack.c.h.b16 %v2777
    %v2970 = vunpack.c.l.b16 %v2778
    %v2971 = vunpack.c.h.b16 %v2778
    %v2972 = vunpack.c.l.b16 %v2779
    %v2973 = vunpack.c.h.b16 %v2779
    %v2974 = vunpack.c.l.b16 %v2780
    %v2975 = vunpack.c.h.b16 %v2780
    %v2976 = vunpack.c.l.b16 %v2781
    %v2977 = vunpack.c.h.b16 %v2781
    %v2978 = vunpack.c.l.b16 %v2782
    %v2979 = vunpack.c.h.b16 %v2782
    %v2980 = vunpack.c.l.b16 %v2783
    %v2981 = vunpack.c.h.b16 %v2783
    %v2982 = vpack.c.b16 %v2856, %v2854
    %v2983 = vpack.c.b16 %v2857, %v2855
    %v2984 = vpack.c.b16 %v2860, %v2858
    %v2985 = vpack.c.b16 %v2861, %v2859
    %v2986 = vpack.c.b16 %v2864, %v2862
    %v2987 = vpack.c.b16 %v2865, %v2863
    %v2988 = vpack.c.b16 %v2868, %v2866
    %v2989 = vpack.c.b16 %v2869, %v2867
    %v2990 = vpack.c.b16 %v2872, %v2870
    %v2991 = vpack.c.b16 %v2873, %v2871
    %v2992 = vpack.c.b16 %v2876, %v2874
    %v2993 = vpack.c.b16 %v2877, %v2875
    %v2994 = vpack.c.b16 %v2880, %v2878
    %v2995 = vpack.c.b16 %v2881, %v2879
    %v2996 = vpack.c.b16 %v2884, %v2882
    %v2997 = vpack.c.b16 %v2885, %v2883
    %v2998 = vpack.c.b16 %v2888, %v2886
    %v2999 = vpack.c.b16 %v2889, %v2887
    %v3000 = vpack.c.b16 %v2892, %v2890
    %v3001 = vpack.c.b16 %v2893, %v2891
    %v3002 = vpack.c.b16 %v2896, %v2894
    %v3003 = vpack.c.b16 %v2897, %v2895
    %v3004 = vpack.c.b16 %v2900, %v2898
    %v3005 = vpack.c.b16 %v2901, %v2899
    %v3006 = vpack.c.b16 %v2904, %v2902
    %v3007 = vpack.c.b16 %v2905, %v2903
    %v3008 = vpack.c.b16 %v2908, %v2906
    %v3009 = vpack.c.b16 %v2909, %v2907
    %v3010 = vpack.c.b16 %v2912, %v2910
    %v3011 = vpack.c.b16 %v2913, %v2911
    %v3012 = vpack.c.b16 %v2916, %v2914
    %v3013 = vpack.c.b16 %v2917, %v2915
    %v3014 = vpack.c.b16 %v2920, %v2918
    %v3015 = vpack.c.b16 %v2921, %v2919
    %v3016 = vpack.c.b16 %v2924, %v2922
    %v3017 = vpack.c.b16 %v2925, %v2923
    %v3018 = vpack.c.b16 %v2928, %v2926
    %v3019 = vpack.c.b16 %v2929, %v2927
    %v3020 = vpack.c.b16 %v2932, %v2930
    %v3021 = vpack.c.b16 %v2933, %v2931
    %v3022 = vpack.c.b16 %v2936, %v2934
    %v3023 = vpack.c.b16 %v2937, %v2935
    %v3024 = vpack.c.b16 %v2940, %v2938
    %v3025 = vpack.c.b16 %v2941, %v2939
    %v3026 = vpack.c.b16 %v2944, %v2942
    %v3027 = vpack.c.b16 %v2945, %v2943
    %v3028 = vpack.c.b16 %v2948, %v2946
    %v3029 = vpack.c.b16 %v2949, %v2947
    %v3030 = vpack.c.b16 %v2952, %v2950
    %v3031 = vpack.c.b16 %v2953, %v2951
    %v3032 = vpack.c.b16 %v2956, %v2954
    %v3033 = vpack.c.b16 %v2957, %v2955
    %v3034 = vpack.c.b16 %v2960, %v2958
    %v3035 = vpack.c.b16 %v2961, %v2959
    %v3036 = vpack.c.b16 %v2964, %v2962
    %v3037 = vpack.c.b16 %v2965, %v2963
    %v3038 = vpack.c.b16 %v2968, %v2966
    %v3039 = vpack.c.b16 %v2969, %v2967
    %v3040 = vpack.c.b16 %v2972, %v2970
    %v3041 = vpack.c.b16 %v2973, %v2971
    %v3042 = vpack.c.b16 %v2976, %v2974
    %v3043 = vpack.c.b16 %v2977, %v2975
    %v3044 = vpack.c.b16 %v2980, %v2978
    %v3045 = vpack.c.b16 %v2981, %v2979
    %3110 = vmatpush.bf16.msra.mxu0 %v2996
    %3111 = vmatpush.bf16.msra.mxu0 %v2994
    %3112 = vmatpush.bf16.msra.mxu0 %v2992
    %3113 = vmatpush.bf16.msra.mxu0 %v2990
    %3114 = vmatpush.bf16.msra.mxu0 %v2988
    %3115 = vmatpush.bf16.msra.mxu0 %v2986
    %3116 = vmatpush.bf16.msra.mxu0 %v2984
    %3117 = vmatpush.bf16.msra.mxu0 %v2982
    %3118 = vmatmul.bf16.gmra.mxu0 %v2716
    %v3119 = vpop.f32.mrf.mxu0
    %v3120 = vadd.f32 %v2786, %v3119
    %v3121 = vpop.f32.mrf.mxu0
    %3122 = vdwg.mxu0
    %3123 = vmatpush.bf16.msra.mxu0 %v3012
    %3124 = vmatpush.bf16.msra.mxu0 %v3010
    %3125 = vmatpush.bf16.msra.mxu0 %v3008
    %3126 = vmatpush.bf16.msra.mxu0 %v3006
    %3127 = vmatpush.bf16.msra.mxu0 %v3004
    %3128 = vmatpush.bf16.msra.mxu0 %v3002
    %3129 = vmatpush.bf16.msra.mxu0 %v3000
    %3130 = vmatpush.bf16.msra.mxu0 %v2998
    %3131 = vmatmul.bf16.gmra.mxu0 %v2717
    %v3132 = vpop.f32.mrf.mxu0
    %v3133 = vadd.f32 %v3120, %v3132
    %v3134 = vpop.f32.mrf.mxu0
    %3135 = vdwg.mxu0
    %3136 = vmatpush.bf16.msra.mxu0 %v3028
    %3137 = vmatpush.bf16.msra.mxu0 %v3026
    %3138 = vmatpush.bf16.msra.mxu0 %v3024
    %3139 = vmatpush.bf16.msra.mxu0 %v3022
    %3140 = vmatpush.bf16.msra.mxu0 %v3020
    %3141 = vmatpush.bf16.msra.mxu0 %v3018
    %3142 = vmatpush.bf16.msra.mxu0 %v3016
    %3143 = vmatpush.bf16.msra.mxu0 %v3014
    %3144 = vmatmul.bf16.gmra.mxu0 %v2718
    %v3145 = vpop.f32.mrf.mxu0
    %v3146 = vadd.f32 %v3133, %v3145
    %v3147 = vpop.f32.mrf.mxu0
    %3148 = vdwg.mxu0
    %3149 = vmatpush.bf16.msra.mxu0 %v3044
    %3150 = vmatpush.bf16.msra.mxu0 %v3042
    %3151 = vmatpush.bf16.msra.mxu0 %v3040
    %3152 = vmatpush.bf16.msra.mxu0 %v3038
    %3153 = vmatpush.bf16.msra.mxu0 %v3036
    %3154 = vmatpush.bf16.msra.mxu0 %v3034
    %3155 = vmatpush.bf16.msra.mxu0 %v3032
    %3156 = vmatpush.bf16.msra.mxu0 %v3030
    %3157 = vmatmul.bf16.gmra.mxu0 %v2719
    %v3158 = vpop.f32.mrf.mxu0
    %v3159 = vadd.f32 %v3146, %v3158
    %v3160 = vpop.f32.mrf.mxu0
    %3161 = vdwg.mxu0
    %3162 = vmatpush.bf16.msra.mxu0 %v2997
    %3163 = vmatpush.bf16.msra.mxu0 %v2995
    %3164 = vmatpush.bf16.msra.mxu0 %v2993
    %3165 = vmatpush.bf16.msra.mxu0 %v2991
    %3166 = vmatpush.bf16.msra.mxu0 %v2989
    %3167 = vmatpush.bf16.msra.mxu0 %v2987
    %3168 = vmatpush.bf16.msra.mxu0 %v2985
    %3169 = vmatpush.bf16.msra.mxu0 %v2983
    %3170 = vmatmul.bf16.gmra.mxu0 %v2716
    %v3171 = vpop.f32.mrf.mxu0
    %v3172 = vadd.f32 %v2787, %v3171
    %v3173 = vpop.f32.mrf.mxu0
    %3174 = vdwg.mxu0
    %3175 = vmatpush.bf16.msra.mxu0 %v3013
    %3176 = vmatpush.bf16.msra.mxu0 %v3011
    %3177 = vmatpush.bf16.msra.mxu0 %v3009
    %3178 = vmatpush.bf16.msra.mxu0 %v3007
    %3179 = vmatpush.bf16.msra.mxu0 %v3005
    %3180 = vmatpush.bf16.msra.mxu0 %v3003
    %3181 = vmatpush.bf16.msra.mxu0 %v3001
    %3182 = vmatpush.bf16.msra.mxu0 %v2999
    %3183 = vmatmul.bf16.gmra.mxu0 %v2717
    %v3184 = vpop.f32.mrf.mxu0
    %v3185 = vadd.f32 %v3172, %v3184
    %v3186 = vpop.f32.mrf.mxu0
    %3187 = vdwg.mxu0
    %3188 = vmatpush.bf16.msra.mxu0 %v3029
    %3189 = vmatpush.bf16.msra.mxu0 %v3027
    %3190 = vmatpush.bf16.msra.mxu0 %v3025
    %3191 = vmatpush.bf16.msra.mxu0 %v3023
    %3192 = vmatpush.bf16.msra.mxu0 %v3021
    %3193 = vmatpush.bf16.msra.mxu0 %v3019
    %3194 = vmatpush.bf16.msra.mxu0 %v3017
    %3195 = vmatpush.bf16.msra.mxu0 %v3015
    %3196 = vmatmul.bf16.gmra.mxu0 %v2718
    %v3197 = vpop.f32.mrf.mxu0
    %v3198 = vadd.f32 %v3185, %v3197
    %v3199 = vpop.f32.mrf.mxu0
    %3200 = vdwg.mxu0
    %3201 = vmatpush.bf16.msra.mxu0 %v3045
    %3202 = vmatpush.bf16.msra.mxu0 %v3043
    %3203 = vmatpush.bf16.msra.mxu0 %v3041
    %3204 = vmatpush.bf16.msra.mxu0 %v3039
    %3205 = vmatpush.bf16.msra.mxu0 %v3037
    %3206 = vmatpush.bf16.msra.mxu0 %v3035
    %3207 = vmatpush.bf16.msra.mxu0 %v3033
    %3208 = vmatpush.bf16.msra.mxu0 %v3031
    %3209 = vmatmul.bf16.gmra.mxu0 %v2719
    %v3210 = vpop.f32.mrf.mxu0
    %v3211 = vadd.f32 %v3198, %v3210
    %v3212 = vpop.f32.mrf.mxu0
    %3213 = vdwg.mxu0
    %v3214 = vld [vmem:[#allocation5] sm:$0x3]
    %v3215 = vmul.f32 %v3211, 0.5
    %v3216 = vmul.f32 %v3215, 1.442695
    %v3217 = vpow.pop %v3216
    %v3218 = vmul.f32 %v3214, %v3217
    %v3219 = vadd.f32 %v3159, %v3218
    %v3220 = vpack.c.bf16 %v3219, %v3219
    %v3221 = vld [vmem:[#allocation14] sm:$0xff]
    %v3222 = vld [vmem:[#allocation14 + $0x8] sm:$0xff]
    %v3223 = vld [vmem:[#allocation14 + $0x10] sm:$0xff]
    %v3224 = vld [vmem:[#allocation14 + $0x18] sm:$0xff]
    %v3225 = vld [vmem:[#allocation14 + $0x20] sm:$0xff]
    %v3226 = vld [vmem:[#allocation14 + $0x28] sm:$0xff]
    %v3227 = vld [vmem:[#allocation14 + $0x30] sm:$0xff]
    %v3228 = vld [vmem:[#allocation14 + $0x38] sm:$0xff]
    %v3229 = vld [vmem:[#allocation14 + $0x40] sm:$0xff]
    %v3230 = vld [vmem:[#allocation14 + $0x48] sm:$0xff]
    %v3231 = vld [vmem:[#allocation14 + $0x50] sm:$0xff]
    %v3232 = vld [vmem:[#allocation14 + $0x58] sm:$0xff]
    %v3233 = vld [vmem:[#allocation14 + $0x60] sm:$0xff]
    %v3234 = vld [vmem:[#allocation14 + $0x68] sm:$0xff]
    %v3235 = vld [vmem:[#allocation14 + $0x70] sm:$0xff]
    %v3236 = vld [vmem:[#allocation14 + $0x78] sm:$0xff]
    %v3237 = vld [vmem:[#allocation14 + $0x80] sm:$0xff]
    %v3238 = vld [vmem:[#allocation14 + $0x88] sm:$0xff]
    %v3239 = vld [vmem:[#allocation14 + $0x90] sm:$0xff]
    %v3240 = vld [vmem:[#allocation14 + $0x98] sm:$0xff]
    %v3241 = vld [vmem:[#allocation14 + $0xa0] sm:$0xff]
    %v3242 = vld [vmem:[#allocation14 + $0xa8] sm:$0xff]
    %v3243 = vld [vmem:[#allocation14 + $0xb0] sm:$0xff]
    %v3244 = vld [vmem:[#allocation14 + $0xb8] sm:$0xff]
    %v3245 = vld [vmem:[#allocation14 + $0xc0] sm:$0xff]
    %v3246 = vld [vmem:[#allocation14 + $0xc8] sm:$0xff]
    %v3247 = vld [vmem:[#allocation14 + $0xd0] sm:$0xff]
    %v3248 = vld [vmem:[#allocation14 + $0xd8] sm:$0xff]
    %v3249 = vld [vmem:[#allocation14 + $0xe0] sm:$0xff]
    %v3250 = vld [vmem:[#allocation14 + $0xe8] sm:$0xff]
    %v3251 = vld [vmem:[#allocation14 + $0xf0] sm:$0xff]
    %v3252 = vld [vmem:[#allocation14 + $0xf8] sm:$0xff]
    %v3253 = vld [vmem:[#allocation16] sm:$0xf]
    %v3255 = vperm.slane %v3253, 0
    %v3256 = vperm.slane %v3253, 1
    %v3257 = vperm.slane %v3253, 2
    %v3258 = vperm.slane %v3253, 3
    %v3295 = vunpack.c.l.b16 %v3221
    %v3296 = vunpack.c.h.b16 %v3221
    %v3297 = vunpack.c.l.b16 %v3222
    %v3298 = vunpack.c.h.b16 %v3222
    %v3299 = vunpack.c.l.b16 %v3223
    %v3300 = vunpack.c.h.b16 %v3223
    %v3301 = vunpack.c.l.b16 %v3224
    %v3302 = vunpack.c.h.b16 %v3224
    %v3303 = vunpack.c.l.b16 %v3225
    %v3304 = vunpack.c.h.b16 %v3225
    %v3305 = vunpack.c.l.b16 %v3226
    %v3306 = vunpack.c.h.b16 %v3226
    %v3307 = vunpack.c.l.b16 %v3227
    %v3308 = vunpack.c.h.b16 %v3227
    %v3309 = vunpack.c.l.b16 %v3228
    %v3310 = vunpack.c.h.b16 %v3228
    %v3311 = vunpack.c.l.b16 %v3229
    %v3312 = vunpack.c.h.b16 %v3229
    %v3313 = vunpack.c.l.b16 %v3230
    %v3314 = vunpack.c.h.b16 %v3230
    %v3315 = vunpack.c.l.b16 %v3231
    %v3316 = vunpack.c.h.b16 %v3231
    %v3317 = vunpack.c.l.b16 %v3232
    %v3318 = vunpack.c.h.b16 %v3232
    %v3319 = vunpack.c.l.b16 %v3233
    %v3320 = vunpack.c.h.b16 %v3233
    %v3321 = vunpack.c.l.b16 %v3234
    %v3322 = vunpack.c.h.b16 %v3234
    %v3323 = vunpack.c.l.b16 %v3235
    %v3324 = vunpack.c.h.b16 %v3235
    %v3325 = vunpack.c.l.b16 %v3236
    %v3326 = vunpack.c.h.b16 %v3236
    %v3327 = vunpack.c.l.b16 %v3237
    %v3328 = vunpack.c.h.b16 %v3237
    %v3329 = vunpack.c.l.b16 %v3238
    %v3330 = vunpack.c.h.b16 %v3238
    %v3331 = vunpack.c.l.b16 %v3239
    %v3332 = vunpack.c.h.b16 %v3239
    %v3333 = vunpack.c.l.b16 %v3240
    %v3334 = vunpack.c.h.b16 %v3240
    %v3335 = vunpack.c.l.b16 %v3241
    %v3336 = vunpack.c.h.b16 %v3241
    %v3337 = vunpack.c.l.b16 %v3242
    %v3338 = vunpack.c.h.b16 %v3242
    %v3339 = vunpack.c.l.b16 %v3243
    %v3340 = vunpack.c.h.b16 %v3243
    %v3341 = vunpack.c.l.b16 %v3244
    %v3342 = vunpack.c.h.b16 %v3244
    %v3343 = vunpack.c.l.b16 %v3245
    %v3344 = vunpack.c.h.b16 %v3245
    %v3345 = vunpack.c.l.b16 %v3246
    %v3346 = vunpack.c.h.b16 %v3246
    %v3347 = vunpack.c.l.b16 %v3247
    %v3348 = vunpack.c.h.b16 %v3247
    %v3349 = vunpack.c.l.b16 %v3248
    %v3350 = vunpack.c.h.b16 %v3248
    %v3351 = vunpack.c.l.b16 %v3249
    %v3352 = vunpack.c.h.b16 %v3249
    %v3353 = vunpack.c.l.b16 %v3250
    %v3354 = vunpack.c.h.b16 %v3250
    %v3355 = vunpack.c.l.b16 %v3251
    %v3356 = vunpack.c.h.b16 %v3251
    %v3357 = vunpack.c.l.b16 %v3252
    %v3358 = vunpack.c.h.b16 %v3252
    %v3359 = vpack.c.b16 %v3299, %v3295
    %v3360 = vpack.c.b16 %v3300, %v3296
    %v3361 = vpack.c.b16 %v3301, %v3297
    %v3362 = vpack.c.b16 %v3302, %v3298
    %v3363 = vpack.c.b16 %v3307, %v3303
    %v3364 = vpack.c.b16 %v3308, %v3304
    %v3365 = vpack.c.b16 %v3309, %v3305
    %v3366 = vpack.c.b16 %v3310, %v3306
    %v3367 = vpack.c.b16 %v3315, %v3311
    %v3368 = vpack.c.b16 %v3316, %v3312
    %v3369 = vpack.c.b16 %v3317, %v3313
    %v3370 = vpack.c.b16 %v3318, %v3314
    %v3371 = vpack.c.b16 %v3323, %v3319
    %v3372 = vpack.c.b16 %v3324, %v3320
    %v3373 = vpack.c.b16 %v3325, %v3321
    %v3374 = vpack.c.b16 %v3326, %v3322
    %v3375 = vpack.c.b16 %v3331, %v3327
    %v3376 = vpack.c.b16 %v3332, %v3328
    %v3377 = vpack.c.b16 %v3333, %v3329
    %v3378 = vpack.c.b16 %v3334, %v3330
    %v3379 = vpack.c.b16 %v3339, %v3335
    %v3380 = vpack.c.b16 %v3340, %v3336
    %v3381 = vpack.c.b16 %v3341, %v3337
    %v3382 = vpack.c.b16 %v3342, %v3338
    %v3383 = vpack.c.b16 %v3347, %v3343
    %v3384 = vpack.c.b16 %v3348, %v3344
    %v3385 = vpack.c.b16 %v3349, %v3345
    %v3386 = vpack.c.b16 %v3350, %v3346
    %v3387 = vpack.c.b16 %v3355, %v3351
    %v3388 = vpack.c.b16 %v3356, %v3352
    %v3389 = vpack.c.b16 %v3357, %v3353
    %v3390 = vpack.c.b16 %v3358, %v3354
    %3423 = vmatpush.bf16.msra.mxu0 %v3387
    %3424 = vmatpush.bf16.msra.mxu0 %v3383
    %3425 = vmatpush.bf16.msra.mxu0 %v3379
    %3426 = vmatpush.bf16.msra.mxu0 %v3375
    %3427 = vmatpush.bf16.msra.mxu0 %v3371
    %3428 = vmatpush.bf16.msra.mxu0 %v3367
    %3429 = vmatpush.bf16.msra.mxu0 %v3363
    %3430 = vmatpush.bf16.msra.mxu0 %v3359
    %3431 = vmatmul.bf16.gmra.mxu0 %v3220
    %v3432 = vpop.f32.mrf.mxu0
    %v3433 = vadd.f32 %v3255, %v3432
    %v3434 = vpop.f32.mrf.mxu0
    %3435 = vdwg.mxu0
    %3436 = vmatpush.bf16.msra.mxu0 %v3388
    %3437 = vmatpush.bf16.msra.mxu0 %v3384
    %3438 = vmatpush.bf16.msra.mxu0 %v3380
    %3439 = vmatpush.bf16.msra.mxu0 %v3376
    %3440 = vmatpush.bf16.msra.mxu0 %v3372
    %3441 = vmatpush.bf16.msra.mxu0 %v3368
    %3442 = vmatpush.bf16.msra.mxu0 %v3364
    %3443 = vmatpush.bf16.msra.mxu0 %v3360
    %3444 = vmatmul.bf16.gmra.mxu0 %v3220
    %v3445 = vpop.f32.mrf.mxu0
    %v3446 = vadd.f32 %v3256, %v3445
    %v3447 = vpop.f32.mrf.mxu0
    %3448 = vdwg.mxu0
    %3449 = vmatpush.bf16.msra.mxu0 %v3389
    %3450 = vmatpush.bf16.msra.mxu0 %v3385
    %3451 = vmatpush.bf16.msra.mxu0 %v3381
    %3452 = vmatpush.bf16.msra.mxu0 %v3377
    %3453 = vmatpush.bf16.msra.mxu0 %v3373
    %3454 = vmatpush.bf16.msra.mxu0 %v3369
    %3455 = vmatpush.bf16.msra.mxu0 %v3365
    %3456 = vmatpush.bf16.msra.mxu0 %v3361
    %3457 = vmatmul.bf16.gmra.mxu0 %v3220
    %v3458 = vpop.f32.mrf.mxu0
    %v3459 = vadd.f32 %v3257, %v3458
    %v3460 = vpop.f32.mrf.mxu0
    %3461 = vdwg.mxu0
    %3462 = vmatpush.bf16.msra.mxu0 %v3390
    %3463 = vmatpush.bf16.msra.mxu0 %v3386
    %3464 = vmatpush.bf16.msra.mxu0 %v3382
    %3465 = vmatpush.bf16.msra.mxu0 %v3378
    %3466 = vmatpush.bf16.msra.mxu0 %v3374
    %3467 = vmatpush.bf16.msra.mxu0 %v3370
    %3468 = vmatpush.bf16.msra.mxu0 %v3366
    %3469 = vmatpush.bf16.msra.mxu0 %v3362
    %3470 = vmatmul.bf16.gmra.mxu0 %v3220
    %v3471 = vpop.f32.mrf.mxu0
    %v3472 = vadd.f32 %v3258, %v3471
    %v3473 = vpop.f32.mrf.mxu0
    %3474 = vdwg.mxu0
    %v3475 = vmax.f32 %v3433, 0.0
    %v3476 = vmax.f32 %v3446, 0.0
    %v3477 = vmax.f32 %v3459, 0.0
    %v3478 = vmax.f32 %v3472, 0.0
    %v3479 = vpack.c.bf16 %v3475, %v3475
    %v3480 = vpack.c.bf16 %v3476, %v3476
    %v3481 = vpack.c.bf16 %v3477, %v3477
    %v3482 = vpack.c.bf16 %v3478, %v3478
    %v3483 = vld [vmem:[#allocation17] sm:$0xff]
    %v3484 = vld [vmem:[#allocation17 + $0x8] sm:$0xff]
    %v3485 = vld [vmem:[#allocation17 + $0x10] sm:$0xff]
    %v3486 = vld [vmem:[#allocation17 + $0x18] sm:$0xff]
    %v3487 = vld [vmem:[#allocation17 + $0x20] sm:$0xff]
    %v3488 = vld [vmem:[#allocation17 + $0x28] sm:$0xff]
    %v3489 = vld [vmem:[#allocation17 + $0x30] sm:$0xff]
    %v3490 = vld [vmem:[#allocation17 + $0x38] sm:$0xff]
    %v3491 = vld [vmem:[#allocation17 + $0x40] sm:$0xff]
    %v3492 = vld [vmem:[#allocation17 + $0x48] sm:$0xff]
    %v3493 = vld [vmem:[#allocation17 + $0x50] sm:$0xff]
    %v3494 = vld [vmem:[#allocation17 + $0x58] sm:$0xff]
    %v3495 = vld [vmem:[#allocation17 + $0x60] sm:$0xff]
    %v3496 = vld [vmem:[#allocation17 + $0x68] sm:$0xff]
    %v3497 = vld [vmem:[#allocation17 + $0x70] sm:$0xff]
    %v3498 = vld [vmem:[#allocation17 + $0x78] sm:$0xff]
    %v3499 = vld [vmem:[#allocation17 + $0x80] sm:$0xff]
    %v3500 = vld [vmem:[#allocation17 + $0x88] sm:$0xff]
    %v3501 = vld [vmem:[#allocation17 + $0x90] sm:$0xff]
    %v3502 = vld [vmem:[#allocation17 + $0x98] sm:$0xff]
    %v3503 = vld [vmem:[#allocation17 + $0xa0] sm:$0xff]
    %v3504 = vld [vmem:[#allocation17 + $0xa8] sm:$0xff]
    %v3505 = vld [vmem:[#allocation17 + $0xb0] sm:$0xff]
    %v3506 = vld [vmem:[#allocation17 + $0xb8] sm:$0xff]
    %v3507 = vld [vmem:[#allocation17 + $0xc0] sm:$0xff]
    %v3508 = vld [vmem:[#allocation17 + $0xc8] sm:$0xff]
    %v3509 = vld [vmem:[#allocation17 + $0xd0] sm:$0xff]
    %v3510 = vld [vmem:[#allocation17 + $0xd8] sm:$0xff]
    %v3511 = vld [vmem:[#allocation17 + $0xe0] sm:$0xff]
    %v3512 = vld [vmem:[#allocation17 + $0xe8] sm:$0xff]
    %v3513 = vld [vmem:[#allocation17 + $0xf0] sm:$0xff]
    %v3514 = vld [vmem:[#allocation17 + $0xf8] sm:$0xff]
    %v3515 = vld [vmem:[#allocation17 + $0x100] sm:$0xff]
    %v3516 = vld [vmem:[#allocation17 + $0x108] sm:$0xff]
    %v3517 = vld [vmem:[#allocation17 + $0x110] sm:$0xff]
    %v3518 = vld [vmem:[#allocation17 + $0x118] sm:$0xff]
    %v3519 = vld [vmem:[#allocation17 + $0x120] sm:$0xff]
    %v3520 = vld [vmem:[#allocation17 + $0x128] sm:$0xff]
    %v3521 = vld [vmem:[#allocation17 + $0x130] sm:$0xff]
    %v3522 = vld [vmem:[#allocation17 + $0x138] sm:$0xff]
    %v3523 = vld [vmem:[#allocation17 + $0x140] sm:$0xff]
    %v3524 = vld [vmem:[#allocation17 + $0x148] sm:$0xff]
    %v3525 = vld [vmem:[#allocation17 + $0x150] sm:$0xff]
    %v3526 = vld [vmem:[#allocation17 + $0x158] sm:$0xff]
    %v3527 = vld [vmem:[#allocation17 + $0x160] sm:$0xff]
    %v3528 = vld [vmem:[#allocation17 + $0x168] sm:$0xff]
    %v3529 = vld [vmem:[#allocation17 + $0x170] sm:$0xff]
    %v3530 = vld [vmem:[#allocation17 + $0x178] sm:$0xff]
    %v3531 = vld [vmem:[#allocation17 + $0x180] sm:$0xff]
    %v3532 = vld [vmem:[#allocation17 + $0x188] sm:$0xff]
    %v3533 = vld [vmem:[#allocation17 + $0x190] sm:$0xff]
    %v3534 = vld [vmem:[#allocation17 + $0x198] sm:$0xff]
    %v3535 = vld [vmem:[#allocation17 + $0x1a0] sm:$0xff]
    %v3536 = vld [vmem:[#allocation17 + $0x1a8] sm:$0xff]
    %v3537 = vld [vmem:[#allocation17 + $0x1b0] sm:$0xff]
    %v3538 = vld [vmem:[#allocation17 + $0x1b8] sm:$0xff]
    %v3539 = vld [vmem:[#allocation17 + $0x1c0] sm:$0xff]
    %v3540 = vld [vmem:[#allocation17 + $0x1c8] sm:$0xff]
    %v3541 = vld [vmem:[#allocation17 + $0x1d0] sm:$0xff]
    %v3542 = vld [vmem:[#allocation17 + $0x1d8] sm:$0xff]
    %v3543 = vld [vmem:[#allocation17 + $0x1e0] sm:$0xff]
    %v3544 = vld [vmem:[#allocation17 + $0x1e8] sm:$0xff]
    %v3545 = vld [vmem:[#allocation17 + $0x1f0] sm:$0xff]
    %v3546 = vld [vmem:[#allocation17 + $0x1f8] sm:$0xff]
    %v3547 = vld [vmem:[#allocation17 + $0x200] sm:$0xff]
    %v3548 = vld [vmem:[#allocation17 + $0x208] sm:$0xff]
    %v3549 = vld [vmem:[#allocation17 + $0x210] sm:$0xff]
    %v3550 = vld [vmem:[#allocation17 + $0x218] sm:$0xff]
    %v3551 = vld [vmem:[#allocation17 + $0x220] sm:$0xff]
    %v3552 = vld [vmem:[#allocation17 + $0x228] sm:$0xff]
    %v3553 = vld [vmem:[#allocation17 + $0x230] sm:$0xff]
    %v3554 = vld [vmem:[#allocation17 + $0x238] sm:$0xff]
    %v3555 = vld [vmem:[#allocation17 + $0x240] sm:$0xff]
    %v3556 = vld [vmem:[#allocation17 + $0x248] sm:$0xff]
    %v3557 = vld [vmem:[#allocation17 + $0x250] sm:$0xff]
    %v3558 = vld [vmem:[#allocation17 + $0x258] sm:$0xff]
    %v3559 = vld [vmem:[#allocation17 + $0x260] sm:$0xff]
    %v3560 = vld [vmem:[#allocation17 + $0x268] sm:$0xff]
    %v3561 = vld [vmem:[#allocation17 + $0x270] sm:$0xff]
    %v3562 = vld [vmem:[#allocation17 + $0x278] sm:$0xff]
    %v3563 = vld [vmem:[#allocation17 + $0x280] sm:$0xff]
    %v3564 = vld [vmem:[#allocation17 + $0x288] sm:$0xff]
    %v3565 = vld [vmem:[#allocation17 + $0x290] sm:$0xff]
    %v3566 = vld [vmem:[#allocation17 + $0x298] sm:$0xff]
    %v3567 = vld [vmem:[#allocation17 + $0x2a0] sm:$0xff]
    %v3568 = vld [vmem:[#allocation17 + $0x2a8] sm:$0xff]
    %v3569 = vld [vmem:[#allocation17 + $0x2b0] sm:$0xff]
    %v3570 = vld [vmem:[#allocation17 + $0x2b8] sm:$0xff]
    %v3571 = vld [vmem:[#allocation17 + $0x2c0] sm:$0xff]
    %v3572 = vld [vmem:[#allocation17 + $0x2c8] sm:$0xff]
    %v3573 = vld [vmem:[#allocation17 + $0x2d0] sm:$0xff]
    %v3574 = vld [vmem:[#allocation17 + $0x2d8] sm:$0xff]
    %v3575 = vld [vmem:[#allocation17 + $0x2e0] sm:$0xff]
    %v3576 = vld [vmem:[#allocation17 + $0x2e8] sm:$0xff]
    %v3577 = vld [vmem:[#allocation17 + $0x2f0] sm:$0xff]
    %v3578 = vld [vmem:[#allocation17 + $0x2f8] sm:$0xff]
    %v3579 = vld [vmem:[#allocation17 + $0x300] sm:$0xff]
    %v3580 = vld [vmem:[#allocation17 + $0x308] sm:$0xff]
    %v3581 = vld [vmem:[#allocation17 + $0x310] sm:$0xff]
    %v3582 = vld [vmem:[#allocation17 + $0x318] sm:$0xff]
    %v3583 = vld [vmem:[#allocation17 + $0x320] sm:$0xff]
    %v3584 = vld [vmem:[#allocation17 + $0x328] sm:$0xff]
    %v3585 = vld [vmem:[#allocation17 + $0x330] sm:$0xff]
    %v3586 = vld [vmem:[#allocation17 + $0x338] sm:$0xff]
    %v3587 = vld [vmem:[#allocation17 + $0x340] sm:$0xff]
    %v3588 = vld [vmem:[#allocation17 + $0x348] sm:$0xff]
    %v3589 = vld [vmem:[#allocation17 + $0x350] sm:$0xff]
    %v3590 = vld [vmem:[#allocation17 + $0x358] sm:$0xff]
    %v3591 = vld [vmem:[#allocation17 + $0x360] sm:$0xff]
    %v3592 = vld [vmem:[#allocation17 + $0x368] sm:$0xff]
    %v3593 = vld [vmem:[#allocation17 + $0x370] sm:$0xff]
    %v3594 = vld [vmem:[#allocation17 + $0x378] sm:$0xff]
    %v3595 = vld [vmem:[#allocation17 + $0x380] sm:$0xff]
    %v3596 = vld [vmem:[#allocation17 + $0x388] sm:$0xff]
    %v3597 = vld [vmem:[#allocation17 + $0x390] sm:$0xff]
    %v3598 = vld [vmem:[#allocation17 + $0x398] sm:$0xff]
    %v3599 = vld [vmem:[#allocation17 + $0x3a0] sm:$0xff]
    %v3600 = vld [vmem:[#allocation17 + $0x3a8] sm:$0xff]
    %v3601 = vld [vmem:[#allocation17 + $0x3b0] sm:$0xff]
    %v3602 = vld [vmem:[#allocation17 + $0x3b8] sm:$0xff]
    %v3603 = vld [vmem:[#allocation17 + $0x3c0] sm:$0xff]
    %v3604 = vld [vmem:[#allocation17 + $0x3c8] sm:$0xff]
    %v3605 = vld [vmem:[#allocation17 + $0x3d0] sm:$0xff]
    %v3606 = vld [vmem:[#allocation17 + $0x3d8] sm:$0xff]
    %v3607 = vld [vmem:[#allocation17 + $0x3e0] sm:$0xff]
    %v3608 = vld [vmem:[#allocation17 + $0x3e8] sm:$0xff]
    %v3609 = vld [vmem:[#allocation17 + $0x3f0] sm:$0xff]
    %v3610 = vld [vmem:[#allocation17 + $0x3f8] sm:$0xff]
    %v3611 = vld [vmem:[#allocation19] sm:$0xf]
    %v3613 = vperm.slane %v3611, 0
    %v3614 = vperm.slane %v3611, 1
    %v3615 = vperm.slane %v3611, 2
    %v3616 = vperm.slane %v3611, 3
    %v3749 = vunpack.c.l.b16 %v3483
    %v3750 = vunpack.c.h.b16 %v3483
    %v3751 = vunpack.c.l.b16 %v3484
    %v3752 = vunpack.c.h.b16 %v3484
    %v3753 = vunpack.c.l.b16 %v3485
    %v3754 = vunpack.c.h.b16 %v3485
    %v3755 = vunpack.c.l.b16 %v3486
    %v3756 = vunpack.c.h.b16 %v3486
    %v3757 = vunpack.c.l.b16 %v3487
    %v3758 = vunpack.c.h.b16 %v3487
    %v3759 = vunpack.c.l.b16 %v3488
    %v3760 = vunpack.c.h.b16 %v3488
    %v3761 = vunpack.c.l.b16 %v3489
    %v3762 = vunpack.c.h.b16 %v3489
    %v3763 = vunpack.c.l.b16 %v3490
    %v3764 = vunpack.c.h.b16 %v3490
    %v3765 = vunpack.c.l.b16 %v3491
    %v3766 = vunpack.c.h.b16 %v3491
    %v3767 = vunpack.c.l.b16 %v3492
    %v3768 = vunpack.c.h.b16 %v3492
    %v3769 = vunpack.c.l.b16 %v3493
    %v3770 = vunpack.c.h.b16 %v3493
    %v3771 = vunpack.c.l.b16 %v3494
    %v3772 = vunpack.c.h.b16 %v3494
    %v3773 = vunpack.c.l.b16 %v3495
    %v3774 = vunpack.c.h.b16 %v3495
    %v3775 = vunpack.c.l.b16 %v3496
    %v3776 = vunpack.c.h.b16 %v3496
    %v3777 = vunpack.c.l.b16 %v3497
    %v3778 = vunpack.c.h.b16 %v3497
    %v3779 = vunpack.c.l.b16 %v3498
    %v3780 = vunpack.c.h.b16 %v3498
    %v3781 = vunpack.c.l.b16 %v3499
    %v3782 = vunpack.c.h.b16 %v3499
    %v3783 = vunpack.c.l.b16 %v3500
    %v3784 = vunpack.c.h.b16 %v3500
    %v3785 = vunpack.c.l.b16 %v3501
    %v3786 = vunpack.c.h.b16 %v3501
    %v3787 = vunpack.c.l.b16 %v3502
    %v3788 = vunpack.c.h.b16 %v3502
    %v3789 = vunpack.c.l.b16 %v3503
    %v3790 = vunpack.c.h.b16 %v3503
    %v3791 = vunpack.c.l.b16 %v3504
    %v3792 = vunpack.c.h.b16 %v3504
    %v3793 = vunpack.c.l.b16 %v3505
    %v3794 = vunpack.c.h.b16 %v3505
    %v3795 = vunpack.c.l.b16 %v3506
    %v3796 = vunpack.c.h.b16 %v3506
    %v3797 = vunpack.c.l.b16 %v3507
    %v3798 = vunpack.c.h.b16 %v3507
    %v3799 = vunpack.c.l.b16 %v3508
    %v3800 = vunpack.c.h.b16 %v3508
    %v3801 = vunpack.c.l.b16 %v3509
    %v3802 = vunpack.c.h.b16 %v3509
    %v3803 = vunpack.c.l.b16 %v3510
    %v3804 = vunpack.c.h.b16 %v3510
    %v3805 = vunpack.c.l.b16 %v3511
    %v3806 = vunpack.c.h.b16 %v3511
    %v3807 = vunpack.c.l.b16 %v3512
    %v3808 = vunpack.c.h.b16 %v3512
    %v3809 = vunpack.c.l.b16 %v3513
    %v3810 = vunpack.c.h.b16 %v3513
    %v3811 = vunpack.c.l.b16 %v3514
    %v3812 = vunpack.c.h.b16 %v3514
    %v3813 = vunpack.c.l.b16 %v3515
    %v3814 = vunpack.c.h.b16 %v3515
    %v3815 = vunpack.c.l.b16 %v3516
    %v3816 = vunpack.c.h.b16 %v3516
    %v3817 = vunpack.c.l.b16 %v3517
    %v3818 = vunpack.c.h.b16 %v3517
    %v3819 = vunpack.c.l.b16 %v3518
    %v3820 = vunpack.c.h.b16 %v3518
    %v3821 = vunpack.c.l.b16 %v3519
    %v3822 = vunpack.c.h.b16 %v3519
    %v3823 = vunpack.c.l.b16 %v3520
    %v3824 = vunpack.c.h.b16 %v3520
    %v3825 = vunpack.c.l.b16 %v3521
    %v3826 = vunpack.c.h.b16 %v3521
    %v3827 = vunpack.c.l.b16 %v3522
    %v3828 = vunpack.c.h.b16 %v3522
    %v3829 = vunpack.c.l.b16 %v3523
    %v3830 = vunpack.c.h.b16 %v3523
    %v3831 = vunpack.c.l.b16 %v3524
    %v3832 = vunpack.c.h.b16 %v3524
    %v3833 = vunpack.c.l.b16 %v3525
    %v3834 = vunpack.c.h.b16 %v3525
    %v3835 = vunpack.c.l.b16 %v3526
    %v3836 = vunpack.c.h.b16 %v3526
    %v3837 = vunpack.c.l.b16 %v3527
    %v3838 = vunpack.c.h.b16 %v3527
    %v3839 = vunpack.c.l.b16 %v3528
    %v3840 = vunpack.c.h.b16 %v3528
    %v3841 = vunpack.c.l.b16 %v3529
    %v3842 = vunpack.c.h.b16 %v3529
    %v3843 = vunpack.c.l.b16 %v3530
    %v3844 = vunpack.c.h.b16 %v3530
    %v3845 = vunpack.c.l.b16 %v3531
    %v3846 = vunpack.c.h.b16 %v3531
    %v3847 = vunpack.c.l.b16 %v3532
    %v3848 = vunpack.c.h.b16 %v3532
    %v3849 = vunpack.c.l.b16 %v3533
    %v3850 = vunpack.c.h.b16 %v3533
    %v3851 = vunpack.c.l.b16 %v3534
    %v3852 = vunpack.c.h.b16 %v3534
    %v3853 = vunpack.c.l.b16 %v3535
    %v3854 = vunpack.c.h.b16 %v3535
    %v3855 = vunpack.c.l.b16 %v3536
    %v3856 = vunpack.c.h.b16 %v3536
    %v3857 = vunpack.c.l.b16 %v3537
    %v3858 = vunpack.c.h.b16 %v3537
    %v3859 = vunpack.c.l.b16 %v3538
    %v3860 = vunpack.c.h.b16 %v3538
    %v3861 = vunpack.c.l.b16 %v3539
    %v3862 = vunpack.c.h.b16 %v3539
    %v3863 = vunpack.c.l.b16 %v3540
    %v3864 = vunpack.c.h.b16 %v3540
    %v3865 = vunpack.c.l.b16 %v3541
    %v3866 = vunpack.c.h.b16 %v3541
    %v3867 = vunpack.c.l.b16 %v3542
    %v3868 = vunpack.c.h.b16 %v3542
    %v3869 = vunpack.c.l.b16 %v3543
    %v3870 = vunpack.c.h.b16 %v3543
    %v3871 = vunpack.c.l.b16 %v3544
    %v3872 = vunpack.c.h.b16 %v3544
    %v3873 = vunpack.c.l.b16 %v3545
    %v3874 = vunpack.c.h.b16 %v3545
    %v3875 = vunpack.c.l.b16 %v3546
    %v3876 = vunpack.c.h.b16 %v3546
    %v3877 = vunpack.c.l.b16 %v3547
    %v3878 = vunpack.c.h.b16 %v3547
    %v3879 = vunpack.c.l.b16 %v3548
    %v3880 = vunpack.c.h.b16 %v3548
    %v3881 = vunpack.c.l.b16 %v3549
    %v3882 = vunpack.c.h.b16 %v3549
    %v3883 = vunpack.c.l.b16 %v3550
    %v3884 = vunpack.c.h.b16 %v3550
    %v3885 = vunpack.c.l.b16 %v3551
    %v3886 = vunpack.c.h.b16 %v3551
    %v3887 = vunpack.c.l.b16 %v3552
    %v3888 = vunpack.c.h.b16 %v3552
    %v3889 = vunpack.c.l.b16 %v3553
    %v3890 = vunpack.c.h.b16 %v3553
    %v3891 = vunpack.c.l.b16 %v3554
    %v3892 = vunpack.c.h.b16 %v3554
    %v3893 = vunpack.c.l.b16 %v3555
    %v3894 = vunpack.c.h.b16 %v3555
    %v3895 = vunpack.c.l.b16 %v3556
    %v3896 = vunpack.c.h.b16 %v3556
    %v3897 = vunpack.c.l.b16 %v3557
    %v3898 = vunpack.c.h.b16 %v3557
    %v3899 = vunpack.c.l.b16 %v3558
    %v3900 = vunpack.c.h.b16 %v3558
    %v3901 = vunpack.c.l.b16 %v3559
    %v3902 = vunpack.c.h.b16 %v3559
    %v3903 = vunpack.c.l.b16 %v3560
    %v3904 = vunpack.c.h.b16 %v3560
    %v3905 = vunpack.c.l.b16 %v3561
    %v3906 = vunpack.c.h.b16 %v3561
    %v3907 = vunpack.c.l.b16 %v3562
    %v3908 = vunpack.c.h.b16 %v3562
    %v3909 = vunpack.c.l.b16 %v3563
    %v3910 = vunpack.c.h.b16 %v3563
    %v3911 = vunpack.c.l.b16 %v3564
    %v3912 = vunpack.c.h.b16 %v3564
    %v3913 = vunpack.c.l.b16 %v3565
    %v3914 = vunpack.c.h.b16 %v3565
    %v3915 = vunpack.c.l.b16 %v3566
    %v3916 = vunpack.c.h.b16 %v3566
    %v3917 = vunpack.c.l.b16 %v3567
    %v3918 = vunpack.c.h.b16 %v3567
    %v3919 = vunpack.c.l.b16 %v3568
    %v3920 = vunpack.c.h.b16 %v3568
    %v3921 = vunpack.c.l.b16 %v3569
    %v3922 = vunpack.c.h.b16 %v3569
    %v3923 = vunpack.c.l.b16 %v3570
    %v3924 = vunpack.c.h.b16 %v3570
    %v3925 = vunpack.c.l.b16 %v3571
    %v3926 = vunpack.c.h.b16 %v3571
    %v3927 = vunpack.c.l.b16 %v3572
    %v3928 = vunpack.c.h.b16 %v3572
    %v3929 = vunpack.c.l.b16 %v3573
    %v3930 = vunpack.c.h.b16 %v3573
    %v3931 = vunpack.c.l.b16 %v3574
    %v3932 = vunpack.c.h.b16 %v3574
    %v3933 = vunpack.c.l.b16 %v3575
    %v3934 = vunpack.c.h.b16 %v3575
    %v3935 = vunpack.c.l.b16 %v3576
    %v3936 = vunpack.c.h.b16 %v3576
    %v3937 = vunpack.c.l.b16 %v3577
    %v3938 = vunpack.c.h.b16 %v3577
    %v3939 = vunpack.c.l.b16 %v3578
    %v3940 = vunpack.c.h.b16 %v3578
    %v3941 = vunpack.c.l.b16 %v3579
    %v3942 = vunpack.c.h.b16 %v3579
    %v3943 = vunpack.c.l.b16 %v3580
    %v3944 = vunpack.c.h.b16 %v3580
    %v3945 = vunpack.c.l.b16 %v3581
    %v3946 = vunpack.c.h.b16 %v3581
    %v3947 = vunpack.c.l.b16 %v3582
    %v3948 = vunpack.c.h.b16 %v3582
    %v3949 = vunpack.c.l.b16 %v3583
    %v3950 = vunpack.c.h.b16 %v3583
    %v3951 = vunpack.c.l.b16 %v3584
    %v3952 = vunpack.c.h.b16 %v3584
    %v3953 = vunpack.c.l.b16 %v3585
    %v3954 = vunpack.c.h.b16 %v3585
    %v3955 = vunpack.c.l.b16 %v3586
    %v3956 = vunpack.c.h.b16 %v3586
    %v3957 = vunpack.c.l.b16 %v3587
    %v3958 = vunpack.c.h.b16 %v3587
    %v3959 = vunpack.c.l.b16 %v3588
    %v3960 = vunpack.c.h.b16 %v3588
    %v3961 = vunpack.c.l.b16 %v3589
    %v3962 = vunpack.c.h.b16 %v3589
    %v3963 = vunpack.c.l.b16 %v3590
    %v3964 = vunpack.c.h.b16 %v3590
    %v3965 = vunpack.c.l.b16 %v3591
    %v3966 = vunpack.c.h.b16 %v3591
    %v3967 = vunpack.c.l.b16 %v3592
    %v3968 = vunpack.c.h.b16 %v3592
    %v3969 = vunpack.c.l.b16 %v3593
    %v3970 = vunpack.c.h.b16 %v3593
    %v3971 = vunpack.c.l.b16 %v3594
    %v3972 = vunpack.c.h.b16 %v3594
    %v3973 = vunpack.c.l.b16 %v3595
    %v3974 = vunpack.c.h.b16 %v3595
    %v3975 = vunpack.c.l.b16 %v3596
    %v3976 = vunpack.c.h.b16 %v3596
    %v3977 = vunpack.c.l.b16 %v3597
    %v3978 = vunpack.c.h.b16 %v3597
    %v3979 = vunpack.c.l.b16 %v3598
    %v3980 = vunpack.c.h.b16 %v3598
    %v3981 = vunpack.c.l.b16 %v3599
    %v3982 = vunpack.c.h.b16 %v3599
    %v3983 = vunpack.c.l.b16 %v3600
    %v3984 = vunpack.c.h.b16 %v3600
    %v3985 = vunpack.c.l.b16 %v3601
    %v3986 = vunpack.c.h.b16 %v3601
    %v3987 = vunpack.c.l.b16 %v3602
    %v3988 = vunpack.c.h.b16 %v3602
    %v3989 = vunpack.c.l.b16 %v3603
    %v3990 = vunpack.c.h.b16 %v3603
    %v3991 = vunpack.c.l.b16 %v3604
    %v3992 = vunpack.c.h.b16 %v3604
    %v3993 = vunpack.c.l.b16 %v3605
    %v3994 = vunpack.c.h.b16 %v3605
    %v3995 = vunpack.c.l.b16 %v3606
    %v3996 = vunpack.c.h.b16 %v3606
    %v3997 = vunpack.c.l.b16 %v3607
    %v3998 = vunpack.c.h.b16 %v3607
    %v3999 = vunpack.c.l.b16 %v3608
    %v4000 = vunpack.c.h.b16 %v3608
    %v4001 = vunpack.c.l.b16 %v3609
    %v4002 = vunpack.c.h.b16 %v3609
    %v4003 = vunpack.c.l.b16 %v3610
    %v4004 = vunpack.c.h.b16 %v3610
    %v4005 = vpack.c.b16 %v3753, %v3749
    %v4006 = vpack.c.b16 %v3754, %v3750
    %v4007 = vpack.c.b16 %v3755, %v3751
    %v4008 = vpack.c.b16 %v3756, %v3752
    %v4009 = vpack.c.b16 %v3761, %v3757
    %v4010 = vpack.c.b16 %v3762, %v3758
    %v4011 = vpack.c.b16 %v3763, %v3759
    %v4012 = vpack.c.b16 %v3764, %v3760
    %v4013 = vpack.c.b16 %v3769, %v3765
    %v4014 = vpack.c.b16 %v3770, %v3766
    %v4015 = vpack.c.b16 %v3771, %v3767
    %v4016 = vpack.c.b16 %v3772, %v3768
    %v4017 = vpack.c.b16 %v3777, %v3773
    %v4018 = vpack.c.b16 %v3778, %v3774
    %v4019 = vpack.c.b16 %v3779, %v3775
    %v4020 = vpack.c.b16 %v3780, %v3776
    %v4021 = vpack.c.b16 %v3785, %v3781
    %v4022 = vpack.c.b16 %v3786, %v3782
    %v4023 = vpack.c.b16 %v3787, %v3783
    %v4024 = vpack.c.b16 %v3788, %v3784
    %v4025 = vpack.c.b16 %v3793, %v3789
    %v4026 = vpack.c.b16 %v3794, %v3790
    %v4027 = vpack.c.b16 %v3795, %v3791
    %v4028 = vpack.c.b16 %v3796, %v3792
    %v4029 = vpack.c.b16 %v3801, %v3797
    %v4030 = vpack.c.b16 %v3802, %v3798
    %v4031 = vpack.c.b16 %v3803, %v3799
    %v4032 = vpack.c.b16 %v3804, %v3800
    %v4033 = vpack.c.b16 %v3809, %v3805
    %v4034 = vpack.c.b16 %v3810, %v3806
    %v4035 = vpack.c.b16 %v3811, %v3807
    %v4036 = vpack.c.b16 %v3812, %v3808
    %v4037 = vpack.c.b16 %v3817, %v3813
    %v4038 = vpack.c.b16 %v3818, %v3814
    %v4039 = vpack.c.b16 %v3819, %v3815
    %v4040 = vpack.c.b16 %v3820, %v3816
    %v4041 = vpack.c.b16 %v3825, %v3821
    %v4042 = vpack.c.b16 %v3826, %v3822
    %v4043 = vpack.c.b16 %v3827, %v3823
    %v4044 = vpack.c.b16 %v3828, %v3824
    %v4045 = vpack.c.b16 %v3833, %v3829
    %v4046 = vpack.c.b16 %v3834, %v3830
    %v4047 = vpack.c.b16 %v3835, %v3831
    %v4048 = vpack.c.b16 %v3836, %v3832
    %v4049 = vpack.c.b16 %v3841, %v3837
    %v4050 = vpack.c.b16 %v3842, %v3838
    %v4051 = vpack.c.b16 %v3843, %v3839
    %v4052 = vpack.c.b16 %v3844, %v3840
    %v4053 = vpack.c.b16 %v3849, %v3845
    %v4054 = vpack.c.b16 %v3850, %v3846
    %v4055 = vpack.c.b16 %v3851, %v3847
    %v4056 = vpack.c.b16 %v3852, %v3848
    %v4057 = vpack.c.b16 %v3857, %v3853
    %v4058 = vpack.c.b16 %v3858, %v3854
    %v4059 = vpack.c.b16 %v3859, %v3855
    %v4060 = vpack.c.b16 %v3860, %v3856
    %v4061 = vpack.c.b16 %v3865, %v3861
    %v4062 = vpack.c.b16 %v3866, %v3862
    %v4063 = vpack.c.b16 %v3867, %v3863
    %v4064 = vpack.c.b16 %v3868, %v3864
    %v4065 = vpack.c.b16 %v3873, %v3869
    %v4066 = vpack.c.b16 %v3874, %v3870
    %v4067 = vpack.c.b16 %v3875, %v3871
    %v4068 = vpack.c.b16 %v3876, %v3872
    %v4069 = vpack.c.b16 %v3881, %v3877
    %v4070 = vpack.c.b16 %v3882, %v3878
    %v4071 = vpack.c.b16 %v3883, %v3879
    %v4072 = vpack.c.b16 %v3884, %v3880
    %v4073 = vpack.c.b16 %v3889, %v3885
    %v4074 = vpack.c.b16 %v3890, %v3886
    %v4075 = vpack.c.b16 %v3891, %v3887
    %v4076 = vpack.c.b16 %v3892, %v3888
    %v4077 = vpack.c.b16 %v3897, %v3893
    %v4078 = vpack.c.b16 %v3898, %v3894
    %v4079 = vpack.c.b16 %v3899, %v3895
    %v4080 = vpack.c.b16 %v3900, %v3896
    %v4081 = vpack.c.b16 %v3905, %v3901
    %v4082 = vpack.c.b16 %v3906, %v3902
    %v4083 = vpack.c.b16 %v3907, %v3903
    %v4084 = vpack.c.b16 %v3908, %v3904
    %v4085 = vpack.c.b16 %v3913, %v3909
    %v4086 = vpack.c.b16 %v3914, %v3910
    %v4087 = vpack.c.b16 %v3915, %v3911
    %v4088 = vpack.c.b16 %v3916, %v3912
    %v4089 = vpack.c.b16 %v3921, %v3917
    %v4090 = vpack.c.b16 %v3922, %v3918
    %v4091 = vpack.c.b16 %v3923, %v3919
    %v4092 = vpack.c.b16 %v3924, %v3920
    %v4093 = vpack.c.b16 %v3929, %v3925
    %v4094 = vpack.c.b16 %v3930, %v3926
    %v4095 = vpack.c.b16 %v3931, %v3927
    %v4096 = vpack.c.b16 %v3932, %v3928
    %v4097 = vpack.c.b16 %v3937, %v3933
    %v4098 = vpack.c.b16 %v3938, %v3934
    %v4099 = vpack.c.b16 %v3939, %v3935
    %v4100 = vpack.c.b16 %v3940, %v3936
    %v4101 = vpack.c.b16 %v3945, %v3941
    %v4102 = vpack.c.b16 %v3946, %v3942
    %v4103 = vpack.c.b16 %v3947, %v3943
    %v4104 = vpack.c.b16 %v3948, %v3944
    %v4105 = vpack.c.b16 %v3953, %v3949
    %v4106 = vpack.c.b16 %v3954, %v3950
    %v4107 = vpack.c.b16 %v3955, %v3951
    %v4108 = vpack.c.b16 %v3956, %v3952
    %v4109 = vpack.c.b16 %v3961, %v3957
    %v4110 = vpack.c.b16 %v3962, %v3958
    %v4111 = vpack.c.b16 %v3963, %v3959
    %v4112 = vpack.c.b16 %v3964, %v3960
    %v4113 = vpack.c.b16 %v3969, %v3965
    %v4114 = vpack.c.b16 %v3970, %v3966
    %v4115 = vpack.c.b16 %v3971, %v3967
    %v4116 = vpack.c.b16 %v3972, %v3968
    %v4117 = vpack.c.b16 %v3977, %v3973
    %v4118 = vpack.c.b16 %v3978, %v3974
    %v4119 = vpack.c.b16 %v3979, %v3975
    %v4120 = vpack.c.b16 %v3980, %v3976
    %v4121 = vpack.c.b16 %v3985, %v3981
    %v4122 = vpack.c.b16 %v3986, %v3982
    %v4123 = vpack.c.b16 %v3987, %v3983
    %v4124 = vpack.c.b16 %v3988, %v3984
    %v4125 = vpack.c.b16 %v3993, %v3989
    %v4126 = vpack.c.b16 %v3994, %v3990
    %v4127 = vpack.c.b16 %v3995, %v3991
    %v4128 = vpack.c.b16 %v3996, %v3992
    %v4129 = vpack.c.b16 %v4001, %v3997
    %v4130 = vpack.c.b16 %v4002, %v3998
    %v4131 = vpack.c.b16 %v4003, %v3999
    %v4132 = vpack.c.b16 %v4004, %v4000
    %4261 = vmatpush.bf16.msra.mxu0 %v4033
    %4262 = vmatpush.bf16.msra.mxu0 %v4029
    %4263 = vmatpush.bf16.msra.mxu0 %v4025
    %4264 = vmatpush.bf16.msra.mxu0 %v4021
    %4265 = vmatpush.bf16.msra.mxu0 %v4017
    %4266 = vmatpush.bf16.msra.mxu0 %v4013
    %4267 = vmatpush.bf16.msra.mxu0 %v4009
    %4268 = vmatpush.bf16.msra.mxu0 %v4005
    %4269 = vmatmul.bf16.gmra.mxu0 %v3479
    %v4270 = vpop.f32.mrf.mxu0
    %v4271 = vadd.f32 %v3613, %v4270
    %v4272 = vpop.f32.mrf.mxu0
    %4273 = vdwg.mxu0
    %4274 = vmatpush.bf16.msra.mxu0 %v4065
    %4275 = vmatpush.bf16.msra.mxu0 %v4061
    %4276 = vmatpush.bf16.msra.mxu0 %v4057
    %4277 = vmatpush.bf16.msra.mxu0 %v4053
    %4278 = vmatpush.bf16.msra.mxu0 %v4049
    %4279 = vmatpush.bf16.msra.mxu0 %v4045
    %4280 = vmatpush.bf16.msra.mxu0 %v4041
    %4281 = vmatpush.bf16.msra.mxu0 %v4037
    %4282 = vmatmul.bf16.gmra.mxu0 %v3480
    %v4283 = vpop.f32.mrf.mxu0
    %v4284 = vadd.f32 %v4271, %v4283
    %v4285 = vpop.f32.mrf.mxu0
    %4286 = vdwg.mxu0
    %4287 = vmatpush.bf16.msra.mxu0 %v4097
    %4288 = vmatpush.bf16.msra.mxu0 %v4093
    %4289 = vmatpush.bf16.msra.mxu0 %v4089
    %4290 = vmatpush.bf16.msra.mxu0 %v4085
    %4291 = vmatpush.bf16.msra.mxu0 %v4081
    %4292 = vmatpush.bf16.msra.mxu0 %v4077
    %4293 = vmatpush.bf16.msra.mxu0 %v4073
    %4294 = vmatpush.bf16.msra.mxu0 %v4069
    %4295 = vmatmul.bf16.gmra.mxu0 %v3481
    %v4296 = vpop.f32.mrf.mxu0
    %v4297 = vadd.f32 %v4284, %v4296
    %v4298 = vpop.f32.mrf.mxu0
    %4299 = vdwg.mxu0
    %4300 = vmatpush.bf16.msra.mxu0 %v4129
    %4301 = vmatpush.bf16.msra.mxu0 %v4125
    %4302 = vmatpush.bf16.msra.mxu0 %v4121
    %4303 = vmatpush.bf16.msra.mxu0 %v4117
    %4304 = vmatpush.bf16.msra.mxu0 %v4113
    %4305 = vmatpush.bf16.msra.mxu0 %v4109
    %4306 = vmatpush.bf16.msra.mxu0 %v4105
    %4307 = vmatpush.bf16.msra.mxu0 %v4101
    %4308 = vmatmul.bf16.gmra.mxu0 %v3482
    %v4309 = vpop.f32.mrf.mxu0
    %v4310 = vadd.f32 %v4297, %v4309
    %v4311 = vpop.f32.mrf.mxu0
    %4312 = vdwg.mxu0
    %4313 = vmatpush.bf16.msra.mxu0 %v4034
    %4314 = vmatpush.bf16.msra.mxu0 %v4030
    %4315 = vmatpush.bf16.msra.mxu0 %v4026
    %4316 = vmatpush.bf16.msra.mxu0 %v4022
    %4317 = vmatpush.bf16.msra.mxu0 %v4018
    %4318 = vmatpush.bf16.msra.mxu0 %v4014
    %4319 = vmatpush.bf16.msra.mxu0 %v4010
    %4320 = vmatpush.bf16.msra.mxu0 %v4006
    %4321 = vmatmul.bf16.gmra.mxu0 %v3479
    %v4322 = vpop.f32.mrf.mxu0
    %v4323 = vadd.f32 %v3614, %v4322
    %v4324 = vpop.f32.mrf.mxu0
    %4325 = vdwg.mxu0
    %4326 = vmatpush.bf16.msra.mxu0 %v4066
    %4327 = vmatpush.bf16.msra.mxu0 %v4062
    %4328 = vmatpush.bf16.msra.mxu0 %v4058
    %4329 = vmatpush.bf16.msra.mxu0 %v4054
    %4330 = vmatpush.bf16.msra.mxu0 %v4050
    %4331 = vmatpush.bf16.msra.mxu0 %v4046
    %4332 = vmatpush.bf16.msra.mxu0 %v4042
    %4333 = vmatpush.bf16.msra.mxu0 %v4038
    %4334 = vmatmul.bf16.gmra.mxu0 %v3480
    %v4335 = vpop.f32.mrf.mxu0
    %v4336 = vadd.f32 %v4323, %v4335
    %v4337 = vpop.f32.mrf.mxu0
    %4338 = vdwg.mxu0
    %4339 = vmatpush.bf16.msra.mxu0 %v4098
    %4340 = vmatpush.bf16.msra.mxu0 %v4094
    %4341 = vmatpush.bf16.msra.mxu0 %v4090
    %4342 = vmatpush.bf16.msra.mxu0 %v4086
    %4343 = vmatpush.bf16.msra.mxu0 %v4082
    %4344 = vmatpush.bf16.msra.mxu0 %v4078
    %4345 = vmatpush.bf16.msra.mxu0 %v4074
    %4346 = vmatpush.bf16.msra.mxu0 %v4070
    %4347 = vmatmul.bf16.gmra.mxu0 %v3481
    %v4348 = vpop.f32.mrf.mxu0
    %v4349 = vadd.f32 %v4336, %v4348
    %v4350 = vpop.f32.mrf.mxu0
    %4351 = vdwg.mxu0
    %4352 = vmatpush.bf16.msra.mxu0 %v4130
    %4353 = vmatpush.bf16.msra.mxu0 %v4126
    %4354 = vmatpush.bf16.msra.mxu0 %v4122
    %4355 = vmatpush.bf16.msra.mxu0 %v4118
    %4356 = vmatpush.bf16.msra.mxu0 %v4114
    %4357 = vmatpush.bf16.msra.mxu0 %v4110
    %4358 = vmatpush.bf16.msra.mxu0 %v4106
    %4359 = vmatpush.bf16.msra.mxu0 %v4102
    %4360 = vmatmul.bf16.gmra.mxu0 %v3482
    %v4361 = vpop.f32.mrf.mxu0
    %v4362 = vadd.f32 %v4349, %v4361
    %v4363 = vpop.f32.mrf.mxu0
    %4364 = vdwg.mxu0
    %4365 = vmatpush.bf16.msra.mxu0 %v4035
    %4366 = vmatpush.bf16.msra.mxu0 %v4031
    %4367 = vmatpush.bf16.msra.mxu0 %v4027
    %4368 = vmatpush.bf16.msra.mxu0 %v4023
    %4369 = vmatpush.bf16.msra.mxu0 %v4019
    %4370 = vmatpush.bf16.msra.mxu0 %v4015
    %4371 = vmatpush.bf16.msra.mxu0 %v4011
    %4372 = vmatpush.bf16.msra.mxu0 %v4007
    %4373 = vmatmul.bf16.gmra.mxu0 %v3479
    %v4374 = vpop.f32.mrf.mxu0
    %v4375 = vadd.f32 %v3615, %v4374
    %v4376 = vpop.f32.mrf.mxu0
    %4377 = vdwg.mxu0
    %4378 = vmatpush.bf16.msra.mxu0 %v4067
    %4379 = vmatpush.bf16.msra.mxu0 %v4063
    %4380 = vmatpush.bf16.msra.mxu0 %v4059
    %4381 = vmatpush.bf16.msra.mxu0 %v4055
    %4382 = vmatpush.bf16.msra.mxu0 %v4051
    %4383 = vmatpush.bf16.msra.mxu0 %v4047
    %4384 = vmatpush.bf16.msra.mxu0 %v4043
    %4385 = vmatpush.bf16.msra.mxu0 %v4039
    %4386 = vmatmul.bf16.gmra.mxu0 %v3480
    %v4387 = vpop.f32.mrf.mxu0
    %v4388 = vadd.f32 %v4375, %v4387
    %v4389 = vpop.f32.mrf.mxu0
    %4390 = vdwg.mxu0
    %4391 = vmatpush.bf16.msra.mxu0 %v4099
    %4392 = vmatpush.bf16.msra.mxu0 %v4095
    %4393 = vmatpush.bf16.msra.mxu0 %v4091
    %4394 = vmatpush.bf16.msra.mxu0 %v4087
    %4395 = vmatpush.bf16.msra.mxu0 %v4083
    %4396 = vmatpush.bf16.msra.mxu0 %v4079
    %4397 = vmatpush.bf16.msra.mxu0 %v4075
    %4398 = vmatpush.bf16.msra.mxu0 %v4071
    %4399 = vmatmul.bf16.gmra.mxu0 %v3481
    %v4400 = vpop.f32.mrf.mxu0
    %v4401 = vadd.f32 %v4388, %v4400
    %v4402 = vpop.f32.mrf.mxu0
    %4403 = vdwg.mxu0
    %4404 = vmatpush.bf16.msra.mxu0 %v4131
    %4405 = vmatpush.bf16.msra.mxu0 %v4127
    %4406 = vmatpush.bf16.msra.mxu0 %v4123
    %4407 = vmatpush.bf16.msra.mxu0 %v4119
    %4408 = vmatpush.bf16.msra.mxu0 %v4115
    %4409 = vmatpush.bf16.msra.mxu0 %v4111
    %4410 = vmatpush.bf16.msra.mxu0 %v4107
    %4411 = vmatpush.bf16.msra.mxu0 %v4103
    %4412 = vmatmul.bf16.gmra.mxu0 %v3482
    %v4413 = vpop.f32.mrf.mxu0
    %v4414 = vadd.f32 %v4401, %v4413
    %v4415 = vpop.f32.mrf.mxu0
    %4416 = vdwg.mxu0
    %4417 = vmatpush.bf16.msra.mxu0 %v4036
    %4418 = vmatpush.bf16.msra.mxu0 %v4032
    %4419 = vmatpush.bf16.msra.mxu0 %v4028
    %4420 = vmatpush.bf16.msra.mxu0 %v4024
    %4421 = vmatpush.bf16.msra.mxu0 %v4020
    %4422 = vmatpush.bf16.msra.mxu0 %v4016
    %4423 = vmatpush.bf16.msra.mxu0 %v4012
    %4424 = vmatpush.bf16.msra.mxu0 %v4008
    %4425 = vmatmul.bf16.gmra.mxu0 %v3479
    %v4426 = vpop.f32.mrf.mxu0
    %v4427 = vadd.f32 %v3616, %v4426
    %v4428 = vpop.f32.mrf.mxu0
    %4429 = vdwg.mxu0
    %4430 = vmatpush.bf16.msra.mxu0 %v4068
    %4431 = vmatpush.bf16.msra.mxu0 %v4064
    %4432 = vmatpush.bf16.msra.mxu0 %v4060
    %4433 = vmatpush.bf16.msra.mxu0 %v4056
    %4434 = vmatpush.bf16.msra.mxu0 %v4052
    %4435 = vmatpush.bf16.msra.mxu0 %v4048
    %4436 = vmatpush.bf16.msra.mxu0 %v4044
    %4437 = vmatpush.bf16.msra.mxu0 %v4040
    %4438 = vmatmul.bf16.gmra.mxu0 %v3480
    %v4439 = vpop.f32.mrf.mxu0
    %v4440 = vadd.f32 %v4427, %v4439
    %v4441 = vpop.f32.mrf.mxu0
    %4442 = vdwg.mxu0
    %4443 = vmatpush.bf16.msra.mxu0 %v4100
    %4444 = vmatpush.bf16.msra.mxu0 %v4096
    %4445 = vmatpush.bf16.msra.mxu0 %v4092
    %4446 = vmatpush.bf16.msra.mxu0 %v4088
    %4447 = vmatpush.bf16.msra.mxu0 %v4084
    %4448 = vmatpush.bf16.msra.mxu0 %v4080
    %4449 = vmatpush.bf16.msra.mxu0 %v4076
    %4450 = vmatpush.bf16.msra.mxu0 %v4072
    %4451 = vmatmul.bf16.gmra.mxu0 %v3481
    %v4452 = vpop.f32.mrf.mxu0
    %v4453 = vadd.f32 %v4440, %v4452
    %v4454 = vpop.f32.mrf.mxu0
    %4455 = vdwg.mxu0
    %4456 = vmatpush.bf16.msra.mxu0 %v4132
    %4457 = vmatpush.bf16.msra.mxu0 %v4128
    %4458 = vmatpush.bf16.msra.mxu0 %v4124
    %4459 = vmatpush.bf16.msra.mxu0 %v4120
    %4460 = vmatpush.bf16.msra.mxu0 %v4116
    %4461 = vmatpush.bf16.msra.mxu0 %v4112
    %4462 = vmatpush.bf16.msra.mxu0 %v4108
    %4463 = vmatpush.bf16.msra.mxu0 %v4104
    %4464 = vmatmul.bf16.gmra.mxu0 %v3482
    %v4465 = vpop.f32.mrf.mxu0
    %v4466 = vadd.f32 %v4453, %v4465
    %v4467 = vpop.f32.mrf.mxu0
    %4468 = vdwg.mxu0
    %v4469 = vmax.f32 %v4310, 0.0
    %v4470 = vmax.f32 %v4362, 0.0
    %v4471 = vmax.f32 %v4414, 0.0
    %v4472 = vmax.f32 %v4466, 0.0
    %v4473 = vpack.c.bf16 %v4469, %v4469
    %v4474 = vpack.c.bf16 %v4470, %v4470
    %v4475 = vpack.c.bf16 %v4471, %v4471
    %v4476 = vpack.c.bf16 %v4472, %v4472
    %v4477 = vld [vmem:[#allocation20] sm:$0xff]
    %v4478 = vld [vmem:[#allocation20 + $0x8] sm:$0xff]
    %v4479 = vld [vmem:[#allocation20 + $0x10] sm:$0xff]
    %v4480 = vld [vmem:[#allocation20 + $0x18] sm:$0xff]
    %v4481 = vld [vmem:[#allocation20 + $0x20] sm:$0xff]
    %v4482 = vld [vmem:[#allocation20 + $0x28] sm:$0xff]
    %v4483 = vld [vmem:[#allocation20 + $0x30] sm:$0xff]
    %v4484 = vld [vmem:[#allocation20 + $0x38] sm:$0xff]
    %v4485 = vld [vmem:[#allocation20 + $0x40] sm:$0xff]
    %v4486 = vld [vmem:[#allocation20 + $0x48] sm:$0xff]
    %v4487 = vld [vmem:[#allocation20 + $0x50] sm:$0xff]
    %v4488 = vld [vmem:[#allocation20 + $0x58] sm:$0xff]
    %v4489 = vld [vmem:[#allocation20 + $0x60] sm:$0xff]
    %v4490 = vld [vmem:[#allocation20 + $0x68] sm:$0xff]
    %v4491 = vld [vmem:[#allocation20 + $0x70] sm:$0xff]
    %v4492 = vld [vmem:[#allocation20 + $0x78] sm:$0xff]
    %v4493 = vld [vmem:[#allocation20 + $0x80] sm:$0xff]
    %v4494 = vld [vmem:[#allocation20 + $0x88] sm:$0xff]
    %v4495 = vld [vmem:[#allocation20 + $0x90] sm:$0xff]
    %v4496 = vld [vmem:[#allocation20 + $0x98] sm:$0xff]
    %v4497 = vld [vmem:[#allocation20 + $0xa0] sm:$0xff]
    %v4498 = vld [vmem:[#allocation20 + $0xa8] sm:$0xff]
    %v4499 = vld [vmem:[#allocation20 + $0xb0] sm:$0xff]
    %v4500 = vld [vmem:[#allocation20 + $0xb8] sm:$0xff]
    %v4501 = vld [vmem:[#allocation20 + $0xc0] sm:$0xff]
    %v4502 = vld [vmem:[#allocation20 + $0xc8] sm:$0xff]
    %v4503 = vld [vmem:[#allocation20 + $0xd0] sm:$0xff]
    %v4504 = vld [vmem:[#allocation20 + $0xd8] sm:$0xff]
    %v4505 = vld [vmem:[#allocation20 + $0xe0] sm:$0xff]
    %v4506 = vld [vmem:[#allocation20 + $0xe8] sm:$0xff]
    %v4507 = vld [vmem:[#allocation20 + $0xf0] sm:$0xff]
    %v4508 = vld [vmem:[#allocation20 + $0xf8] sm:$0xff]
    %v4509 = vld [vmem:[#allocation20 + $0x100] sm:$0xff]
    %v4510 = vld [vmem:[#allocation20 + $0x108] sm:$0xff]
    %v4511 = vld [vmem:[#allocation20 + $0x110] sm:$0xff]
    %v4512 = vld [vmem:[#allocation20 + $0x118] sm:$0xff]
    %v4513 = vld [vmem:[#allocation20 + $0x120] sm:$0xff]
    %v4514 = vld [vmem:[#allocation20 + $0x128] sm:$0xff]
    %v4515 = vld [vmem:[#allocation20 + $0x130] sm:$0xff]
    %v4516 = vld [vmem:[#allocation20 + $0x138] sm:$0xff]
    %v4517 = vld [vmem:[#allocation20 + $0x140] sm:$0xff]
    %v4518 = vld [vmem:[#allocation20 + $0x148] sm:$0xff]
    %v4519 = vld [vmem:[#allocation20 + $0x150] sm:$0xff]
    %v4520 = vld [vmem:[#allocation20 + $0x158] sm:$0xff]
    %v4521 = vld [vmem:[#allocation20 + $0x160] sm:$0xff]
    %v4522 = vld [vmem:[#allocation20 + $0x168] sm:$0xff]
    %v4523 = vld [vmem:[#allocation20 + $0x170] sm:$0xff]
    %v4524 = vld [vmem:[#allocation20 + $0x178] sm:$0xff]
    %v4525 = vld [vmem:[#allocation20 + $0x180] sm:$0xff]
    %v4526 = vld [vmem:[#allocation20 + $0x188] sm:$0xff]
    %v4527 = vld [vmem:[#allocation20 + $0x190] sm:$0xff]
    %v4528 = vld [vmem:[#allocation20 + $0x198] sm:$0xff]
    %v4529 = vld [vmem:[#allocation20 + $0x1a0] sm:$0xff]
    %v4530 = vld [vmem:[#allocation20 + $0x1a8] sm:$0xff]
    %v4531 = vld [vmem:[#allocation20 + $0x1b0] sm:$0xff]
    %v4532 = vld [vmem:[#allocation20 + $0x1b8] sm:$0xff]
    %v4533 = vld [vmem:[#allocation20 + $0x1c0] sm:$0xff]
    %v4534 = vld [vmem:[#allocation20 + $0x1c8] sm:$0xff]
    %v4535 = vld [vmem:[#allocation20 + $0x1d0] sm:$0xff]
    %v4536 = vld [vmem:[#allocation20 + $0x1d8] sm:$0xff]
    %v4537 = vld [vmem:[#allocation20 + $0x1e0] sm:$0xff]
    %v4538 = vld [vmem:[#allocation20 + $0x1e8] sm:$0xff]
    %v4539 = vld [vmem:[#allocation20 + $0x1f0] sm:$0xff]
    %v4540 = vld [vmem:[#allocation20 + $0x1f8] sm:$0xff]
    %v4541 = vld [vmem:[#allocation20 + $0x200] sm:$0xff]
    %v4542 = vld [vmem:[#allocation20 + $0x208] sm:$0xff]
    %v4543 = vld [vmem:[#allocation20 + $0x210] sm:$0xff]
    %v4544 = vld [vmem:[#allocation20 + $0x218] sm:$0xff]
    %v4545 = vld [vmem:[#allocation20 + $0x220] sm:$0xff]
    %v4546 = vld [vmem:[#allocation20 + $0x228] sm:$0xff]
    %v4547 = vld [vmem:[#allocation20 + $0x230] sm:$0xff]
    %v4548 = vld [vmem:[#allocation20 + $0x238] sm:$0xff]
    %v4549 = vld [vmem:[#allocation20 + $0x240] sm:$0xff]
    %v4550 = vld [vmem:[#allocation20 + $0x248] sm:$0xff]
    %v4551 = vld [vmem:[#allocation20 + $0x250] sm:$0xff]
    %v4552 = vld [vmem:[#allocation20 + $0x258] sm:$0xff]
    %v4553 = vld [vmem:[#allocation20 + $0x260] sm:$0xff]
    %v4554 = vld [vmem:[#allocation20 + $0x268] sm:$0xff]
    %v4555 = vld [vmem:[#allocation20 + $0x270] sm:$0xff]
    %v4556 = vld [vmem:[#allocation20 + $0x278] sm:$0xff]
    %v4557 = vld [vmem:[#allocation20 + $0x280] sm:$0xff]
    %v4558 = vld [vmem:[#allocation20 + $0x288] sm:$0xff]
    %v4559 = vld [vmem:[#allocation20 + $0x290] sm:$0xff]
    %v4560 = vld [vmem:[#allocation20 + $0x298] sm:$0xff]
    %v4561 = vld [vmem:[#allocation20 + $0x2a0] sm:$0xff]
    %v4562 = vld [vmem:[#allocation20 + $0x2a8] sm:$0xff]
    %v4563 = vld [vmem:[#allocation20 + $0x2b0] sm:$0xff]
    %v4564 = vld [vmem:[#allocation20 + $0x2b8] sm:$0xff]
    %v4565 = vld [vmem:[#allocation20 + $0x2c0] sm:$0xff]
    %v4566 = vld [vmem:[#allocation20 + $0x2c8] sm:$0xff]
    %v4567 = vld [vmem:[#allocation20 + $0x2d0] sm:$0xff]
    %v4568 = vld [vmem:[#allocation20 + $0x2d8] sm:$0xff]
    %v4569 = vld [vmem:[#allocation20 + $0x2e0] sm:$0xff]
    %v4570 = vld [vmem:[#allocation20 + $0x2e8] sm:$0xff]
    %v4571 = vld [vmem:[#allocation20 + $0x2f0] sm:$0xff]
    %v4572 = vld [vmem:[#allocation20 + $0x2f8] sm:$0xff]
    %v4573 = vld [vmem:[#allocation20 + $0x300] sm:$0xff]
    %v4574 = vld [vmem:[#allocation20 + $0x308] sm:$0xff]
    %v4575 = vld [vmem:[#allocation20 + $0x310] sm:$0xff]
    %v4576 = vld [vmem:[#allocation20 + $0x318] sm:$0xff]
    %v4577 = vld [vmem:[#allocation20 + $0x320] sm:$0xff]
    %v4578 = vld [vmem:[#allocation20 + $0x328] sm:$0xff]
    %v4579 = vld [vmem:[#allocation20 + $0x330] sm:$0xff]
    %v4580 = vld [vmem:[#allocation20 + $0x338] sm:$0xff]
    %v4581 = vld [vmem:[#allocation20 + $0x340] sm:$0xff]
    %v4582 = vld [vmem:[#allocation20 + $0x348] sm:$0xff]
    %v4583 = vld [vmem:[#allocation20 + $0x350] sm:$0xff]
    %v4584 = vld [vmem:[#allocation20 + $0x358] sm:$0xff]
    %v4585 = vld [vmem:[#allocation20 + $0x360] sm:$0xff]
    %v4586 = vld [vmem:[#allocation20 + $0x368] sm:$0xff]
    %v4587 = vld [vmem:[#allocation20 + $0x370] sm:$0xff]
    %v4588 = vld [vmem:[#allocation20 + $0x378] sm:$0xff]
    %v4589 = vld [vmem:[#allocation20 + $0x380] sm:$0xff]
    %v4590 = vld [vmem:[#allocation20 + $0x388] sm:$0xff]
    %v4591 = vld [vmem:[#allocation20 + $0x390] sm:$0xff]
    %v4592 = vld [vmem:[#allocation20 + $0x398] sm:$0xff]
    %v4593 = vld [vmem:[#allocation20 + $0x3a0] sm:$0xff]
    %v4594 = vld [vmem:[#allocation20 + $0x3a8] sm:$0xff]
    %v4595 = vld [vmem:[#allocation20 + $0x3b0] sm:$0xff]
    %v4596 = vld [vmem:[#allocation20 + $0x3b8] sm:$0xff]
    %v4597 = vld [vmem:[#allocation20 + $0x3c0] sm:$0xff]
    %v4598 = vld [vmem:[#allocation20 + $0x3c8] sm:$0xff]
    %v4599 = vld [vmem:[#allocation20 + $0x3d0] sm:$0xff]
    %v4600 = vld [vmem:[#allocation20 + $0x3d8] sm:$0xff]
    %v4601 = vld [vmem:[#allocation20 + $0x3e0] sm:$0xff]
    %v4602 = vld [vmem:[#allocation20 + $0x3e8] sm:$0xff]
    %v4603 = vld [vmem:[#allocation20 + $0x3f0] sm:$0xff]
    %v4604 = vld [vmem:[#allocation20 + $0x3f8] sm:$0xff]
    %v4605 = vld [vmem:[#allocation20 + $0x400] sm:$0xff]
    %v4606 = vld [vmem:[#allocation20 + $0x408] sm:$0xff]
    %v4607 = vld [vmem:[#allocation20 + $0x410] sm:$0xff]
    %v4608 = vld [vmem:[#allocation20 + $0x418] sm:$0xff]
    %v4609 = vld [vmem:[#allocation20 + $0x420] sm:$0xff]
    %v4610 = vld [vmem:[#allocation20 + $0x428] sm:$0xff]
    %v4611 = vld [vmem:[#allocation20 + $0x430] sm:$0xff]
    %v4612 = vld [vmem:[#allocation20 + $0x438] sm:$0xff]
    %v4613 = vld [vmem:[#allocation20 + $0x440] sm:$0xff]
    %v4614 = vld [vmem:[#allocation20 + $0x448] sm:$0xff]
    %v4615 = vld [vmem:[#allocation20 + $0x450] sm:$0xff]
    %v4616 = vld [vmem:[#allocation20 + $0x458] sm:$0xff]
    %v4617 = vld [vmem:[#allocation20 + $0x460] sm:$0xff]
    %v4618 = vld [vmem:[#allocation20 + $0x468] sm:$0xff]
    %v4619 = vld [vmem:[#allocation20 + $0x470] sm:$0xff]
    %v4620 = vld [vmem:[#allocation20 + $0x478] sm:$0xff]
    %v4621 = vld [vmem:[#allocation20 + $0x480] sm:$0xff]
    %v4622 = vld [vmem:[#allocation20 + $0x488] sm:$0xff]
    %v4623 = vld [vmem:[#allocation20 + $0x490] sm:$0xff]
    %v4624 = vld [vmem:[#allocation20 + $0x498] sm:$0xff]
    %v4625 = vld [vmem:[#allocation20 + $0x4a0] sm:$0xff]
    %v4626 = vld [vmem:[#allocation20 + $0x4a8] sm:$0xff]
    %v4627 = vld [vmem:[#allocation20 + $0x4b0] sm:$0xff]
    %v4628 = vld [vmem:[#allocation20 + $0x4b8] sm:$0xff]
    %v4629 = vld [vmem:[#allocation20 + $0x4c0] sm:$0xff]
    %v4630 = vld [vmem:[#allocation20 + $0x4c8] sm:$0xff]
    %v4631 = vld [vmem:[#allocation20 + $0x4d0] sm:$0xff]
    %v4632 = vld [vmem:[#allocation20 + $0x4d8] sm:$0xff]
    %v4633 = vld [vmem:[#allocation20 + $0x4e0] sm:$0xff]
    %v4634 = vld [vmem:[#allocation20 + $0x4e8] sm:$0xff]
    %v4635 = vld [vmem:[#allocation20 + $0x4f0] sm:$0xff]
    %v4636 = vld [vmem:[#allocation20 + $0x4f8] sm:$0xff]
    %v4637 = vld [vmem:[#allocation20 + $0x500] sm:$0xff]
    %v4638 = vld [vmem:[#allocation20 + $0x508] sm:$0xff]
    %v4639 = vld [vmem:[#allocation20 + $0x510] sm:$0xff]
    %v4640 = vld [vmem:[#allocation20 + $0x518] sm:$0xff]
    %v4641 = vld [vmem:[#allocation20 + $0x520] sm:$0xff]
    %v4642 = vld [vmem:[#allocation20 + $0x528] sm:$0xff]
    %v4643 = vld [vmem:[#allocation20 + $0x530] sm:$0xff]
    %v4644 = vld [vmem:[#allocation20 + $0x538] sm:$0xff]
    %v4645 = vld [vmem:[#allocation20 + $0x540] sm:$0xff]
    %v4646 = vld [vmem:[#allocation20 + $0x548] sm:$0xff]
    %v4647 = vld [vmem:[#allocation20 + $0x550] sm:$0xff]
    %v4648 = vld [vmem:[#allocation20 + $0x558] sm:$0xff]
    %v4649 = vld [vmem:[#allocation20 + $0x560] sm:$0xff]
    %v4650 = vld [vmem:[#allocation20 + $0x568] sm:$0xff]
    %v4651 = vld [vmem:[#allocation20 + $0x570] sm:$0xff]
    %v4652 = vld [vmem:[#allocation20 + $0x578] sm:$0xff]
    %v4653 = vld [vmem:[#allocation20 + $0x580] sm:$0xff]
    %v4654 = vld [vmem:[#allocation20 + $0x588] sm:$0xff]
    %v4655 = vld [vmem:[#allocation20 + $0x590] sm:$0xff]
    %v4656 = vld [vmem:[#allocation20 + $0x598] sm:$0xff]
    %v4657 = vld [vmem:[#allocation20 + $0x5a0] sm:$0xff]
    %v4658 = vld [vmem:[#allocation20 + $0x5a8] sm:$0xff]
    %v4659 = vld [vmem:[#allocation20 + $0x5b0] sm:$0xff]
    %v4660 = vld [vmem:[#allocation20 + $0x5b8] sm:$0xff]
    %v4661 = vld [vmem:[#allocation20 + $0x5c0] sm:$0xff]
    %v4662 = vld [vmem:[#allocation20 + $0x5c8] sm:$0xff]
    %v4663 = vld [vmem:[#allocation20 + $0x5d0] sm:$0xff]
    %v4664 = vld [vmem:[#allocation20 + $0x5d8] sm:$0xff]
    %v4665 = vld [vmem:[#allocation20 + $0x5e0] sm:$0xff]
    %v4666 = vld [vmem:[#allocation20 + $0x5e8] sm:$0xff]
    %v4667 = vld [vmem:[#allocation20 + $0x5f0] sm:$0xff]
    %v4668 = vld [vmem:[#allocation20 + $0x5f8] sm:$0xff]
    %v4669 = vld [vmem:[%s13] sm:$0x3f]
    %v4671 = vperm.slane %v4669, 0
    %v4672 = vperm.slane %v4669, 1
    %v4673 = vperm.slane %v4669, 2
    %v4674 = vperm.slane %v4669, 3
    %v4675 = vperm.slane %v4669, 4
    %v4676 = vperm.slane %v4669, 5
    %v4875 = vunpack.c.l.b16 %v4477
    %v4876 = vunpack.c.h.b16 %v4477
    %v4877 = vunpack.c.l.b16 %v4478
    %v4878 = vunpack.c.h.b16 %v4478
    %v4879 = vunpack.c.l.b16 %v4479
    %v4880 = vunpack.c.h.b16 %v4479
    %v4881 = vunpack.c.l.b16 %v4480
    %v4882 = vunpack.c.h.b16 %v4480
    %v4883 = vunpack.c.l.b16 %v4481
    %v4884 = vunpack.c.h.b16 %v4481
    %v4885 = vunpack.c.l.b16 %v4482
    %v4886 = vunpack.c.h.b16 %v4482
    %v4887 = vunpack.c.l.b16 %v4483
    %v4888 = vunpack.c.h.b16 %v4483
    %v4889 = vunpack.c.l.b16 %v4484
    %v4890 = vunpack.c.h.b16 %v4484
    %v4891 = vunpack.c.l.b16 %v4485
    %v4892 = vunpack.c.h.b16 %v4485
    %v4893 = vunpack.c.l.b16 %v4486
    %v4894 = vunpack.c.h.b16 %v4486
    %v4895 = vunpack.c.l.b16 %v4487
    %v4896 = vunpack.c.h.b16 %v4487
    %v4897 = vunpack.c.l.b16 %v4488
    %v4898 = vunpack.c.h.b16 %v4488
    %v4899 = vunpack.c.l.b16 %v4489
    %v4900 = vunpack.c.h.b16 %v4489
    %v4901 = vunpack.c.l.b16 %v4490
    %v4902 = vunpack.c.h.b16 %v4490
    %v4903 = vunpack.c.l.b16 %v4491
    %v4904 = vunpack.c.h.b16 %v4491
    %v4905 = vunpack.c.l.b16 %v4492
    %v4906 = vunpack.c.h.b16 %v4492
    %v4907 = vunpack.c.l.b16 %v4493
    %v4908 = vunpack.c.h.b16 %v4493
    %v4909 = vunpack.c.l.b16 %v4494
    %v4910 = vunpack.c.h.b16 %v4494
    %v4911 = vunpack.c.l.b16 %v4495
    %v4912 = vunpack.c.h.b16 %v4495
    %v4913 = vunpack.c.l.b16 %v4496
    %v4914 = vunpack.c.h.b16 %v4496
    %v4915 = vunpack.c.l.b16 %v4497
    %v4916 = vunpack.c.h.b16 %v4497
    %v4917 = vunpack.c.l.b16 %v4498
    %v4918 = vunpack.c.h.b16 %v4498
    %v4919 = vunpack.c.l.b16 %v4499
    %v4920 = vunpack.c.h.b16 %v4499
    %v4921 = vunpack.c.l.b16 %v4500
    %v4922 = vunpack.c.h.b16 %v4500
    %v4923 = vunpack.c.l.b16 %v4501
    %v4924 = vunpack.c.h.b16 %v4501
    %v4925 = vunpack.c.l.b16 %v4502
    %v4926 = vunpack.c.h.b16 %v4502
    %v4927 = vunpack.c.l.b16 %v4503
    %v4928 = vunpack.c.h.b16 %v4503
    %v4929 = vunpack.c.l.b16 %v4504
    %v4930 = vunpack.c.h.b16 %v4504
    %v4931 = vunpack.c.l.b16 %v4505
    %v4932 = vunpack.c.h.b16 %v4505
    %v4933 = vunpack.c.l.b16 %v4506
    %v4934 = vunpack.c.h.b16 %v4506
    %v4935 = vunpack.c.l.b16 %v4507
    %v4936 = vunpack.c.h.b16 %v4507
    %v4937 = vunpack.c.l.b16 %v4508
    %v4938 = vunpack.c.h.b16 %v4508
    %v4939 = vunpack.c.l.b16 %v4509
    %v4940 = vunpack.c.h.b16 %v4509
    %v4941 = vunpack.c.l.b16 %v4510
    %v4942 = vunpack.c.h.b16 %v4510
    %v4943 = vunpack.c.l.b16 %v4511
    %v4944 = vunpack.c.h.b16 %v4511
    %v4945 = vunpack.c.l.b16 %v4512
    %v4946 = vunpack.c.h.b16 %v4512
    %v4947 = vunpack.c.l.b16 %v4513
    %v4948 = vunpack.c.h.b16 %v4513
    %v4949 = vunpack.c.l.b16 %v4514
    %v4950 = vunpack.c.h.b16 %v4514
    %v4951 = vunpack.c.l.b16 %v4515
    %v4952 = vunpack.c.h.b16 %v4515
    %v4953 = vunpack.c.l.b16 %v4516
    %v4954 = vunpack.c.h.b16 %v4516
    %v4955 = vunpack.c.l.b16 %v4517
    %v4956 = vunpack.c.h.b16 %v4517
    %v4957 = vunpack.c.l.b16 %v4518
    %v4958 = vunpack.c.h.b16 %v4518
    %v4959 = vunpack.c.l.b16 %v4519
    %v4960 = vunpack.c.h.b16 %v4519
    %v4961 = vunpack.c.l.b16 %v4520
    %v4962 = vunpack.c.h.b16 %v4520
    %v4963 = vunpack.c.l.b16 %v4521
    %v4964 = vunpack.c.h.b16 %v4521
    %v4965 = vunpack.c.l.b16 %v4522
    %v4966 = vunpack.c.h.b16 %v4522
    %v4967 = vunpack.c.l.b16 %v4523
    %v4968 = vunpack.c.h.b16 %v4523
    %v4969 = vunpack.c.l.b16 %v4524
    %v4970 = vunpack.c.h.b16 %v4524
    %v4971 = vunpack.c.l.b16 %v4525
    %v4972 = vunpack.c.h.b16 %v4525
    %v4973 = vunpack.c.l.b16 %v4526
    %v4974 = vunpack.c.h.b16 %v4526
    %v4975 = vunpack.c.l.b16 %v4527
    %v4976 = vunpack.c.h.b16 %v4527
    %v4977 = vunpack.c.l.b16 %v4528
    %v4978 = vunpack.c.h.b16 %v4528
    %v4979 = vunpack.c.l.b16 %v4529
    %v4980 = vunpack.c.h.b16 %v4529
    %v4981 = vunpack.c.l.b16 %v4530
    %v4982 = vunpack.c.h.b16 %v4530
    %v4983 = vunpack.c.l.b16 %v4531
    %v4984 = vunpack.c.h.b16 %v4531
    %v4985 = vunpack.c.l.b16 %v4532
    %v4986 = vunpack.c.h.b16 %v4532
    %v4987 = vunpack.c.l.b16 %v4533
    %v4988 = vunpack.c.h.b16 %v4533
    %v4989 = vunpack.c.l.b16 %v4534
    %v4990 = vunpack.c.h.b16 %v4534
    %v4991 = vunpack.c.l.b16 %v4535
    %v4992 = vunpack.c.h.b16 %v4535
    %v4993 = vunpack.c.l.b16 %v4536
    %v4994 = vunpack.c.h.b16 %v4536
    %v4995 = vunpack.c.l.b16 %v4537
    %v4996 = vunpack.c.h.b16 %v4537
    %v4997 = vunpack.c.l.b16 %v4538
    %v4998 = vunpack.c.h.b16 %v4538
    %v4999 = vunpack.c.l.b16 %v4539
    %v5000 = vunpack.c.h.b16 %v4539
    %v5001 = vunpack.c.l.b16 %v4540
    %v5002 = vunpack.c.h.b16 %v4540
    %v5003 = vunpack.c.l.b16 %v4541
    %v5004 = vunpack.c.h.b16 %v4541
    %v5005 = vunpack.c.l.b16 %v4542
    %v5006 = vunpack.c.h.b16 %v4542
    %v5007 = vunpack.c.l.b16 %v4543
    %v5008 = vunpack.c.h.b16 %v4543
    %v5009 = vunpack.c.l.b16 %v4544
    %v5010 = vunpack.c.h.b16 %v4544
    %v5011 = vunpack.c.l.b16 %v4545
    %v5012 = vunpack.c.h.b16 %v4545
    %v5013 = vunpack.c.l.b16 %v4546
    %v5014 = vunpack.c.h.b16 %v4546
    %v5015 = vunpack.c.l.b16 %v4547
    %v5016 = vunpack.c.h.b16 %v4547
    %v5017 = vunpack.c.l.b16 %v4548
    %v5018 = vunpack.c.h.b16 %v4548
    %v5019 = vunpack.c.l.b16 %v4549
    %v5020 = vunpack.c.h.b16 %v4549
    %v5021 = vunpack.c.l.b16 %v4550
    %v5022 = vunpack.c.h.b16 %v4550
    %v5023 = vunpack.c.l.b16 %v4551
    %v5024 = vunpack.c.h.b16 %v4551
    %v5025 = vunpack.c.l.b16 %v4552
    %v5026 = vunpack.c.h.b16 %v4552
    %v5027 = vunpack.c.l.b16 %v4553
    %v5028 = vunpack.c.h.b16 %v4553
    %v5029 = vunpack.c.l.b16 %v4554
    %v5030 = vunpack.c.h.b16 %v4554
    %v5031 = vunpack.c.l.b16 %v4555
    %v5032 = vunpack.c.h.b16 %v4555
    %v5033 = vunpack.c.l.b16 %v4556
    %v5034 = vunpack.c.h.b16 %v4556
    %v5035 = vunpack.c.l.b16 %v4557
    %v5036 = vunpack.c.h.b16 %v4557
    %v5037 = vunpack.c.l.b16 %v4558
    %v5038 = vunpack.c.h.b16 %v4558
    %v5039 = vunpack.c.l.b16 %v4559
    %v5040 = vunpack.c.h.b16 %v4559
    %v5041 = vunpack.c.l.b16 %v4560
    %v5042 = vunpack.c.h.b16 %v4560
    %v5043 = vunpack.c.l.b16 %v4561
    %v5044 = vunpack.c.h.b16 %v4561
    %v5045 = vunpack.c.l.b16 %v4562
    %v5046 = vunpack.c.h.b16 %v4562
    %v5047 = vunpack.c.l.b16 %v4563
    %v5048 = vunpack.c.h.b16 %v4563
    %v5049 = vunpack.c.l.b16 %v4564
    %v5050 = vunpack.c.h.b16 %v4564
    %v5051 = vunpack.c.l.b16 %v4565
    %v5052 = vunpack.c.h.b16 %v4565
    %v5053 = vunpack.c.l.b16 %v4566
    %v5054 = vunpack.c.h.b16 %v4566
    %v5055 = vunpack.c.l.b16 %v4567
    %v5056 = vunpack.c.h.b16 %v4567
    %v5057 = vunpack.c.l.b16 %v4568
    %v5058 = vunpack.c.h.b16 %v4568
    %v5059 = vunpack.c.l.b16 %v4569
    %v5060 = vunpack.c.h.b16 %v4569
    %v5061 = vunpack.c.l.b16 %v4570
    %v5062 = vunpack.c.h.b16 %v4570
    %v5063 = vunpack.c.l.b16 %v4571
    %v5064 = vunpack.c.h.b16 %v4571
    %v5065 = vunpack.c.l.b16 %v4572
    %v5066 = vunpack.c.h.b16 %v4572
    %v5067 = vunpack.c.l.b16 %v4573
    %v5068 = vunpack.c.h.b16 %v4573
    %v5069 = vunpack.c.l.b16 %v4574
    %v5070 = vunpack.c.h.b16 %v4574
    %v5071 = vunpack.c.l.b16 %v4575
    %v5072 = vunpack.c.h.b16 %v4575
    %v5073 = vunpack.c.l.b16 %v4576
    %v5074 = vunpack.c.h.b16 %v4576
    %v5075 = vunpack.c.l.b16 %v4577
    %v5076 = vunpack.c.h.b16 %v4577
    %v5077 = vunpack.c.l.b16 %v4578
    %v5078 = vunpack.c.h.b16 %v4578
    %v5079 = vunpack.c.l.b16 %v4579
    %v5080 = vunpack.c.h.b16 %v4579
    %v5081 = vunpack.c.l.b16 %v4580
    %v5082 = vunpack.c.h.b16 %v4580
    %v5083 = vunpack.c.l.b16 %v4581
    %v5084 = vunpack.c.h.b16 %v4581
    %v5085 = vunpack.c.l.b16 %v4582
    %v5086 = vunpack.c.h.b16 %v4582
    %v5087 = vunpack.c.l.b16 %v4583
    %v5088 = vunpack.c.h.b16 %v4583
    %v5089 = vunpack.c.l.b16 %v4584
    %v5090 = vunpack.c.h.b16 %v4584
    %v5091 = vunpack.c.l.b16 %v4585
    %v5092 = vunpack.c.h.b16 %v4585
    %v5093 = vunpack.c.l.b16 %v4586
    %v5094 = vunpack.c.h.b16 %v4586
    %v5095 = vunpack.c.l.b16 %v4587
    %v5096 = vunpack.c.h.b16 %v4587
    %v5097 = vunpack.c.l.b16 %v4588
    %v5098 = vunpack.c.h.b16 %v4588
    %v5099 = vunpack.c.l.b16 %v4589
    %v5100 = vunpack.c.h.b16 %v4589
    %v5101 = vunpack.c.l.b16 %v4590
    %v5102 = vunpack.c.h.b16 %v4590
    %v5103 = vunpack.c.l.b16 %v4591
    %v5104 = vunpack.c.h.b16 %v4591
    %v5105 = vunpack.c.l.b16 %v4592
    %v5106 = vunpack.c.h.b16 %v4592
    %v5107 = vunpack.c.l.b16 %v4593
    %v5108 = vunpack.c.h.b16 %v4593
    %v5109 = vunpack.c.l.b16 %v4594
    %v5110 = vunpack.c.h.b16 %v4594
    %v5111 = vunpack.c.l.b16 %v4595
    %v5112 = vunpack.c.h.b16 %v4595
    %v5113 = vunpack.c.l.b16 %v4596
    %v5114 = vunpack.c.h.b16 %v4596
    %v5115 = vunpack.c.l.b16 %v4597
    %v5116 = vunpack.c.h.b16 %v4597
    %v5117 = vunpack.c.l.b16 %v4598
    %v5118 = vunpack.c.h.b16 %v4598
    %v5119 = vunpack.c.l.b16 %v4599
    %v5120 = vunpack.c.h.b16 %v4599
    %v5121 = vunpack.c.l.b16 %v4600
    %v5122 = vunpack.c.h.b16 %v4600
    %v5123 = vunpack.c.l.b16 %v4601
    %v5124 = vunpack.c.h.b16 %v4601
    %v5125 = vunpack.c.l.b16 %v4602
    %v5126 = vunpack.c.h.b16 %v4602
    %v5127 = vunpack.c.l.b16 %v4603
    %v5128 = vunpack.c.h.b16 %v4603
    %v5129 = vunpack.c.l.b16 %v4604
    %v5130 = vunpack.c.h.b16 %v4604
    %v5131 = vunpack.c.l.b16 %v4605
    %v5132 = vunpack.c.h.b16 %v4605
    %v5133 = vunpack.c.l.b16 %v4606
    %v5134 = vunpack.c.h.b16 %v4606
    %v5135 = vunpack.c.l.b16 %v4607
    %v5136 = vunpack.c.h.b16 %v4607
    %v5137 = vunpack.c.l.b16 %v4608
    %v5138 = vunpack.c.h.b16 %v4608
    %v5139 = vunpack.c.l.b16 %v4609
    %v5140 = vunpack.c.h.b16 %v4609
    %v5141 = vunpack.c.l.b16 %v4610
    %v5142 = vunpack.c.h.b16 %v4610
    %v5143 = vunpack.c.l.b16 %v4611
    %v5144 = vunpack.c.h.b16 %v4611
    %v5145 = vunpack.c.l.b16 %v4612
    %v5146 = vunpack.c.h.b16 %v4612
    %v5147 = vunpack.c.l.b16 %v4613
    %v5148 = vunpack.c.h.b16 %v4613
    %v5149 = vunpack.c.l.b16 %v4614
    %v5150 = vunpack.c.h.b16 %v4614
    %v5151 = vunpack.c.l.b16 %v4615
    %v5152 = vunpack.c.h.b16 %v4615
    %v5153 = vunpack.c.l.b16 %v4616
    %v5154 = vunpack.c.h.b16 %v4616
    %v5155 = vunpack.c.l.b16 %v4617
    %v5156 = vunpack.c.h.b16 %v4617
    %v5157 = vunpack.c.l.b16 %v4618
    %v5158 = vunpack.c.h.b16 %v4618
    %v5159 = vunpack.c.l.b16 %v4619
    %v5160 = vunpack.c.h.b16 %v4619
    %v5161 = vunpack.c.l.b16 %v4620
    %v5162 = vunpack.c.h.b16 %v4620
    %v5163 = vunpack.c.l.b16 %v4621
    %v5164 = vunpack.c.h.b16 %v4621
    %v5165 = vunpack.c.l.b16 %v4622
    %v5166 = vunpack.c.h.b16 %v4622
    %v5167 = vunpack.c.l.b16 %v4623
    %v5168 = vunpack.c.h.b16 %v4623
    %v5169 = vunpack.c.l.b16 %v4624
    %v5170 = vunpack.c.h.b16 %v4624
    %v5171 = vunpack.c.l.b16 %v4625
    %v5172 = vunpack.c.h.b16 %v4625
    %v5173 = vunpack.c.l.b16 %v4626
    %v5174 = vunpack.c.h.b16 %v4626
    %v5175 = vunpack.c.l.b16 %v4627
    %v5176 = vunpack.c.h.b16 %v4627
    %v5177 = vunpack.c.l.b16 %v4628
    %v5178 = vunpack.c.h.b16 %v4628
    %v5179 = vunpack.c.l.b16 %v4629
    %v5180 = vunpack.c.h.b16 %v4629
    %v5181 = vunpack.c.l.b16 %v4630
    %v5182 = vunpack.c.h.b16 %v4630
    %v5183 = vunpack.c.l.b16 %v4631
    %v5184 = vunpack.c.h.b16 %v4631
    %v5185 = vunpack.c.l.b16 %v4632
    %v5186 = vunpack.c.h.b16 %v4632
    %v5187 = vunpack.c.l.b16 %v4633
    %v5188 = vunpack.c.h.b16 %v4633
    %v5189 = vunpack.c.l.b16 %v4634
    %v5190 = vunpack.c.h.b16 %v4634
    %v5191 = vunpack.c.l.b16 %v4635
    %v5192 = vunpack.c.h.b16 %v4635
    %v5193 = vunpack.c.l.b16 %v4636
    %v5194 = vunpack.c.h.b16 %v4636
    %v5195 = vunpack.c.l.b16 %v4637
    %v5196 = vunpack.c.h.b16 %v4637
    %v5197 = vunpack.c.l.b16 %v4638
    %v5198 = vunpack.c.h.b16 %v4638
    %v5199 = vunpack.c.l.b16 %v4639
    %v5200 = vunpack.c.h.b16 %v4639
    %v5201 = vunpack.c.l.b16 %v4640
    %v5202 = vunpack.c.h.b16 %v4640
    %v5203 = vunpack.c.l.b16 %v4641
    %v5204 = vunpack.c.h.b16 %v4641
    %v5205 = vunpack.c.l.b16 %v4642
    %v5206 = vunpack.c.h.b16 %v4642
    %v5207 = vunpack.c.l.b16 %v4643
    %v5208 = vunpack.c.h.b16 %v4643
    %v5209 = vunpack.c.l.b16 %v4644
    %v5210 = vunpack.c.h.b16 %v4644
    %v5211 = vunpack.c.l.b16 %v4645
    %v5212 = vunpack.c.h.b16 %v4645
    %v5213 = vunpack.c.l.b16 %v4646
    %v5214 = vunpack.c.h.b16 %v4646
    %v5215 = vunpack.c.l.b16 %v4647
    %v5216 = vunpack.c.h.b16 %v4647
    %v5217 = vunpack.c.l.b16 %v4648
    %v5218 = vunpack.c.h.b16 %v4648
    %v5219 = vunpack.c.l.b16 %v4649
    %v5220 = vunpack.c.h.b16 %v4649
    %v5221 = vunpack.c.l.b16 %v4650
    %v5222 = vunpack.c.h.b16 %v4650
    %v5223 = vunpack.c.l.b16 %v4651
    %v5224 = vunpack.c.h.b16 %v4651
    %v5225 = vunpack.c.l.b16 %v4652
    %v5226 = vunpack.c.h.b16 %v4652
    %v5227 = vunpack.c.l.b16 %v4653
    %v5228 = vunpack.c.h.b16 %v4653
    %v5229 = vunpack.c.l.b16 %v4654
    %v5230 = vunpack.c.h.b16 %v4654
    %v5231 = vunpack.c.l.b16 %v4655
    %v5232 = vunpack.c.h.b16 %v4655
    %v5233 = vunpack.c.l.b16 %v4656
    %v5234 = vunpack.c.h.b16 %v4656
    %v5235 = vunpack.c.l.b16 %v4657
    %v5236 = vunpack.c.h.b16 %v4657
    %v5237 = vunpack.c.l.b16 %v4658
    %v5238 = vunpack.c.h.b16 %v4658
    %v5239 = vunpack.c.l.b16 %v4659
    %v5240 = vunpack.c.h.b16 %v4659
    %v5241 = vunpack.c.l.b16 %v4660
    %v5242 = vunpack.c.h.b16 %v4660
    %v5243 = vunpack.c.l.b16 %v4661
    %v5244 = vunpack.c.h.b16 %v4661
    %v5245 = vunpack.c.l.b16 %v4662
    %v5246 = vunpack.c.h.b16 %v4662
    %v5247 = vunpack.c.l.b16 %v4663
    %v5248 = vunpack.c.h.b16 %v4663
    %v5249 = vunpack.c.l.b16 %v4664
    %v5250 = vunpack.c.h.b16 %v4664
    %v5251 = vunpack.c.l.b16 %v4665
    %v5252 = vunpack.c.h.b16 %v4665
    %v5253 = vunpack.c.l.b16 %v4666
    %v5254 = vunpack.c.h.b16 %v4666
    %v5255 = vunpack.c.l.b16 %v4667
    %v5256 = vunpack.c.h.b16 %v4667
    %v5257 = vunpack.c.l.b16 %v4668
    %v5258 = vunpack.c.h.b16 %v4668
    %v5259 = vpack.c.b16 %v4881, %v4875
    %v5260 = vpack.c.b16 %v4882, %v4876
    %v5261 = vpack.c.b16 %v4883, %v4877
    %v5262 = vpack.c.b16 %v4884, %v4878
    %v5263 = vpack.c.b16 %v4885, %v4879
    %v5264 = vpack.c.b16 %v4886, %v4880
    %v5265 = vpack.c.b16 %v4893, %v4887
    %v5266 = vpack.c.b16 %v4894, %v4888
    %v5267 = vpack.c.b16 %v4895, %v4889
    %v5268 = vpack.c.b16 %v4896, %v4890
    %v5269 = vpack.c.b16 %v4897, %v4891
    %v5270 = vpack.c.b16 %v4898, %v4892
    %v5271 = vpack.c.b16 %v4905, %v4899
    %v5272 = vpack.c.b16 %v4906, %v4900
    %v5273 = vpack.c.b16 %v4907, %v4901
    %v5274 = vpack.c.b16 %v4908, %v4902
    %v5275 = vpack.c.b16 %v4909, %v4903
    %v5276 = vpack.c.b16 %v4910, %v4904
    %v5277 = vpack.c.b16 %v4917, %v4911
    %v5278 = vpack.c.b16 %v4918, %v4912
    %v5279 = vpack.c.b16 %v4919, %v4913
    %v5280 = vpack.c.b16 %v4920, %v4914
    %v5281 = vpack.c.b16 %v4921, %v4915
    %v5282 = vpack.c.b16 %v4922, %v4916
    %v5283 = vpack.c.b16 %v4929, %v4923
    %v5284 = vpack.c.b16 %v4930, %v4924
    %v5285 = vpack.c.b16 %v4931, %v4925
    %v5286 = vpack.c.b16 %v4932, %v4926
    %v5287 = vpack.c.b16 %v4933, %v4927
    %v5288 = vpack.c.b16 %v4934, %v4928
    %v5289 = vpack.c.b16 %v4941, %v4935
    %v5290 = vpack.c.b16 %v4942, %v4936
    %v5291 = vpack.c.b16 %v4943, %v4937
    %v5292 = vpack.c.b16 %v4944, %v4938
    %v5293 = vpack.c.b16 %v4945, %v4939
    %v5294 = vpack.c.b16 %v4946, %v4940
    %v5295 = vpack.c.b16 %v4953, %v4947
    %v5296 = vpack.c.b16 %v4954, %v4948
    %v5297 = vpack.c.b16 %v4955, %v4949
    %v5298 = vpack.c.b16 %v4956, %v4950
    %v5299 = vpack.c.b16 %v4957, %v4951
    %v5300 = vpack.c.b16 %v4958, %v4952
    %v5301 = vpack.c.b16 %v4965, %v4959
    %v5302 = vpack.c.b16 %v4966, %v4960
    %v5303 = vpack.c.b16 %v4967, %v4961
    %v5304 = vpack.c.b16 %v4968, %v4962
    %v5305 = vpack.c.b16 %v4969, %v4963
    %v5306 = vpack.c.b16 %v4970, %v4964
    %v5307 = vpack.c.b16 %v4977, %v4971
    %v5308 = vpack.c.b16 %v4978, %v4972
    %v5309 = vpack.c.b16 %v4979, %v4973
    %v5310 = vpack.c.b16 %v4980, %v4974
    %v5311 = vpack.c.b16 %v4981, %v4975
    %v5312 = vpack.c.b16 %v4982, %v4976
    %v5313 = vpack.c.b16 %v4989, %v4983
    %v5314 = vpack.c.b16 %v4990, %v4984
    %v5315 = vpack.c.b16 %v4991, %v4985
    %v5316 = vpack.c.b16 %v4992, %v4986
    %v5317 = vpack.c.b16 %v4993, %v4987
    %v5318 = vpack.c.b16 %v4994, %v4988
    %v5319 = vpack.c.b16 %v5001, %v4995
    %v5320 = vpack.c.b16 %v5002, %v4996
    %v5321 = vpack.c.b16 %v5003, %v4997
    %v5322 = vpack.c.b16 %v5004, %v4998
    %v5323 = vpack.c.b16 %v5005, %v4999
    %v5324 = vpack.c.b16 %v5006, %v5000
    %v5325 = vpack.c.b16 %v5013, %v5007
    %v5326 = vpack.c.b16 %v5014, %v5008
    %v5327 = vpack.c.b16 %v5015, %v5009
    %v5328 = vpack.c.b16 %v5016, %v5010
    %v5329 = vpack.c.b16 %v5017, %v5011
    %v5330 = vpack.c.b16 %v5018, %v5012
    %v5331 = vpack.c.b16 %v5025, %v5019
    %v5332 = vpack.c.b16 %v5026, %v5020
    %v5333 = vpack.c.b16 %v5027, %v5021
    %v5334 = vpack.c.b16 %v5028, %v5022
    %v5335 = vpack.c.b16 %v5029, %v5023
    %v5336 = vpack.c.b16 %v5030, %v5024
    %v5337 = vpack.c.b16 %v5037, %v5031
    %v5338 = vpack.c.b16 %v5038, %v5032
    %v5339 = vpack.c.b16 %v5039, %v5033
    %v5340 = vpack.c.b16 %v5040, %v5034
    %v5341 = vpack.c.b16 %v5041, %v5035
    %v5342 = vpack.c.b16 %v5042, %v5036
    %v5343 = vpack.c.b16 %v5049, %v5043
    %v5344 = vpack.c.b16 %v5050, %v5044
    %v5345 = vpack.c.b16 %v5051, %v5045
    %v5346 = vpack.c.b16 %v5052, %v5046
    %v5347 = vpack.c.b16 %v5053, %v5047
    %v5348 = vpack.c.b16 %v5054, %v5048
    %v5349 = vpack.c.b16 %v5061, %v5055
    %v5350 = vpack.c.b16 %v5062, %v5056
    %v5351 = vpack.c.b16 %v5063, %v5057
    %v5352 = vpack.c.b16 %v5064, %v5058
    %v5353 = vpack.c.b16 %v5065, %v5059
    %v5354 = vpack.c.b16 %v5066, %v5060
    %v5355 = vpack.c.b16 %v5073, %v5067
    %v5356 = vpack.c.b16 %v5074, %v5068
    %v5357 = vpack.c.b16 %v5075, %v5069
    %v5358 = vpack.c.b16 %v5076, %v5070
    %v5359 = vpack.c.b16 %v5077, %v5071
    %v5360 = vpack.c.b16 %v5078, %v5072
    %v5361 = vpack.c.b16 %v5085, %v5079
    %v5362 = vpack.c.b16 %v5086, %v5080
    %v5363 = vpack.c.b16 %v5087, %v5081
    %v5364 = vpack.c.b16 %v5088, %v5082
    %v5365 = vpack.c.b16 %v5089, %v5083
    %v5366 = vpack.c.b16 %v5090, %v5084
    %v5367 = vpack.c.b16 %v5097, %v5091
    %v5368 = vpack.c.b16 %v5098, %v5092
    %v5369 = vpack.c.b16 %v5099, %v5093
    %v5370 = vpack.c.b16 %v5100, %v5094
    %v5371 = vpack.c.b16 %v5101, %v5095
    %v5372 = vpack.c.b16 %v5102, %v5096
    %v5373 = vpack.c.b16 %v5109, %v5103
    %v5374 = vpack.c.b16 %v5110, %v5104
    %v5375 = vpack.c.b16 %v5111, %v5105
    %v5376 = vpack.c.b16 %v5112, %v5106
    %v5377 = vpack.c.b16 %v5113, %v5107
    %v5378 = vpack.c.b16 %v5114, %v5108
    %v5379 = vpack.c.b16 %v5121, %v5115
    %v5380 = vpack.c.b16 %v5122, %v5116
    %v5381 = vpack.c.b16 %v5123, %v5117
    %v5382 = vpack.c.b16 %v5124, %v5118
    %v5383 = vpack.c.b16 %v5125, %v5119
    %v5384 = vpack.c.b16 %v5126, %v5120
    %v5385 = vpack.c.b16 %v5133, %v5127
    %v5386 = vpack.c.b16 %v5134, %v5128
    %v5387 = vpack.c.b16 %v5135, %v5129
    %v5388 = vpack.c.b16 %v5136, %v5130
    %v5389 = vpack.c.b16 %v5137, %v5131
    %v5390 = vpack.c.b16 %v5138, %v5132
    %v5391 = vpack.c.b16 %v5145, %v5139
    %v5392 = vpack.c.b16 %v5146, %v5140
    %v5393 = vpack.c.b16 %v5147, %v5141
    %v5394 = vpack.c.b16 %v5148, %v5142
    %v5395 = vpack.c.b16 %v5149, %v5143
    %v5396 = vpack.c.b16 %v5150, %v5144
    %v5397 = vpack.c.b16 %v5157, %v5151
    %v5398 = vpack.c.b16 %v5158, %v5152
    %v5399 = vpack.c.b16 %v5159, %v5153
    %v5400 = vpack.c.b16 %v5160, %v5154
    %v5401 = vpack.c.b16 %v5161, %v5155
    %v5402 = vpack.c.b16 %v5162, %v5156
    %v5403 = vpack.c.b16 %v5169, %v5163
    %v5404 = vpack.c.b16 %v5170, %v5164
    %v5405 = vpack.c.b16 %v5171, %v5165
    %v5406 = vpack.c.b16 %v5172, %v5166
    %v5407 = vpack.c.b16 %v5173, %v5167
    %v5408 = vpack.c.b16 %v5174, %v5168
    %v5409 = vpack.c.b16 %v5181, %v5175
    %v5410 = vpack.c.b16 %v5182, %v5176
    %v5411 = vpack.c.b16 %v5183, %v5177
    %v5412 = vpack.c.b16 %v5184, %v5178
    %v5413 = vpack.c.b16 %v5185, %v5179
    %v5414 = vpack.c.b16 %v5186, %v5180
    %v5415 = vpack.c.b16 %v5193, %v5187
    %v5416 = vpack.c.b16 %v5194, %v5188
    %v5417 = vpack.c.b16 %v5195, %v5189
    %v5418 = vpack.c.b16 %v5196, %v5190
    %v5419 = vpack.c.b16 %v5197, %v5191
    %v5420 = vpack.c.b16 %v5198, %v5192
    %v5421 = vpack.c.b16 %v5205, %v5199
    %v5422 = vpack.c.b16 %v5206, %v5200
    %v5423 = vpack.c.b16 %v5207, %v5201
    %v5424 = vpack.c.b16 %v5208, %v5202
    %v5425 = vpack.c.b16 %v5209, %v5203
    %v5426 = vpack.c.b16 %v5210, %v5204
    %v5427 = vpack.c.b16 %v5217, %v5211
    %v5428 = vpack.c.b16 %v5218, %v5212
    %v5429 = vpack.c.b16 %v5219, %v5213
    %v5430 = vpack.c.b16 %v5220, %v5214
    %v5431 = vpack.c.b16 %v5221, %v5215
    %v5432 = vpack.c.b16 %v5222, %v5216
    %v5433 = vpack.c.b16 %v5229, %v5223
    %v5434 = vpack.c.b16 %v5230, %v5224
    %v5435 = vpack.c.b16 %v5231, %v5225
    %v5436 = vpack.c.b16 %v5232, %v5226
    %v5437 = vpack.c.b16 %v5233, %v5227
    %v5438 = vpack.c.b16 %v5234, %v5228
    %v5439 = vpack.c.b16 %v5241, %v5235
    %v5440 = vpack.c.b16 %v5242, %v5236
    %v5441 = vpack.c.b16 %v5243, %v5237
    %v5442 = vpack.c.b16 %v5244, %v5238
    %v5443 = vpack.c.b16 %v5245, %v5239
    %v5444 = vpack.c.b16 %v5246, %v5240
    %v5445 = vpack.c.b16 %v5253, %v5247
    %v5446 = vpack.c.b16 %v5254, %v5248
    %v5447 = vpack.c.b16 %v5255, %v5249
    %v5448 = vpack.c.b16 %v5256, %v5250
    %v5449 = vpack.c.b16 %v5257, %v5251
    %v5450 = vpack.c.b16 %v5258, %v5252
    %5643 = vmatpush.bf16.msra.mxu0 %v5301
    %5644 = vmatpush.bf16.msra.mxu0 %v5295
    %5645 = vmatpush.bf16.msra.mxu0 %v5289
    %5646 = vmatpush.bf16.msra.mxu0 %v5283
    %5647 = vmatpush.bf16.msra.mxu0 %v5277
    %5648 = vmatpush.bf16.msra.mxu0 %v5271
    %5649 = vmatpush.bf16.msra.mxu0 %v5265
    %5650 = vmatpush.bf16.msra.mxu0 %v5259
    %5651 = vmatmul.bf16.gmra.mxu0 %v4473
    %v5652 = vpop.f32.mrf.mxu0
    %v5653 = vadd.f32 %v4671, %v5652
    %v5654 = vpop.f32.mrf.mxu0
    %5655 = vdwg.mxu0
    %5656 = vmatpush.bf16.msra.mxu0 %v5349
    %5657 = vmatpush.bf16.msra.mxu0 %v5343
    %5658 = vmatpush.bf16.msra.mxu0 %v5337
    %5659 = vmatpush.bf16.msra.mxu0 %v5331
    %5660 = vmatpush.bf16.msra.mxu0 %v5325
    %5661 = vmatpush.bf16.msra.mxu0 %v5319
    %5662 = vmatpush.bf16.msra.mxu0 %v5313
    %5663 = vmatpush.bf16.msra.mxu0 %v5307
    %5664 = vmatmul.bf16.gmra.mxu0 %v4474
    %v5665 = vpop.f32.mrf.mxu0
    %v5666 = vadd.f32 %v5653, %v5665
    %v5667 = vpop.f32.mrf.mxu0
    %5668 = vdwg.mxu0
    %5669 = vmatpush.bf16.msra.mxu0 %v5397
    %5670 = vmatpush.bf16.msra.mxu0 %v5391
    %5671 = vmatpush.bf16.msra.mxu0 %v5385
    %5672 = vmatpush.bf16.msra.mxu0 %v5379
    %5673 = vmatpush.bf16.msra.mxu0 %v5373
    %5674 = vmatpush.bf16.msra.mxu0 %v5367
    %5675 = vmatpush.bf16.msra.mxu0 %v5361
    %5676 = vmatpush.bf16.msra.mxu0 %v5355
    %5677 = vmatmul.bf16.gmra.mxu0 %v4475
    %v5678 = vpop.f32.mrf.mxu0
    %v5679 = vadd.f32 %v5666, %v5678
    %v5680 = vpop.f32.mrf.mxu0
    %5681 = vdwg.mxu0
    %5682 = vmatpush.bf16.msra.mxu0 %v5445
    %5683 = vmatpush.bf16.msra.mxu0 %v5439
    %5684 = vmatpush.bf16.msra.mxu0 %v5433
    %5685 = vmatpush.bf16.msra.mxu0 %v5427
    %5686 = vmatpush.bf16.msra.mxu0 %v5421
    %5687 = vmatpush.bf16.msra.mxu0 %v5415
    %5688 = vmatpush.bf16.msra.mxu0 %v5409
    %5689 = vmatpush.bf16.msra.mxu0 %v5403
    %5690 = vmatmul.bf16.gmra.mxu0 %v4476
    %v5691 = vpop.f32.mrf.mxu0
    %v5692 = vadd.f32 %v5679, %v5691
    %v5693 = vpop.f32.mrf.mxu0
    %5694 = vdwg.mxu0
    %5695 = vmatpush.bf16.msra.mxu0 %v5302
    %5696 = vmatpush.bf16.msra.mxu0 %v5296
    %5697 = vmatpush.bf16.msra.mxu0 %v5290
    %5698 = vmatpush.bf16.msra.mxu0 %v5284
    %5699 = vmatpush.bf16.msra.mxu0 %v5278
    %5700 = vmatpush.bf16.msra.mxu0 %v5272
    %5701 = vmatpush.bf16.msra.mxu0 %v5266
    %5702 = vmatpush.bf16.msra.mxu0 %v5260
    %5703 = vmatmul.bf16.gmra.mxu0 %v4473
    %v5704 = vpop.f32.mrf.mxu0
    %v5705 = vadd.f32 %v4672, %v5704
    %v5706 = vpop.f32.mrf.mxu0
    %5707 = vdwg.mxu0
    %5708 = vmatpush.bf16.msra.mxu0 %v5350
    %5709 = vmatpush.bf16.msra.mxu0 %v5344
    %5710 = vmatpush.bf16.msra.mxu0 %v5338
    %5711 = vmatpush.bf16.msra.mxu0 %v5332
    %5712 = vmatpush.bf16.msra.mxu0 %v5326
    %5713 = vmatpush.bf16.msra.mxu0 %v5320
    %5714 = vmatpush.bf16.msra.mxu0 %v5314
    %5715 = vmatpush.bf16.msra.mxu0 %v5308
    %5716 = vmatmul.bf16.gmra.mxu0 %v4474
    %v5717 = vpop.f32.mrf.mxu0
    %v5718 = vadd.f32 %v5705, %v5717
    %v5719 = vpop.f32.mrf.mxu0
    %5720 = vdwg.mxu0
    %5721 = vmatpush.bf16.msra.mxu0 %v5398
    %5722 = vmatpush.bf16.msra.mxu0 %v5392
    %5723 = vmatpush.bf16.msra.mxu0 %v5386
    %5724 = vmatpush.bf16.msra.mxu0 %v5380
    %5725 = vmatpush.bf16.msra.mxu0 %v5374
    %5726 = vmatpush.bf16.msra.mxu0 %v5368
    %5727 = vmatpush.bf16.msra.mxu0 %v5362
    %5728 = vmatpush.bf16.msra.mxu0 %v5356
    %5729 = vmatmul.bf16.gmra.mxu0 %v4475
    %v5730 = vpop.f32.mrf.mxu0
    %v5731 = vadd.f32 %v5718, %v5730
    %v5732 = vpop.f32.mrf.mxu0
    %5733 = vdwg.mxu0
    %5734 = vmatpush.bf16.msra.mxu0 %v5446
    %5735 = vmatpush.bf16.msra.mxu0 %v5440
    %5736 = vmatpush.bf16.msra.mxu0 %v5434
    %5737 = vmatpush.bf16.msra.mxu0 %v5428
    %5738 = vmatpush.bf16.msra.mxu0 %v5422
    %5739 = vmatpush.bf16.msra.mxu0 %v5416
    %5740 = vmatpush.bf16.msra.mxu0 %v5410
    %5741 = vmatpush.bf16.msra.mxu0 %v5404
    %5742 = vmatmul.bf16.gmra.mxu0 %v4476
    %v5743 = vpop.f32.mrf.mxu0
    %v5744 = vadd.f32 %v5731, %v5743
    %v5745 = vpop.f32.mrf.mxu0
    %5746 = vdwg.mxu0
    %5747 = vmatpush.bf16.msra.mxu0 %v5303
    %5748 = vmatpush.bf16.msra.mxu0 %v5297
    %5749 = vmatpush.bf16.msra.mxu0 %v5291
    %5750 = vmatpush.bf16.msra.mxu0 %v5285
    %5751 = vmatpush.bf16.msra.mxu0 %v5279
    %5752 = vmatpush.bf16.msra.mxu0 %v5273
    %5753 = vmatpush.bf16.msra.mxu0 %v5267
    %5754 = vmatpush.bf16.msra.mxu0 %v5261
    %5755 = vmatmul.bf16.gmra.mxu0 %v4473
    %v5756 = vpop.f32.mrf.mxu0
    %v5757 = vadd.f32 %v4673, %v5756
    %v5758 = vpop.f32.mrf.mxu0
    %5759 = vdwg.mxu0
    %5760 = vmatpush.bf16.msra.mxu0 %v5351
    %5761 = vmatpush.bf16.msra.mxu0 %v5345
    %5762 = vmatpush.bf16.msra.mxu0 %v5339
    %5763 = vmatpush.bf16.msra.mxu0 %v5333
    %5764 = vmatpush.bf16.msra.mxu0 %v5327
    %5765 = vmatpush.bf16.msra.mxu0 %v5321
    %5766 = vmatpush.bf16.msra.mxu0 %v5315
    %5767 = vmatpush.bf16.msra.mxu0 %v5309
    %5768 = vmatmul.bf16.gmra.mxu0 %v4474
    %v5769 = vpop.f32.mrf.mxu0
    %v5770 = vadd.f32 %v5757, %v5769
    %v5771 = vpop.f32.mrf.mxu0
    %5772 = vdwg.mxu0
    %5773 = vmatpush.bf16.msra.mxu0 %v5399
    %5774 = vmatpush.bf16.msra.mxu0 %v5393
    %5775 = vmatpush.bf16.msra.mxu0 %v5387
    %5776 = vmatpush.bf16.msra.mxu0 %v5381
    %5777 = vmatpush.bf16.msra.mxu0 %v5375
    %5778 = vmatpush.bf16.msra.mxu0 %v5369
    %5779 = vmatpush.bf16.msra.mxu0 %v5363
    %5780 = vmatpush.bf16.msra.mxu0 %v5357
    %5781 = vmatmul.bf16.gmra.mxu0 %v4475
    %v5782 = vpop.f32.mrf.mxu0
    %v5783 = vadd.f32 %v5770, %v5782
    %v5784 = vpop.f32.mrf.mxu0
    %5785 = vdwg.mxu0
    %5786 = vmatpush.bf16.msra.mxu0 %v5447
    %5787 = vmatpush.bf16.msra.mxu0 %v5441
    %5788 = vmatpush.bf16.msra.mxu0 %v5435
    %5789 = vmatpush.bf16.msra.mxu0 %v5429
    %5790 = vmatpush.bf16.msra.mxu0 %v5423
    %5791 = vmatpush.bf16.msra.mxu0 %v5417
    %5792 = vmatpush.bf16.msra.mxu0 %v5411
    %5793 = vmatpush.bf16.msra.mxu0 %v5405
    %5794 = vmatmul.bf16.gmra.mxu0 %v4476
    %v5795 = vpop.f32.mrf.mxu0
    %v5796 = vadd.f32 %v5783, %v5795
    %v5797 = vpop.f32.mrf.mxu0
    %5798 = vdwg.mxu0
    %5799 = vmatpush.bf16.msra.mxu0 %v5304
    %5800 = vmatpush.bf16.msra.mxu0 %v5298
    %5801 = vmatpush.bf16.msra.mxu0 %v5292
    %5802 = vmatpush.bf16.msra.mxu0 %v5286
    %5803 = vmatpush.bf16.msra.mxu0 %v5280
    %5804 = vmatpush.bf16.msra.mxu0 %v5274
    %5805 = vmatpush.bf16.msra.mxu0 %v5268
    %5806 = vmatpush.bf16.msra.mxu0 %v5262
    %5807 = vmatmul.bf16.gmra.mxu0 %v4473
    %v5808 = vpop.f32.mrf.mxu0
    %v5809 = vadd.f32 %v4674, %v5808
    %v5810 = vpop.f32.mrf.mxu0
    %5811 = vdwg.mxu0
    %5812 = vmatpush.bf16.msra.mxu0 %v5352
    %5813 = vmatpush.bf16.msra.mxu0 %v5346
    %5814 = vmatpush.bf16.msra.mxu0 %v5340
    %5815 = vmatpush.bf16.msra.mxu0 %v5334
    %5816 = vmatpush.bf16.msra.mxu0 %v5328
    %5817 = vmatpush.bf16.msra.mxu0 %v5322
    %5818 = vmatpush.bf16.msra.mxu0 %v5316
    %5819 = vmatpush.bf16.msra.mxu0 %v5310
    %5820 = vmatmul.bf16.gmra.mxu0 %v4474
    %v5821 = vpop.f32.mrf.mxu0
    %v5822 = vadd.f32 %v5809, %v5821
    %v5823 = vpop.f32.mrf.mxu0
    %5824 = vdwg.mxu0
    %5825 = vmatpush.bf16.msra.mxu0 %v5400
    %5826 = vmatpush.bf16.msra.mxu0 %v5394
    %5827 = vmatpush.bf16.msra.mxu0 %v5388
    %5828 = vmatpush.bf16.msra.mxu0 %v5382
    %5829 = vmatpush.bf16.msra.mxu0 %v5376
    %5830 = vmatpush.bf16.msra.mxu0 %v5370
    %5831 = vmatpush.bf16.msra.mxu0 %v5364
    %5832 = vmatpush.bf16.msra.mxu0 %v5358
    %5833 = vmatmul.bf16.gmra.mxu0 %v4475
    %v5834 = vpop.f32.mrf.mxu0
    %v5835 = vadd.f32 %v5822, %v5834
    %v5836 = vpop.f32.mrf.mxu0
    %5837 = vdwg.mxu0
    %5838 = vmatpush.bf16.msra.mxu0 %v5448
    %5839 = vmatpush.bf16.msra.mxu0 %v5442
    %5840 = vmatpush.bf16.msra.mxu0 %v5436
    %5841 = vmatpush.bf16.msra.mxu0 %v5430
    %5842 = vmatpush.bf16.msra.mxu0 %v5424
    %5843 = vmatpush.bf16.msra.mxu0 %v5418
    %5844 = vmatpush.bf16.msra.mxu0 %v5412
    %5845 = vmatpush.bf16.msra.mxu0 %v5406
    %5846 = vmatmul.bf16.gmra.mxu0 %v4476
    %v5847 = vpop.f32.mrf.mxu0
    %v5848 = vadd.f32 %v5835, %v5847
    %v5849 = vpop.f32.mrf.mxu0
    %5850 = vdwg.mxu0
    %5851 = vmatpush.bf16.msra.mxu0 %v5305
    %5852 = vmatpush.bf16.msra.mxu0 %v5299
    %5853 = vmatpush.bf16.msra.mxu0 %v5293
    %5854 = vmatpush.bf16.msra.mxu0 %v5287
    %5855 = vmatpush.bf16.msra.mxu0 %v5281
    %5856 = vmatpush.bf16.msra.mxu0 %v5275
    %5857 = vmatpush.bf16.msra.mxu0 %v5269
    %5858 = vmatpush.bf16.msra.mxu0 %v5263
    %5859 = vmatmul.bf16.gmra.mxu0 %v4473
    %v5860 = vpop.f32.mrf.mxu0
    %v5861 = vadd.f32 %v4675, %v5860
    %v5862 = vpop.f32.mrf.mxu0
    %5863 = vdwg.mxu0
    %5864 = vmatpush.bf16.msra.mxu0 %v5353
    %5865 = vmatpush.bf16.msra.mxu0 %v5347
    %5866 = vmatpush.bf16.msra.mxu0 %v5341
    %5867 = vmatpush.bf16.msra.mxu0 %v5335
    %5868 = vmatpush.bf16.msra.mxu0 %v5329
    %5869 = vmatpush.bf16.msra.mxu0 %v5323
    %5870 = vmatpush.bf16.msra.mxu0 %v5317
    %5871 = vmatpush.bf16.msra.mxu0 %v5311
    %5872 = vmatmul.bf16.gmra.mxu0 %v4474
    %v5873 = vpop.f32.mrf.mxu0
    %v5874 = vadd.f32 %v5861, %v5873
    %v5875 = vpop.f32.mrf.mxu0
    %5876 = vdwg.mxu0
    %5877 = vmatpush.bf16.msra.mxu0 %v5401
    %5878 = vmatpush.bf16.msra.mxu0 %v5395
    %5879 = vmatpush.bf16.msra.mxu0 %v5389
    %5880 = vmatpush.bf16.msra.mxu0 %v5383
    %5881 = vmatpush.bf16.msra.mxu0 %v5377
    %5882 = vmatpush.bf16.msra.mxu0 %v5371
    %5883 = vmatpush.bf16.msra.mxu0 %v5365
    %5884 = vmatpush.bf16.msra.mxu0 %v5359
    %5885 = vmatmul.bf16.gmra.mxu0 %v4475
    %v5886 = vpop.f32.mrf.mxu0
    %v5887 = vadd.f32 %v5874, %v5886
    %v5888 = vpop.f32.mrf.mxu0
    %5889 = vdwg.mxu0
    %5890 = vmatpush.bf16.msra.mxu0 %v5449
    %5891 = vmatpush.bf16.msra.mxu0 %v5443
    %5892 = vmatpush.bf16.msra.mxu0 %v5437
    %5893 = vmatpush.bf16.msra.mxu0 %v5431
    %5894 = vmatpush.bf16.msra.mxu0 %v5425
    %5895 = vmatpush.bf16.msra.mxu0 %v5419
    %5896 = vmatpush.bf16.msra.mxu0 %v5413
    %5897 = vmatpush.bf16.msra.mxu0 %v5407
    %5898 = vmatmul.bf16.gmra.mxu0 %v4476
    %v5899 = vpop.f32.mrf.mxu0
    %v5900 = vadd.f32 %v5887, %v5899
    %v5901 = vpop.f32.mrf.mxu0
    %5902 = vdwg.mxu0
    %5903 = vmatpush.bf16.msra.mxu0 %v5306
    %5904 = vmatpush.bf16.msra.mxu0 %v5300
    %5905 = vmatpush.bf16.msra.mxu0 %v5294
    %5906 = vmatpush.bf16.msra.mxu0 %v5288
    %5907 = vmatpush.bf16.msra.mxu0 %v5282
    %5908 = vmatpush.bf16.msra.mxu0 %v5276
    %5909 = vmatpush.bf16.msra.mxu0 %v5270
    %5910 = vmatpush.bf16.msra.mxu0 %v5264
    %5911 = vmatmul.bf16.gmra.mxu0 %v4473
    %v5912 = vpop.f32.mrf.mxu0
    %v5913 = vadd.f32 %v4676, %v5912
    %v5914 = vpop.f32.mrf.mxu0
    %5915 = vdwg.mxu0
    %5916 = vmatpush.bf16.msra.mxu0 %v5354
    %5917 = vmatpush.bf16.msra.mxu0 %v5348
    %5918 = vmatpush.bf16.msra.mxu0 %v5342
    %5919 = vmatpush.bf16.msra.mxu0 %v5336
    %5920 = vmatpush.bf16.msra.mxu0 %v5330
    %5921 = vmatpush.bf16.msra.mxu0 %v5324
    %5922 = vmatpush.bf16.msra.mxu0 %v5318
    %5923 = vmatpush.bf16.msra.mxu0 %v5312
    %5924 = vmatmul.bf16.gmra.mxu0 %v4474
    %v5925 = vpop.f32.mrf.mxu0
    %v5926 = vadd.f32 %v5913, %v5925
    %v5927 = vpop.f32.mrf.mxu0
    %5928 = vdwg.mxu0
    %5929 = vmatpush.bf16.msra.mxu0 %v5402
    %5930 = vmatpush.bf16.msra.mxu0 %v5396
    %5931 = vmatpush.bf16.msra.mxu0 %v5390
    %5932 = vmatpush.bf16.msra.mxu0 %v5384
    %5933 = vmatpush.bf16.msra.mxu0 %v5378
    %5934 = vmatpush.bf16.msra.mxu0 %v5372
    %5935 = vmatpush.bf16.msra.mxu0 %v5366
    %5936 = vmatpush.bf16.msra.mxu0 %v5360
    %5937 = vmatmul.bf16.gmra.mxu0 %v4475
    %v5938 = vpop.f32.mrf.mxu0
    %v5939 = vadd.f32 %v5926, %v5938
    %v5940 = vpop.f32.mrf.mxu0
    %5941 = vdwg.mxu0
    %5942 = vmatpush.bf16.msra.mxu0 %v5450
    %5943 = vmatpush.bf16.msra.mxu0 %v5444
    %5944 = vmatpush.bf16.msra.mxu0 %v5438
    %5945 = vmatpush.bf16.msra.mxu0 %v5432
    %5946 = vmatpush.bf16.msra.mxu0 %v5426
    %5947 = vmatpush.bf16.msra.mxu0 %v5420
    %5948 = vmatpush.bf16.msra.mxu0 %v5414
    %5949 = vmatpush.bf16.msra.mxu0 %v5408
    %5950 = vmatmul.bf16.gmra.mxu0 %v4476
    %v5951 = vpop.f32.mrf.mxu0
    %v5952 = vadd.f32 %v5939, %v5951
    %v5953 = vpop.f32.mrf.mxu0
    %5954 = vdwg.mxu0
    %v5955 = vsub.f32 0.0, %v5692
    %v5956 = vsub.f32 0.0, %v5744
    %v5957 = vsub.f32 0.0, %v5796
    %v5958 = vsub.f32 0.0, %v5848
    %v5959 = vsub.f32 0.0, %v5900
    %v5960 = vsub.f32 0.0, %v5952
    %v5961 = vmul.f32 %v5955, 1.442695
    %v5962 = vpow.pop %v5961
    %v5963 = vmul.f32 %v5956, 1.442695
    %v5964 = vpow.pop %v5963
    %v5965 = vmul.f32 %v5957, 1.442695
    %v5966 = vpow.pop %v5965
    %v5967 = vmul.f32 %v5958, 1.442695
    %v5968 = vpow.pop %v5967
    %v5969 = vmul.f32 %v5959, 1.442695
    %v5970 = vpow.pop %v5969
    %v5971 = vmul.f32 %v5960, 1.442695
    %v5972 = vpow.pop %v5971
    %v5973 = vadd.f32 %v5962, 1.0
    %v5974 = vadd.f32 %v5964, 1.0
    %v5975 = vadd.f32 %v5966, 1.0
    %v5976 = vadd.f32 %v5968, 1.0
    %v5977 = vadd.f32 %v5970, 1.0
    %v5978 = vadd.f32 %v5972, 1.0
    %v5979 = vrcp.pop %v5973
    %v5980 = vrcp.pop %v5974
    %v5981 = vrcp.pop %v5975
    %v5982 = vrcp.pop %v5976
    %v5983 = vrcp.pop %v5977
    %v5984 = vrcp.pop %v5978
    %v5985 = vpack.c.bf16 %v5980, %v5979
    %v5986 = vpack.c.bf16 %v5982, %v5981
    %v5987 = vpack.c.bf16 %v5984, %v5983
    %v5991 = vrot.slane %v5985, 3
    %v5992 = vrot.slane %v5986, 6
    %v5993 = vrot.slane %v5986, 1
    %v5994 = vrot.slane %v5987, 4
    %v5995 = vrot.slane %v5987, 7
    %vm5996 = vcmask 1040384
    %v5999 = vsel %vm5996, %v5985, %v5991
    %vm6000 = vcmask 1041408
    %v6002 = vsel %vm6000, %v5999, %v5992
    %vm6003 = vcmask 1043459
    %v6006 = vsel %vm6003, %v5993, %v5994
    %vm6007 = vcmask 1044483
    %v6009 = vsel %vm6007, %v6006, %v5995
    %vm6010 = vcmask 1042432
    %v6011 = vsel %vm6010, %v6002, %v6009
    %6013 = vst [vmem:[#allocation22] sm:$0x3f] %v6011
    %6014 = vst [vmem:[#allocation23] sm:$0x3] %v3159
    %6015 = vst [vmem:[#allocation25] sm:$0x3] %v3211
    %6016 = vst [vmem:[#allocation26] sm:$0x3] %v3219
    // Predicated region
    $region106: #{tpu_custom_call.1} parent=1 // pred_check
      _
    $region107: #{tpu_custom_call.1} parent=1 // pred_check_branch
      %6018 = sbr.rel (0) target = $region109
    $region108: #{tpu_custom_call.1} parent=1 // pred_region
      %6020 = vsyncadd [#allocation4], 0
      %s6022 = sshll.u32 [#allocation22], 4
      %s6023 = int_to_ptr.vmem [resolvable:$true] %s6022
      %s6024 = sshll.u32 %s14, 4
      %s6025 = int_to_ptr.hbm [resolvable:$true] %s6024
      %6027 = dma.vmem_to_hbm [thread:$0]  %s6023, 96, %s6025, [#allocation4]
    $region109: #{tpu_custom_call.1} parent=1 // pred_fallthru
      _
    // Predicated region
    $region110: #{tpu_custom_call.1} parent=1 // pred_check
      _
    $region111: #{tpu_custom_call.1} parent=1 // pred_check_branch
      %6029 = sbr.rel (0) target = $region113
    $region112: #{tpu_custom_call.1} parent=1 // pred_region
      %6031 = vsyncadd [#allocation24], 0
      %s6033 = sshll.u32 [#allocation23], 4
      %s6034 = int_to_ptr.vmem [resolvable:$true] %s6033
      %s6035 = sshll.u32 %s15, 4
      %s6036 = int_to_ptr.hbm [resolvable:$true] %s6035
      %6038 = dma.vmem_to_hbm [thread:$0]  %s6034, 32, %s6036, [#allocation24]
    $region113: #{tpu_custom_call.1} parent=1 // pred_fallthru
      _
    // Predicated region
    $region114: #{tpu_custom_call.1} parent=1 // pred_check
      _
    $region115: #{tpu_custom_call.1} parent=1 // pred_check_branch
      %6040 = sbr.rel (0) target = $region117
    $region116: #{tpu_custom_call.1} parent=1 // pred_region
      %6042 = vsyncadd [#allocation24], 0
      %s6044 = sshll.u32 [#allocation25], 4
      %s6045 = int_to_ptr.vmem [resolvable:$true] %s6044
      %s6046 = sshll.u32 %s16, 4
      %s6047 = int_to_ptr.hbm [resolvable:$true] %s6046
      %6049 = dma.vmem_to_hbm [thread:$0]  %s6045, 32, %s6047, [#allocation24]
    $region117: #{tpu_custom_call.1} parent=1 // pred_fallthru
      _
    // Predicated region
    $region118: #{tpu_custom_call.1} parent=1 // pred_check
      _
    $region119: #{tpu_custom_call.1} parent=1 // pred_check_branch
      %6051 = sbr.rel (0) target = $region121
    $region120: #{tpu_custom_call.1} parent=1 // pred_region
      %6053 = vsyncadd [#allocation27], 0
      %s6055 = sshll.u32 [#allocation26], 4
      %s6056 = int_to_ptr.vmem [resolvable:$true] %s6055
      %s6057 = sshll.u32 %s17, 4
      %s6058 = int_to_ptr.hbm [resolvable:$true] %s6057
      %6060 = dma.vmem_to_hbm [thread:$0]  %s6056, 32, %s6058, [#allocation27]
    $region121: #{tpu_custom_call.1} parent=1 // pred_fallthru
      _
    // Predicated region
    $region122: #{tpu_custom_call.1} parent=1 // pred_check
      _
    $region123: #{tpu_custom_call.1} parent=1 // pred_check_branch
      %6062 = sbr.rel (0) target = $region125
    $region124: #{tpu_custom_call.1} parent=1 // pred_region
      %6064 = dma.done [#allocation4], 96
    $region125: #{tpu_custom_call.1} parent=1 // pred_fallthru
      _
    // Predicated region
    $region126: #{tpu_custom_call.1} parent=1 // pred_check
      _
    $region127: #{tpu_custom_call.1} parent=1 // pred_check_branch
      %6066 = sbr.rel (0) target = $region129
    $region128: #{tpu_custom_call.1} parent=1 // pred_region
      %6068 = dma.done [#allocation24], 32
    $region129: #{tpu_custom_call.1} parent=1 // pred_fallthru
      _
    // Predicated region
    $region130: #{tpu_custom_call.1} parent=1 // pred_check
      _
    $region131: #{tpu_custom_call.1} parent=1 // pred_check_branch
      %6070 = sbr.rel (0) target = $region133
    $region132: #{tpu_custom_call.1} parent=1 // pred_region
      %6072 = dma.done [#allocation24], 32
    $region133: #{tpu_custom_call.1} parent=1 // pred_fallthru
      _
    // Predicated region
    $region134: #{tpu_custom_call.1} parent=1 // pred_check
      _
    $region135: #{tpu_custom_call.1} parent=1 // pred_check_branch
      %6074 = sbr.rel (0) target = $region137
    $region136: #{tpu_custom_call.1} parent=1 // pred_region
      %6076 = dma.done [#allocation27], 32
    $region137: #{tpu_custom_call.1} parent=1 // pred_fallthru
      _
    %6077 = vsyncpa [#allocation3], 1
    %6078 = vsyncpa [#allocation6], 1
    %6079 = vsyncpa [#allocation9], 1
    %6080 = vsyncpa [#allocation12], 1
    %6081 = vsyncpa [#allocation15], 1
    %6082 = vsyncpa [#allocation18], 1
    %6083 = vsyncpa [#allocation21], 1
    %6084 = vsyncpa [#allocation4], 1
    %6085 = vsyncpa [#allocation24], 1
    %6086 = vsyncpa [#allocation27], 1

</llo_original>
